<compile_context>
chip_gen: v7x
topology: tpu7x:2x2x1
jax: 0.10.0
libtpu: 0.0.40
codegen_flags: <defaults>
</compile_context>

<pallas_src>
import functools
import math

import jax
import jax.numpy as jnp
from jax.experimental import pallas as pl
from jax.experimental.pallas import tpu as pltpu


# ----------------------------------------------------------------------------
# Small helpers
# ----------------------------------------------------------------------------
def _cparams(grid_rank):
    return pltpu.CompilerParams(
        dimension_semantics=("parallel",) * grid_rank,
        vmem_limit_bytes=32 * 1024 * 1024,
    )


def _pick_rows(rows, target=256):
    """Largest multiple-of-8 divisor of `rows` that is <= target and gives
    >= 2 grid steps (v7x has 2 TensorCores); falls back to `rows`."""
    upper = min(rows, target)
    for cand in range(upper, 7, -1):
        if cand < rows and rows % cand == 0 and cand % 8 == 0:
            return cand
    return rows


def _round_f16(x):
    """Emulate a float16 round-to-nearest-even on an f32 value, in-kernel.

    TODO(synk): fp16 overflow / subnormal behaviour is not reproduced (values
    here are O(1)); the torch reference truly runs the DWT/filter path in half
    precision, here only the quantisation grid is emulated.
    """
    bits = pltpu.bitcast(x, jnp.uint32)
    tie = (bits >> jnp.uint32(13)) & jnp.uint32(1)
    bits = (bits + tie + jnp.uint32(0x0FFF)) & jnp.uint32(0xFFFFE000)
    return pltpu.bitcast(bits, jnp.float32)


def _butterfly(a, b, c, d):
    """Self-inverse Haar 2x2 butterfly (used for DWT_2D and IDWT_2D)."""
    return (0.5 * (a + b + c + d), 0.5 * (a + b - c - d),
            0.5 * (a - b + c - d), 0.5 * (a - b - c + d))


# ----------------------------------------------------------------------------
# Pallas kernels
# ----------------------------------------------------------------------------
def _q_reduce_kernel(x_ref, w_ref, b_ref, q_ref, r_ref, *, c):
    """Fused q-Linear (scale folded into W) + 1x1 reduce conv + BN + ReLU."""
    acc = jnp.dot(x_ref[...], w_ref[...],
                  preferred_element_type=jnp.float32) + b_ref[...]
    q_ref[...] = acc[:, :c]
    # reduce branch: ReLU then .type(float16) emulation
    r_ref[...] = _round_f16(jnp.maximum(acc[:, c:], 0.0))


def _dwt_kernel(s_ref, o_ref, *, cr):
    """Haar DWT butterfly; one lane-dense (rows, 4*Cr) output [LL|LH|HL|HH]."""
    a, b, c, d = s_ref[0], s_ref[1], s_ref[2], s_ref[3]
    ll, lh, hl, hh = _butterfly(a, b, c, d)
    # TODO(synk): LH/HL labelling convention only matters when porting
    # torch-trained filter weights; the pipeline here is self-consistent.
    o_ref[:, 0 * cr:1 * cr] = _round_f16(ll)
    o_ref[:, 1 * cr:2 * cr] = _round_f16(lh)
    o_ref[:, 2 * cr:3 * cr] = _round_f16(hl)
    o_ref[:, 3 * cr:4 * cr] = _round_f16(hh)


def _filter_kernel(x_ref, w_ref, b_ref, o_ref, *, hh, ww, c):
    """3x3 conv + BN(folded) + ReLU via 9 shifted reads of the padded VMEM
    block (no HBM im2col); fp16 quantisation fused in the epilogue."""
    xp = x_ref[0]                                        # (hh+2, ww+2, C)
    acc = jnp.zeros((hh * ww, c), jnp.float32)
    for k in range(9):
        dy, dx = divmod(k, 3)
        patch = xp[dy:dy + hh, dx:dx + ww, :].reshape(hh * ww, c)
        acc = acc + jnp.dot(patch, w_ref[k],
                            preferred_element_type=jnp.float32)
    acc = jnp.maximum(acc + b_ref[...], 0.0)
    o_ref[...] = _round_f16(acc)                         # .half() emulation


def _idwt_kernel(x_ref, o_ref, *, cr):
    """Haar IDWT butterfly; output columns are the 4 spatial offsets."""
    x = x_ref[...]
    ll = x[:, 0 * cr:1 * cr]
    lh = x[:, 1 * cr:2 * cr]
    hl = x[:, 2 * cr:3 * cr]
    hh = x[:, 3 * cr:4 * cr]
    a, b, c, d = _butterfly(ll, lh, hl, hh)              # self-inverse
    o_ref[:, 0 * cr:1 * cr] = _round_f16(a)
    o_ref[:, 1 * cr:2 * cr] = _round_f16(b)
    o_ref[:, 2 * cr:3 * cr] = _round_f16(c)
    o_ref[:, 3 * cr:4 * cr] = _round_f16(d)


def _kv_embed_ln_kernel(p_ref, we_ref, be_ref, g_ref, b2_ref, wk_ref, bk_ref,
                        o_ref):
    """Fused kv_embed (k=s=sr conv as patch matmul) + LayerNorm + kv Linear."""
    t = jnp.dot(p_ref[...], we_ref[...],
                preferred_element_type=jnp.float32) + be_ref[...]
    mu = jnp.mean(t, axis=-1, keepdims=True)
    tc = t - mu
    var = jnp.mean(tc * tc, axis=-1, keepdims=True)
    tn = tc * jax.lax.rsqrt(var + 1e-5) * g_ref[...] + b2_ref[...]
    o_ref[...] = (jnp.dot(tn, wk_ref[...], preferred_element_type=jnp.float32)
                  + bk_ref[...])


def _ln_kv_kernel(x_ref, g_ref, b2_ref, wk_ref, bk_ref, o_ref):
    """LayerNorm + kv Linear (sr_ratio == 1 path, kv_embed = Identity)."""
    t = x_ref[...]
    mu = jnp.mean(t, axis=-1, keepdims=True)
    tc = t - mu
    var = jnp.mean(tc * tc, axis=-1, keepdims=True)
    tn = tc * jax.lax.rsqrt(var + 1e-5) * g_ref[...] + b2_ref[...]
    o_ref[...] = (jnp.dot(tn, wk_ref[...], preferred_element_type=jnp.float32)
                  + bk_ref[...])


def _attn_proj_kernel(q_ref, kv_ref, xi_ref, wo_ref, wi_ref, b_ref, o_ref,
                      *, heads, hd):
    """All-heads attention for one batch block + fused output projection:
       out = softmax(q k^T) v @ Wo + x_idwt @ Wi + b   (scale folded into q)."""
    c = heads * hd
    q = q_ref[0]                       # (N, C), token-major, lane-dense
    kv = kv_ref[0]                     # (M, 2C) = [k | v]
    wo = wo_ref[...]                   # (C, C)
    acc = jnp.dot(xi_ref[0], wi_ref[...],
                  preferred_element_type=jnp.float32) + b_ref[...]
    for h in range(heads):             # all heads in one grid block
        lo, hi = h * hd, (h + 1) * hd
        qh = q[:, lo:hi]
        kh = kv[:, lo:hi]
        vh = kv[:, c + lo:c + hi]
        # q @ k^T without an explicit in-kernel transpose
        s = jax.lax.dot_general(qh, kh, (((1,), (1,)), ((), ())),
                                preferred_element_type=jnp.float32)   # (N, M)
        s = s - jnp.max(s, axis=-1, keepdims=True)
        p = jnp.exp(s)
        p = p * pl.reciprocal(jnp.sum(p, axis=-1, keepdims=True), approx=True)
        oh = jnp.dot(p, vh, preferred_element_type=jnp.float32)       # (N, hd)
        acc = acc + jnp.dot(oh, wo[lo:hi, :],
                            preferred_element_type=jnp.float32)
    o_ref[0] = acc.astype(o_ref.dtype)
    # Dropout in proj is identity at inference.


# ----------------------------------------------------------------------------
# Parameter init (deterministic, mirrors WaveAttention.__init__/_init_weights)
# ----------------------------------------------------------------------------
def init_params(key, dim, sr_ratio):
    C = dim
    Cr = C // 4
    ks = jax.random.split(key, 8)

    def trunc_normal(k, shape, std=0.02):
        return std * jax.random.truncated_normal(k, -2.0, 2.0, shape, jnp.float32)

    def conv_normal(k, shape, fan_out):
        return math.sqrt(2.0 / fan_out) * jax.random.normal(k, shape, jnp.float32)

    # BatchNorm (eval mode, default stats): gamma=1, beta=0, mean=0, var=1
    bn_scale = 1.0 / math.sqrt(1.0 + 1e-5)

    p = {}
    # reduce = Conv2d(C, C/4, 1) + BN + ReLU  (BN folded into weights)
    p["reduce_w"] = conv_normal(ks[0], (C, Cr), fan_out=1 * 1 * Cr) * bn_scale
    p["reduce_b"] = jnp.zeros((Cr,), jnp.float32)
    # filter = Conv2d(C, C, 3, pad=1) + BN + ReLU ; stored as (9, Cin, Cout)
    p["filter_w"] = (conv_normal(ks[1], (3, 3, C, C), fan_out=3 * 3 * C)
                     * bn_scale).reshape(9, C, C)
    p["filter_b"] = jnp.zeros((C,), jnp.float32)
    # q = Linear(C, C)
    p["q_w"] = trunc_normal(ks[2], (C, C))
    p["q_b"] = jnp.zeros((C,), jnp.float32)
    # kv = LayerNorm(C) + Linear(C, 2C)
    p["ln_g"] = jnp.ones((C,), jnp.float32)
    p["ln_b"] = jnp.zeros((C,), jnp.float32)
    p["kv_w"] = trunc_normal(ks[3], (C, 2 * C))
    p["kv_b"] = jnp.zeros((2 * C,), jnp.float32)
    # kv_embed = Conv2d(C, C, sr, stride=sr) if sr > 1
    if sr_ratio > 1:
        p["kv_embed_w"] = conv_normal(
            ks[4], (sr_ratio, sr_ratio, C, C), fan_out=sr_ratio * sr_ratio * C
        ).reshape(sr_ratio * sr_ratio * C, C)
        p["kv_embed_b"] = jnp.zeros((C,), jnp.float32)
    # proj = Linear(C + C/4, C) (+ Dropout, identity at inference)
    p["proj_w"] = trunc_normal(ks[5], (C + Cr, C))
    p["proj_b"] = jnp.zeros((C,), jnp.float32)
    return p


# ----------------------------------------------------------------------------
# Forward pass
# ----------------------------------------------------------------------------
def wave_attention_forward(params, x, H, W, heads, sr_ratio):
    B, N, C = x.shape
    hd = C // heads
    scale = hd ** (-0.5)
    Cr = C // 4
    h2, w2 = H // 2, W // 2
    R = B * N                 # token rows
    R2 = B * h2 * w2          # DWT-map token rows

    x_tok = x.reshape(R, C)

    # ---- fused q projection (scale folded into weights) + reduce conv ------
    w_qr = jnp.concatenate([params["q_w"] * scale, params["reduce_w"]], axis=1)
    b_qr = jnp.concatenate([params["q_b"] * scale,
                            params["reduce_b"]]).reshape(1, C + Cr)
    br = _pick_rows(R)
    q_tok, xr = pl.pallas_call(
        functools.partial(_q_reduce_kernel, c=C),
        out_shape=(jax.ShapeDtypeStruct((R, C), jnp.float32),
                   jax.ShapeDtypeStruct((R, Cr), jnp.float32)),
        grid=(R // br,),
        in_specs=[pl.BlockSpec((br, C), lambda i: (i, 0)),
                  pl.BlockSpec((C, C + Cr), lambda i: (0, 0)),
                  pl.BlockSpec((1, C + Cr), lambda i: (0, 0))],
        out_specs=(pl.BlockSpec((br, C), lambda i: (i, 0)),
                   pl.BlockSpec((br, Cr), lambda i: (i, 0))),
        compiler_params=_cparams(1),
    )(x_tok, w_qr, b_qr)

    # ---- DWT_2D (haar): even/odd gather (tiny glue) + fused butterfly ------
    xr4 = xr.reshape(B, h2, 2, w2, 2, Cr)
    stacked = jnp.stack([xr4[:, :, 0, :, 0, :].reshape(R2, Cr),
                         xr4[:, :, 0, :, 1, :].reshape(R2, Cr),
                         xr4[:, :, 1, :, 0, :].reshape(R2, Cr),
                         xr4[:, :, 1, :, 1, :].reshape(R2, Cr)], axis=0)
    br2 = _pick_rows(R2)
    x_dwt = pl.pallas_call(
        functools.partial(_dwt_kernel, cr=Cr),
        out_shape=jax.ShapeDtypeStruct((R2, C), jnp.float32),
        grid=(R2 // br2,),
        in_specs=[pl.BlockSpec((4, br2, Cr), lambda i: (0, i, 0))],
        out_specs=pl.BlockSpec((br2, C), lambda i: (i, 0)),
        compiler_params=_cparams(1),
    )(stacked)

    # ---- filter: 3x3 conv + BN + ReLU (in-kernel shifted reads) ------------
    x_dwt_pad = jnp.pad(x_dwt.reshape(B, h2, w2, C),
                        ((0, 0), (1, 1), (1, 1), (0, 0)))
    x_filt = pl.pallas_call(
        functools.partial(_filter_kernel, hh=h2, ww=w2, c=C),
        out_shape=jax.ShapeDtypeStruct((R2, C), jnp.float32),
        grid=(B,),
        in_specs=[pl.BlockSpec((1, h2 + 2, w2 + 2, C), lambda b: (b, 0, 0, 0)),
                  pl.BlockSpec((9, C, C), lambda b: (0, 0, 0)),
                  pl.BlockSpec((1, C), lambda b: (0, 0))],
        out_specs=pl.BlockSpec((h2 * w2, C), lambda b: (b, 0)),
        compiler_params=_cparams(1),
    )(x_dwt_pad, params["filter_w"], params["filter_b"].reshape(1, C))

    # ---- IDWT_2D (haar) -----------------------------------------------------
    x_idwt_tok = pl.pallas_call(
        functools.partial(_idwt_kernel, cr=Cr),
        out_shape=jax.ShapeDtypeStruct((R2, C), jnp.float32),
        grid=(R2 // br2,),
        in_specs=[pl.BlockSpec((br2, C), lambda i: (i, 0))],
        out_specs=pl.BlockSpec((br2, C), lambda i: (i, 0)),
        compiler_params=_cparams(1),
    )(x_filt)
    # spatial interleave of [a|b|c|d] columns back to (B, H, W, Cr) -> tokens
    x_idwt = (x_idwt_tok.reshape(B, h2, w2, 2, 2, Cr)
              .transpose(0, 1, 3, 2, 4, 5).reshape(B, N, Cr))

    # ---- kv_embed (strided conv) + LayerNorm + kv Linear, fused ------------
    if sr_ratio > 1:
        hk, wk = h2 // sr_ratio, w2 // sr_ratio
        M = hk * wk
        Kp = sr_ratio * sr_ratio * C
        patches = (x_filt.reshape(B, hk, sr_ratio, wk, sr_ratio, C)
                   .transpose(0, 1, 3, 2, 4, 5).reshape(B * M, Kp))
        brk = _pick_rows(B * M)
        kv = pl.pallas_call(
            _kv_embed_ln_kernel,
            out_shape=jax.ShapeDtypeStruct((B * M, 2 * C), jnp.float32),
            grid=((B * M) // brk,),
            in_specs=[pl.BlockSpec((brk, Kp), lambda i: (i, 0)),
                      pl.BlockSpec((Kp, C), lambda i: (0, 0)),
                      pl.BlockSpec((1, C), lambda i: (0, 0)),
                      pl.BlockSpec((1, C), lambda i: (0, 0)),
                      pl.BlockSpec((1, C), lambda i: (0, 0)),
                      pl.BlockSpec((C, 2 * C), lambda i: (0, 0)),
                      pl.BlockSpec((1, 2 * C), lambda i: (0, 0))],
            out_specs=pl.BlockSpec((brk, 2 * C), lambda i: (i, 0)),
            compiler_params=_cparams(1),
        )(patches, params["kv_embed_w"], params["kv_embed_b"].reshape(1, C),
          params["ln_g"].reshape(1, C), params["ln_b"].reshape(1, C),
          params["kv_w"], params["kv_b"].reshape(1, 2 * C))
    else:
        M = h2 * w2
        brk = _pick_rows(B * M)
        kv = pl.pallas_call(
            _ln_kv_kernel,
            out_shape=jax.ShapeDtypeStruct((B * M, 2 * C), jnp.float32),
            grid=((B * M) // brk,),
            in_specs=[pl.BlockSpec((brk, C), lambda i: (i, 0)),
                      pl.BlockSpec((1, C), lambda i: (0, 0)),
                      pl.BlockSpec((1, C), lambda i: (0, 0)),
                      pl.BlockSpec((C, 2 * C), lambda i: (0, 0)),
                      pl.BlockSpec((1, 2 * C), lambda i: (0, 0))],
            out_specs=pl.BlockSpec((brk, 2 * C), lambda i: (i, 0)),
            compiler_params=_cparams(1),
        )(x_filt, params["ln_g"].reshape(1, C), params["ln_b"].reshape(1, C),
          params["kv_w"], params["kv_b"].reshape(1, 2 * C))

    # ---- attention (all heads per batch block) + fused proj Linear ---------
    q_b3 = q_tok.reshape(B, N, C)
    kv_b3 = kv.reshape(B, M, 2 * C)
    out = pl.pallas_call(
        functools.partial(_attn_proj_kernel, heads=heads, hd=hd),
        out_shape=jax.ShapeDtypeStruct((B, N, C), jnp.float32),
        grid=(B,),
        in_specs=[pl.BlockSpec((1, N, C), lambda b: (b, 0, 0)),
                  pl.BlockSpec((1, M, 2 * C), lambda b: (b, 0, 0)),
                  pl.BlockSpec((1, N, Cr), lambda b: (b, 0, 0)),
                  pl.BlockSpec((C, C), lambda b: (0, 0)),
                  pl.BlockSpec((Cr, C), lambda b: (0, 0)),
                  pl.BlockSpec((1, C), lambda b: (0, 0))],
        out_specs=pl.BlockSpec((1, N, C), lambda b: (b, 0, 0)),
        compiler_params=_cparams(1),
    )(q_b3, kv_b3, x_idwt,
      params["proj_w"][:C, :], params["proj_w"][C:, :],
      params["proj_b"].reshape(1, C))
    return out


# ----------------------------------------------------------------------------
# Main
# ----------------------------------------------------------------------------
if __name__ == "__main__":
    B = 2
    DIM = 32
    HEADS = 4
    SR_RATIO = 2
    H = W = 16
    N = H * W

    key = jax.random.PRNGKey(0)
    k_param, k_x = jax.random.split(key)
    params = init_params(k_param, DIM, SR_RATIO)
    x = jax.random.normal(k_x, (B, N, DIM), dtype=jnp.float32)

    fwd = jax.jit(functools.partial(
        wave_attention_forward, H=H, W=W, heads=HEADS, sr_ratio=SR_RATIO))
    out = jax.block_until_ready(fwd(params, x))

    assert out.shape == (B, N, DIM), out.shape
    assert bool(jnp.all(jnp.isfinite(out)))
    print("KERNEL_OK")
</pallas_src>

<mosaic_0001>
module attributes {stable_mosaic.version = 11 : i64} {
  func.func @_dwt_kernel(%arg0: i32, %arg1: memref<4x64x8xf32, #tpu.memory_space<vmem>>, %arg2: memref<64x32xf32, #tpu.memory_space<vmem>>) attributes {dimension_semantics = [#tpu.dimension_semantics<parallel>], iteration_bounds = array<i64: 2>, scalar_prefetch = 0 : i64, scratch_operands = 0 : i64, tpu.core_type = #tpu.core_type<tc>, window_params = [{transform_indices = @transform_0, window_bounds = array<i64: 4, 64, 8>}, {transform_indices = @transform_1, window_bounds = array<i64: 64, 32>}]} {
    %c0 = arith.constant 0 : index
    %c0_0 = arith.constant 0 : index
    %c0_1 = arith.constant 0 : index
    %0 = vector.load %arg1[%c0, %c0_0, %c0_1] : memref<4x64x8xf32, #tpu.memory_space<vmem>>, vector<1x64x8xf32>
    %1 = vector.shape_cast %0 : vector<1x64x8xf32> to vector<64x8xf32>
    %c1 = arith.constant 1 : index
    %c0_2 = arith.constant 0 : index
    %c0_3 = arith.constant 0 : index
    %2 = vector.load %arg1[%c1, %c0_2, %c0_3] : memref<4x64x8xf32, #tpu.memory_space<vmem>>, vector<1x64x8xf32>
    %3 = vector.shape_cast %2 : vector<1x64x8xf32> to vector<64x8xf32>
    %c2 = arith.constant 2 : index
    %c0_4 = arith.constant 0 : index
    %c0_5 = arith.constant 0 : index
    %4 = vector.load %arg1[%c2, %c0_4, %c0_5] : memref<4x64x8xf32, #tpu.memory_space<vmem>>, vector<1x64x8xf32>
    %5 = vector.shape_cast %4 : vector<1x64x8xf32> to vector<64x8xf32>
    %c3 = arith.constant 3 : index
    %c0_6 = arith.constant 0 : index
    %c0_7 = arith.constant 0 : index
    %6 = vector.load %arg1[%c3, %c0_6, %c0_7] : memref<4x64x8xf32, #tpu.memory_space<vmem>>, vector<1x64x8xf32>
    %7 = vector.shape_cast %6 : vector<1x64x8xf32> to vector<64x8xf32>
    %8 = arith.addf %1, %3 : vector<64x8xf32>
    %9 = arith.addf %8, %5 : vector<64x8xf32>
    %10 = arith.addf %9, %7 : vector<64x8xf32>
    %cst = arith.constant 5.000000e-01 : f32
    %11 = vector.broadcast %cst : f32 to vector<64x8xf32>
    %12 = arith.mulf %11, %10 : vector<64x8xf32>
    %13 = arith.addf %1, %3 : vector<64x8xf32>
    %14 = arith.subf %13, %5 : vector<64x8xf32>
    %15 = arith.subf %14, %7 : vector<64x8xf32>
    %cst_8 = arith.constant 5.000000e-01 : f32
    %16 = vector.broadcast %cst_8 : f32 to vector<64x8xf32>
    %17 = arith.mulf %16, %15 : vector<64x8xf32>
    %18 = arith.subf %1, %3 : vector<64x8xf32>
    %19 = arith.addf %18, %5 : vector<64x8xf32>
    %20 = arith.subf %19, %7 : vector<64x8xf32>
    %cst_9 = arith.constant 5.000000e-01 : f32
    %21 = vector.broadcast %cst_9 : f32 to vector<64x8xf32>
    %22 = arith.mulf %21, %20 : vector<64x8xf32>
    %23 = arith.subf %1, %3 : vector<64x8xf32>
    %24 = arith.subf %23, %5 : vector<64x8xf32>
    %25 = arith.addf %24, %7 : vector<64x8xf32>
    %cst_10 = arith.constant 5.000000e-01 : f32
    %26 = vector.broadcast %cst_10 : f32 to vector<64x8xf32>
    %27 = arith.mulf %26, %25 : vector<64x8xf32>
    %28 = tpu.bitcast %12 : vector<64x8xf32> -> vector<64x8xi32>
    %c13_i32 = arith.constant 13 : i32
    %29 = vector.broadcast %c13_i32 : i32 to vector<64x8xi32>
    %30 = arith.shrui %28, %29 : vector<64x8xi32>
    %c1_i32 = arith.constant 1 : i32
    %31 = vector.broadcast %c1_i32 : i32 to vector<64x8xi32>
    %32 = arith.andi %30, %31 : vector<64x8xi32>
    %33 = arith.addi %28, %32 : vector<64x8xi32>
    %c4095_i32 = arith.constant 4095 : i32
    %34 = vector.broadcast %c4095_i32 : i32 to vector<64x8xi32>
    %35 = arith.addi %33, %34 : vector<64x8xi32>
    %c-8192_i32 = arith.constant -8192 : i32
    %36 = vector.broadcast %c-8192_i32 : i32 to vector<64x8xi32>
    %37 = arith.andi %35, %36 : vector<64x8xi32>
    %38 = tpu.bitcast %37 : vector<64x8xi32> -> vector<64x8xf32>
    %c0_11 = arith.constant 0 : index
    %c0_12 = arith.constant 0 : index
    %39 = vector.load %arg2[%c0_11, %c0_12] : memref<64x32xf32, #tpu.memory_space<vmem>>, vector<64x8xf32>
    tpu.vector_store %arg2[%c0_11, %c0_12], %38 {strides = array<i32>} : memref<64x32xf32, #tpu.memory_space<vmem>>, vector<64x8xf32>,
    %40 = tpu.bitcast %17 : vector<64x8xf32> -> vector<64x8xi32>
    %c13_i32_13 = arith.constant 13 : i32
    %41 = vector.broadcast %c13_i32_13 : i32 to vector<64x8xi32>
    %42 = arith.shrui %40, %41 : vector<64x8xi32>
    %c1_i32_14 = arith.constant 1 : i32
    %43 = vector.broadcast %c1_i32_14 : i32 to vector<64x8xi32>
    %44 = arith.andi %42, %43 : vector<64x8xi32>
    %45 = arith.addi %40, %44 : vector<64x8xi32>
    %c4095_i32_15 = arith.constant 4095 : i32
    %46 = vector.broadcast %c4095_i32_15 : i32 to vector<64x8xi32>
    %47 = arith.addi %45, %46 : vector<64x8xi32>
    %c-8192_i32_16 = arith.constant -8192 : i32
    %48 = vector.broadcast %c-8192_i32_16 : i32 to vector<64x8xi32>
    %49 = arith.andi %47, %48 : vector<64x8xi32>
    %50 = tpu.bitcast %49 : vector<64x8xi32> -> vector<64x8xf32>
    %c0_17 = arith.constant 0 : index
    %c8 = arith.constant 8 : index
    %51 = vector.load %arg2[%c0_17, %c8] : memref<64x32xf32, #tpu.memory_space<vmem>>, vector<64x8xf32>
    tpu.vector_store %arg2[%c0_17, %c8], %50 {strides = array<i32>} : memref<64x32xf32, #tpu.memory_space<vmem>>, vector<64x8xf32>,
    %52 = tpu.bitcast %22 : vector<64x8xf32> -> vector<64x8xi32>
    %c13_i32_18 = arith.constant 13 : i32
    %53 = vector.broadcast %c13_i32_18 : i32 to vector<64x8xi32>
    %54 = arith.shrui %52, %53 : vector<64x8xi32>
    %c1_i32_19 = arith.constant 1 : i32
    %55 = vector.broadcast %c1_i32_19 : i32 to vector<64x8xi32>
    %56 = arith.andi %54, %55 : vector<64x8xi32>
    %57 = arith.addi %52, %56 : vector<64x8xi32>
    %c4095_i32_20 = arith.constant 4095 : i32
    %58 = vector.broadcast %c4095_i32_20 : i32 to vector<64x8xi32>
    %59 = arith.addi %57, %58 : vector<64x8xi32>
    %c-8192_i32_21 = arith.constant -8192 : i32
    %60 = vector.broadcast %c-8192_i32_21 : i32 to vector<64x8xi32>
    %61 = arith.andi %59, %60 : vector<64x8xi32>
    %62 = tpu.bitcast %61 : vector<64x8xi32> -> vector<64x8xf32>
    %c0_22 = arith.constant 0 : index
    %c16 = arith.constant 16 : index
    %63 = vector.load %arg2[%c0_22, %c16] : memref<64x32xf32, #tpu.memory_space<vmem>>, vector<64x8xf32>
    tpu.vector_store %arg2[%c0_22, %c16], %62 {strides = array<i32>} : memref<64x32xf32, #tpu.memory_space<vmem>>, vector<64x8xf32>,
    %64 = tpu.bitcast %27 : vector<64x8xf32> -> vector<64x8xi32>
    %c13_i32_23 = arith.constant 13 : i32
    %65 = vector.broadcast %c13_i32_23 : i32 to vector<64x8xi32>
    %66 = arith.shrui %64, %65 : vector<64x8xi32>
    %c1_i32_24 = arith.constant 1 : i32
    %67 = vector.broadcast %c1_i32_24 : i32 to vector<64x8xi32>
    %68 = arith.andi %66, %67 : vector<64x8xi32>
    %69 = arith.addi %64, %68 : vector<64x8xi32>
    %c4095_i32_25 = arith.constant 4095 : i32
    %70 = vector.broadcast %c4095_i32_25 : i32 to vector<64x8xi32>
    %71 = arith.addi %69, %70 : vector<64x8xi32>
    %c-8192_i32_26 = arith.constant -8192 : i32
    %72 = vector.broadcast %c-8192_i32_26 : i32 to vector<64x8xi32>
    %73 = arith.andi %71, %72 : vector<64x8xi32>
    %74 = tpu.bitcast %73 : vector<64x8xi32> -> vector<64x8xf32>
    %c0_27 = arith.constant 0 : index
    %c24 = arith.constant 24 : index
    %75 = vector.load %arg2[%c0_27, %c24] : memref<64x32xf32, #tpu.memory_space<vmem>>, vector<64x8xf32>
    tpu.vector_store %arg2[%c0_27, %c24], %74 {strides = array<i32>} : memref<64x32xf32, #tpu.memory_space<vmem>>, vector<64x8xf32>,
    return
  }
  func.func @transform_0(%arg0: i32) -> (i32, i32, i32) {
    %c0_i32 = arith.constant 0 : i32
    %c0_i32_0 = arith.constant 0 : i32
    %c0_i32_1 = arith.constant 0 : i32
    return %c0_i32, %arg0, %c0_i32_0 : i32, i32, i32
  }
  func.func @transform_1(%arg0: i32) -> (i32, i32) {
    %c0_i32 = arith.constant 0 : i32
    %c0_i32_0 = arith.constant 0 : i32
    return %arg0, %c0_i32 : i32, i32
  }
}

module attributes {stable_mosaic.version = 11 : i64} {
  func.func @_q_reduce_kernel(%arg0: i32, %arg1: memref<256x32xf32, #tpu.memory_space<vmem>>, %arg2: memref<32x40xf32, #tpu.memory_space<vmem>>, %arg3: memref<1x40xf32, #tpu.memory_space<vmem>>, %arg4: memref<256x32xf32, #tpu.memory_space<vmem>>, %arg5: memref<256x8xf32, #tpu.memory_space<vmem>>) attributes {dimension_semantics = [#tpu.dimension_semantics<parallel>], iteration_bounds = array<i64: 2>, scalar_prefetch = 0 : i64, scratch_operands = 0 : i64, tpu.core_type = #tpu.core_type<tc>, window_params = [{transform_indices = @transform_0, window_bounds = array<i64: 256, 32>}, {pipeline_mode = #tpu.pipeline_mode<synchronous>, transform_indices = @transform_1, window_bounds = array<i64: 32, 40>}, {pipeline_mode = #tpu.pipeline_mode<synchronous>, transform_indices = @transform_2, window_bounds = array<i64: 1, 40>}, {transform_indices = @transform_3, window_bounds = array<i64: 256, 32>}, {transform_indices = @transform_4, window_bounds = array<i64: 256, 8>}]} {
    %c0 = arith.constant 0 : index
    %c0_0 = arith.constant 0 : index
    %0 = vector.load %arg1[%c0, %c0_0] : memref<256x32xf32, #tpu.memory_space<vmem>>, vector<256x32xf32>
    %c0_1 = arith.constant 0 : index
    %c0_2 = arith.constant 0 : index
    %1 = vector.load %arg2[%c0_1, %c0_2] : memref<32x40xf32, #tpu.memory_space<vmem>>, vector<32x40xf32>
    %cst = arith.constant dense<0.000000e+00> : vector<256x40xf32>
    %2 = tpu.matmul %0, %1, %cst {dimension_numbers = #tpu.dot_dimension_numbers<[1], [0], [0], [1], [0, 0, 1, 1], [], []>} : vector<256x32xf32>, vector<32x40xf32>, vector<256x40xf32> -> vector<256x40xf32>
    %c0_3 = arith.constant 0 : index
    %c0_4 = arith.constant 0 : index
    %3 = vector.load %arg3[%c0_3, %c0_4] : memref<1x40xf32, #tpu.memory_space<vmem>>, vector<1x40xf32>
    %4 = vector.broadcast %3 : vector<1x40xf32> to vector<256x40xf32>
    %5 = arith.addf %2, %4 : vector<256x40xf32>
    %6 = vector.extract_strided_slice %5 {offsets = [0, 0], sizes = [256, 32], strides = [1, 1]} : vector<256x40xf32> to vector<256x32xf32>
    %c0_5 = arith.constant 0 : index
    %c0_6 = arith.constant 0 : index
    %7 = vector.load %arg4[%c0_5, %c0_6] : memref<256x32xf32, #tpu.memory_space<vmem>>, vector<256x32xf32>
    tpu.vector_store %arg4[%c0_5, %c0_6], %6 {strides = array<i32>} : memref<256x32xf32, #tpu.memory_space<vmem>>, vector<256x32xf32>,
    %8 = vector.extract_strided_slice %5 {offsets = [0, 32], sizes = [256, 8], strides = [1, 1]} : vector<256x40xf32> to vector<256x8xf32>
    %cst_7 = arith.constant 0.000000e+00 : f32
    %9 = vector.broadcast %cst_7 : f32 to vector<256x8xf32>
    %10 = arith.maximumf %8, %9 : vector<256x8xf32>
    %11 = tpu.bitcast %10 : vector<256x8xf32> -> vector<256x8xi32>
    %c13_i32 = arith.constant 13 : i32
    %12 = vector.broadcast %c13_i32 : i32 to vector<256x8xi32>
    %13 = arith.shrui %11, %12 : vector<256x8xi32>
    %c1_i32 = arith.constant 1 : i32
    %14 = vector.broadcast %c1_i32 : i32 to vector<256x8xi32>
    %15 = arith.andi %13, %14 : vector<256x8xi32>
    %16 = arith.addi %11, %15 : vector<256x8xi32>
    %c4095_i32 = arith.constant 4095 : i32
    %17 = vector.broadcast %c4095_i32 : i32 to vector<256x8xi32>
    %18 = arith.addi %16, %17 : vector<256x8xi32>
    %c-8192_i32 = arith.constant -8192 : i32
    %19 = vector.broadcast %c-8192_i32 : i32 to vector<256x8xi32>
    %20 = arith.andi %18, %19 : vector<256x8xi32>
    %21 = tpu.bitcast %20 : vector<256x8xi32> -> vector<256x8xf32>
    %c0_8 = arith.constant 0 : index
    %c0_9 = arith.constant 0 : index
    %22 = vector.load %arg5[%c0_8, %c0_9] : memref<256x8xf32, #tpu.memory_space<vmem>>, vector<256x8xf32>
    tpu.vector_store %arg5[%c0_8, %c0_9], %21 {strides = array<i32>} : memref<256x8xf32, #tpu.memory_space<vmem>>, vector<256x8xf32>,
    return
  }
  func.func @transform_0(%arg0: i32) -> (i32, i32) {
    %c0_i32 = arith.constant 0 : i32
    %c0_i32_0 = arith.constant 0 : i32
    return %arg0, %c0_i32 : i32, i32
  }
  func.func @transform_1(%arg0: i32) -> (i32, i32) {
    %c0_i32 = arith.constant 0 : i32
    %c0_i32_0 = arith.constant 0 : i32
    %c0_i32_1 = arith.constant 0 : i32
    return %c0_i32, %c0_i32_0 : i32, i32
  }
  func.func @transform_2(%arg0: i32) -> (i32, i32) {
    %c0_i32 = arith.constant 0 : i32
    %c0_i32_0 = arith.constant 0 : i32
    %c0_i32_1 = arith.constant 0 : i32
    return %c0_i32, %c0_i32_0 : i32, i32
  }
  func.func @transform_3(%arg0: i32) -> (i32, i32) {
    %c0_i32 = arith.constant 0 : i32
    %c0_i32_0 = arith.constant 0 : i32
    return %arg0, %c0_i32 : i32, i32
  }
  func.func @transform_4(%arg0: i32) -> (i32, i32) {
    %c0_i32 = arith.constant 0 : i32
    %c0_i32_0 = arith.constant 0 : i32
    return %arg0, %c0_i32 : i32, i32
  }
}

module attributes {stable_mosaic.version = 11 : i64} {
  func.func @_filter_kernel(%arg0: i32, %arg1: memref<1x10x10x32xf32, #tpu.memory_space<vmem>>, %arg2: memref<9x32x32xf32, #tpu.memory_space<vmem>>, %arg3: memref<1x32xf32, #tpu.memory_space<vmem>>, %arg4: memref<64x32xf32, #tpu.memory_space<vmem>>) attributes {dimension_semantics = [#tpu.dimension_semantics<parallel>], iteration_bounds = array<i64: 2>, scalar_prefetch = 0 : i64, scratch_operands = 0 : i64, tpu.core_type = #tpu.core_type<tc>, window_params = [{transform_indices = @transform_0, window_bounds = array<i64: 1, 10, 10, 32>}, {pipeline_mode = #tpu.pipeline_mode<synchronous>, transform_indices = @transform_1, window_bounds = array<i64: 9, 32, 32>}, {pipeline_mode = #tpu.pipeline_mode<synchronous>, transform_indices = @transform_2, window_bounds = array<i64: 1, 32>}, {transform_indices = @transform_3, window_bounds = array<i64: 64, 32>}]} {
    %c0 = arith.constant 0 : index
    %c0_0 = arith.constant 0 : index
    %c0_1 = arith.constant 0 : index
    %c0_2 = arith.constant 0 : index
    %0 = vector.load %arg1[%c0, %c0_0, %c0_1, %c0_2] : memref<1x10x10x32xf32, #tpu.memory_space<vmem>>, vector<1x10x10x32xf32>
    %1 = vector.shape_cast %0 : vector<1x10x10x32xf32> to vector<10x10x32xf32>
    %cst = arith.constant 0.000000e+00 : f32
    %2 = vector.broadcast %cst : f32 to vector<64x32xf32>
    %3 = vector.extract_strided_slice %1 {offsets = [0, 0, 0], sizes = [8, 8, 32], strides = [1, 1, 1]} : vector<10x10x32xf32> to vector<8x8x32xf32>
    %4 = vector.shape_cast %3 : vector<8x8x32xf32> to vector<64x32xf32>
    %c0_3 = arith.constant 0 : index
    %c0_4 = arith.constant 0 : index
    %c0_5 = arith.constant 0 : index
    %5 = vector.load %arg2[%c0_3, %c0_4, %c0_5] : memref<9x32x32xf32, #tpu.memory_space<vmem>>, vector<1x32x32xf32>
    %6 = vector.shape_cast %5 : vector<1x32x32xf32> to vector<32x32xf32>
    %cst_6 = arith.constant dense<0.000000e+00> : vector<64x32xf32>
    %7 = tpu.matmul %4, %6, %cst_6 {dimension_numbers = #tpu.dot_dimension_numbers<[1], [0], [0], [1], [0, 0, 1, 1], [], []>} : vector<64x32xf32>, vector<32x32xf32>, vector<64x32xf32> -> vector<64x32xf32>
    %8 = arith.addf %2, %7 : vector<64x32xf32>
    %9 = vector.extract_strided_slice %1 {offsets = [0, 1, 0], sizes = [8, 8, 32], strides = [1, 1, 1]} : vector<10x10x32xf32> to vector<8x8x32xf32>
    %10 = vector.shape_cast %9 : vector<8x8x32xf32> to vector<64x32xf32>
    %c1 = arith.constant 1 : index
    %c0_7 = arith.constant 0 : index
    %c0_8 = arith.constant 0 : index
    %11 = vector.load %arg2[%c1, %c0_7, %c0_8] : memref<9x32x32xf32, #tpu.memory_space<vmem>>, vector<1x32x32xf32>
    %12 = vector.shape_cast %11 : vector<1x32x32xf32> to vector<32x32xf32>
    %cst_9 = arith.constant dense<0.000000e+00> : vector<64x32xf32>
    %13 = tpu.matmul %10, %12, %cst_9 {dimension_numbers = #tpu.dot_dimension_numbers<[1], [0], [0], [1], [0, 0, 1, 1], [], []>} : vector<64x32xf32>, vector<32x32xf32>, vector<64x32xf32> -> vector<64x32xf32>
    %14 = arith.addf %8, %13 : vector<64x32xf32>
    %15 = vector.extract_strided_slice %1 {offsets = [0, 2, 0], sizes = [8, 8, 32], strides = [1, 1, 1]} : vector<10x10x32xf32> to vector<8x8x32xf32>
    %16 = vector.shape_cast %15 : vector<8x8x32xf32> to vector<64x32xf32>
    %c2 = arith.constant 2 : index
    %c0_10 = arith.constant 0 : index
    %c0_11 = arith.constant 0 : index
    %17 = vector.load %arg2[%c2, %c0_10, %c0_11] : memref<9x32x32xf32, #tpu.memory_space<vmem>>, vector<1x32x32xf32>
    %18 = vector.shape_cast %17 : vector<1x32x32xf32> to vector<32x32xf32>
    %cst_12 = arith.constant dense<0.000000e+00> : vector<64x32xf32>
    %19 = tpu.matmul %16, %18, %cst_12 {dimension_numbers = #tpu.dot_dimension_numbers<[1], [0], [0], [1], [0, 0, 1, 1], [], []>} : vector<64x32xf32>, vector<32x32xf32>, vector<64x32xf32> -> vector<64x32xf32>
    %20 = arith.addf %14, %19 : vector<64x32xf32>
    %21 = vector.extract_strided_slice %1 {offsets = [1, 0, 0], sizes = [8, 8, 32], strides = [1, 1, 1]} : vector<10x10x32xf32> to vector<8x8x32xf32>
    %22 = vector.shape_cast %21 : vector<8x8x32xf32> to vector<64x32xf32>
    %c3 = arith.constant 3 : index
    %c0_13 = arith.constant 0 : index
    %c0_14 = arith.constant 0 : index
    %23 = vector.load %arg2[%c3, %c0_13, %c0_14] : memref<9x32x32xf32, #tpu.memory_space<vmem>>, vector<1x32x32xf32>
    %24 = vector.shape_cast %23 : vector<1x32x32xf32> to vector<32x32xf32>
    %cst_15 = arith.constant dense<0.000000e+00> : vector<64x32xf32>
    %25 = tpu.matmul %22, %24, %cst_15 {dimension_numbers = #tpu.dot_dimension_numbers<[1], [0], [0], [1], [0, 0, 1, 1], [], []>} : vector<64x32xf32>, vector<32x32xf32>, vector<64x32xf32> -> vector<64x32xf32>
    %26 = arith.addf %20, %25 : vector<64x32xf32>
    %27 = vector.extract_strided_slice %1 {offsets = [1, 1, 0], sizes = [8, 8, 32], strides = [1, 1, 1]} : vector<10x10x32xf32> to vector<8x8x32xf32>
    %28 = vector.shape_cast %27 : vector<8x8x32xf32> to vector<64x32xf32>
    %c4 = arith.constant 4 : index
    %c0_16 = arith.constant 0 : index
    %c0_17 = arith.constant 0 : index
    %29 = vector.load %arg2[%c4, %c0_16, %c0_17] : memref<9x32x32xf32, #tpu.memory_space<vmem>>, vector<1x32x32xf32>
    %30 = vector.shape_cast %29 : vector<1x32x32xf32> to vector<32x32xf32>
    %cst_18 = arith.constant dense<0.000000e+00> : vector<64x32xf32>
    %31 = tpu.matmul %28, %30, %cst_18 {dimension_numbers = #tpu.dot_dimension_numbers<[1], [0], [0], [1], [0, 0, 1, 1], [], []>} : vector<64x32xf32>, vector<32x32xf32>, vector<64x32xf32> -> vector<64x32xf32>
    %32 = arith.addf %26, %31 : vector<64x32xf32>
    %33 = vector.extract_strided_slice %1 {offsets = [1, 2, 0], sizes = [8, 8, 32], strides = [1, 1, 1]} : vector<10x10x32xf32> to vector<8x8x32xf32>
    %34 = vector.shape_cast %33 : vector<8x8x32xf32> to vector<64x32xf32>
    %c5 = arith.constant 5 : index
    %c0_19 = arith.constant 0 : index
    %c0_20 = arith.constant 0 : index
    %35 = vector.load %arg2[%c5, %c0_19, %c0_20] : memref<9x32x32xf32, #tpu.memory_space<vmem>>, vector<1x32x32xf32>
    %36 = vector.shape_cast %35 : vector<1x32x32xf32> to vector<32x32xf32>
    %cst_21 = arith.constant dense<0.000000e+00> : vector<64x32xf32>
    %37 = tpu.matmul %34, %36, %cst_21 {dimension_numbers = #tpu.dot_dimension_numbers<[1], [0], [0], [1], [0, 0, 1, 1], [], []>} : vector<64x32xf32>, vector<32x32xf32>, vector<64x32xf32> -> vector<64x32xf32>
    %38 = arith.addf %32, %37 : vector<64x32xf32>
    %39 = vector.extract_strided_slice %1 {offsets = [2, 0, 0], sizes = [8, 8, 32], strides = [1, 1, 1]} : vector<10x10x32xf32> to vector<8x8x32xf32>
    %40 = vector.shape_cast %39 : vector<8x8x32xf32> to vector<64x32xf32>
    %c6 = arith.constant 6 : index
    %c0_22 = arith.constant 0 : index
    %c0_23 = arith.constant 0 : index
    %41 = vector.load %arg2[%c6, %c0_22, %c0_23] : memref<9x32x32xf32, #tpu.memory_space<vmem>>, vector<1x32x32xf32>
    %42 = vector.shape_cast %41 : vector<1x32x32xf32> to vector<32x32xf32>
    %cst_24 = arith.constant dense<0.000000e+00> : vector<64x32xf32>
    %43 = tpu.matmul %40, %42, %cst_24 {dimension_numbers = #tpu.dot_dimension_numbers<[1], [0], [0], [1], [0, 0, 1, 1], [], []>} : vector<64x32xf32>, vector<32x32xf32>, vector<64x32xf32> -> vector<64x32xf32>
    %44 = arith.addf %38, %43 : vector<64x32xf32>
    %45 = vector.extract_strided_slice %1 {offsets = [2, 1, 0], sizes = [8, 8, 32], strides = [1, 1, 1]} : vector<10x10x32xf32> to vector<8x8x32xf32>
    %46 = vector.shape_cast %45 : vector<8x8x32xf32> to vector<64x32xf32>
    %c7 = arith.constant 7 : index
    %c0_25 = arith.constant 0 : index
    %c0_26 = arith.constant 0 : index
    %47 = vector.load %arg2[%c7, %c0_25, %c0_26] : memref<9x32x32xf32, #tpu.memory_space<vmem>>, vector<1x32x32xf32>
    %48 = vector.shape_cast %47 : vector<1x32x32xf32> to vector<32x32xf32>
    %cst_27 = arith.constant dense<0.000000e+00> : vector<64x32xf32>
    %49 = tpu.matmul %46, %48, %cst_27 {dimension_numbers = #tpu.dot_dimension_numbers<[1], [0], [0], [1], [0, 0, 1, 1], [], []>} : vector<64x32xf32>, vector<32x32xf32>, vector<64x32xf32> -> vector<64x32xf32>
    %50 = arith.addf %44, %49 : vector<64x32xf32>
    %51 = vector.extract_strided_slice %1 {offsets = [2, 2, 0], sizes = [8, 8, 32], strides = [1, 1, 1]} : vector<10x10x32xf32> to vector<8x8x32xf32>
    %52 = vector.shape_cast %51 : vector<8x8x32xf32> to vector<64x32xf32>
    %c8 = arith.constant 8 : index
    %c0_28 = arith.constant 0 : index
    %c0_29 = arith.constant 0 : index
    %53 = vector.load %arg2[%c8, %c0_28, %c0_29] : memref<9x32x32xf32, #tpu.memory_space<vmem>>, vector<1x32x32xf32>
    %54 = vector.shape_cast %53 : vector<1x32x32xf32> to vector<32x32xf32>
    %cst_30 = arith.constant dense<0.000000e+00> : vector<64x32xf32>
    %55 = tpu.matmul %52, %54, %cst_30 {dimension_numbers = #tpu.dot_dimension_numbers<[1], [0], [0], [1], [0, 0, 1, 1], [], []>} : vector<64x32xf32>, vector<32x32xf32>, vector<64x32xf32> -> vector<64x32xf32>
    %56 = arith.addf %50, %55 : vector<64x32xf32>
    %c0_31 = arith.constant 0 : index
    %c0_32 = arith.constant 0 : index
    %57 = vector.load %arg3[%c0_31, %c0_32] : memref<1x32xf32, #tpu.memory_space<vmem>>, vector<1x32xf32>
    %58 = vector.broadcast %57 : vector<1x32xf32> to vector<64x32xf32>
    %59 = arith.addf %56, %58 : vector<64x32xf32>
    %cst_33 = arith.constant 0.000000e+00 : f32
    %60 = vector.broadcast %cst_33 : f32 to vector<64x32xf32>
    %61 = arith.maximumf %59, %60 : vector<64x32xf32>
    %62 = tpu.bitcast %61 : vector<64x32xf32> -> vector<64x32xi32>
    %c13_i32 = arith.constant 13 : i32
    %63 = vector.broadcast %c13_i32 : i32 to vector<64x32xi32>
    %64 = arith.shrui %62, %63 : vector<64x32xi32>
    %c1_i32 = arith.constant 1 : i32
    %65 = vector.broadcast %c1_i32 : i32 to vector<64x32xi32>
    %66 = arith.andi %64, %65 : vector<64x32xi32>
    %67 = arith.addi %62, %66 : vector<64x32xi32>
    %c4095_i32 = arith.constant 4095 : i32
    %68 = vector.broadcast %c4095_i32 : i32 to vector<64x32xi32>
    %69 = arith.addi %67, %68 : vector<64x32xi32>
    %c-8192_i32 = arith.constant -8192 : i32
    %70 = vector.broadcast %c-8192_i32 : i32 to vector<64x32xi32>
    %71 = arith.andi %69, %70 : vector<64x32xi32>
    %72 = tpu.bitcast %71 : vector<64x32xi32> -> vector<64x32xf32>
    %c0_34 = arith.constant 0 : index
    %c0_35 = arith.constant 0 : index
    %73 = vector.load %arg4[%c0_34, %c0_35] : memref<64x32xf32, #tpu.memory_space<vmem>>, vector<64x32xf32>
    tpu.vector_store %arg4[%c0_34, %c0_35], %72 {strides = array<i32>} : memref<64x32xf32, #tpu.memory_space<vmem>>, vector<64x32xf32>,
    return
  }
  func.func @transform_0(%arg0: i32) -> (i32, i32, i32, i32) {
    %c0_i32 = arith.constant 0 : i32
    %c0_i32_0 = arith.constant 0 : i32
    %c0_i32_1 = arith.constant 0 : i32
    %c0_i32_2 = arith.constant 0 : i32
    return %arg0, %c0_i32, %c0_i32_0, %c0_i32_1 : i32, i32, i32, i32
  }
  func.func @transform_1(%arg0: i32) -> (i32, i32, i32) {
    %c0_i32 = arith.constant 0 : i32
    %c0_i32_0 = arith.constant 0 : i32
    %c0_i32_1 = arith.constant 0 : i32
    %c0_i32_2 = arith.constant 0 : i32
    return %c0_i32, %c0_i32_0, %c0_i32_1 : i32, i32, i32
  }
  func.func @transform_2(%arg0: i32) -> (i32, i32) {
    %c0_i32 = arith.constant 0 : i32
    %c0_i32_0 = arith.constant 0 : i32
    %c0_i32_1 = arith.constant 0 : i32
    return %c0_i32, %c0_i32_0 : i32, i32
  }
  func.func @transform_3(%arg0: i32) -> (i32, i32) {
    %c0_i32 = arith.constant 0 : i32
    %c0_i32_0 = arith.constant 0 : i32
    return %arg0, %c0_i32 : i32, i32
  }
}

module attributes {stable_mosaic.version = 11 : i64} {
  func.func @_kv_embed_ln_kernel(%arg0: i32, %arg1: memref<16x128xf32, #tpu.memory_space<vmem>>, %arg2: memref<128x32xf32, #tpu.memory_space<vmem>>, %arg3: memref<1x32xf32, #tpu.memory_space<vmem>>, %arg4: memref<1x32xf32, #tpu.memory_space<vmem>>, %arg5: memref<1x32xf32, #tpu.memory_space<vmem>>, %arg6: memref<32x64xf32, #tpu.memory_space<vmem>>, %arg7: memref<1x64xf32, #tpu.memory_space<vmem>>, %arg8: memref<16x64xf32, #tpu.memory_space<vmem>>) attributes {dimension_semantics = [#tpu.dimension_semantics<parallel>], iteration_bounds = array<i64: 2>, scalar_prefetch = 0 : i64, scratch_operands = 0 : i64, tpu.core_type = #tpu.core_type<tc>, window_params = [{transform_indices = @transform_0, window_bounds = array<i64: 16, 128>}, {pipeline_mode = #tpu.pipeline_mode<synchronous>, transform_indices = @transform_1, window_bounds = array<i64: 128, 32>}, {pipeline_mode = #tpu.pipeline_mode<synchronous>, transform_indices = @transform_2, window_bounds = array<i64: 1, 32>}, {pipeline_mode = #tpu.pipeline_mode<synchronous>, transform_indices = @transform_3, window_bounds = array<i64: 1, 32>}, {pipeline_mode = #tpu.pipeline_mode<synchronous>, transform_indices = @transform_4, window_bounds = array<i64: 1, 32>}, {pipeline_mode = #tpu.pipeline_mode<synchronous>, transform_indices = @transform_5, window_bounds = array<i64: 32, 64>}, {pipeline_mode = #tpu.pipeline_mode<synchronous>, transform_indices = @transform_6, window_bounds = array<i64: 1, 64>}, {transform_indices = @transform_7, window_bounds = array<i64: 16, 64>}]} {
    %c0 = arith.constant 0 : index
    %c0_0 = arith.constant 0 : index
    %0 = vector.load %arg1[%c0, %c0_0] : memref<16x128xf32, #tpu.memory_space<vmem>>, vector<16x128xf32>
    %c0_1 = arith.constant 0 : index
    %c0_2 = arith.constant 0 : index
    %1 = vector.load %arg2[%c0_1, %c0_2] : memref<128x32xf32, #tpu.memory_space<vmem>>, vector<128x32xf32>
    %cst = arith.constant dense<0.000000e+00> : vector<16x32xf32>
    %2 = tpu.matmul %0, %1, %cst {dimension_numbers = #tpu.dot_dimension_numbers<[1], [0], [0], [1], [0, 0, 1, 1], [], []>} : vector<16x128xf32>, vector<128x32xf32>, vector<16x32xf32> -> vector<16x32xf32>
    %c0_3 = arith.constant 0 : index
    %c0_4 = arith.constant 0 : index
    %3 = vector.load %arg3[%c0_3, %c0_4] : memref<1x32xf32, #tpu.memory_space<vmem>>, vector<1x32xf32>
    %4 = vector.broadcast %3 : vector<1x32xf32> to vector<16x32xf32>
    %5 = arith.addf %2, %4 : vector<16x32xf32>
    %cst_5 = arith.constant dense<0.000000e+00> : vector<16xf32>
    %6 = vector.multi_reduction <add>, %5, %cst_5 [1] : vector<16x32xf32> to vector<16xf32>
    %7 = vector.shape_cast %6 : vector<16xf32> to vector<16x1xf32>
    %cst_6 = arith.constant 3.200000e+01 : f32
    %8 = vector.broadcast %cst_6 : f32 to vector<16x1xf32>
    %9 = arith.divf %7, %8 : vector<16x1xf32>
    %10 = vector.broadcast %9 : vector<16x1xf32> to vector<16x32xf32>
    %11 = arith.subf %5, %10 : vector<16x32xf32>
    %12 = arith.mulf %11, %11 : vector<16x32xf32>
    %cst_7 = arith.constant dense<0.000000e+00> : vector<16xf32>
    %13 = vector.multi_reduction <add>, %12, %cst_7 [1] : vector<16x32xf32> to vector<16xf32>
    %14 = vector.shape_cast %13 : vector<16xf32> to vector<16x1xf32>
    %cst_8 = arith.constant 3.200000e+01 : f32
    %15 = vector.broadcast %cst_8 : f32 to vector<16x1xf32>
    %16 = arith.divf %14, %15 : vector<16x1xf32>
    %cst_9 = arith.constant 9.99999974E-6 : f32
    %17 = vector.broadcast %cst_9 : f32 to vector<16x1xf32>
    %18 = arith.addf %16, %17 : vector<16x1xf32>
    %19 = math.rsqrt %18 : vector<16x1xf32>
    %20 = vector.broadcast %19 : vector<16x1xf32> to vector<16x32xf32>
    %21 = arith.mulf %11, %20 : vector<16x32xf32>
    %c0_10 = arith.constant 0 : index
    %c0_11 = arith.constant 0 : index
    %22 = vector.load %arg4[%c0_10, %c0_11] : memref<1x32xf32, #tpu.memory_space<vmem>>, vector<1x32xf32>
    %23 = vector.broadcast %22 : vector<1x32xf32> to vector<16x32xf32>
    %24 = arith.mulf %21, %23 : vector<16x32xf32>
    %c0_12 = arith.constant 0 : index
    %c0_13 = arith.constant 0 : index
    %25 = vector.load %arg5[%c0_12, %c0_13] : memref<1x32xf32, #tpu.memory_space<vmem>>, vector<1x32xf32>
    %26 = vector.broadcast %25 : vector<1x32xf32> to vector<16x32xf32>
    %27 = arith.addf %24, %26 : vector<16x32xf32>
    %c0_14 = arith.constant 0 : index
    %c0_15 = arith.constant 0 : index
    %28 = vector.load %arg6[%c0_14, %c0_15] : memref<32x64xf32, #tpu.memory_space<vmem>>, vector<32x64xf32>
    %cst_16 = arith.constant dense<0.000000e+00> : vector<16x64xf32>
    %29 = tpu.matmul %27, %28, %cst_16 {dimension_numbers = #tpu.dot_dimension_numbers<[1], [0], [0], [1], [0, 0, 1, 1], [], []>} : vector<16x32xf32>, vector<32x64xf32>, vector<16x64xf32> -> vector<16x64xf32>
    %c0_17 = arith.constant 0 : index
    %c0_18 = arith.constant 0 : index
    %30 = vector.load %arg7[%c0_17, %c0_18] : memref<1x64xf32, #tpu.memory_space<vmem>>, vector<1x64xf32>
    %31 = vector.broadcast %30 : vector<1x64xf32> to vector<16x64xf32>
    %32 = arith.addf %29, %31 : vector<16x64xf32>
    %c0_19 = arith.constant 0 : index
    %c0_20 = arith.constant 0 : index
    %33 = vector.load %arg8[%c0_19, %c0_20] : memref<16x64xf32, #tpu.memory_space<vmem>>, vector<16x64xf32>
    tpu.vector_store %arg8[%c0_19, %c0_20], %32 {strides = array<i32>} : memref<16x64xf32, #tpu.memory_space<vmem>>, vector<16x64xf32>,
    return
  }
  func.func @transform_0(%arg0: i32) -> (i32, i32) {
    %c0_i32 = arith.constant 0 : i32
    %c0_i32_0 = arith.constant 0 : i32
    return %arg0, %c0_i32 : i32, i32
  }
  func.func @transform_1(%arg0: i32) -> (i32, i32) {
    %c0_i32 = arith.constant 0 : i32
    %c0_i32_0 = arith.constant 0 : i32
    %c0_i32_1 = arith.constant 0 : i32
    return %c0_i32, %c0_i32_0 : i32, i32
  }
  func.func @transform_2(%arg0: i32) -> (i32, i32) {
    %c0_i32 = arith.constant 0 : i32
    %c0_i32_0 = arith.constant 0 : i32
    %c0_i32_1 = arith.constant 0 : i32
    return %c0_i32, %c0_i32_0 : i32, i32
  }
  func.func @transform_3(%arg0: i32) -> (i32, i32) {
    %c0_i32 = arith.constant 0 : i32
    %c0_i32_0 = arith.constant 0 : i32
    %c0_i32_1 = arith.constant 0 : i32
    return %c0_i32, %c0_i32_0 : i32, i32
  }
  func.func @transform_4(%arg0: i32) -> (i32, i32) {
    %c0_i32 = arith.constant 0 : i32
    %c0_i32_0 = arith.constant 0 : i32
    %c0_i32_1 = arith.constant 0 : i32
    return %c0_i32, %c0_i32_0 : i32, i32
  }
  func.func @transform_5(%arg0: i32) -> (i32, i32) {
    %c0_i32 = arith.constant 0 : i32
    %c0_i32_0 = arith.constant 0 : i32
    %c0_i32_1 = arith.constant 0 : i32
    return %c0_i32, %c0_i32_0 : i32, i32
  }
  func.func @transform_6(%arg0: i32) -> (i32, i32) {
    %c0_i32 = arith.constant 0 : i32
    %c0_i32_0 = arith.constant 0 : i32
    %c0_i32_1 = arith.constant 0 : i32
    return %c0_i32, %c0_i32_0 : i32, i32
  }
  func.func @transform_7(%arg0: i32) -> (i32, i32) {
    %c0_i32 = arith.constant 0 : i32
    %c0_i32_0 = arith.constant 0 : i32
    return %arg0, %c0_i32 : i32, i32
  }
}

module attributes {stable_mosaic.version = 11 : i64} {
  func.func @_idwt_kernel(%arg0: i32, %arg1: memref<64x32xf32, #tpu.memory_space<vmem>>, %arg2: memref<64x32xf32, #tpu.memory_space<vmem>>) attributes {dimension_semantics = [#tpu.dimension_semantics<parallel>], iteration_bounds = array<i64: 2>, scalar_prefetch = 0 : i64, scratch_operands = 0 : i64, tpu.core_type = #tpu.core_type<tc>, window_params = [{transform_indices = @transform_0, window_bounds = array<i64: 64, 32>}, {transform_indices = @transform_1, window_bounds = array<i64: 64, 32>}]} {
    %c0 = arith.constant 0 : index
    %c0_0 = arith.constant 0 : index
    %0 = vector.load %arg1[%c0, %c0_0] : memref<64x32xf32, #tpu.memory_space<vmem>>, vector<64x32xf32>
    %1 = vector.extract_strided_slice %0 {offsets = [0, 0], sizes = [64, 8], strides = [1, 1]} : vector<64x32xf32> to vector<64x8xf32>
    %2 = vector.extract_strided_slice %0 {offsets = [0, 8], sizes = [64, 8], strides = [1, 1]} : vector<64x32xf32> to vector<64x8xf32>
    %3 = vector.extract_strided_slice %0 {offsets = [0, 16], sizes = [64, 8], strides = [1, 1]} : vector<64x32xf32> to vector<64x8xf32>
    %4 = vector.extract_strided_slice %0 {offsets = [0, 24], sizes = [64, 8], strides = [1, 1]} : vector<64x32xf32> to vector<64x8xf32>
    %5 = arith.addf %1, %2 : vector<64x8xf32>
    %6 = arith.addf %5, %3 : vector<64x8xf32>
    %7 = arith.addf %6, %4 : vector<64x8xf32>
    %cst = arith.constant 5.000000e-01 : f32
    %8 = vector.broadcast %cst : f32 to vector<64x8xf32>
    %9 = arith.mulf %8, %7 : vector<64x8xf32>
    %10 = arith.addf %1, %2 : vector<64x8xf32>
    %11 = arith.subf %10, %3 : vector<64x8xf32>
    %12 = arith.subf %11, %4 : vector<64x8xf32>
    %cst_1 = arith.constant 5.000000e-01 : f32
    %13 = vector.broadcast %cst_1 : f32 to vector<64x8xf32>
    %14 = arith.mulf %13, %12 : vector<64x8xf32>
    %15 = arith.subf %1, %2 : vector<64x8xf32>
    %16 = arith.addf %15, %3 : vector<64x8xf32>
    %17 = arith.subf %16, %4 : vector<64x8xf32>
    %cst_2 = arith.constant 5.000000e-01 : f32
    %18 = vector.broadcast %cst_2 : f32 to vector<64x8xf32>
    %19 = arith.mulf %18, %17 : vector<64x8xf32>
    %20 = arith.subf %1, %2 : vector<64x8xf32>
    %21 = arith.subf %20, %3 : vector<64x8xf32>
    %22 = arith.addf %21, %4 : vector<64x8xf32>
    %cst_3 = arith.constant 5.000000e-01 : f32
    %23 = vector.broadcast %cst_3 : f32 to vector<64x8xf32>
    %24 = arith.mulf %23, %22 : vector<64x8xf32>
    %25 = tpu.bitcast %9 : vector<64x8xf32> -> vector<64x8xi32>
    %c13_i32 = arith.constant 13 : i32
    %26 = vector.broadcast %c13_i32 : i32 to vector<64x8xi32>
    %27 = arith.shrui %25, %26 : vector<64x8xi32>
    %c1_i32 = arith.constant 1 : i32
    %28 = vector.broadcast %c1_i32 : i32 to vector<64x8xi32>
    %29 = arith.andi %27, %28 : vector<64x8xi32>
    %30 = arith.addi %25, %29 : vector<64x8xi32>
    %c4095_i32 = arith.constant 4095 : i32
    %31 = vector.broadcast %c4095_i32 : i32 to vector<64x8xi32>
    %32 = arith.addi %30, %31 : vector<64x8xi32>
    %c-8192_i32 = arith.constant -8192 : i32
    %33 = vector.broadcast %c-8192_i32 : i32 to vector<64x8xi32>
    %34 = arith.andi %32, %33 : vector<64x8xi32>
    %35 = tpu.bitcast %34 : vector<64x8xi32> -> vector<64x8xf32>
    %c0_4 = arith.constant 0 : index
    %c0_5 = arith.constant 0 : index
    %36 = vector.load %arg2[%c0_4, %c0_5] : memref<64x32xf32, #tpu.memory_space<vmem>>, vector<64x8xf32>
    tpu.vector_store %arg2[%c0_4, %c0_5], %35 {strides = array<i32>} : memref<64x32xf32, #tpu.memory_space<vmem>>, vector<64x8xf32>,
    %37 = tpu.bitcast %14 : vector<64x8xf32> -> vector<64x8xi32>
    %c13_i32_6 = arith.constant 13 : i32
    %38 = vector.broadcast %c13_i32_6 : i32 to vector<64x8xi32>
    %39 = arith.shrui %37, %38 : vector<64x8xi32>
    %c1_i32_7 = arith.constant 1 : i32
    %40 = vector.broadcast %c1_i32_7 : i32 to vector<64x8xi32>
    %41 = arith.andi %39, %40 : vector<64x8xi32>
    %42 = arith.addi %37, %41 : vector<64x8xi32>
    %c4095_i32_8 = arith.constant 4095 : i32
    %43 = vector.broadcast %c4095_i32_8 : i32 to vector<64x8xi32>
    %44 = arith.addi %42, %43 : vector<64x8xi32>
    %c-8192_i32_9 = arith.constant -8192 : i32
    %45 = vector.broadcast %c-8192_i32_9 : i32 to vector<64x8xi32>
    %46 = arith.andi %44, %45 : vector<64x8xi32>
    %47 = tpu.bitcast %46 : vector<64x8xi32> -> vector<64x8xf32>
    %c0_10 = arith.constant 0 : index
    %c8 = arith.constant 8 : index
    %48 = vector.load %arg2[%c0_10, %c8] : memref<64x32xf32, #tpu.memory_space<vmem>>, vector<64x8xf32>
    tpu.vector_store %arg2[%c0_10, %c8], %47 {strides = array<i32>} : memref<64x32xf32, #tpu.memory_space<vmem>>, vector<64x8xf32>,
    %49 = tpu.bitcast %19 : vector<64x8xf32> -> vector<64x8xi32>
    %c13_i32_11 = arith.constant 13 : i32
    %50 = vector.broadcast %c13_i32_11 : i32 to vector<64x8xi32>
    %51 = arith.shrui %49, %50 : vector<64x8xi32>
    %c1_i32_12 = arith.constant 1 : i32
    %52 = vector.broadcast %c1_i32_12 : i32 to vector<64x8xi32>
    %53 = arith.andi %51, %52 : vector<64x8xi32>
    %54 = arith.addi %49, %53 : vector<64x8xi32>
    %c4095_i32_13 = arith.constant 4095 : i32
    %55 = vector.broadcast %c4095_i32_13 : i32 to vector<64x8xi32>
    %56 = arith.addi %54, %55 : vector<64x8xi32>
    %c-8192_i32_14 = arith.constant -8192 : i32
    %57 = vector.broadcast %c-8192_i32_14 : i32 to vector<64x8xi32>
    %58 = arith.andi %56, %57 : vector<64x8xi32>
    %59 = tpu.bitcast %58 : vector<64x8xi32> -> vector<64x8xf32>
    %c0_15 = arith.constant 0 : index
    %c16 = arith.constant 16 : index
    %60 = vector.load %arg2[%c0_15, %c16] : memref<64x32xf32, #tpu.memory_space<vmem>>, vector<64x8xf32>
    tpu.vector_store %arg2[%c0_15, %c16], %59 {strides = array<i32>} : memref<64x32xf32, #tpu.memory_space<vmem>>, vector<64x8xf32>,
    %61 = tpu.bitcast %24 : vector<64x8xf32> -> vector<64x8xi32>
    %c13_i32_16 = arith.constant 13 : i32
    %62 = vector.broadcast %c13_i32_16 : i32 to vector<64x8xi32>
    %63 = arith.shrui %61, %62 : vector<64x8xi32>
    %c1_i32_17 = arith.constant 1 : i32
    %64 = vector.broadcast %c1_i32_17 : i32 to vector<64x8xi32>
    %65 = arith.andi %63, %64 : vector<64x8xi32>
    %66 = arith.addi %61, %65 : vector<64x8xi32>
    %c4095_i32_18 = arith.constant 4095 : i32
    %67 = vector.broadcast %c4095_i32_18 : i32 to vector<64x8xi32>
    %68 = arith.addi %66, %67 : vector<64x8xi32>
    %c-8192_i32_19 = arith.constant -8192 : i32
    %69 = vector.broadcast %c-8192_i32_19 : i32 to vector<64x8xi32>
    %70 = arith.andi %68, %69 : vector<64x8xi32>
    %71 = tpu.bitcast %70 : vector<64x8xi32> -> vector<64x8xf32>
    %c0_20 = arith.constant 0 : index
    %c24 = arith.constant 24 : index
    %72 = vector.load %arg2[%c0_20, %c24] : memref<64x32xf32, #tpu.memory_space<vmem>>, vector<64x8xf32>
    tpu.vector_store %arg2[%c0_20, %c24], %71 {strides = array<i32>} : memref<64x32xf32, #tpu.memory_space<vmem>>, vector<64x8xf32>,
    return
  }
  func.func @transform_0(%arg0: i32) -> (i32, i32) {
    %c0_i32 = arith.constant 0 : i32
    %c0_i32_0 = arith.constant 0 : i32
    return %arg0, %c0_i32 : i32, i32
  }
  func.func @transform_1(%arg0: i32) -> (i32, i32) {
    %c0_i32 = arith.constant 0 : i32
    %c0_i32_0 = arith.constant 0 : i32
    return %arg0, %c0_i32 : i32, i32
  }
}

module attributes {stable_mosaic.version = 11 : i64} {
  func.func @_attn_proj_kernel(%arg0: i32, %arg1: memref<1x256x32xf32, #tpu.memory_space<vmem>>, %arg2: memref<1x16x64xf32, #tpu.memory_space<vmem>>, %arg3: memref<1x256x8xf32, #tpu.memory_space<vmem>>, %arg4: memref<32x32xf32, #tpu.memory_space<vmem>>, %arg5: memref<8x32xf32, #tpu.memory_space<vmem>>, %arg6: memref<1x32xf32, #tpu.memory_space<vmem>>, %arg7: memref<1x256x32xf32, #tpu.memory_space<vmem>>) attributes {dimension_semantics = [#tpu.dimension_semantics<parallel>], iteration_bounds = array<i64: 2>, scalar_prefetch = 0 : i64, scratch_operands = 0 : i64, tpu.core_type = #tpu.core_type<tc>, window_params = [{transform_indices = @transform_0, window_bounds = array<i64: 1, 256, 32>}, {transform_indices = @transform_1, window_bounds = array<i64: 1, 16, 64>}, {transform_indices = @transform_2, window_bounds = array<i64: 1, 256, 8>}, {pipeline_mode = #tpu.pipeline_mode<synchronous>, transform_indices = @transform_3, window_bounds = array<i64: 32, 32>}, {pipeline_mode = #tpu.pipeline_mode<synchronous>, transform_indices = @transform_4, window_bounds = array<i64: 8, 32>}, {pipeline_mode = #tpu.pipeline_mode<synchronous>, transform_indices = @transform_5, window_bounds = array<i64: 1, 32>}, {transform_indices = @transform_6, window_bounds = array<i64: 1, 256, 32>}]} {
    %c0 = arith.constant 0 : index
    %c0_0 = arith.constant 0 : index
    %c0_1 = arith.constant 0 : index
    %0 = vector.load %arg1[%c0, %c0_0, %c0_1] : memref<1x256x32xf32, #tpu.memory_space<vmem>>, vector<1x256x32xf32>
    %1 = vector.shape_cast %0 : vector<1x256x32xf32> to vector<256x32xf32>
    %c0_2 = arith.constant 0 : index
    %c0_3 = arith.constant 0 : index
    %c0_4 = arith.constant 0 : index
    %2 = vector.load %arg2[%c0_2, %c0_3, %c0_4] : memref<1x16x64xf32, #tpu.memory_space<vmem>>, vector<1x16x64xf32>
    %3 = vector.shape_cast %2 : vector<1x16x64xf32> to vector<16x64xf32>
    %c0_5 = arith.constant 0 : index
    %c0_6 = arith.constant 0 : index
    %4 = vector.load %arg4[%c0_5, %c0_6] : memref<32x32xf32, #tpu.memory_space<vmem>>, vector<32x32xf32>
    %c0_7 = arith.constant 0 : index
    %c0_8 = arith.constant 0 : index
    %c0_9 = arith.constant 0 : index
    %5 = vector.load %arg3[%c0_7, %c0_8, %c0_9] : memref<1x256x8xf32, #tpu.memory_space<vmem>>, vector<1x256x8xf32>
    %6 = vector.shape_cast %5 : vector<1x256x8xf32> to vector<256x8xf32>
    %c0_10 = arith.constant 0 : index
    %c0_11 = arith.constant 0 : index
    %7 = vector.load %arg5[%c0_10, %c0_11] : memref<8x32xf32, #tpu.memory_space<vmem>>, vector<8x32xf32>
    %cst = arith.constant dense<0.000000e+00> : vector<256x32xf32>
    %8 = tpu.matmul %6, %7, %cst {dimension_numbers = #tpu.dot_dimension_numbers<[1], [0], [0], [1], [0, 0, 1, 1], [], []>} : vector<256x8xf32>, vector<8x32xf32>, vector<256x32xf32> -> vector<256x32xf32>
    %c0_12 = arith.constant 0 : index
    %c0_13 = arith.constant 0 : index
    %9 = vector.load %arg6[%c0_12, %c0_13] : memref<1x32xf32, #tpu.memory_space<vmem>>, vector<1x32xf32>
    %10 = vector.broadcast %9 : vector<1x32xf32> to vector<256x32xf32>
    %11 = arith.addf %8, %10 : vector<256x32xf32>
    %12 = vector.extract_strided_slice %1 {offsets = [0, 0], sizes = [256, 8], strides = [1, 1]} : vector<256x32xf32> to vector<256x8xf32>
    %13 = vector.extract_strided_slice %3 {offsets = [0, 0], sizes = [16, 8], strides = [1, 1]} : vector<16x64xf32> to vector<16x8xf32>
    %14 = vector.extract_strided_slice %3 {offsets = [0, 32], sizes = [16, 8], strides = [1, 1]} : vector<16x64xf32> to vector<16x8xf32>
    %cst_14 = arith.constant dense<0.000000e+00> : vector<256x16xf32>
    %15 = tpu.matmul %12, %13, %cst_14 {dimension_numbers = #tpu.dot_dimension_numbers<[1], [1], [0], [0], [0, 0, 1, 0], [], []>} : vector<256x8xf32>, vector<16x8xf32>, vector<256x16xf32> -> vector<256x16xf32>
    %cst_15 = arith.constant dense<0xFF800000> : vector<256xf32>
    %16 = vector.multi_reduction <maximumf>, %15, %cst_15 [1] : vector<256x16xf32> to vector<256xf32>
    %17 = vector.shape_cast %16 : vector<256xf32> to vector<256x1xf32>
    %18 = vector.broadcast %17 : vector<256x1xf32> to vector<256x16xf32>
    %19 = arith.subf %15, %18 : vector<256x16xf32>
    %20 = math.exp %19 : vector<256x16xf32>
    %cst_16 = arith.constant dense<0.000000e+00> : vector<256xf32>
    %21 = vector.multi_reduction <add>, %20, %cst_16 [1] : vector<256x16xf32> to vector<256xf32>
    %22 = vector.shape_cast %21 : vector<256xf32> to vector<256x1xf32>
    %23 = tpu.reciprocal %22 {approx = true} : vector<256x1xf32> -> vector<256x1xf32>
    %24 = vector.broadcast %23 : vector<256x1xf32> to vector<256x16xf32>
    %25 = arith.mulf %20, %24 : vector<256x16xf32>
    %cst_17 = arith.constant dense<0.000000e+00> : vector<256x8xf32>
    %26 = tpu.matmul %25, %14, %cst_17 {dimension_numbers = #tpu.dot_dimension_numbers<[1], [0], [0], [1], [0, 0, 1, 1], [], []>} : vector<256x16xf32>, vector<16x8xf32>, vector<256x8xf32> -> vector<256x8xf32>
    %27 = vector.extract_strided_slice %4 {offsets = [0, 0], sizes = [8, 32], strides = [1, 1]} : vector<32x32xf32> to vector<8x32xf32>
    %cst_18 = arith.constant dense<0.000000e+00> : vector<256x32xf32>
    %28 = tpu.matmul %26, %27, %cst_18 {dimension_numbers = #tpu.dot_dimension_numbers<[1], [0], [0], [1], [0, 0, 1, 1], [], []>} : vector<256x8xf32>, vector<8x32xf32>, vector<256x32xf32> -> vector<256x32xf32>
    %29 = arith.addf %11, %28 : vector<256x32xf32>
    %30 = vector.extract_strided_slice %1 {offsets = [0, 8], sizes = [256, 8], strides = [1, 1]} : vector<256x32xf32> to vector<256x8xf32>
    %31 = vector.extract_strided_slice %3 {offsets = [0, 8], sizes = [16, 8], strides = [1, 1]} : vector<16x64xf32> to vector<16x8xf32>
    %32 = vector.extract_strided_slice %3 {offsets = [0, 40], sizes = [16, 8], strides = [1, 1]} : vector<16x64xf32> to vector<16x8xf32>
    %cst_19 = arith.constant dense<0.000000e+00> : vector<256x16xf32>
    %33 = tpu.matmul %30, %31, %cst_19 {dimension_numbers = #tpu.dot_dimension_numbers<[1], [1], [0], [0], [0, 0, 1, 0], [], []>} : vector<256x8xf32>, vector<16x8xf32>, vector<256x16xf32> -> vector<256x16xf32>
    %cst_20 = arith.constant dense<0xFF800000> : vector<256xf32>
    %34 = vector.multi_reduction <maximumf>, %33, %cst_20 [1] : vector<256x16xf32> to vector<256xf32>
    %35 = vector.shape_cast %34 : vector<256xf32> to vector<256x1xf32>
    %36 = vector.broadcast %35 : vector<256x1xf32> to vector<256x16xf32>
    %37 = arith.subf %33, %36 : vector<256x16xf32>
    %38 = math.exp %37 : vector<256x16xf32>
    %cst_21 = arith.constant dense<0.000000e+00> : vector<256xf32>
    %39 = vector.multi_reduction <add>, %38, %cst_21 [1] : vector<256x16xf32> to vector<256xf32>
    %40 = vector.shape_cast %39 : vector<256xf32> to vector<256x1xf32>
    %41 = tpu.reciprocal %40 {approx = true} : vector<256x1xf32> -> vector<256x1xf32>
    %42 = vector.broadcast %41 : vector<256x1xf32> to vector<256x16xf32>
    %43 = arith.mulf %38, %42 : vector<256x16xf32>
    %cst_22 = arith.constant dense<0.000000e+00> : vector<256x8xf32>
    %44 = tpu.matmul %43, %32, %cst_22 {dimension_numbers = #tpu.dot_dimension_numbers<[1], [0], [0], [1], [0, 0, 1, 1], [], []>} : vector<256x16xf32>, vector<16x8xf32>, vector<256x8xf32> -> vector<256x8xf32>
    %45 = vector.extract_strided_slice %4 {offsets = [8, 0], sizes = [8, 32], strides = [1, 1]} : vector<32x32xf32> to vector<8x32xf32>
    %cst_23 = arith.constant dense<0.000000e+00> : vector<256x32xf32>
    %46 = tpu.matmul %44, %45, %cst_23 {dimension_numbers = #tpu.dot_dimension_numbers<[1], [0], [0], [1], [0, 0, 1, 1], [], []>} : vector<256x8xf32>, vector<8x32xf32>, vector<256x32xf32> -> vector<256x32xf32>
    %47 = arith.addf %29, %46 : vector<256x32xf32>
    %48 = vector.extract_strided_slice %1 {offsets = [0, 16], sizes = [256, 8], strides = [1, 1]} : vector<256x32xf32> to vector<256x8xf32>
    %49 = vector.extract_strided_slice %3 {offsets = [0, 16], sizes = [16, 8], strides = [1, 1]} : vector<16x64xf32> to vector<16x8xf32>
    %50 = vector.extract_strided_slice %3 {offsets = [0, 48], sizes = [16, 8], strides = [1, 1]} : vector<16x64xf32> to vector<16x8xf32>
    %cst_24 = arith.constant dense<0.000000e+00> : vector<256x16xf32>
    %51 = tpu.matmul %48, %49, %cst_24 {dimension_numbers = #tpu.dot_dimension_numbers<[1], [1], [0], [0], [0, 0, 1, 0], [], []>} : vector<256x8xf32>, vector<16x8xf32>, vector<256x16xf32> -> vector<256x16xf32>
    %cst_25 = arith.constant dense<0xFF800000> : vector<256xf32>
    %52 = vector.multi_reduction <maximumf>, %51, %cst_25 [1] : vector<256x16xf32> to vector<256xf32>
    %53 = vector.shape_cast %52 : vector<256xf32> to vector<256x1xf32>
    %54 = vector.broadcast %53 : vector<256x1xf32> to vector<256x16xf32>
    %55 = arith.subf %51, %54 : vector<256x16xf32>
    %56 = math.exp %55 : vector<256x16xf32>
    %cst_26 = arith.constant dense<0.000000e+00> : vector<256xf32>
    %57 = vector.multi_reduction <add>, %56, %cst_26 [1] : vector<256x16xf32> to vector<256xf32>
    %58 = vector.shape_cast %57 : vector<256xf32> to vector<256x1xf32>
    %59 = tpu.reciprocal %58 {approx = true} : vector<256x1xf32> -> vector<256x1xf32>
    %60 = vector.broadcast %59 : vector<256x1xf32> to vector<256x16xf32>
    %61 = arith.mulf %56, %60 : vector<256x16xf32>
    %cst_27 = arith.constant dense<0.000000e+00> : vector<256x8xf32>
    %62 = tpu.matmul %61, %50, %cst_27 {dimension_numbers = #tpu.dot_dimension_numbers<[1], [0], [0], [1], [0, 0, 1, 1], [], []>} : vector<256x16xf32>, vector<16x8xf32>, vector<256x8xf32> -> vector<256x8xf32>
    %63 = vector.extract_strided_slice %4 {offsets = [16, 0], sizes = [8, 32], strides = [1, 1]} : vector<32x32xf32> to vector<8x32xf32>
    %cst_28 = arith.constant dense<0.000000e+00> : vector<256x32xf32>
    %64 = tpu.matmul %62, %63, %cst_28 {dimension_numbers = #tpu.dot_dimension_numbers<[1], [0], [0], [1], [0, 0, 1, 1], [], []>} : vector<256x8xf32>, vector<8x32xf32>, vector<256x32xf32> -> vector<256x32xf32>
    %65 = arith.addf %47, %64 : vector<256x32xf32>
    %66 = vector.extract_strided_slice %1 {offsets = [0, 24], sizes = [256, 8], strides = [1, 1]} : vector<256x32xf32> to vector<256x8xf32>
    %67 = vector.extract_strided_slice %3 {offsets = [0, 24], sizes = [16, 8], strides = [1, 1]} : vector<16x64xf32> to vector<16x8xf32>
    %68 = vector.extract_strided_slice %3 {offsets = [0, 56], sizes = [16, 8], strides = [1, 1]} : vector<16x64xf32> to vector<16x8xf32>
    %cst_29 = arith.constant dense<0.000000e+00> : vector<256x16xf32>
    %69 = tpu.matmul %66, %67, %cst_29 {dimension_numbers = #tpu.dot_dimension_numbers<[1], [1], [0], [0], [0, 0, 1, 0], [], []>} : vector<256x8xf32>, vector<16x8xf32>, vector<256x16xf32> -> vector<256x16xf32>
    %cst_30 = arith.constant dense<0xFF800000> : vector<256xf32>
    %70 = vector.multi_reduction <maximumf>, %69, %cst_30 [1] : vector<256x16xf32> to vector<256xf32>
    %71 = vector.shape_cast %70 : vector<256xf32> to vector<256x1xf32>
    %72 = vector.broadcast %71 : vector<256x1xf32> to vector<256x16xf32>
    %73 = arith.subf %69, %72 : vector<256x16xf32>
    %74 = math.exp %73 : vector<256x16xf32>
    %cst_31 = arith.constant dense<0.000000e+00> : vector<256xf32>
    %75 = vector.multi_reduction <add>, %74, %cst_31 [1] : vector<256x16xf32> to vector<256xf32>
    %76 = vector.shape_cast %75 : vector<256xf32> to vector<256x1xf32>
    %77 = tpu.reciprocal %76 {approx = true} : vector<256x1xf32> -> vector<256x1xf32>
    %78 = vector.broadcast %77 : vector<256x1xf32> to vector<256x16xf32>
    %79 = arith.mulf %74, %78 : vector<256x16xf32>
    %cst_32 = arith.constant dense<0.000000e+00> : vector<256x8xf32>
    %80 = tpu.matmul %79, %68, %cst_32 {dimension_numbers = #tpu.dot_dimension_numbers<[1], [0], [0], [1], [0, 0, 1, 1], [], []>} : vector<256x16xf32>, vector<16x8xf32>, vector<256x8xf32> -> vector<256x8xf32>
    %81 = vector.extract_strided_slice %4 {offsets = [24, 0], sizes = [8, 32], strides = [1, 1]} : vector<32x32xf32> to vector<8x32xf32>
    %cst_33 = arith.constant dense<0.000000e+00> : vector<256x32xf32>
    %82 = tpu.matmul %80, %81, %cst_33 {dimension_numbers = #tpu.dot_dimension_numbers<[1], [0], [0], [1], [0, 0, 1, 1], [], []>} : vector<256x8xf32>, vector<8x32xf32>, vector<256x32xf32> -> vector<256x32xf32>
    %83 = arith.addf %65, %82 : vector<256x32xf32>
    %c0_34 = arith.constant 0 : index
    %c0_35 = arith.constant 0 : index
    %c0_36 = arith.constant 0 : index
    %84 = vector.load %arg7[%c0_34, %c0_35, %c0_36] : memref<1x256x32xf32, #tpu.memory_space<vmem>>, vector<1x256x32xf32>
    %85 = vector.shape_cast %84 : vector<1x256x32xf32> to vector<256x32xf32>
    %86 = vector.shape_cast %83 : vector<256x32xf32> to vector<1x256x32xf32>
    tpu.vector_store %arg7[%c0_34, %c0_35, %c0_36], %86 {strides = array<i32>} : memref<1x256x32xf32, #tpu.memory_space<vmem>>, vector<1x256x32xf32>,
    return
  }
  func.func @transform_0(%arg0: i32) -> (i32, i32, i32) {
    %c0_i32 = arith.constant 0 : i32
    %c0_i32_0 = arith.constant 0 : i32
    %c0_i32_1 = arith.constant 0 : i32
    return %arg0, %c0_i32, %c0_i32_0 : i32, i32, i32
  }
  func.func @transform_1(%arg0: i32) -> (i32, i32, i32) {
    %c0_i32 = arith.constant 0 : i32
    %c0_i32_0 = arith.constant 0 : i32
    %c0_i32_1 = arith.constant 0 : i32
    return %arg0, %c0_i32, %c0_i32_0 : i32, i32, i32
  }
  func.func @transform_2(%arg0: i32) -> (i32, i32, i32) {
    %c0_i32 = arith.constant 0 : i32
    %c0_i32_0 = arith.constant 0 : i32
    %c0_i32_1 = arith.constant 0 : i32
    return %arg0, %c0_i32, %c0_i32_0 : i32, i32, i32
  }
  func.func @transform_3(%arg0: i32) -> (i32, i32) {
    %c0_i32 = arith.constant 0 : i32
    %c0_i32_0 = arith.constant 0 : i32
    %c0_i32_1 = arith.constant 0 : i32
    return %c0_i32, %c0_i32_0 : i32, i32
  }
  func.func @transform_4(%arg0: i32) -> (i32, i32) {
    %c0_i32 = arith.constant 0 : i32
    %c0_i32_0 = arith.constant 0 : i32
    %c0_i32_1 = arith.constant 0 : i32
    return %c0_i32, %c0_i32_0 : i32, i32
  }
  func.func @transform_5(%arg0: i32) -> (i32, i32) {
    %c0_i32 = arith.constant 0 : i32
    %c0_i32_0 = arith.constant 0 : i32
    %c0_i32_1 = arith.constant 0 : i32
    return %c0_i32, %c0_i32_0 : i32, i32
  }
  func.func @transform_6(%arg0: i32) -> (i32, i32, i32) {
    %c0_i32 = arith.constant 0 : i32
    %c0_i32_0 = arith.constant 0 : i32
    %c0_i32_1 = arith.constant 0 : i32
    return %arg0, %c0_i32, %c0_i32_0 : i32, i32, i32
  }
}

</mosaic_0001>

<llo_original>
// kernel: wave_attention_forward.7
$region0: #{wave_attention_forward.7}
  #allocation0 [shape = 'u32[]', space=smem, size = 0x4, offset = 0x4, fixed_abs, tag = 'smem constant byte address 0x4 - core index']
  #allocation1 [shape = 'u32[144,128]{1,0:T(1,128)}', space=vmem, size = 0x12000, scoped, tag = 'internal scratch']
  %s0 = inlined_call_operand.vmem [shape: f32[4,128,8], index: 0, kind: input, shape index: {}]
  %s1 = inlined_call_operand.vmem [shape: f32[128,32], index: 1, kind: output, shape index: {}]
  %s2 = sld [smem:[#allocation0]]
  $region75: #{wave_attention_forward.7} parent=0
    _
  %s4 = ssub.s32 1, %s2
  %s5 = scalar_select 0, %s4, %s2
  $region1: #{wave_attention_forward.7} parent=0
    #allocation2 [shape = 'u8[262144]{0}', space=vmem, size = 0x40000, scoped, tag = 'input window, operand 0']
    loop: start=0, step=1, limit=4
    $region2: #{wave_attention_forward.7} parent=1 // loop_pre_header
      _
    $region3: #{wave_attention_forward.7} parent=1 // loop_header
      %s7 = sphi 0, %s11
      %p8 = scmp.ge.s32.totalorder %s7, 4
      %s17 = sphi 0, %s19
      %s20 = sphi 0, %s17
      %s21 = sphi 0, %s20
      %s37 = sphi 0, %s21
      %s43 = sphi 0, %s45
      %s46 = sphi 0, %s43
      %s47 = sphi 0, %s46
      %s63 = sphi 0, %s47
    $region4: #{wave_attention_forward.7} parent=1 // loop_header_branch
      %10 = sbr.rel (%p8) target = $region8
    $region5: #{wave_attention_forward.7} parent=1 // loop_body
      %s12 = ssub.s32 %s7, 1
      %s13 = ssub.s32 %s7, 2
      %s14 = sadd.s32 %s7, 1
      %s15 = ssub.s32 %s7, %s14
      %p16 = scmp.eq.s32.totalorder %s15, 0
      %s18 = sadd.s32 %s17, 1
      %s19 = scalar_select %p16, %s17, %s18
      %p22 = pneg %p16
      %p23 = scmp.eq.s32.totalorder %s7, 1
      %p24 = por %p22, %p23
      %p25 = scmp.ne.s32.totalorder %s17, %s20
      %p26 = scmp.eq.s32.totalorder %s7, 0
      %p27 = por %p25, %p26
      %p28 = scmp.ne.s32.totalorder %s17, %s20
      %p29 = scmp.eq.s32.totalorder %s12, 1
      %p30 = por %p28, %p29
      %p31 = scmp.ne.s32.totalorder %s20, %s21
      %p32 = scmp.eq.s32.totalorder %s12, 0
      %p33 = por %p31, %p32
      %p34 = scmp.ne.s32.totalorder %s20, %s21
      %p35 = scmp.eq.s32.totalorder %s13, 1
      %p36 = por %p34, %p35
      %p38 = scmp.ne.s32.totalorder %s21, %s37
      %p39 = scmp.eq.s32.totalorder %s13, 0
      %p40 = por %p38, %p39
      %s41 = ssub.s32 %s7, %s14
      %p42 = scmp.eq.s32.totalorder %s41, 0
      %s44 = sadd.s32 %s43, 1
      %s45 = scalar_select %p42, %s43, %s44
      %p48 = pneg %p42
      %p49 = scmp.eq.s32.totalorder %s7, 1
      %p50 = por %p48, %p49
      %p51 = scmp.ne.s32.totalorder %s43, %s46
      %p52 = scmp.eq.s32.totalorder %s7, 0
      %p53 = por %p51, %p52
      %p54 = scmp.ne.s32.totalorder %s43, %s46
      %p55 = scmp.eq.s32.totalorder %s12, 1
      %p56 = por %p54, %p55
      %p57 = scmp.ne.s32.totalorder %s46, %s47
      %p58 = scmp.eq.s32.totalorder %s12, 0
      %p59 = por %p57, %p58
      %p60 = scmp.ne.s32.totalorder %s46, %s47
      %p61 = scmp.eq.s32.totalorder %s13, 1
      %p62 = por %p60, %p61
      %p64 = scmp.ne.s32.totalorder %s47, %s63
      %p65 = scmp.eq.s32.totalorder %s13, 0
      %p66 = por %p64, %p65
      %p67 = scmp.le.s32.totalorder 1, %s7
      %p68 = scmp.lt.s32.totalorder %s7, 3
      %p69 = pnand %p67, %p68
      %p70 = pneg %p69
      // Predicated region
      $region9: #{wave_attention_forward.7} parent=5 // pred_check
        _
      $region10: #{wave_attention_forward.7} parent=5 // pred_check_branch
        %72 = sbr.rel (%p69) target = $region12
      $region11: #{wave_attention_forward.7} parent=5 // pred_region
        %s73 = ssub.s32 %s7, 1
      $region12: #{wave_attention_forward.7} parent=5 // pred_fallthru
        _
      %p74 = scmp.lt.s32.totalorder %s7, 2
      // Predicated region
      $region13: #{wave_attention_forward.7} parent=5 // pred_check
        %p75 = pneg %p74
      $region14: #{wave_attention_forward.7} parent=5 // pred_check_branch
        %77 = sbr.rel (%p75) target = $region16
      $region15: #{wave_attention_forward.7} parent=5 // pred_region
        // Predicated region
        $region17: #{wave_attention_forward.7} parent=15 // pred_check
          %p78 = pneg %p27
        $region18: #{wave_attention_forward.7} parent=15 // pred_check_branch
          %80 = sbr.rel (%p78) target = $region20
        $region19: #{wave_attention_forward.7} parent=15 // pred_region
          %s81 = sand.u32 %s17, 1
          %s82 = sand.u32 %s17, 1
          %s83 = smul.addr %s82, 256
          %s84 = scalar_lea.vmem [#allocation2], %s83
          %s85 = smul.u32 8, %s7
          %s86 = smul.addr %s85, 8
          %s87 = scalar_lea.vmem %s0, %s86
          // Predicated region
          $region21: #{wave_attention_forward.7} parent=19 // pred_check
            _
          $region22: #{wave_attention_forward.7} parent=19 // pred_check_branch
            %89 = sbr.rel (0) target = $region24
          $region23: #{wave_attention_forward.7} parent=19 // pred_region
            // Predicated region
            $region25: #{wave_attention_forward.7} parent=23 // pred_check
              _
            $region26: #{wave_attention_forward.7} parent=23 // pred_check_branch
              %91 = sbr.rel (0) target = $region28
            $region27: #{wave_attention_forward.7} parent=23 // pred_region
              // Predicated region
              $region40: #{wave_attention_forward.7} parent=27 // pred_check
                _
              $region41: #{wave_attention_forward.7} parent=27 // pred_check_branch
                %168 = sbr.rel (0) target = $region43
              $region42: #{wave_attention_forward.7} parent=27 // pred_region
                loop: start=0, step=1, limit=1
                $region44: #{wave_attention_forward.7} parent=42 // loop_pre_header
                  _
                $region45: #{wave_attention_forward.7} parent=42 // loop_header
                  %s170 = sphi 0, %s174
                  %p171 = scmp.ge.s32.totalorder %s170, 1
                  %s175 = sphi %s87, %s87
                  %s176 = sphi %s84, %s84
                $region46: #{wave_attention_forward.7} parent=42 // loop_header_branch
                  %173 = sbr.rel (%p171) target = $region50
                $region47: #{wave_attention_forward.7} parent=42 // loop_body
                  %v177 = vld [vmem:[%s175] sm:$0xff]
                  %178 = vst [vmem:[%s176] sm:$0xff] %v177
                  %v179 = vld [vmem:[%s175 + $0x8] sm:$0xff]
                  %180 = vst [vmem:[%s176 + $0x8] sm:$0xff] %v179
                  %v181 = vld [vmem:[%s175 + $0x10] sm:$0xff]
                  %182 = vst [vmem:[%s176 + $0x10] sm:$0xff] %v181
                  %v183 = vld [vmem:[%s175 + $0x18] sm:$0xff]
                  %184 = vst [vmem:[%s176 + $0x18] sm:$0xff] %v183
                  %v185 = vld [vmem:[%s175 + $0x20] sm:$0xff]
                  %186 = vst [vmem:[%s176 + $0x20] sm:$0xff] %v185
                  %v187 = vld [vmem:[%s175 + $0x28] sm:$0xff]
                  %188 = vst [vmem:[%s176 + $0x28] sm:$0xff] %v187
                  %v189 = vld [vmem:[%s175 + $0x30] sm:$0xff]
                  %190 = vst [vmem:[%s176 + $0x30] sm:$0xff] %v189
                  %v191 = vld [vmem:[%s175 + $0x38] sm:$0xff]
                  %192 = vst [vmem:[%s176 + $0x38] sm:$0xff] %v191
                  %v193 = vld [vmem:[%s175 + $0x80] sm:$0xff]
                  %194 = vst [vmem:[%s176 + $0x40] sm:$0xff] %v193
                  %v195 = vld [vmem:[%s175 + $0x88] sm:$0xff]
                  %196 = vst [vmem:[%s176 + $0x48] sm:$0xff] %v195
                  %v197 = vld [vmem:[%s175 + $0x90] sm:$0xff]
                  %198 = vst [vmem:[%s176 + $0x50] sm:$0xff] %v197
                  %v199 = vld [vmem:[%s175 + $0x98] sm:$0xff]
                  %200 = vst [vmem:[%s176 + $0x58] sm:$0xff] %v199
                  %v201 = vld [vmem:[%s175 + $0xa0] sm:$0xff]
                  %202 = vst [vmem:[%s176 + $0x60] sm:$0xff] %v201
                  %v203 = vld [vmem:[%s175 + $0xa8] sm:$0xff]
                  %204 = vst [vmem:[%s176 + $0x68] sm:$0xff] %v203
                  %v205 = vld [vmem:[%s175 + $0xb0] sm:$0xff]
                  %206 = vst [vmem:[%s176 + $0x70] sm:$0xff] %v205
                  %v207 = vld [vmem:[%s175 + $0xb8] sm:$0xff]
                  %208 = vst [vmem:[%s176 + $0x78] sm:$0xff] %v207
                  %v209 = vld [vmem:[%s175 + $0x100] sm:$0xff]
                  %210 = vst [vmem:[%s176 + $0x80] sm:$0xff] %v209
                  %v211 = vld [vmem:[%s175 + $0x108] sm:$0xff]
                  %212 = vst [vmem:[%s176 + $0x88] sm:$0xff] %v211
                  %v213 = vld [vmem:[%s175 + $0x110] sm:$0xff]
                  %214 = vst [vmem:[%s176 + $0x90] sm:$0xff] %v213
                  %v215 = vld [vmem:[%s175 + $0x118] sm:$0xff]
                  %216 = vst [vmem:[%s176 + $0x98] sm:$0xff] %v215
                  %v217 = vld [vmem:[%s175 + $0x120] sm:$0xff]
                  %218 = vst [vmem:[%s176 + $0xa0] sm:$0xff] %v217
                  %v219 = vld [vmem:[%s175 + $0x128] sm:$0xff]
                  %220 = vst [vmem:[%s176 + $0xa8] sm:$0xff] %v219
                  %v221 = vld [vmem:[%s175 + $0x130] sm:$0xff]
                  %222 = vst [vmem:[%s176 + $0xb0] sm:$0xff] %v221
                  %v223 = vld [vmem:[%s175 + $0x138] sm:$0xff]
                  %224 = vst [vmem:[%s176 + $0xb8] sm:$0xff] %v223
                  %v225 = vld [vmem:[%s175 + $0x180] sm:$0xff]
                  %226 = vst [vmem:[%s176 + $0xc0] sm:$0xff] %v225
                  %v227 = vld [vmem:[%s175 + $0x188] sm:$0xff]
                  %228 = vst [vmem:[%s176 + $0xc8] sm:$0xff] %v227
                  %v229 = vld [vmem:[%s175 + $0x190] sm:$0xff]
                  %230 = vst [vmem:[%s176 + $0xd0] sm:$0xff] %v229
                  %v231 = vld [vmem:[%s175 + $0x198] sm:$0xff]
                  %232 = vst [vmem:[%s176 + $0xd8] sm:$0xff] %v231
                  %v233 = vld [vmem:[%s175 + $0x1a0] sm:$0xff]
                  %234 = vst [vmem:[%s176 + $0xe0] sm:$0xff] %v233
                  %v235 = vld [vmem:[%s175 + $0x1a8] sm:$0xff]
                  %236 = vst [vmem:[%s176 + $0xe8] sm:$0xff] %v235
                  %v237 = vld [vmem:[%s175 + $0x1b0] sm:$0xff]
                  %238 = vst [vmem:[%s176 + $0xf0] sm:$0xff] %v237
                  %v239 = vld [vmem:[%s175 + $0x1b8] sm:$0xff]
                  %240 = vst [vmem:[%s176 + $0xf8] sm:$0xff] %v239
                $region48: #{wave_attention_forward.7} parent=42 // loop_footer
                  %s174 = sadd.s32 1, %s170
                $region49: #{wave_attention_forward.7} parent=42 // loop_footer_branch
                  %169 = sbr.rel target = $region45
                $region50: #{wave_attention_forward.7} parent=42 // loop_exit
                  _
              $region43: #{wave_attention_forward.7} parent=27 // pred_fallthru
                _
              // Predicated region
              $region51: #{wave_attention_forward.7} parent=27 // pred_check
                _
              $region52: #{wave_attention_forward.7} parent=27 // pred_check_branch
                %242 = sbr.rel target = $region54
              $region53: #{wave_attention_forward.7} parent=27 // pred_region
                _
              $region54: #{wave_attention_forward.7} parent=27 // pred_fallthru
                _
            $region28: #{wave_attention_forward.7} parent=23 // pred_fallthru
              _
            // Predicated region
            $region29: #{wave_attention_forward.7} parent=23 // pred_check
              _
            $region30: #{wave_attention_forward.7} parent=23 // pred_check_branch
              %93 = sbr.rel target = $region32
            $region31: #{wave_attention_forward.7} parent=23 // pred_region
              loop: start=0, step=1, limit=1
              $region33: #{wave_attention_forward.7} parent=31 // loop_pre_header
                _
              $region34: #{wave_attention_forward.7} parent=31 // loop_header
                %s96 = sphi 0, %s100
                %p97 = scmp.ge.s32.totalorder %s96, 1
                %s101 = sphi %s87, %s87
                %s102 = sphi %s84, %s84
              $region35: #{wave_attention_forward.7} parent=31 // loop_header_branch
                %99 = sbr.rel (%p97) target = $region39
              $region36: #{wave_attention_forward.7} parent=31 // loop_body
                %v103 = vld [vmem:[%s101] sm:$0xff]
                %104 = vst [vmem:[%s102] sm:$0xff] %v103
                %v105 = vld [vmem:[%s101 + $0x8] sm:$0xff]
                %106 = vst [vmem:[%s102 + $0x8] sm:$0xff] %v105
                %v107 = vld [vmem:[%s101 + $0x10] sm:$0xff]
                %108 = vst [vmem:[%s102 + $0x10] sm:$0xff] %v107
                %v109 = vld [vmem:[%s101 + $0x18] sm:$0xff]
                %110 = vst [vmem:[%s102 + $0x18] sm:$0xff] %v109
                %v111 = vld [vmem:[%s101 + $0x20] sm:$0xff]
                %112 = vst [vmem:[%s102 + $0x20] sm:$0xff] %v111
                %v113 = vld [vmem:[%s101 + $0x28] sm:$0xff]
                %114 = vst [vmem:[%s102 + $0x28] sm:$0xff] %v113
                %v115 = vld [vmem:[%s101 + $0x30] sm:$0xff]
                %116 = vst [vmem:[%s102 + $0x30] sm:$0xff] %v115
                %v117 = vld [vmem:[%s101 + $0x38] sm:$0xff]
                %118 = vst [vmem:[%s102 + $0x38] sm:$0xff] %v117
                %v119 = vld [vmem:[%s101 + $0x80] sm:$0xff]
                %120 = vst [vmem:[%s102 + $0x40] sm:$0xff] %v119
                %v121 = vld [vmem:[%s101 + $0x88] sm:$0xff]
                %122 = vst [vmem:[%s102 + $0x48] sm:$0xff] %v121
                %v123 = vld [vmem:[%s101 + $0x90] sm:$0xff]
                %124 = vst [vmem:[%s102 + $0x50] sm:$0xff] %v123
                %v125 = vld [vmem:[%s101 + $0x98] sm:$0xff]
                %126 = vst [vmem:[%s102 + $0x58] sm:$0xff] %v125
                %v127 = vld [vmem:[%s101 + $0xa0] sm:$0xff]
                %128 = vst [vmem:[%s102 + $0x60] sm:$0xff] %v127
                %v129 = vld [vmem:[%s101 + $0xa8] sm:$0xff]
                %130 = vst [vmem:[%s102 + $0x68] sm:$0xff] %v129
                %v131 = vld [vmem:[%s101 + $0xb0] sm:$0xff]
                %132 = vst [vmem:[%s102 + $0x70] sm:$0xff] %v131
                %v133 = vld [vmem:[%s101 + $0xb8] sm:$0xff]
                %134 = vst [vmem:[%s102 + $0x78] sm:$0xff] %v133
                %v135 = vld [vmem:[%s101 + $0x100] sm:$0xff]
                %136 = vst [vmem:[%s102 + $0x80] sm:$0xff] %v135
                %v137 = vld [vmem:[%s101 + $0x108] sm:$0xff]
                %138 = vst [vmem:[%s102 + $0x88] sm:$0xff] %v137
                %v139 = vld [vmem:[%s101 + $0x110] sm:$0xff]
                %140 = vst [vmem:[%s102 + $0x90] sm:$0xff] %v139
                %v141 = vld [vmem:[%s101 + $0x118] sm:$0xff]
                %142 = vst [vmem:[%s102 + $0x98] sm:$0xff] %v141
                %v143 = vld [vmem:[%s101 + $0x120] sm:$0xff]
                %144 = vst [vmem:[%s102 + $0xa0] sm:$0xff] %v143
                %v145 = vld [vmem:[%s101 + $0x128] sm:$0xff]
                %146 = vst [vmem:[%s102 + $0xa8] sm:$0xff] %v145
                %v147 = vld [vmem:[%s101 + $0x130] sm:$0xff]
                %148 = vst [vmem:[%s102 + $0xb0] sm:$0xff] %v147
                %v149 = vld [vmem:[%s101 + $0x138] sm:$0xff]
                %150 = vst [vmem:[%s102 + $0xb8] sm:$0xff] %v149
                %v151 = vld [vmem:[%s101 + $0x180] sm:$0xff]
                %152 = vst [vmem:[%s102 + $0xc0] sm:$0xff] %v151
                %v153 = vld [vmem:[%s101 + $0x188] sm:$0xff]
                %154 = vst [vmem:[%s102 + $0xc8] sm:$0xff] %v153
                %v155 = vld [vmem:[%s101 + $0x190] sm:$0xff]
                %156 = vst [vmem:[%s102 + $0xd0] sm:$0xff] %v155
                %v157 = vld [vmem:[%s101 + $0x198] sm:$0xff]
                %158 = vst [vmem:[%s102 + $0xd8] sm:$0xff] %v157
                %v159 = vld [vmem:[%s101 + $0x1a0] sm:$0xff]
                %160 = vst [vmem:[%s102 + $0xe0] sm:$0xff] %v159
                %v161 = vld [vmem:[%s101 + $0x1a8] sm:$0xff]
                %162 = vst [vmem:[%s102 + $0xe8] sm:$0xff] %v161
                %v163 = vld [vmem:[%s101 + $0x1b0] sm:$0xff]
                %164 = vst [vmem:[%s102 + $0xf0] sm:$0xff] %v163
                %v165 = vld [vmem:[%s101 + $0x1b8] sm:$0xff]
                %166 = vst [vmem:[%s102 + $0xf8] sm:$0xff] %v165
              $region37: #{wave_attention_forward.7} parent=31 // loop_footer
                %s100 = sadd.s32 1, %s96
              $region38: #{wave_attention_forward.7} parent=31 // loop_footer_branch
                %95 = sbr.rel target = $region34
              $region39: #{wave_attention_forward.7} parent=31 // loop_exit
                _
            $region32: #{wave_attention_forward.7} parent=23 // pred_fallthru
              _
          $region24: #{wave_attention_forward.7} parent=19 // pred_fallthru
            _
          %243 = vnop
        $region20: #{wave_attention_forward.7} parent=15 // pred_fallthru
          _
      $region16: #{wave_attention_forward.7} parent=5 // pred_fallthru
        _
      %p244 = scmp.le.s32.totalorder 1, %s7
      %p245 = scmp.lt.s32.totalorder %s7, 3
      %p246 = pnand %p244, %p245
      %p247 = pneg %p246
      // Predicated region
      $region55: #{wave_attention_forward.7} parent=5 // pred_check
        _
      $region56: #{wave_attention_forward.7} parent=5 // pred_check_branch
        %249 = sbr.rel (%p246) target = $region58
      $region57: #{wave_attention_forward.7} parent=5 // pred_region
        %s250 = ssub.s32 %s7, 1
        %s251 = sand.u32 %s20, 1
        %s252 = sand.u32 %s20, 1
        %s253 = smul.addr %s252, 256
        %s254 = scalar_lea.vmem [#allocation2], %s253
        // Predicated region
        $region59: #{wave_attention_forward.7} parent=57 // pred_check
          %p255 = pneg %p33
        $region60: #{wave_attention_forward.7} parent=57 // pred_check_branch
          %257 = sbr.rel (%p255) target = $region62
        $region61: #{wave_attention_forward.7} parent=57 // pred_region
          _
        $region62: #{wave_attention_forward.7} parent=57 // pred_fallthru
          _
        %s258 = sand.u32 %s20, 1
        %s259 = sand.u32 %s20, 1
        %s260 = smul.addr %s259, 256
        %s261 = scalar_lea.vmem [#allocation2], %s260
        %p262 = pneg %p33
        %p263 = pneg %p30
        %p264 = pneg %p59
        %p265 = pneg %p56
        %s266 = smul.u32 8, %s12
        %p267 = scmp.lt.s32.totalorder %s266, 15
        %s268 = scalar_select %p267, %s266, 15
        %s269 = smul.addr %s268, 8
        %s270 = scalar_lea.vmem %s1, %s269
        %s271 = smul.u32 8, %s12
        %s272 = smul.u32 8, %s12
        %p273 = scmp.lt.s32.totalorder %s272, 15
        %s274 = scalar_select %p273, %s272, 15
        %s275 = smul.addr %s274, 8
        %s276 = scalar_lea.vmem %s1, %s275
        %s277 = smul.u32 8, %s12
        %v278 = vld [vmem:[%s254] sm:$0xff]
        %v279 = vld [vmem:[%s254 + $0x8] sm:$0xff]
        %v280 = vld [vmem:[%s254 + $0x10] sm:$0xff]
        %v281 = vld [vmem:[%s254 + $0x18] sm:$0xff]
        %v282 = vld [vmem:[%s254 + $0x20] sm:$0xff]
        %v283 = vld [vmem:[%s254 + $0x28] sm:$0xff]
        %v284 = vld [vmem:[%s254 + $0x30] sm:$0xff]
        %v285 = vld [vmem:[%s254 + $0x38] sm:$0xff]
        %s286 = scalar_lea.vmem %s254, 64 [#allocation2]
        %v287 = vld [vmem:[%s286] sm:$0xff]
        %v288 = vld [vmem:[%s286 + $0x8] sm:$0xff]
        %v289 = vld [vmem:[%s286 + $0x10] sm:$0xff]
        %v290 = vld [vmem:[%s286 + $0x18] sm:$0xff]
        %v291 = vld [vmem:[%s286 + $0x20] sm:$0xff]
        %v292 = vld [vmem:[%s286 + $0x28] sm:$0xff]
        %v293 = vld [vmem:[%s286 + $0x30] sm:$0xff]
        %v294 = vld [vmem:[%s286 + $0x38] sm:$0xff]
        %s295 = scalar_lea.vmem %s254, 128 [#allocation2]
        %v296 = vld [vmem:[%s295] sm:$0xff]
        %v297 = vld [vmem:[%s295 + $0x8] sm:$0xff]
        %v298 = vld [vmem:[%s295 + $0x10] sm:$0xff]
        %v299 = vld [vmem:[%s295 + $0x18] sm:$0xff]
        %v300 = vld [vmem:[%s295 + $0x20] sm:$0xff]
        %v301 = vld [vmem:[%s295 + $0x28] sm:$0xff]
        %v302 = vld [vmem:[%s295 + $0x30] sm:$0xff]
        %v303 = vld [vmem:[%s295 + $0x38] sm:$0xff]
        %s304 = scalar_lea.vmem %s254, 192 [#allocation2]
        %v305 = vld [vmem:[%s304] sm:$0xff]
        %v306 = vld [vmem:[%s304 + $0x8] sm:$0xff]
        %v307 = vld [vmem:[%s304 + $0x10] sm:$0xff]
        %v308 = vld [vmem:[%s304 + $0x18] sm:$0xff]
        %v309 = vld [vmem:[%s304 + $0x20] sm:$0xff]
        %v310 = vld [vmem:[%s304 + $0x28] sm:$0xff]
        %v311 = vld [vmem:[%s304 + $0x30] sm:$0xff]
        %v312 = vld [vmem:[%s304 + $0x38] sm:$0xff]
        %v313 = vadd.f32 %v278, %v287
        %v314 = vadd.f32 %v279, %v288
        %v315 = vadd.f32 %v280, %v289
        %v316 = vadd.f32 %v281, %v290
        %v317 = vadd.f32 %v282, %v291
        %v318 = vadd.f32 %v283, %v292
        %v319 = vadd.f32 %v284, %v293
        %v320 = vadd.f32 %v285, %v294
        %v321 = vadd.f32 %v313, %v296
        %v322 = vadd.f32 %v314, %v297
        %v323 = vadd.f32 %v315, %v298
        %v324 = vadd.f32 %v316, %v299
        %v325 = vadd.f32 %v317, %v300
        %v326 = vadd.f32 %v318, %v301
        %v327 = vadd.f32 %v319, %v302
        %v328 = vadd.f32 %v320, %v303
        %v329 = vadd.f32 %v321, %v305
        %v330 = vadd.f32 %v322, %v306
        %v331 = vadd.f32 %v323, %v307
        %v332 = vadd.f32 %v324, %v308
        %v333 = vadd.f32 %v325, %v309
        %v334 = vadd.f32 %v326, %v310
        %v335 = vadd.f32 %v327, %v311
        %v336 = vadd.f32 %v328, %v312
        %v337 = vmul.f32 %v329, 0.5
        %v338 = vmul.f32 %v330, 0.5
        %v339 = vmul.f32 %v331, 0.5
        %v340 = vmul.f32 %v332, 0.5
        %v341 = vmul.f32 %v333, 0.5
        %v342 = vmul.f32 %v334, 0.5
        %v343 = vmul.f32 %v335, 0.5
        %v344 = vmul.f32 %v336, 0.5
        %v345 = vsub.f32 %v313, %v296
        %v346 = vsub.f32 %v314, %v297
        %v347 = vsub.f32 %v315, %v298
        %v348 = vsub.f32 %v316, %v299
        %v349 = vsub.f32 %v317, %v300
        %v350 = vsub.f32 %v318, %v301
        %v351 = vsub.f32 %v319, %v302
        %v352 = vsub.f32 %v320, %v303
        %v353 = vsub.f32 %v345, %v305
        %v354 = vsub.f32 %v346, %v306
        %v355 = vsub.f32 %v347, %v307
        %v356 = vsub.f32 %v348, %v308
        %v357 = vsub.f32 %v349, %v309
        %v358 = vsub.f32 %v350, %v310
        %v359 = vsub.f32 %v351, %v311
        %v360 = vsub.f32 %v352, %v312
        %v361 = vmul.f32 %v353, 0.5
        %v362 = vmul.f32 %v354, 0.5
        %v363 = vmul.f32 %v355, 0.5
        %v364 = vmul.f32 %v356, 0.5
        %v365 = vmul.f32 %v357, 0.5
        %v366 = vmul.f32 %v358, 0.5
        %v367 = vmul.f32 %v359, 0.5
        %v368 = vmul.f32 %v360, 0.5
        %v369 = vsub.f32 %v278, %v287
        %v370 = vsub.f32 %v279, %v288
        %v371 = vsub.f32 %v280, %v289
        %v372 = vsub.f32 %v281, %v290
        %v373 = vsub.f32 %v282, %v291
        %v374 = vsub.f32 %v283, %v292
        %v375 = vsub.f32 %v284, %v293
        %v376 = vsub.f32 %v285, %v294
        %v377 = vadd.f32 %v369, %v296
        %v378 = vadd.f32 %v370, %v297
        %v379 = vadd.f32 %v371, %v298
        %v380 = vadd.f32 %v372, %v299
        %v381 = vadd.f32 %v373, %v300
        %v382 = vadd.f32 %v374, %v301
        %v383 = vadd.f32 %v375, %v302
        %v384 = vadd.f32 %v376, %v303
        %v385 = vsub.f32 %v377, %v305
        %v386 = vsub.f32 %v378, %v306
        %v387 = vsub.f32 %v379, %v307
        %v388 = vsub.f32 %v380, %v308
        %v389 = vsub.f32 %v381, %v309
        %v390 = vsub.f32 %v382, %v310
        %v391 = vsub.f32 %v383, %v311
        %v392 = vsub.f32 %v384, %v312
        %v393 = vmul.f32 %v385, 0.5
        %v394 = vmul.f32 %v386, 0.5
        %v395 = vmul.f32 %v387, 0.5
        %v396 = vmul.f32 %v388, 0.5
        %v397 = vmul.f32 %v389, 0.5
        %v398 = vmul.f32 %v390, 0.5
        %v399 = vmul.f32 %v391, 0.5
        %v400 = vmul.f32 %v392, 0.5
        %v401 = vsub.f32 %v369, %v296
        %v402 = vsub.f32 %v370, %v297
        %v403 = vsub.f32 %v371, %v298
        %v404 = vsub.f32 %v372, %v299
        %v405 = vsub.f32 %v373, %v300
        %v406 = vsub.f32 %v374, %v301
        %v407 = vsub.f32 %v375, %v302
        %v408 = vsub.f32 %v376, %v303
        %v409 = vadd.f32 %v401, %v305
        %v410 = vadd.f32 %v402, %v306
        %v411 = vadd.f32 %v403, %v307
        %v412 = vadd.f32 %v404, %v308
        %v413 = vadd.f32 %v405, %v309
        %v414 = vadd.f32 %v406, %v310
        %v415 = vadd.f32 %v407, %v311
        %v416 = vadd.f32 %v408, %v312
        %v417 = vmul.f32 %v409, 0.5
        %v418 = vmul.f32 %v410, 0.5
        %v419 = vmul.f32 %v411, 0.5
        %v420 = vmul.f32 %v412, 0.5
        %v421 = vmul.f32 %v413, 0.5
        %v422 = vmul.f32 %v414, 0.5
        %v423 = vmul.f32 %v415, 0.5
        %v424 = vmul.f32 %v416, 0.5
        %v433 = vshrl.u32 %v337, 13
        %v434 = vshrl.u32 %v338, 13
        %v435 = vshrl.u32 %v339, 13
        %v436 = vshrl.u32 %v340, 13
        %v437 = vshrl.u32 %v341, 13
        %v438 = vshrl.u32 %v342, 13
        %v439 = vshrl.u32 %v343, 13
        %v440 = vshrl.u32 %v344, 13
        %v441 = vand.u32 %v433, 1
        %v442 = vand.u32 %v434, 1
        %v443 = vand.u32 %v435, 1
        %v444 = vand.u32 %v436, 1
        %v445 = vand.u32 %v437, 1
        %v446 = vand.u32 %v438, 1
        %v447 = vand.u32 %v439, 1
        %v448 = vand.u32 %v440, 1
        %v449 = vadd.s32 %v337, %v441
        %v450 = vadd.s32 %v338, %v442
        %v451 = vadd.s32 %v339, %v443
        %v452 = vadd.s32 %v340, %v444
        %v453 = vadd.s32 %v341, %v445
        %v454 = vadd.s32 %v342, %v446
        %v455 = vadd.s32 %v343, %v447
        %v456 = vadd.s32 %v344, %v448
        %v457 = vadd.s32 %v449, 4095
        %v458 = vadd.s32 %v450, 4095
        %v459 = vadd.s32 %v451, 4095
        %v460 = vadd.s32 %v452, 4095
        %v461 = vadd.s32 %v453, 4095
        %v462 = vadd.s32 %v454, 4095
        %v463 = vadd.s32 %v455, 4095
        %v464 = vadd.s32 %v456, 4095
        %v465 = vand.u32 %v457, 4294959104
        %v466 = vand.u32 %v458, 4294959104
        %v467 = vand.u32 %v459, 4294959104
        %v468 = vand.u32 %v460, 4294959104
        %v469 = vand.u32 %v461, 4294959104
        %v470 = vand.u32 %v462, 4294959104
        %v471 = vand.u32 %v463, 4294959104
        %v472 = vand.u32 %v464, 4294959104
        %vm481 = vcmask 64512
        %482 = vst.msk [vmem:[%s276] sm:$0xff] %vm481, %v465
        %483 = vst.msk [vmem:[%s276 + $0x8] sm:$0xff] %vm481, %v466
        %484 = vst.msk [vmem:[%s276 + $0x10] sm:$0xff] %vm481, %v467
        %485 = vst.msk [vmem:[%s276 + $0x18] sm:$0xff] %vm481, %v468
        %486 = vst.msk [vmem:[%s276 + $0x20] sm:$0xff] %vm481, %v469
        %487 = vst.msk [vmem:[%s276 + $0x28] sm:$0xff] %vm481, %v470
        %488 = vst.msk [vmem:[%s276 + $0x30] sm:$0xff] %vm481, %v471
        %489 = vst.msk [vmem:[%s276 + $0x38] sm:$0xff] %vm481, %v472
        %v498 = vshrl.u32 %v361, 13
        %v499 = vshrl.u32 %v362, 13
        %v500 = vshrl.u32 %v363, 13
        %v501 = vshrl.u32 %v364, 13
        %v502 = vshrl.u32 %v365, 13
        %v503 = vshrl.u32 %v366, 13
        %v504 = vshrl.u32 %v367, 13
        %v505 = vshrl.u32 %v368, 13
        %v506 = vand.u32 %v498, 1
        %v507 = vand.u32 %v499, 1
        %v508 = vand.u32 %v500, 1
        %v509 = vand.u32 %v501, 1
        %v510 = vand.u32 %v502, 1
        %v511 = vand.u32 %v503, 1
        %v512 = vand.u32 %v504, 1
        %v513 = vand.u32 %v505, 1
        %v514 = vadd.s32 %v361, %v506
        %v515 = vadd.s32 %v362, %v507
        %v516 = vadd.s32 %v363, %v508
        %v517 = vadd.s32 %v364, %v509
        %v518 = vadd.s32 %v365, %v510
        %v519 = vadd.s32 %v366, %v511
        %v520 = vadd.s32 %v367, %v512
        %v521 = vadd.s32 %v368, %v513
        %v522 = vadd.s32 %v514, 4095
        %v523 = vadd.s32 %v515, 4095
        %v524 = vadd.s32 %v516, 4095
        %v525 = vadd.s32 %v517, 4095
        %v526 = vadd.s32 %v518, 4095
        %v527 = vadd.s32 %v519, 4095
        %v528 = vadd.s32 %v520, 4095
        %v529 = vadd.s32 %v521, 4095
        %v530 = vand.u32 %v522, 4294959104
        %v531 = vand.u32 %v523, 4294959104
        %v532 = vand.u32 %v524, 4294959104
        %v533 = vand.u32 %v525, 4294959104
        %v534 = vand.u32 %v526, 4294959104
        %v535 = vand.u32 %v527, 4294959104
        %v536 = vand.u32 %v528, 4294959104
        %v537 = vand.u32 %v529, 4294959104
        %538 = vrot.lane.b32.xlu0 %v530, 8
        %v539 = vpop.permute.xlu0 %538
        %540 = vrot.lane.b32.xlu0 %v531, 8
        %v541 = vpop.permute.xlu0 %540
        %542 = vrot.lane.b32.xlu0 %v532, 8
        %v543 = vpop.permute.xlu0 %542
        %544 = vrot.lane.b32.xlu0 %v533, 8
        %v545 = vpop.permute.xlu0 %544
        %546 = vrot.lane.b32.xlu0 %v534, 8
        %v547 = vpop.permute.xlu0 %546
        %548 = vrot.lane.b32.xlu0 %v535, 8
        %v549 = vpop.permute.xlu0 %548
        %550 = vrot.lane.b32.xlu0 %v536, 8
        %v551 = vpop.permute.xlu0 %550
        %552 = vrot.lane.b32.xlu0 %v537, 8
        %v553 = vpop.permute.xlu0 %552
        %vm562 = vcmask 130112
        %563 = vst.msk [vmem:[%s276] sm:$0xff] %vm562, %v539
        %564 = vst.msk [vmem:[%s276 + $0x8] sm:$0xff] %vm562, %v541
        %565 = vst.msk [vmem:[%s276 + $0x10] sm:$0xff] %vm562, %v543
        %566 = vst.msk [vmem:[%s276 + $0x18] sm:$0xff] %vm562, %v545
        %567 = vst.msk [vmem:[%s276 + $0x20] sm:$0xff] %vm562, %v547
        %568 = vst.msk [vmem:[%s276 + $0x28] sm:$0xff] %vm562, %v549
        %569 = vst.msk [vmem:[%s276 + $0x30] sm:$0xff] %vm562, %v551
        %570 = vst.msk [vmem:[%s276 + $0x38] sm:$0xff] %vm562, %v553
        %v579 = vshrl.u32 %v393, 13
        %v580 = vshrl.u32 %v394, 13
        %v581 = vshrl.u32 %v395, 13
        %v582 = vshrl.u32 %v396, 13
        %v583 = vshrl.u32 %v397, 13
        %v584 = vshrl.u32 %v398, 13
        %v585 = vshrl.u32 %v399, 13
        %v586 = vshrl.u32 %v400, 13
        %v587 = vand.u32 %v579, 1
        %v588 = vand.u32 %v580, 1
        %v589 = vand.u32 %v581, 1
        %v590 = vand.u32 %v582, 1
        %v591 = vand.u32 %v583, 1
        %v592 = vand.u32 %v584, 1
        %v593 = vand.u32 %v585, 1
        %v594 = vand.u32 %v586, 1
        %v595 = vadd.s32 %v393, %v587
        %v596 = vadd.s32 %v394, %v588
        %v597 = vadd.s32 %v395, %v589
        %v598 = vadd.s32 %v396, %v590
        %v599 = vadd.s32 %v397, %v591
        %v600 = vadd.s32 %v398, %v592
        %v601 = vadd.s32 %v399, %v593
        %v602 = vadd.s32 %v400, %v594
        %v603 = vadd.s32 %v595, 4095
        %v604 = vadd.s32 %v596, 4095
        %v605 = vadd.s32 %v597, 4095
        %v606 = vadd.s32 %v598, 4095
        %v607 = vadd.s32 %v599, 4095
        %v608 = vadd.s32 %v600, 4095
        %v609 = vadd.s32 %v601, 4095
        %v610 = vadd.s32 %v602, 4095
        %v611 = vand.u32 %v603, 4294959104
        %v612 = vand.u32 %v604, 4294959104
        %v613 = vand.u32 %v605, 4294959104
        %v614 = vand.u32 %v606, 4294959104
        %v615 = vand.u32 %v607, 4294959104
        %v616 = vand.u32 %v608, 4294959104
        %v617 = vand.u32 %v609, 4294959104
        %v618 = vand.u32 %v610, 4294959104
        %619 = vrot.lane.b32.xlu0 %v611, 16
        %v620 = vpop.permute.xlu0 %619
        %621 = vrot.lane.b32.xlu0 %v612, 16
        %v622 = vpop.permute.xlu0 %621
        %623 = vrot.lane.b32.xlu0 %v613, 16
        %v624 = vpop.permute.xlu0 %623
        %625 = vrot.lane.b32.xlu0 %v614, 16
        %v626 = vpop.permute.xlu0 %625
        %627 = vrot.lane.b32.xlu0 %v615, 16
        %v628 = vpop.permute.xlu0 %627
        %629 = vrot.lane.b32.xlu0 %v616, 16
        %v630 = vpop.permute.xlu0 %629
        %631 = vrot.lane.b32.xlu0 %v617, 16
        %v632 = vpop.permute.xlu0 %631
        %633 = vrot.lane.b32.xlu0 %v618, 16
        %v634 = vpop.permute.xlu0 %633
        %vm643 = vcmask 195712
        %644 = vst.msk [vmem:[%s276] sm:$0xff] %vm643, %v620
        %645 = vst.msk [vmem:[%s276 + $0x8] sm:$0xff] %vm643, %v622
        %646 = vst.msk [vmem:[%s276 + $0x10] sm:$0xff] %vm643, %v624
        %647 = vst.msk [vmem:[%s276 + $0x18] sm:$0xff] %vm643, %v626
        %648 = vst.msk [vmem:[%s276 + $0x20] sm:$0xff] %vm643, %v628
        %649 = vst.msk [vmem:[%s276 + $0x28] sm:$0xff] %vm643, %v630
        %650 = vst.msk [vmem:[%s276 + $0x30] sm:$0xff] %vm643, %v632
        %651 = vst.msk [vmem:[%s276 + $0x38] sm:$0xff] %vm643, %v634
        %v660 = vshrl.u32 %v417, 13
        %v661 = vshrl.u32 %v418, 13
        %v662 = vshrl.u32 %v419, 13
        %v663 = vshrl.u32 %v420, 13
        %v664 = vshrl.u32 %v421, 13
        %v665 = vshrl.u32 %v422, 13
        %v666 = vshrl.u32 %v423, 13
        %v667 = vshrl.u32 %v424, 13
        %v668 = vand.u32 %v660, 1
        %v669 = vand.u32 %v661, 1
        %v670 = vand.u32 %v662, 1
        %v671 = vand.u32 %v663, 1
        %v672 = vand.u32 %v664, 1
        %v673 = vand.u32 %v665, 1
        %v674 = vand.u32 %v666, 1
        %v675 = vand.u32 %v667, 1
        %v676 = vadd.s32 %v417, %v668
        %v677 = vadd.s32 %v418, %v669
        %v678 = vadd.s32 %v419, %v670
        %v679 = vadd.s32 %v420, %v671
        %v680 = vadd.s32 %v421, %v672
        %v681 = vadd.s32 %v422, %v673
        %v682 = vadd.s32 %v423, %v674
        %v683 = vadd.s32 %v424, %v675
        %v684 = vadd.s32 %v676, 4095
        %v685 = vadd.s32 %v677, 4095
        %v686 = vadd.s32 %v678, 4095
        %v687 = vadd.s32 %v679, 4095
        %v688 = vadd.s32 %v680, 4095
        %v689 = vadd.s32 %v681, 4095
        %v690 = vadd.s32 %v682, 4095
        %v691 = vadd.s32 %v683, 4095
        %v692 = vand.u32 %v684, 4294959104
        %v693 = vand.u32 %v685, 4294959104
        %v694 = vand.u32 %v686, 4294959104
        %v695 = vand.u32 %v687, 4294959104
        %v696 = vand.u32 %v688, 4294959104
        %v697 = vand.u32 %v689, 4294959104
        %v698 = vand.u32 %v690, 4294959104
        %v699 = vand.u32 %v691, 4294959104
        %700 = vrot.lane.b32.xlu0 %v692, 24
        %v701 = vpop.permute.xlu0 %700
        %702 = vrot.lane.b32.xlu0 %v693, 24
        %v703 = vpop.permute.xlu0 %702
        %704 = vrot.lane.b32.xlu0 %v694, 24
        %v705 = vpop.permute.xlu0 %704
        %706 = vrot.lane.b32.xlu0 %v695, 24
        %v707 = vpop.permute.xlu0 %706
        %708 = vrot.lane.b32.xlu0 %v696, 24
        %v709 = vpop.permute.xlu0 %708
        %710 = vrot.lane.b32.xlu0 %v697, 24
        %v711 = vpop.permute.xlu0 %710
        %712 = vrot.lane.b32.xlu0 %v698, 24
        %v713 = vpop.permute.xlu0 %712
        %714 = vrot.lane.b32.xlu0 %v699, 24
        %v715 = vpop.permute.xlu0 %714
        %vm724 = vcmask 261312
        %725 = vst.msk [vmem:[%s276] sm:$0xff] %vm724, %v701
        %726 = vst.msk [vmem:[%s276 + $0x8] sm:$0xff] %vm724, %v703
        %727 = vst.msk [vmem:[%s276 + $0x10] sm:$0xff] %vm724, %v705
        %728 = vst.msk [vmem:[%s276 + $0x18] sm:$0xff] %vm724, %v707
        %729 = vst.msk [vmem:[%s276 + $0x20] sm:$0xff] %vm724, %v709
        %730 = vst.msk [vmem:[%s276 + $0x28] sm:$0xff] %vm724, %v711
        %731 = vst.msk [vmem:[%s276 + $0x30] sm:$0xff] %vm724, %v713
        %732 = vst.msk [vmem:[%s276 + $0x38] sm:$0xff] %vm724, %v715
        %s733 = smul.u32 8, %s12
        %p734 = scmp.lt.s32.totalorder %s733, 15
        %s735 = scalar_select %p734, %s733, 15
        %s736 = smul.addr %s735, 8
        %s737 = scalar_lea.vmem %s1, %s736
        // Predicated region
        $region63: #{wave_attention_forward.7} parent=57 // pred_check
          %p738 = pneg %p56
        $region64: #{wave_attention_forward.7} parent=57 // pred_check_branch
          %740 = sbr.rel (%p738) target = $region66
        $region65: #{wave_attention_forward.7} parent=57 // pred_region
          %s741 = smul.u32 8, %s12
        $region66: #{wave_attention_forward.7} parent=57 // pred_fallthru
          _
      $region58: #{wave_attention_forward.7} parent=5 // pred_fallthru
        _
      %p742 = scmp.le.s32.totalorder 2, %s7
      // Predicated region
      $region67: #{wave_attention_forward.7} parent=5 // pred_check
        %p743 = pneg %p742
      $region68: #{wave_attention_forward.7} parent=5 // pred_check_branch
        %745 = sbr.rel (%p743) target = $region70
      $region69: #{wave_attention_forward.7} parent=5 // pred_region
        %s746 = ssub.s32 %s7, 2
        // Predicated region
        $region71: #{wave_attention_forward.7} parent=69 // pred_check
          %p747 = pneg %p62
        $region72: #{wave_attention_forward.7} parent=69 // pred_check_branch
          %749 = sbr.rel (%p747) target = $region74
        $region73: #{wave_attention_forward.7} parent=69 // pred_region
          %s750 = smul.u32 8, %s13
          %p751 = scmp.lt.s32.totalorder %s750, 15
          %s752 = scalar_select %p751, %s750, 15
          %s753 = smul.addr %s752, 8
          %s754 = scalar_lea.vmem %s1, %s753
        $region74: #{wave_attention_forward.7} parent=69 // pred_fallthru
          _
      $region70: #{wave_attention_forward.7} parent=5 // pred_fallthru
        _
    $region6: #{wave_attention_forward.7} parent=1 // loop_footer
      %s11 = sadd.s32 1, %s7
    $region7: #{wave_attention_forward.7} parent=1 // loop_footer_branch
      %6 = sbr.rel target = $region3
    $region8: #{wave_attention_forward.7} parent=1 // loop_exit
      _

// kernel: wave_attention_forward.6
$region0: #{wave_attention_forward.6}
  #allocation0 [shape = 'u32[]', space=smem, size = 0x4, offset = 0x4, fixed_abs, tag = 'smem constant byte address 0x4 - core index']
  #allocation1 [shape = 'u32[144,128]{1,0:T(1,128)}', space=vmem, size = 0x12000, scoped, tag = 'internal scratch']
  %s0 = inlined_call_operand.vmem [shape: f32[512,32], index: 0, kind: input, shape index: {}]
  %s1 = inlined_call_operand.vmem [shape: f32[32,40], index: 1, kind: input, shape index: {}]
  %s2 = inlined_call_operand.vmem [shape: f32[1,40], index: 2, kind: input, shape index: {}]
  %s3 = inlined_call_operand.vmem [shape: f32[512,32], index: 3, kind: output, shape index: {0}]
  %s4 = inlined_call_operand.vmem [shape: f32[512,8], index: 4, kind: output, shape index: {1}]
  %5 = xla_tuple %s3, %s4
  %s6 = sld [smem:[#allocation0]]
  $region53: #{wave_attention_forward.6} parent=0
    _
  %s8 = ssub.s32 1, %s6
  %s9 = scalar_select 0, %s8, %s6
  loop: start=0, step=1, limit=4
  $region2: #{wave_attention_forward.6} parent=0 // loop_pre_header
    _
  $region3: #{wave_attention_forward.6} parent=0 // loop_header
    %s11 = sphi 0, %s15
    %p12 = scmp.ge.s32.totalorder %s11, 4
    %s21 = sphi 0, %s23
    %s24 = sphi 0, %s21
    %s25 = sphi 0, %s24
    %s41 = sphi 0, %s25
    %s45 = sphi 0, %s45
    %s47 = sphi 0, %s45
    %s48 = sphi 0, %s47
    %s62 = sphi 0, %s48
    %s66 = sphi 0, %s66
    %s68 = sphi 0, %s66
    %s69 = sphi 0, %s68
    %s83 = sphi 0, %s69
    %s89 = sphi 0, %s91
    %s92 = sphi 0, %s89
    %s93 = sphi 0, %s92
    %s109 = sphi 0, %s93
    %s115 = sphi 0, %s117
    %s118 = sphi 0, %s115
    %s119 = sphi 0, %s118
    %s135 = sphi 0, %s119
  $region4: #{wave_attention_forward.6} parent=0 // loop_header_branch
    %14 = sbr.rel (%p12) target = $region8
  $region5: #{wave_attention_forward.6} parent=0 // loop_body
    %s16 = ssub.s32 %s11, 1
    %s17 = ssub.s32 %s11, 2
    %s18 = sadd.s32 %s11, 1
    %s19 = ssub.s32 %s11, %s18
    %p20 = scmp.eq.s32.totalorder %s19, 0
    %s22 = sadd.s32 %s21, 1
    %s23 = scalar_select %p20, %s21, %s22
    %p26 = pneg %p20
    %p27 = scmp.eq.s32.totalorder %s11, 1
    %p28 = por %p26, %p27
    %p29 = scmp.ne.s32.totalorder %s21, %s24
    %p30 = scmp.eq.s32.totalorder %s11, 0
    %p31 = por %p29, %p30
    %p32 = scmp.ne.s32.totalorder %s21, %s24
    %p33 = scmp.eq.s32.totalorder %s16, 1
    %p34 = por %p32, %p33
    %p35 = scmp.ne.s32.totalorder %s24, %s25
    %p36 = scmp.eq.s32.totalorder %s16, 0
    %p37 = por %p35, %p36
    %p38 = scmp.ne.s32.totalorder %s24, %s25
    %p39 = scmp.eq.s32.totalorder %s17, 1
    %p40 = por %p38, %p39
    %p42 = scmp.ne.s32.totalorder %s25, %s41
    %p43 = scmp.eq.s32.totalorder %s17, 0
    %p44 = por %p42, %p43
    %s46 = sadd.s32 %s45, 1
    %p49 = scmp.eq.s32.totalorder %s11, 1
    %p50 = scmp.ne.s32.totalorder %s45, %s47
    %p51 = scmp.eq.s32.totalorder %s11, 0
    %p52 = por %p50, %p51
    %p53 = scmp.ne.s32.totalorder %s45, %s47
    %p54 = scmp.eq.s32.totalorder %s16, 1
    %p55 = por %p53, %p54
    %p56 = scmp.ne.s32.totalorder %s47, %s48
    %p57 = scmp.eq.s32.totalorder %s16, 0
    %p58 = por %p56, %p57
    %p59 = scmp.ne.s32.totalorder %s47, %s48
    %p60 = scmp.eq.s32.totalorder %s17, 1
    %p61 = por %p59, %p60
    %p63 = scmp.ne.s32.totalorder %s48, %s62
    %p64 = scmp.eq.s32.totalorder %s17, 0
    %p65 = por %p63, %p64
    %s67 = sadd.s32 %s66, 1
    %p70 = scmp.eq.s32.totalorder %s11, 1
    %p71 = scmp.ne.s32.totalorder %s66, %s68
    %p72 = scmp.eq.s32.totalorder %s11, 0
    %p73 = por %p71, %p72
    %p74 = scmp.ne.s32.totalorder %s66, %s68
    %p75 = scmp.eq.s32.totalorder %s16, 1
    %p76 = por %p74, %p75
    %p77 = scmp.ne.s32.totalorder %s68, %s69
    %p78 = scmp.eq.s32.totalorder %s16, 0
    %p79 = por %p77, %p78
    %p80 = scmp.ne.s32.totalorder %s68, %s69
    %p81 = scmp.eq.s32.totalorder %s17, 1
    %p82 = por %p80, %p81
    %p84 = scmp.ne.s32.totalorder %s69, %s83
    %p85 = scmp.eq.s32.totalorder %s17, 0
    %p86 = por %p84, %p85
    %s87 = ssub.s32 %s11, %s18
    %p88 = scmp.eq.s32.totalorder %s87, 0
    %s90 = sadd.s32 %s89, 1
    %s91 = scalar_select %p88, %s89, %s90
    %p94 = pneg %p88
    %p95 = scmp.eq.s32.totalorder %s11, 1
    %p96 = por %p94, %p95
    %p97 = scmp.ne.s32.totalorder %s89, %s92
    %p98 = scmp.eq.s32.totalorder %s11, 0
    %p99 = por %p97, %p98
    %p100 = scmp.ne.s32.totalorder %s89, %s92
    %p101 = scmp.eq.s32.totalorder %s16, 1
    %p102 = por %p100, %p101
    %p103 = scmp.ne.s32.totalorder %s92, %s93
    %p104 = scmp.eq.s32.totalorder %s16, 0
    %p105 = por %p103, %p104
    %p106 = scmp.ne.s32.totalorder %s92, %s93
    %p107 = scmp.eq.s32.totalorder %s17, 1
    %p108 = por %p106, %p107
    %p110 = scmp.ne.s32.totalorder %s93, %s109
    %p111 = scmp.eq.s32.totalorder %s17, 0
    %p112 = por %p110, %p111
    %s113 = ssub.s32 %s11, %s18
    %p114 = scmp.eq.s32.totalorder %s113, 0
    %s116 = sadd.s32 %s115, 1
    %s117 = scalar_select %p114, %s115, %s116
    %p120 = pneg %p114
    %p121 = scmp.eq.s32.totalorder %s11, 1
    %p122 = por %p120, %p121
    %p123 = scmp.ne.s32.totalorder %s115, %s118
    %p124 = scmp.eq.s32.totalorder %s11, 0
    %p125 = por %p123, %p124
    %p126 = scmp.ne.s32.totalorder %s115, %s118
    %p127 = scmp.eq.s32.totalorder %s16, 1
    %p128 = por %p126, %p127
    %p129 = scmp.ne.s32.totalorder %s118, %s119
    %p130 = scmp.eq.s32.totalorder %s16, 0
    %p131 = por %p129, %p130
    %p132 = scmp.ne.s32.totalorder %s118, %s119
    %p133 = scmp.eq.s32.totalorder %s17, 1
    %p134 = por %p132, %p133
    %p136 = scmp.ne.s32.totalorder %s119, %s135
    %p137 = scmp.eq.s32.totalorder %s17, 0
    %p138 = por %p136, %p137
    %p139 = scmp.le.s32.totalorder 1, %s11
    %p140 = scmp.lt.s32.totalorder %s11, 3
    %p141 = pnand %p139, %p140
    %p142 = pneg %p141
    // Predicated region
    $region9: #{wave_attention_forward.6} parent=5 // pred_check
      _
    $region10: #{wave_attention_forward.6} parent=5 // pred_check_branch
      %144 = sbr.rel (%p141) target = $region12
    $region11: #{wave_attention_forward.6} parent=5 // pred_region
      %s145 = ssub.s32 %s11, 1
      // Predicated region
      $region13: #{wave_attention_forward.6} parent=11 // pred_check
        %p146 = pneg %p58
      $region14: #{wave_attention_forward.6} parent=11 // pred_check_branch
        %148 = sbr.rel (%p146) target = $region16
      $region15: #{wave_attention_forward.6} parent=11 // pred_region
        _
      $region16: #{wave_attention_forward.6} parent=11 // pred_fallthru
        _
      // Predicated region
      $region17: #{wave_attention_forward.6} parent=11 // pred_check
        %p149 = pneg %p79
      $region18: #{wave_attention_forward.6} parent=11 // pred_check_branch
        %151 = sbr.rel (%p149) target = $region20
      $region19: #{wave_attention_forward.6} parent=11 // pred_region
        _
      $region20: #{wave_attention_forward.6} parent=11 // pred_fallthru
        _
    $region12: #{wave_attention_forward.6} parent=5 // pred_fallthru
      _
    %p152 = scmp.lt.s32.totalorder %s11, 2
    // Predicated region
    $region21: #{wave_attention_forward.6} parent=5 // pred_check
      %p153 = pneg %p152
    $region22: #{wave_attention_forward.6} parent=5 // pred_check_branch
      %155 = sbr.rel (%p153) target = $region24
    $region23: #{wave_attention_forward.6} parent=5 // pred_region
      // Predicated region
      $region25: #{wave_attention_forward.6} parent=23 // pred_check
        %p156 = pneg %p31
      $region26: #{wave_attention_forward.6} parent=23 // pred_check_branch
        %158 = sbr.rel (%p156) target = $region28
      $region27: #{wave_attention_forward.6} parent=23 // pred_region
        %s159 = smul.u32 32, %s11
        %p160 = scmp.lt.s32.totalorder %s159, 63
        %s161 = scalar_select %p160, %s159, 63
        %s162 = smul.addr %s161, 8
        %s163 = scalar_lea.vmem %s0, %s162
        %s164 = smul.u32 32, %s11
      $region28: #{wave_attention_forward.6} parent=23 // pred_fallthru
        _
    $region24: #{wave_attention_forward.6} parent=5 // pred_fallthru
      _
    %p165 = scmp.le.s32.totalorder 1, %s11
    %p166 = scmp.lt.s32.totalorder %s11, 3
    %p167 = pnand %p165, %p166
    %p168 = pneg %p167
    // Predicated region
    $region29: #{wave_attention_forward.6} parent=5 // pred_check
      _
    $region30: #{wave_attention_forward.6} parent=5 // pred_check_branch
      %170 = sbr.rel (%p167) target = $region32
    $region31: #{wave_attention_forward.6} parent=5 // pred_region
      %s171 = ssub.s32 %s11, 1
      %s172 = smul.u32 32, %s16
      %p173 = scmp.lt.s32.totalorder %s172, 63
      %s174 = scalar_select %p173, %s172, 63
      %s175 = smul.addr %s174, 8
      %s176 = scalar_lea.vmem %s0, %s175
      %p177 = pneg %p37
      %p178 = pneg %p34
      %p179 = pneg %p58
      %p180 = pneg %p55
      %p181 = pneg %p79
      %p182 = pneg %p76
      %p183 = pneg %p105
      %p184 = pneg %p102
      %s185 = smul.u32 32, %s16
      %p186 = scmp.lt.s32.totalorder %s185, 63
      %s187 = scalar_select %p186, %s185, 63
      %s188 = smul.addr %s187, 8
      %s189 = scalar_lea.vmem %s3, %s188
      %p190 = pneg %p131
      %p191 = pneg %p128
      %s192 = smul.u32 32, %s16
      %p193 = scmp.lt.s32.totalorder %s192, 63
      %s194 = scalar_select %p193, %s192, 63
      %s195 = smul.addr %s194, 8
      %s196 = scalar_lea.vmem %s4, %s195
      %s197 = smul.u32 32, %s16
      %p198 = scmp.lt.s32.totalorder %s197, 63
      %s199 = scalar_select %p198, %s197, 63
      %s200 = smul.addr %s199, 8
      %s201 = scalar_lea.vmem %s0, %s200
      %s202 = smul.u32 32, %s16
      %s203 = smul.u32 32, %s16
      %p204 = scmp.lt.s32.totalorder %s203, 63
      %s205 = scalar_select %p204, %s203, 63
      %s206 = smul.addr %s205, 8
      %s207 = scalar_lea.vmem %s3, %s206
      %s208 = smul.u32 32, %s16
      %s209 = smul.u32 32, %s16
      %p210 = scmp.lt.s32.totalorder %s209, 63
      %s211 = scalar_select %p210, %s209, 63
      %s212 = smul.addr %s211, 8
      %s213 = scalar_lea.vmem %s4, %s212
      %s214 = smul.u32 32, %s16
      %v215 = vld [vmem:[%s201] sm:$0xff]
      %v216 = vld [vmem:[%s201 + $0x8] sm:$0xff]
      %v217 = vld [vmem:[%s201 + $0x10] sm:$0xff]
      %v218 = vld [vmem:[%s201 + $0x18] sm:$0xff]
      %v219 = vld [vmem:[%s201 + $0x20] sm:$0xff]
      %v220 = vld [vmem:[%s201 + $0x28] sm:$0xff]
      %v221 = vld [vmem:[%s201 + $0x30] sm:$0xff]
      %v222 = vld [vmem:[%s201 + $0x38] sm:$0xff]
      %v223 = vld [vmem:[%s201 + $0x40] sm:$0xff]
      %v224 = vld [vmem:[%s201 + $0x48] sm:$0xff]
      %v225 = vld [vmem:[%s201 + $0x50] sm:$0xff]
      %v226 = vld [vmem:[%s201 + $0x58] sm:$0xff]
      %v227 = vld [vmem:[%s201 + $0x60] sm:$0xff]
      %v228 = vld [vmem:[%s201 + $0x68] sm:$0xff]
      %v229 = vld [vmem:[%s201 + $0x70] sm:$0xff]
      %v230 = vld [vmem:[%s201 + $0x78] sm:$0xff]
      %v231 = vld [vmem:[%s201 + $0x80] sm:$0xff]
      %v232 = vld [vmem:[%s201 + $0x88] sm:$0xff]
      %v233 = vld [vmem:[%s201 + $0x90] sm:$0xff]
      %v234 = vld [vmem:[%s201 + $0x98] sm:$0xff]
      %v235 = vld [vmem:[%s201 + $0xa0] sm:$0xff]
      %v236 = vld [vmem:[%s201 + $0xa8] sm:$0xff]
      %v237 = vld [vmem:[%s201 + $0xb0] sm:$0xff]
      %v238 = vld [vmem:[%s201 + $0xb8] sm:$0xff]
      %v239 = vld [vmem:[%s201 + $0xc0] sm:$0xff]
      %v240 = vld [vmem:[%s201 + $0xc8] sm:$0xff]
      %v241 = vld [vmem:[%s201 + $0xd0] sm:$0xff]
      %v242 = vld [vmem:[%s201 + $0xd8] sm:$0xff]
      %v243 = vld [vmem:[%s201 + $0xe0] sm:$0xff]
      %v244 = vld [vmem:[%s201 + $0xe8] sm:$0xff]
      %v245 = vld [vmem:[%s201 + $0xf0] sm:$0xff]
      %v246 = vld [vmem:[%s201 + $0xf8] sm:$0xff]
      %v247 = vld [vmem:[%s1] sm:$0xff]
      %v248 = vld [vmem:[%s1 + $0x8] sm:$0xff]
      %v249 = vld [vmem:[%s1 + $0x10] sm:$0xff]
      %v250 = vld [vmem:[%s1 + $0x18] sm:$0xff]
      %v251 = vld [vmem:[%s2] sm:$0x1]
      %v253 = vlaneseq
      %v254 = vshrl.u32 %v253, 7
      %v255 = vsub.s32 0, %v254
      %v256 = vrot.slane %v251, %v255
      %vm258 = vcmask 261120
      %v260 = vsel %vm258, %v215, 0
      %v263 = vsel %vm258, %v216, 0
      %v266 = vsel %vm258, %v217, 0
      %v269 = vsel %vm258, %v218, 0
      %v272 = vsel %vm258, %v219, 0
      %v275 = vsel %vm258, %v220, 0
      %v278 = vsel %vm258, %v221, 0
      %v281 = vsel %vm258, %v222, 0
      %v284 = vsel %vm258, %v223, 0
      %v287 = vsel %vm258, %v224, 0
      %v290 = vsel %vm258, %v225, 0
      %v293 = vsel %vm258, %v226, 0
      %v296 = vsel %vm258, %v227, 0
      %v299 = vsel %vm258, %v228, 0
      %v302 = vsel %vm258, %v229, 0
      %v305 = vsel %vm258, %v230, 0
      %v308 = vsel %vm258, %v231, 0
      %v311 = vsel %vm258, %v232, 0
      %v314 = vsel %vm258, %v233, 0
      %v317 = vsel %vm258, %v234, 0
      %v320 = vsel %vm258, %v235, 0
      %v323 = vsel %vm258, %v236, 0
      %v326 = vsel %vm258, %v237, 0
      %v329 = vsel %vm258, %v238, 0
      %v332 = vsel %vm258, %v239, 0
      %v335 = vsel %vm258, %v240, 0
      %v338 = vsel %vm258, %v241, 0
      %v341 = vsel %vm258, %v242, 0
      %v344 = vsel %vm258, %v243, 0
      %v347 = vsel %vm258, %v244, 0
      %v350 = vsel %vm258, %v245, 0
      %v353 = vsel %vm258, %v246, 0
      %355 = vmatprep.subr.mxu0 0.0
      %356 = vmatpush1.msra.mxu0 %v247
      %357 = vmatprep.subr.mxu0 0.0
      %358 = vmatpush1.msra.mxu0 %v248
      %359 = vmatprep.subr.mxu0 0.0
      %360 = vmatpush1.msra.mxu0 %v249
      %361 = vmatprep.subr.mxu0 0.0
      %362 = vmatpush1.msra.mxu0 %v250
      %363 = vmatprep.subr.mxu0 0.0
      %364 = vmatpush1.msra.mxu0 0.0
      %365 = vmatprep.subr.mxu0 0.0
      %366 = vmatpush1.msra.mxu0 0.0
      %367 = vmatprep.subr.mxu0 0.0
      %368 = vmatpush1.msra.mxu0 0.0
      %369 = vmatprep.subr.mxu0 0.0
      %370 = vmatpush1.msra.mxu0 0.0
      %371 = vmatprep.subr.mxu0 0.0
      %372 = vmatpush1.msra.mxu0 0.0
      %373 = vmatprep.subr.mxu0 0.0
      %374 = vmatpush1.msra.mxu0 0.0
      %375 = vmatprep.subr.mxu0 0.0
      %376 = vmatpush1.msra.mxu0 0.0
      %377 = vmatprep.subr.mxu0 0.0
      %378 = vmatpush1.msra.mxu0 0.0
      %379 = vmatprep.subr.mxu0 0.0
      %380 = vmatpush1.msra.mxu0 0.0
      %381 = vmatprep.subr.mxu0 0.0
      %382 = vmatpush1.msra.mxu0 0.0
      %383 = vmatprep.subr.mxu0 0.0
      %384 = vmatpush1.msra.mxu0 0.0
      %385 = vmatprep.subr.mxu0 0.0
      %386 = vmatpush1.msra.mxu0 0.0
      %387 = vmatprep.subr.mxu0 0.0
      %388 = vmatpush1.msra.mxu0 0.0
      %389 = vmatprep.subr.mxu0 0.0
      %390 = vmatpush1.msra.mxu0 0.0
      %391 = vmatprep.subr.mxu0 0.0
      %392 = vmatpush1.msra.mxu0 0.0
      %393 = vmatprep.subr.mxu0 0.0
      %394 = vmatpush1.msra.mxu0 0.0
      %395 = vmatprep.subr.mxu0 0.0
      %396 = vmatpush1.msra.mxu0 0.0
      %397 = vmatprep.subr.mxu0 0.0
      %398 = vmatpush1.msra.mxu0 0.0
      %399 = vmatprep.subr.mxu0 0.0
      %400 = vmatpush1.msra.mxu0 0.0
      %401 = vmatprep.subr.mxu0 0.0
      %402 = vmatpush1.msra.mxu0 0.0
      %403 = vmatprep.subr.mxu0 0.0
      %404 = vmatpush1.msra.mxu0 0.0
      %405 = vmatprep.subr.mxu0 0.0
      %406 = vmatpush1.msra.mxu0 0.0
      %407 = vmatprep.subr.mxu0 0.0
      %408 = vmatpush1.msra.mxu0 0.0
      %409 = vmatprep.subr.mxu0 0.0
      %410 = vmatpush1.msra.mxu0 0.0
      %411 = vmatprep.subr.mxu0 0.0
      %412 = vmatpush1.msra.mxu0 0.0
      %413 = vmatprep.subr.mxu0 0.0
      %414 = vmatpush1.msra.mxu0 0.0
      %415 = vmatprep.subr.mxu0 0.0
      %416 = vmatpush1.msra.mxu0 0.0
      %417 = vmatprep.subr.mxu0 0.0
      %418 = vmatpush1.msra.mxu0 0.0
      %419 = vmatprep.mubr.f32.mxu0 0.0
      %420 = vmatmul.mubr.f32.gmra.mrb[0].mxu0 %v260
      %v421 = vpop.f32.mrb[0].mxu0
      %v422 = vadd.f32 %v256, %v421
      %v423 = vpop.f32.mrb[0].mxu0
      %424 = vmatprep.mubr.f32.mxu0 0.0
      %425 = vmatmul.mubr.f32.gmra.mrb[0].mxu0 %v263
      %v426 = vpop.f32.mrb[0].mxu0
      %v427 = vadd.f32 %v256, %v426
      %v428 = vpop.f32.mrb[0].mxu0
      %429 = vmatprep.mubr.f32.mxu0 0.0
      %430 = vmatmul.mubr.f32.gmra.mrb[0].mxu0 %v266
      %v431 = vpop.f32.mrb[0].mxu0
      %v432 = vadd.f32 %v256, %v431
      %v433 = vpop.f32.mrb[0].mxu0
      %434 = vmatprep.mubr.f32.mxu0 0.0
      %435 = vmatmul.mubr.f32.gmra.mrb[0].mxu0 %v269
      %v436 = vpop.f32.mrb[0].mxu0
      %v437 = vadd.f32 %v256, %v436
      %v438 = vpop.f32.mrb[0].mxu0
      %439 = vmatprep.mubr.f32.mxu0 0.0
      %440 = vmatmul.mubr.f32.gmra.mrb[0].mxu0 %v272
      %v441 = vpop.f32.mrb[0].mxu0
      %v442 = vadd.f32 %v256, %v441
      %v443 = vpop.f32.mrb[0].mxu0
      %444 = vmatprep.mubr.f32.mxu0 0.0
      %445 = vmatmul.mubr.f32.gmra.mrb[0].mxu0 %v275
      %v446 = vpop.f32.mrb[0].mxu0
      %v447 = vadd.f32 %v256, %v446
      %v448 = vpop.f32.mrb[0].mxu0
      %449 = vmatprep.mubr.f32.mxu0 0.0
      %450 = vmatmul.mubr.f32.gmra.mrb[0].mxu0 %v278
      %v451 = vpop.f32.mrb[0].mxu0
      %v452 = vadd.f32 %v256, %v451
      %v453 = vpop.f32.mrb[0].mxu0
      %454 = vmatprep.mubr.f32.mxu0 0.0
      %455 = vmatmul.mubr.f32.gmra.mrb[0].mxu0 %v281
      %v456 = vpop.f32.mrb[0].mxu0
      %v457 = vadd.f32 %v256, %v456
      %v458 = vpop.f32.mrb[0].mxu0
      %459 = vmatprep.mubr.f32.mxu0 0.0
      %460 = vmatmul.mubr.f32.gmra.mrb[0].mxu0 %v284
      %v461 = vpop.f32.mrb[0].mxu0
      %v462 = vadd.f32 %v256, %v461
      %v463 = vpop.f32.mrb[0].mxu0
      %464 = vmatprep.mubr.f32.mxu0 0.0
      %465 = vmatmul.mubr.f32.gmra.mrb[0].mxu0 %v287
      %v466 = vpop.f32.mrb[0].mxu0
      %v467 = vadd.f32 %v256, %v466
      %v468 = vpop.f32.mrb[0].mxu0
      %469 = vmatprep.mubr.f32.mxu0 0.0
      %470 = vmatmul.mubr.f32.gmra.mrb[0].mxu0 %v290
      %v471 = vpop.f32.mrb[0].mxu0
      %v472 = vadd.f32 %v256, %v471
      %v473 = vpop.f32.mrb[0].mxu0
      %474 = vmatprep.mubr.f32.mxu0 0.0
      %475 = vmatmul.mubr.f32.gmra.mrb[0].mxu0 %v293
      %v476 = vpop.f32.mrb[0].mxu0
      %v477 = vadd.f32 %v256, %v476
      %v478 = vpop.f32.mrb[0].mxu0
      %479 = vmatprep.mubr.f32.mxu0 0.0
      %480 = vmatmul.mubr.f32.gmra.mrb[0].mxu0 %v296
      %v481 = vpop.f32.mrb[0].mxu0
      %v482 = vadd.f32 %v256, %v481
      %v483 = vpop.f32.mrb[0].mxu0
      %484 = vmatprep.mubr.f32.mxu0 0.0
      %485 = vmatmul.mubr.f32.gmra.mrb[0].mxu0 %v299
      %v486 = vpop.f32.mrb[0].mxu0
      %v487 = vadd.f32 %v256, %v486
      %v488 = vpop.f32.mrb[0].mxu0
      %489 = vmatprep.mubr.f32.mxu0 0.0
      %490 = vmatmul.mubr.f32.gmra.mrb[0].mxu0 %v302
      %v491 = vpop.f32.mrb[0].mxu0
      %v492 = vadd.f32 %v256, %v491
      %v493 = vpop.f32.mrb[0].mxu0
      %494 = vmatprep.mubr.f32.mxu0 0.0
      %495 = vmatmul.mubr.f32.gmra.mrb[0].mxu0 %v305
      %v496 = vpop.f32.mrb[0].mxu0
      %v497 = vadd.f32 %v256, %v496
      %v498 = vpop.f32.mrb[0].mxu0
      %499 = vmatprep.mubr.f32.mxu0 0.0
      %500 = vmatmul.mubr.f32.gmra.mrb[0].mxu0 %v308
      %v501 = vpop.f32.mrb[0].mxu0
      %v502 = vadd.f32 %v256, %v501
      %v503 = vpop.f32.mrb[0].mxu0
      %504 = vmatprep.mubr.f32.mxu0 0.0
      %505 = vmatmul.mubr.f32.gmra.mrb[0].mxu0 %v311
      %v506 = vpop.f32.mrb[0].mxu0
      %v507 = vadd.f32 %v256, %v506
      %v508 = vpop.f32.mrb[0].mxu0
      %509 = vmatprep.mubr.f32.mxu0 0.0
      %510 = vmatmul.mubr.f32.gmra.mrb[0].mxu0 %v314
      %v511 = vpop.f32.mrb[0].mxu0
      %v512 = vadd.f32 %v256, %v511
      %v513 = vpop.f32.mrb[0].mxu0
      %514 = vmatprep.mubr.f32.mxu0 0.0
      %515 = vmatmul.mubr.f32.gmra.mrb[0].mxu0 %v317
      %v516 = vpop.f32.mrb[0].mxu0
      %v517 = vadd.f32 %v256, %v516
      %v518 = vpop.f32.mrb[0].mxu0
      %519 = vmatprep.mubr.f32.mxu0 0.0
      %520 = vmatmul.mubr.f32.gmra.mrb[0].mxu0 %v320
      %v521 = vpop.f32.mrb[0].mxu0
      %v522 = vadd.f32 %v256, %v521
      %v523 = vpop.f32.mrb[0].mxu0
      %524 = vmatprep.mubr.f32.mxu0 0.0
      %525 = vmatmul.mubr.f32.gmra.mrb[0].mxu0 %v323
      %v526 = vpop.f32.mrb[0].mxu0
      %v527 = vadd.f32 %v256, %v526
      %v528 = vpop.f32.mrb[0].mxu0
      %529 = vmatprep.mubr.f32.mxu0 0.0
      %530 = vmatmul.mubr.f32.gmra.mrb[0].mxu0 %v326
      %v531 = vpop.f32.mrb[0].mxu0
      %v532 = vadd.f32 %v256, %v531
      %v533 = vpop.f32.mrb[0].mxu0
      %534 = vmatprep.mubr.f32.mxu0 0.0
      %535 = vmatmul.mubr.f32.gmra.mrb[0].mxu0 %v329
      %v536 = vpop.f32.mrb[0].mxu0
      %v537 = vadd.f32 %v256, %v536
      %v538 = vpop.f32.mrb[0].mxu0
      %539 = vmatprep.mubr.f32.mxu0 0.0
      %540 = vmatmul.mubr.f32.gmra.mrb[0].mxu0 %v332
      %v541 = vpop.f32.mrb[0].mxu0
      %v542 = vadd.f32 %v256, %v541
      %v543 = vpop.f32.mrb[0].mxu0
      %544 = vmatprep.mubr.f32.mxu0 0.0
      %545 = vmatmul.mubr.f32.gmra.mrb[0].mxu0 %v335
      %v546 = vpop.f32.mrb[0].mxu0
      %v547 = vadd.f32 %v256, %v546
      %v548 = vpop.f32.mrb[0].mxu0
      %549 = vmatprep.mubr.f32.mxu0 0.0
      %550 = vmatmul.mubr.f32.gmra.mrb[0].mxu0 %v338
      %v551 = vpop.f32.mrb[0].mxu0
      %v552 = vadd.f32 %v256, %v551
      %v553 = vpop.f32.mrb[0].mxu0
      %554 = vmatprep.mubr.f32.mxu0 0.0
      %555 = vmatmul.mubr.f32.gmra.mrb[0].mxu0 %v341
      %v556 = vpop.f32.mrb[0].mxu0
      %v557 = vadd.f32 %v256, %v556
      %v558 = vpop.f32.mrb[0].mxu0
      %559 = vmatprep.mubr.f32.mxu0 0.0
      %560 = vmatmul.mubr.f32.gmra.mrb[0].mxu0 %v344
      %v561 = vpop.f32.mrb[0].mxu0
      %v562 = vadd.f32 %v256, %v561
      %v563 = vpop.f32.mrb[0].mxu0
      %564 = vmatprep.mubr.f32.mxu0 0.0
      %565 = vmatmul.mubr.f32.gmra.mrb[0].mxu0 %v347
      %v566 = vpop.f32.mrb[0].mxu0
      %v567 = vadd.f32 %v256, %v566
      %v568 = vpop.f32.mrb[0].mxu0
      %569 = vmatprep.mubr.f32.mxu0 0.0
      %570 = vmatmul.mubr.f32.gmra.mrb[0].mxu0 %v350
      %v571 = vpop.f32.mrb[0].mxu0
      %v572 = vadd.f32 %v256, %v571
      %v573 = vpop.f32.mrb[0].mxu0
      %574 = vmatprep.mubr.f32.mxu0 0.0
      %575 = vmatmul.mubr.f32.gmra.mrb[0].mxu0 %v353
      %v576 = vpop.f32.mrb[0].mxu0
      %v577 = vadd.f32 %v256, %v576
      %v578 = vpop.f32.mrb[0].mxu0
      %579 = vdwg.mxu0
      %580 = vst.msk [vmem:[%s207] sm:$0xff] %vm258, %v422
      %581 = vst.msk [vmem:[%s207 + $0x8] sm:$0xff] %vm258, %v427
      %582 = vst.msk [vmem:[%s207 + $0x10] sm:$0xff] %vm258, %v432
      %583 = vst.msk [vmem:[%s207 + $0x18] sm:$0xff] %vm258, %v437
      %584 = vst.msk [vmem:[%s207 + $0x20] sm:$0xff] %vm258, %v442
      %585 = vst.msk [vmem:[%s207 + $0x28] sm:$0xff] %vm258, %v447
      %586 = vst.msk [vmem:[%s207 + $0x30] sm:$0xff] %vm258, %v452
      %587 = vst.msk [vmem:[%s207 + $0x38] sm:$0xff] %vm258, %v457
      %588 = vst.msk [vmem:[%s207 + $0x40] sm:$0xff] %vm258, %v462
      %589 = vst.msk [vmem:[%s207 + $0x48] sm:$0xff] %vm258, %v467
      %590 = vst.msk [vmem:[%s207 + $0x50] sm:$0xff] %vm258, %v472
      %591 = vst.msk [vmem:[%s207 + $0x58] sm:$0xff] %vm258, %v477
      %592 = vst.msk [vmem:[%s207 + $0x60] sm:$0xff] %vm258, %v482
      %593 = vst.msk [vmem:[%s207 + $0x68] sm:$0xff] %vm258, %v487
      %594 = vst.msk [vmem:[%s207 + $0x70] sm:$0xff] %vm258, %v492
      %595 = vst.msk [vmem:[%s207 + $0x78] sm:$0xff] %vm258, %v497
      %596 = vst.msk [vmem:[%s207 + $0x80] sm:$0xff] %vm258, %v502
      %597 = vst.msk [vmem:[%s207 + $0x88] sm:$0xff] %vm258, %v507
      %598 = vst.msk [vmem:[%s207 + $0x90] sm:$0xff] %vm258, %v512
      %599 = vst.msk [vmem:[%s207 + $0x98] sm:$0xff] %vm258, %v517
      %600 = vst.msk [vmem:[%s207 + $0xa0] sm:$0xff] %vm258, %v522
      %601 = vst.msk [vmem:[%s207 + $0xa8] sm:$0xff] %vm258, %v527
      %602 = vst.msk [vmem:[%s207 + $0xb0] sm:$0xff] %vm258, %v532
      %603 = vst.msk [vmem:[%s207 + $0xb8] sm:$0xff] %vm258, %v537
      %604 = vst.msk [vmem:[%s207 + $0xc0] sm:$0xff] %vm258, %v542
      %605 = vst.msk [vmem:[%s207 + $0xc8] sm:$0xff] %vm258, %v547
      %606 = vst.msk [vmem:[%s207 + $0xd0] sm:$0xff] %vm258, %v552
      %607 = vst.msk [vmem:[%s207 + $0xd8] sm:$0xff] %vm258, %v557
      %608 = vst.msk [vmem:[%s207 + $0xe0] sm:$0xff] %vm258, %v562
      %609 = vst.msk [vmem:[%s207 + $0xe8] sm:$0xff] %vm258, %v567
      %610 = vst.msk [vmem:[%s207 + $0xf0] sm:$0xff] %vm258, %v572
      %611 = vst.msk [vmem:[%s207 + $0xf8] sm:$0xff] %vm258, %v577
      %v612 = vmax.f32 %v422, 0.0
      %v613 = vmax.f32 %v427, 0.0
      %v614 = vmax.f32 %v432, 0.0
      %v615 = vmax.f32 %v437, 0.0
      %v616 = vmax.f32 %v442, 0.0
      %v617 = vmax.f32 %v447, 0.0
      %v618 = vmax.f32 %v452, 0.0
      %v619 = vmax.f32 %v457, 0.0
      %v620 = vmax.f32 %v462, 0.0
      %v621 = vmax.f32 %v467, 0.0
      %v622 = vmax.f32 %v472, 0.0
      %v623 = vmax.f32 %v477, 0.0
      %v624 = vmax.f32 %v482, 0.0
      %v625 = vmax.f32 %v487, 0.0
      %v626 = vmax.f32 %v492, 0.0
      %v627 = vmax.f32 %v497, 0.0
      %v628 = vmax.f32 %v502, 0.0
      %v629 = vmax.f32 %v507, 0.0
      %v630 = vmax.f32 %v512, 0.0
      %v631 = vmax.f32 %v517, 0.0
      %v632 = vmax.f32 %v522, 0.0
      %v633 = vmax.f32 %v527, 0.0
      %v634 = vmax.f32 %v532, 0.0
      %v635 = vmax.f32 %v537, 0.0
      %v636 = vmax.f32 %v542, 0.0
      %v637 = vmax.f32 %v547, 0.0
      %v638 = vmax.f32 %v552, 0.0
      %v639 = vmax.f32 %v557, 0.0
      %v640 = vmax.f32 %v562, 0.0
      %v641 = vmax.f32 %v567, 0.0
      %v642 = vmax.f32 %v572, 0.0
      %v643 = vmax.f32 %v577, 0.0
      %v676 = vshrl.u32 %v612, 13
      %v677 = vshrl.u32 %v613, 13
      %v678 = vshrl.u32 %v614, 13
      %v679 = vshrl.u32 %v615, 13
      %v680 = vshrl.u32 %v616, 13
      %v681 = vshrl.u32 %v617, 13
      %v682 = vshrl.u32 %v618, 13
      %v683 = vshrl.u32 %v619, 13
      %v684 = vshrl.u32 %v620, 13
      %v685 = vshrl.u32 %v621, 13
      %v686 = vshrl.u32 %v622, 13
      %v687 = vshrl.u32 %v623, 13
      %v688 = vshrl.u32 %v624, 13
      %v689 = vshrl.u32 %v625, 13
      %v690 = vshrl.u32 %v626, 13
      %v691 = vshrl.u32 %v627, 13
      %v692 = vshrl.u32 %v628, 13
      %v693 = vshrl.u32 %v629, 13
      %v694 = vshrl.u32 %v630, 13
      %v695 = vshrl.u32 %v631, 13
      %v696 = vshrl.u32 %v632, 13
      %v697 = vshrl.u32 %v633, 13
      %v698 = vshrl.u32 %v634, 13
      %v699 = vshrl.u32 %v635, 13
      %v700 = vshrl.u32 %v636, 13
      %v701 = vshrl.u32 %v637, 13
      %v702 = vshrl.u32 %v638, 13
      %v703 = vshrl.u32 %v639, 13
      %v704 = vshrl.u32 %v640, 13
      %v705 = vshrl.u32 %v641, 13
      %v706 = vshrl.u32 %v642, 13
      %v707 = vshrl.u32 %v643, 13
      %v708 = vand.u32 %v676, 1
      %v709 = vand.u32 %v677, 1
      %v710 = vand.u32 %v678, 1
      %v711 = vand.u32 %v679, 1
      %v712 = vand.u32 %v680, 1
      %v713 = vand.u32 %v681, 1
      %v714 = vand.u32 %v682, 1
      %v715 = vand.u32 %v683, 1
      %v716 = vand.u32 %v684, 1
      %v717 = vand.u32 %v685, 1
      %v718 = vand.u32 %v686, 1
      %v719 = vand.u32 %v687, 1
      %v720 = vand.u32 %v688, 1
      %v721 = vand.u32 %v689, 1
      %v722 = vand.u32 %v690, 1
      %v723 = vand.u32 %v691, 1
      %v724 = vand.u32 %v692, 1
      %v725 = vand.u32 %v693, 1
      %v726 = vand.u32 %v694, 1
      %v727 = vand.u32 %v695, 1
      %v728 = vand.u32 %v696, 1
      %v729 = vand.u32 %v697, 1
      %v730 = vand.u32 %v698, 1
      %v731 = vand.u32 %v699, 1
      %v732 = vand.u32 %v700, 1
      %v733 = vand.u32 %v701, 1
      %v734 = vand.u32 %v702, 1
      %v735 = vand.u32 %v703, 1
      %v736 = vand.u32 %v704, 1
      %v737 = vand.u32 %v705, 1
      %v738 = vand.u32 %v706, 1
      %v739 = vand.u32 %v707, 1
      %v740 = vadd.s32 %v612, %v708
      %v741 = vadd.s32 %v613, %v709
      %v742 = vadd.s32 %v614, %v710
      %v743 = vadd.s32 %v615, %v711
      %v744 = vadd.s32 %v616, %v712
      %v745 = vadd.s32 %v617, %v713
      %v746 = vadd.s32 %v618, %v714
      %v747 = vadd.s32 %v619, %v715
      %v748 = vadd.s32 %v620, %v716
      %v749 = vadd.s32 %v621, %v717
      %v750 = vadd.s32 %v622, %v718
      %v751 = vadd.s32 %v623, %v719
      %v752 = vadd.s32 %v624, %v720
      %v753 = vadd.s32 %v625, %v721
      %v754 = vadd.s32 %v626, %v722
      %v755 = vadd.s32 %v627, %v723
      %v756 = vadd.s32 %v628, %v724
      %v757 = vadd.s32 %v629, %v725
      %v758 = vadd.s32 %v630, %v726
      %v759 = vadd.s32 %v631, %v727
      %v760 = vadd.s32 %v632, %v728
      %v761 = vadd.s32 %v633, %v729
      %v762 = vadd.s32 %v634, %v730
      %v763 = vadd.s32 %v635, %v731
      %v764 = vadd.s32 %v636, %v732
      %v765 = vadd.s32 %v637, %v733
      %v766 = vadd.s32 %v638, %v734
      %v767 = vadd.s32 %v639, %v735
      %v768 = vadd.s32 %v640, %v736
      %v769 = vadd.s32 %v641, %v737
      %v770 = vadd.s32 %v642, %v738
      %v771 = vadd.s32 %v643, %v739
      %v772 = vadd.s32 %v740, 4095
      %v773 = vadd.s32 %v741, 4095
      %v774 = vadd.s32 %v742, 4095
      %v775 = vadd.s32 %v743, 4095
      %v776 = vadd.s32 %v744, 4095
      %v777 = vadd.s32 %v745, 4095
      %v778 = vadd.s32 %v746, 4095
      %v779 = vadd.s32 %v747, 4095
      %v780 = vadd.s32 %v748, 4095
      %v781 = vadd.s32 %v749, 4095
      %v782 = vadd.s32 %v750, 4095
      %v783 = vadd.s32 %v751, 4095
      %v784 = vadd.s32 %v752, 4095
      %v785 = vadd.s32 %v753, 4095
      %v786 = vadd.s32 %v754, 4095
      %v787 = vadd.s32 %v755, 4095
      %v788 = vadd.s32 %v756, 4095
      %v789 = vadd.s32 %v757, 4095
      %v790 = vadd.s32 %v758, 4095
      %v791 = vadd.s32 %v759, 4095
      %v792 = vadd.s32 %v760, 4095
      %v793 = vadd.s32 %v761, 4095
      %v794 = vadd.s32 %v762, 4095
      %v795 = vadd.s32 %v763, 4095
      %v796 = vadd.s32 %v764, 4095
      %v797 = vadd.s32 %v765, 4095
      %v798 = vadd.s32 %v766, 4095
      %v799 = vadd.s32 %v767, 4095
      %v800 = vadd.s32 %v768, 4095
      %v801 = vadd.s32 %v769, 4095
      %v802 = vadd.s32 %v770, 4095
      %v803 = vadd.s32 %v771, 4095
      %v804 = vand.u32 %v772, 4294959104
      %v805 = vand.u32 %v773, 4294959104
      %v806 = vand.u32 %v774, 4294959104
      %v807 = vand.u32 %v775, 4294959104
      %v808 = vand.u32 %v776, 4294959104
      %v809 = vand.u32 %v777, 4294959104
      %v810 = vand.u32 %v778, 4294959104
      %v811 = vand.u32 %v779, 4294959104
      %v812 = vand.u32 %v780, 4294959104
      %v813 = vand.u32 %v781, 4294959104
      %v814 = vand.u32 %v782, 4294959104
      %v815 = vand.u32 %v783, 4294959104
      %v816 = vand.u32 %v784, 4294959104
      %v817 = vand.u32 %v785, 4294959104
      %v818 = vand.u32 %v786, 4294959104
      %v819 = vand.u32 %v787, 4294959104
      %v820 = vand.u32 %v788, 4294959104
      %v821 = vand.u32 %v789, 4294959104
      %v822 = vand.u32 %v790, 4294959104
      %v823 = vand.u32 %v791, 4294959104
      %v824 = vand.u32 %v792, 4294959104
      %v825 = vand.u32 %v793, 4294959104
      %v826 = vand.u32 %v794, 4294959104
      %v827 = vand.u32 %v795, 4294959104
      %v828 = vand.u32 %v796, 4294959104
      %v829 = vand.u32 %v797, 4294959104
      %v830 = vand.u32 %v798, 4294959104
      %v831 = vand.u32 %v799, 4294959104
      %v832 = vand.u32 %v800, 4294959104
      %v833 = vand.u32 %v801, 4294959104
      %v834 = vand.u32 %v802, 4294959104
      %v835 = vand.u32 %v803, 4294959104
      %836 = vrot.lane.b32.xlu0 %v804, 96
      %v837 = vpop.permute.xlu0 %836
      %838 = vrot.lane.b32.xlu0 %v805, 96
      %v839 = vpop.permute.xlu0 %838
      %840 = vrot.lane.b32.xlu0 %v806, 96
      %v841 = vpop.permute.xlu0 %840
      %842 = vrot.lane.b32.xlu0 %v807, 96
      %v843 = vpop.permute.xlu0 %842
      %844 = vrot.lane.b32.xlu0 %v808, 96
      %v845 = vpop.permute.xlu0 %844
      %846 = vrot.lane.b32.xlu0 %v809, 96
      %v847 = vpop.permute.xlu0 %846
      %848 = vrot.lane.b32.xlu0 %v810, 96
      %v849 = vpop.permute.xlu0 %848
      %850 = vrot.lane.b32.xlu0 %v811, 96
      %v851 = vpop.permute.xlu0 %850
      %852 = vrot.lane.b32.xlu0 %v812, 96
      %v853 = vpop.permute.xlu0 %852
      %854 = vrot.lane.b32.xlu0 %v813, 96
      %v855 = vpop.permute.xlu0 %854
      %856 = vrot.lane.b32.xlu0 %v814, 96
      %v857 = vpop.permute.xlu0 %856
      %858 = vrot.lane.b32.xlu0 %v815, 96
      %v859 = vpop.permute.xlu0 %858
      %860 = vrot.lane.b32.xlu0 %v816, 96
      %v861 = vpop.permute.xlu0 %860
      %862 = vrot.lane.b32.xlu0 %v817, 96
      %v863 = vpop.permute.xlu0 %862
      %864 = vrot.lane.b32.xlu0 %v818, 96
      %v865 = vpop.permute.xlu0 %864
      %866 = vrot.lane.b32.xlu0 %v819, 96
      %v867 = vpop.permute.xlu0 %866
      %868 = vrot.lane.b32.xlu0 %v820, 96
      %v869 = vpop.permute.xlu0 %868
      %870 = vrot.lane.b32.xlu0 %v821, 96
      %v871 = vpop.permute.xlu0 %870
      %872 = vrot.lane.b32.xlu0 %v822, 96
      %v873 = vpop.permute.xlu0 %872
      %874 = vrot.lane.b32.xlu0 %v823, 96
      %v875 = vpop.permute.xlu0 %874
      %876 = vrot.lane.b32.xlu0 %v824, 96
      %v877 = vpop.permute.xlu0 %876
      %878 = vrot.lane.b32.xlu0 %v825, 96
      %v879 = vpop.permute.xlu0 %878
      %880 = vrot.lane.b32.xlu0 %v826, 96
      %v881 = vpop.permute.xlu0 %880
      %882 = vrot.lane.b32.xlu0 %v827, 96
      %v883 = vpop.permute.xlu0 %882
      %884 = vrot.lane.b32.xlu0 %v828, 96
      %v885 = vpop.permute.xlu0 %884
      %886 = vrot.lane.b32.xlu0 %v829, 96
      %v887 = vpop.permute.xlu0 %886
      %888 = vrot.lane.b32.xlu0 %v830, 96
      %v889 = vpop.permute.xlu0 %888
      %890 = vrot.lane.b32.xlu0 %v831, 96
      %v891 = vpop.permute.xlu0 %890
      %892 = vrot.lane.b32.xlu0 %v832, 96
      %v893 = vpop.permute.xlu0 %892
      %894 = vrot.lane.b32.xlu0 %v833, 96
      %v895 = vpop.permute.xlu0 %894
      %896 = vrot.lane.b32.xlu0 %v834, 96
      %v897 = vpop.permute.xlu0 %896
      %898 = vrot.lane.b32.xlu0 %v835, 96
      %v899 = vpop.permute.xlu0 %898
      %vm932 = vcmask 64512
      %933 = vst.msk [vmem:[%s213] sm:$0xff] %vm932, %v837
      %934 = vst.msk [vmem:[%s213 + $0x8] sm:$0xff] %vm932, %v839
      %935 = vst.msk [vmem:[%s213 + $0x10] sm:$0xff] %vm932, %v841
      %936 = vst.msk [vmem:[%s213 + $0x18] sm:$0xff] %vm932, %v843
      %937 = vst.msk [vmem:[%s213 + $0x20] sm:$0xff] %vm932, %v845
      %938 = vst.msk [vmem:[%s213 + $0x28] sm:$0xff] %vm932, %v847
      %939 = vst.msk [vmem:[%s213 + $0x30] sm:$0xff] %vm932, %v849
      %940 = vst.msk [vmem:[%s213 + $0x38] sm:$0xff] %vm932, %v851
      %941 = vst.msk [vmem:[%s213 + $0x40] sm:$0xff] %vm932, %v853
      %942 = vst.msk [vmem:[%s213 + $0x48] sm:$0xff] %vm932, %v855
      %943 = vst.msk [vmem:[%s213 + $0x50] sm:$0xff] %vm932, %v857
      %944 = vst.msk [vmem:[%s213 + $0x58] sm:$0xff] %vm932, %v859
      %945 = vst.msk [vmem:[%s213 + $0x60] sm:$0xff] %vm932, %v861
      %946 = vst.msk [vmem:[%s213 + $0x68] sm:$0xff] %vm932, %v863
      %947 = vst.msk [vmem:[%s213 + $0x70] sm:$0xff] %vm932, %v865
      %948 = vst.msk [vmem:[%s213 + $0x78] sm:$0xff] %vm932, %v867
      %949 = vst.msk [vmem:[%s213 + $0x80] sm:$0xff] %vm932, %v869
      %950 = vst.msk [vmem:[%s213 + $0x88] sm:$0xff] %vm932, %v871
      %951 = vst.msk [vmem:[%s213 + $0x90] sm:$0xff] %vm932, %v873
      %952 = vst.msk [vmem:[%s213 + $0x98] sm:$0xff] %vm932, %v875
      %953 = vst.msk [vmem:[%s213 + $0xa0] sm:$0xff] %vm932, %v877
      %954 = vst.msk [vmem:[%s213 + $0xa8] sm:$0xff] %vm932, %v879
      %955 = vst.msk [vmem:[%s213 + $0xb0] sm:$0xff] %vm932, %v881
      %956 = vst.msk [vmem:[%s213 + $0xb8] sm:$0xff] %vm932, %v883
      %957 = vst.msk [vmem:[%s213 + $0xc0] sm:$0xff] %vm932, %v885
      %958 = vst.msk [vmem:[%s213 + $0xc8] sm:$0xff] %vm932, %v887
      %959 = vst.msk [vmem:[%s213 + $0xd0] sm:$0xff] %vm932, %v889
      %960 = vst.msk [vmem:[%s213 + $0xd8] sm:$0xff] %vm932, %v891
      %961 = vst.msk [vmem:[%s213 + $0xe0] sm:$0xff] %vm932, %v893
      %962 = vst.msk [vmem:[%s213 + $0xe8] sm:$0xff] %vm932, %v895
      %963 = vst.msk [vmem:[%s213 + $0xf0] sm:$0xff] %vm932, %v897
      %964 = vst.msk [vmem:[%s213 + $0xf8] sm:$0xff] %vm932, %v899
      %s965 = smul.u32 32, %s16
      %p966 = scmp.lt.s32.totalorder %s965, 63
      %s967 = scalar_select %p966, %s965, 63
      %s968 = smul.addr %s967, 8
      %s969 = scalar_lea.vmem %s3, %s968
      %s970 = smul.u32 32, %s16
      %p971 = scmp.lt.s32.totalorder %s970, 63
      %s972 = scalar_select %p971, %s970, 63
      %s973 = smul.addr %s972, 8
      %s974 = scalar_lea.vmem %s4, %s973
      // Predicated region
      $region33: #{wave_attention_forward.6} parent=31 // pred_check
        %p975 = pneg %p102
      $region34: #{wave_attention_forward.6} parent=31 // pred_check_branch
        %977 = sbr.rel (%p975) target = $region36
      $region35: #{wave_attention_forward.6} parent=31 // pred_region
        %s978 = smul.u32 32, %s16
      $region36: #{wave_attention_forward.6} parent=31 // pred_fallthru
        _
      // Predicated region
      $region37: #{wave_attention_forward.6} parent=31 // pred_check
        %p979 = pneg %p128
      $region38: #{wave_attention_forward.6} parent=31 // pred_check_branch
        %981 = sbr.rel (%p979) target = $region40
      $region39: #{wave_attention_forward.6} parent=31 // pred_region
        %s982 = smul.u32 32, %s16
      $region40: #{wave_attention_forward.6} parent=31 // pred_fallthru
        _
    $region32: #{wave_attention_forward.6} parent=5 // pred_fallthru
      _
    %p983 = scmp.le.s32.totalorder 2, %s11
    // Predicated region
    $region41: #{wave_attention_forward.6} parent=5 // pred_check
      %p984 = pneg %p983
    $region42: #{wave_attention_forward.6} parent=5 // pred_check_branch
      %986 = sbr.rel (%p984) target = $region44
    $region43: #{wave_attention_forward.6} parent=5 // pred_region
      %s987 = ssub.s32 %s11, 2
      // Predicated region
      $region45: #{wave_attention_forward.6} parent=43 // pred_check
        %p988 = pneg %p108
      $region46: #{wave_attention_forward.6} parent=43 // pred_check_branch
        %990 = sbr.rel (%p988) target = $region48
      $region47: #{wave_attention_forward.6} parent=43 // pred_region
        %s991 = smul.u32 32, %s17
        %p992 = scmp.lt.s32.totalorder %s991, 63
        %s993 = scalar_select %p992, %s991, 63
        %s994 = smul.addr %s993, 8
        %s995 = scalar_lea.vmem %s3, %s994
      $region48: #{wave_attention_forward.6} parent=43 // pred_fallthru
        _
      // Predicated region
      $region49: #{wave_attention_forward.6} parent=43 // pred_check
        %p996 = pneg %p134
      $region50: #{wave_attention_forward.6} parent=43 // pred_check_branch
        %998 = sbr.rel (%p996) target = $region52
      $region51: #{wave_attention_forward.6} parent=43 // pred_region
        %s999 = smul.u32 32, %s17
        %p1000 = scmp.lt.s32.totalorder %s999, 63
        %s1001 = scalar_select %p1000, %s999, 63
        %s1002 = smul.addr %s1001, 8
        %s1003 = scalar_lea.vmem %s4, %s1002
      $region52: #{wave_attention_forward.6} parent=43 // pred_fallthru
        _
    $region44: #{wave_attention_forward.6} parent=5 // pred_fallthru
      _
  $region6: #{wave_attention_forward.6} parent=0 // loop_footer
    %s15 = sadd.s32 1, %s11
  $region7: #{wave_attention_forward.6} parent=0 // loop_footer_branch
    %10 = sbr.rel target = $region3
  $region8: #{wave_attention_forward.6} parent=0 // loop_exit
    _

// kernel: wave_attention_forward.8
$region0: #{wave_attention_forward.8}
  #allocation0 [shape = 'u32[]', space=smem, size = 0x4, offset = 0x4, fixed_abs, tag = 'smem constant byte address 0x4 - core index']
  #allocation1 [shape = 'u32[144,128]{1,0:T(1,128)}', space=vmem, size = 0x12000, scoped, tag = 'internal scratch']
  %s0 = inlined_call_operand.vmem [shape: f32[2,10,10,32], index: 0, kind: input, shape index: {}]
  %s1 = inlined_call_operand.vmem [shape: f32[9,32,32], index: 1, kind: input, shape index: {}]
  %s2 = inlined_call_operand.vmem [shape: f32[1,32], index: 2, kind: input, shape index: {}]
  %s3 = inlined_call_operand.vmem [shape: f32[128,32], index: 3, kind: output, shape index: {}]
  %s4 = sld [smem:[#allocation0]]
  $region45: #{wave_attention_forward.8} parent=0
    _
  %s6 = ssub.s32 1, %s4
  %s7 = scalar_select 0, %s6, %s4
  loop: start=0, step=1, limit=4
  $region2: #{wave_attention_forward.8} parent=0 // loop_pre_header
    _
  $region3: #{wave_attention_forward.8} parent=0 // loop_header
    %s9 = sphi 0, %s13
    %p10 = scmp.ge.s32.totalorder %s9, 4
    %s19 = sphi 0, %s21
    %s22 = sphi 0, %s19
    %s23 = sphi 0, %s22
    %s39 = sphi 0, %s23
    %s43 = sphi 0, %s43
    %s45 = sphi 0, %s43
    %s46 = sphi 0, %s45
    %s60 = sphi 0, %s46
    %s64 = sphi 0, %s64
    %s66 = sphi 0, %s64
    %s67 = sphi 0, %s66
    %s81 = sphi 0, %s67
    %s87 = sphi 0, %s89
    %s90 = sphi 0, %s87
    %s91 = sphi 0, %s90
    %s107 = sphi 0, %s91
  $region4: #{wave_attention_forward.8} parent=0 // loop_header_branch
    %12 = sbr.rel (%p10) target = $region8
  $region5: #{wave_attention_forward.8} parent=0 // loop_body
    %s14 = ssub.s32 %s9, 1
    %s15 = ssub.s32 %s9, 2
    %s16 = sadd.s32 %s9, 1
    %s17 = ssub.s32 %s9, %s16
    %p18 = scmp.eq.s32.totalorder %s17, 0
    %s20 = sadd.s32 %s19, 1
    %s21 = scalar_select %p18, %s19, %s20
    %p24 = pneg %p18
    %p25 = scmp.eq.s32.totalorder %s9, 1
    %p26 = por %p24, %p25
    %p27 = scmp.ne.s32.totalorder %s19, %s22
    %p28 = scmp.eq.s32.totalorder %s9, 0
    %p29 = por %p27, %p28
    %p30 = scmp.ne.s32.totalorder %s19, %s22
    %p31 = scmp.eq.s32.totalorder %s14, 1
    %p32 = por %p30, %p31
    %p33 = scmp.ne.s32.totalorder %s22, %s23
    %p34 = scmp.eq.s32.totalorder %s14, 0
    %p35 = por %p33, %p34
    %p36 = scmp.ne.s32.totalorder %s22, %s23
    %p37 = scmp.eq.s32.totalorder %s15, 1
    %p38 = por %p36, %p37
    %p40 = scmp.ne.s32.totalorder %s23, %s39
    %p41 = scmp.eq.s32.totalorder %s15, 0
    %p42 = por %p40, %p41
    %s44 = sadd.s32 %s43, 1
    %p47 = scmp.eq.s32.totalorder %s9, 1
    %p48 = scmp.ne.s32.totalorder %s43, %s45
    %p49 = scmp.eq.s32.totalorder %s9, 0
    %p50 = por %p48, %p49
    %p51 = scmp.ne.s32.totalorder %s43, %s45
    %p52 = scmp.eq.s32.totalorder %s14, 1
    %p53 = por %p51, %p52
    %p54 = scmp.ne.s32.totalorder %s45, %s46
    %p55 = scmp.eq.s32.totalorder %s14, 0
    %p56 = por %p54, %p55
    %p57 = scmp.ne.s32.totalorder %s45, %s46
    %p58 = scmp.eq.s32.totalorder %s15, 1
    %p59 = por %p57, %p58
    %p61 = scmp.ne.s32.totalorder %s46, %s60
    %p62 = scmp.eq.s32.totalorder %s15, 0
    %p63 = por %p61, %p62
    %s65 = sadd.s32 %s64, 1
    %p68 = scmp.eq.s32.totalorder %s9, 1
    %p69 = scmp.ne.s32.totalorder %s64, %s66
    %p70 = scmp.eq.s32.totalorder %s9, 0
    %p71 = por %p69, %p70
    %p72 = scmp.ne.s32.totalorder %s64, %s66
    %p73 = scmp.eq.s32.totalorder %s14, 1
    %p74 = por %p72, %p73
    %p75 = scmp.ne.s32.totalorder %s66, %s67
    %p76 = scmp.eq.s32.totalorder %s14, 0
    %p77 = por %p75, %p76
    %p78 = scmp.ne.s32.totalorder %s66, %s67
    %p79 = scmp.eq.s32.totalorder %s15, 1
    %p80 = por %p78, %p79
    %p82 = scmp.ne.s32.totalorder %s67, %s81
    %p83 = scmp.eq.s32.totalorder %s15, 0
    %p84 = por %p82, %p83
    %s85 = ssub.s32 %s9, %s16
    %p86 = scmp.eq.s32.totalorder %s85, 0
    %s88 = sadd.s32 %s87, 1
    %s89 = scalar_select %p86, %s87, %s88
    %p92 = pneg %p86
    %p93 = scmp.eq.s32.totalorder %s9, 1
    %p94 = por %p92, %p93
    %p95 = scmp.ne.s32.totalorder %s87, %s90
    %p96 = scmp.eq.s32.totalorder %s9, 0
    %p97 = por %p95, %p96
    %p98 = scmp.ne.s32.totalorder %s87, %s90
    %p99 = scmp.eq.s32.totalorder %s14, 1
    %p100 = por %p98, %p99
    %p101 = scmp.ne.s32.totalorder %s90, %s91
    %p102 = scmp.eq.s32.totalorder %s14, 0
    %p103 = por %p101, %p102
    %p104 = scmp.ne.s32.totalorder %s90, %s91
    %p105 = scmp.eq.s32.totalorder %s15, 1
    %p106 = por %p104, %p105
    %p108 = scmp.ne.s32.totalorder %s91, %s107
    %p109 = scmp.eq.s32.totalorder %s15, 0
    %p110 = por %p108, %p109
    %p111 = scmp.le.s32.totalorder 1, %s9
    %p112 = scmp.lt.s32.totalorder %s9, 3
    %p113 = pnand %p111, %p112
    %p114 = pneg %p113
    // Predicated region
    $region9: #{wave_attention_forward.8} parent=5 // pred_check
      _
    $region10: #{wave_attention_forward.8} parent=5 // pred_check_branch
      %116 = sbr.rel (%p113) target = $region12
    $region11: #{wave_attention_forward.8} parent=5 // pred_region
      %s117 = ssub.s32 %s9, 1
      // Predicated region
      $region13: #{wave_attention_forward.8} parent=11 // pred_check
        %p118 = pneg %p56
      $region14: #{wave_attention_forward.8} parent=11 // pred_check_branch
        %120 = sbr.rel (%p118) target = $region16
      $region15: #{wave_attention_forward.8} parent=11 // pred_region
        _
      $region16: #{wave_attention_forward.8} parent=11 // pred_fallthru
        _
      // Predicated region
      $region17: #{wave_attention_forward.8} parent=11 // pred_check
        %p121 = pneg %p77
      $region18: #{wave_attention_forward.8} parent=11 // pred_check_branch
        %123 = sbr.rel (%p121) target = $region20
      $region19: #{wave_attention_forward.8} parent=11 // pred_region
        _
      $region20: #{wave_attention_forward.8} parent=11 // pred_fallthru
        _
    $region12: #{wave_attention_forward.8} parent=5 // pred_fallthru
      _
    %p124 = scmp.lt.s32.totalorder %s9, 2
    // Predicated region
    $region21: #{wave_attention_forward.8} parent=5 // pred_check
      %p125 = pneg %p124
    $region22: #{wave_attention_forward.8} parent=5 // pred_check_branch
      %127 = sbr.rel (%p125) target = $region24
    $region23: #{wave_attention_forward.8} parent=5 // pred_region
      // Predicated region
      $region25: #{wave_attention_forward.8} parent=23 // pred_check
        %p128 = pneg %p29
      $region26: #{wave_attention_forward.8} parent=23 // pred_check_branch
        %130 = sbr.rel (%p128) target = $region28
      $region27: #{wave_attention_forward.8} parent=23 // pred_region
        %p131 = scmp.lt.s32.totalorder %s9, 1
        %s132 = scalar_select %p131, %s9, 1
        %s133 = smul.addr %s132, 20
        %s134 = smul.addr %s133, 8
        %s135 = scalar_lea.vmem %s0, %s134
      $region28: #{wave_attention_forward.8} parent=23 // pred_fallthru
        _
    $region24: #{wave_attention_forward.8} parent=5 // pred_fallthru
      _
    %p136 = scmp.le.s32.totalorder 1, %s9
    %p137 = scmp.lt.s32.totalorder %s9, 3
    %p138 = pnand %p136, %p137
    %p139 = pneg %p138
    // Predicated region
    $region29: #{wave_attention_forward.8} parent=5 // pred_check
      _
    $region30: #{wave_attention_forward.8} parent=5 // pred_check_branch
      %141 = sbr.rel (%p138) target = $region32
    $region31: #{wave_attention_forward.8} parent=5 // pred_region
      %s142 = ssub.s32 %s9, 1
      %p143 = scmp.lt.s32.totalorder %s14, 1
      %s144 = scalar_select %p143, %s14, 1
      %s145 = smul.addr %s144, 20
      %s146 = smul.addr %s145, 8
      %s147 = scalar_lea.vmem %s0, %s146
      %p148 = pneg %p35
      %p149 = pneg %p32
      %p150 = pneg %p56
      %p151 = pneg %p53
      %p152 = pneg %p77
      %p153 = pneg %p74
      %p154 = pneg %p103
      %p155 = pneg %p100
      %s156 = smul.u32 8, %s14
      %p157 = scmp.lt.s32.totalorder %s156, 15
      %s158 = scalar_select %p157, %s156, 15
      %s159 = smul.addr %s158, 8
      %s160 = scalar_lea.vmem %s3, %s159
      %p161 = scmp.lt.s32.totalorder %s14, 1
      %s162 = scalar_select %p161, %s14, 1
      %s163 = smul.addr %s162, 20
      %s164 = smul.addr %s163, 8
      %s165 = scalar_lea.vmem %s0, %s164
      %s166 = smul.u32 8, %s14
      %p167 = scmp.lt.s32.totalorder %s166, 15
      %s168 = scalar_select %p167, %s166, 15
      %s169 = smul.addr %s168, 8
      %s170 = scalar_lea.vmem %s3, %s169
      %s171 = smul.u32 8, %s14
      %v172 = vld [vmem:[%s165] sm:$0xff]
      %v173 = vld [vmem:[%s165 + $0x8] sm:$0x3]
      %v174 = vld [vmem:[%s165 + $0x10] sm:$0xff]
      %v175 = vld [vmem:[%s165 + $0x18] sm:$0x3]
      %v176 = vld [vmem:[%s165 + $0x20] sm:$0xff]
      %v177 = vld [vmem:[%s165 + $0x28] sm:$0x3]
      %v178 = vld [vmem:[%s165 + $0x30] sm:$0xff]
      %v179 = vld [vmem:[%s165 + $0x38] sm:$0x3]
      %v180 = vld [vmem:[%s165 + $0x40] sm:$0xff]
      %v181 = vld [vmem:[%s165 + $0x48] sm:$0x3]
      %v182 = vld [vmem:[%s165 + $0x50] sm:$0xff]
      %v183 = vld [vmem:[%s165 + $0x58] sm:$0x3]
      %v184 = vld [vmem:[%s165 + $0x60] sm:$0xff]
      %v185 = vld [vmem:[%s165 + $0x68] sm:$0x3]
      %v186 = vld [vmem:[%s165 + $0x70] sm:$0xff]
      %v187 = vld [vmem:[%s165 + $0x78] sm:$0x3]
      %v188 = vld [vmem:[%s165 + $0x80] sm:$0xff]
      %v189 = vld [vmem:[%s165 + $0x88] sm:$0x3]
      %v190 = vld [vmem:[%s165 + $0x90] sm:$0xff]
      %v191 = vld [vmem:[%s165 + $0x98] sm:$0x3]
      %v192 = vld [vmem:[%s1] sm:$0xff]
      %v193 = vld [vmem:[%s1 + $0x8] sm:$0xff]
      %v194 = vld [vmem:[%s1 + $0x10] sm:$0xff]
      %v195 = vld [vmem:[%s1 + $0x18] sm:$0xff]
      %vm212 = vcmask 1046528
      %v213 = vrot.slane %v172, 1
      %v214 = vrot.slane %v173, 1
      %v215 = vsel %vm212, %v213, %v214
      %v216 = vrot.slane %v174, 1
      %v217 = vrot.slane %v175, 1
      %v218 = vsel %vm212, %v216, %v217
      %v219 = vrot.slane %v176, 1
      %v220 = vrot.slane %v177, 1
      %v221 = vsel %vm212, %v219, %v220
      %v222 = vrot.slane %v178, 1
      %v223 = vrot.slane %v179, 1
      %v224 = vsel %vm212, %v222, %v223
      %v225 = vrot.slane %v180, 1
      %v226 = vrot.slane %v181, 1
      %v227 = vsel %vm212, %v225, %v226
      %v228 = vrot.slane %v182, 1
      %v229 = vrot.slane %v183, 1
      %v230 = vsel %vm212, %v228, %v229
      %v231 = vrot.slane %v184, 1
      %v232 = vrot.slane %v185, 1
      %v233 = vsel %vm212, %v231, %v232
      %v234 = vrot.slane %v186, 1
      %v235 = vrot.slane %v187, 1
      %v236 = vsel %vm212, %v234, %v235
      %s237 = scalar_lea.vmem %s1, 32
      %v238 = vld [vmem:[%s237] sm:$0xff]
      %v239 = vld [vmem:[%s237 + $0x8] sm:$0xff]
      %v240 = vld [vmem:[%s237 + $0x10] sm:$0xff]
      %v241 = vld [vmem:[%s237 + $0x18] sm:$0xff]
      %vm242 = vcmask 261120
      %v243 = vsel %vm242, %v215, 0
      %v245 = vsel %vm242, %v218, 0
      %v247 = vsel %vm242, %v221, 0
      %v249 = vsel %vm242, %v224, 0
      %v251 = vsel %vm242, %v227, 0
      %v253 = vsel %vm242, %v230, 0
      %v255 = vsel %vm242, %v233, 0
      %v257 = vsel %vm242, %v236, 0
      %259 = vmatprep.subr.mxu0 0.0
      %260 = vmatpush1.msra.mxu0 %v238
      %261 = vmatprep.subr.mxu0 0.0
      %262 = vmatpush1.msra.mxu0 %v239
      %263 = vmatprep.subr.mxu0 0.0
      %264 = vmatpush1.msra.mxu0 %v240
      %265 = vmatprep.subr.mxu0 0.0
      %266 = vmatpush1.msra.mxu0 %v241
      %267 = vmatprep.subr.mxu0 0.0
      %268 = vmatpush1.msra.mxu0 0.0
      %269 = vmatprep.subr.mxu0 0.0
      %270 = vmatpush1.msra.mxu0 0.0
      %271 = vmatprep.subr.mxu0 0.0
      %272 = vmatpush1.msra.mxu0 0.0
      %273 = vmatprep.subr.mxu0 0.0
      %274 = vmatpush1.msra.mxu0 0.0
      %275 = vmatprep.subr.mxu0 0.0
      %276 = vmatpush1.msra.mxu0 0.0
      %277 = vmatprep.subr.mxu0 0.0
      %278 = vmatpush1.msra.mxu0 0.0
      %279 = vmatprep.subr.mxu0 0.0
      %280 = vmatpush1.msra.mxu0 0.0
      %281 = vmatprep.subr.mxu0 0.0
      %282 = vmatpush1.msra.mxu0 0.0
      %283 = vmatprep.subr.mxu0 0.0
      %284 = vmatpush1.msra.mxu0 0.0
      %285 = vmatprep.subr.mxu0 0.0
      %286 = vmatpush1.msra.mxu0 0.0
      %287 = vmatprep.subr.mxu0 0.0
      %288 = vmatpush1.msra.mxu0 0.0
      %289 = vmatprep.subr.mxu0 0.0
      %290 = vmatpush1.msra.mxu0 0.0
      %291 = vmatprep.subr.mxu0 0.0
      %292 = vmatpush1.msra.mxu0 0.0
      %293 = vmatprep.subr.mxu0 0.0
      %294 = vmatpush1.msra.mxu0 0.0
      %295 = vmatprep.subr.mxu0 0.0
      %296 = vmatpush1.msra.mxu0 0.0
      %297 = vmatprep.subr.mxu0 0.0
      %298 = vmatpush1.msra.mxu0 0.0
      %299 = vmatprep.subr.mxu0 0.0
      %300 = vmatpush1.msra.mxu0 0.0
      %301 = vmatprep.subr.mxu0 0.0
      %302 = vmatpush1.msra.mxu0 0.0
      %303 = vmatprep.subr.mxu0 0.0
      %304 = vmatpush1.msra.mxu0 0.0
      %305 = vmatprep.subr.mxu0 0.0
      %306 = vmatpush1.msra.mxu0 0.0
      %307 = vmatprep.subr.mxu0 0.0
      %308 = vmatpush1.msra.mxu0 0.0
      %309 = vmatprep.subr.mxu0 0.0
      %310 = vmatpush1.msra.mxu0 0.0
      %311 = vmatprep.subr.mxu0 0.0
      %312 = vmatpush1.msra.mxu0 0.0
      %313 = vmatprep.subr.mxu0 0.0
      %314 = vmatpush1.msra.mxu0 0.0
      %315 = vmatprep.subr.mxu0 0.0
      %316 = vmatpush1.msra.mxu0 0.0
      %317 = vmatprep.subr.mxu0 0.0
      %318 = vmatpush1.msra.mxu0 0.0
      %319 = vmatprep.subr.mxu0 0.0
      %320 = vmatpush1.msra.mxu0 0.0
      %321 = vmatprep.subr.mxu0 0.0
      %322 = vmatpush1.msra.mxu0 0.0
      %323 = vmatprep.mubr.f32.mxu0 0.0
      %324 = vmatmul.mubr.f32.gmra.mrb[0].mxu0 %v243
      %v325 = vpop.f32.mrb[0].mxu0
      %v326 = vadd.f32 0.0, %v325
      %v327 = vpop.f32.mrb[0].mxu0
      %328 = vmatprep.mubr.f32.mxu0 0.0
      %329 = vmatmul.mubr.f32.gmra.mrb[0].mxu0 %v245
      %v330 = vpop.f32.mrb[0].mxu0
      %v331 = vadd.f32 0.0, %v330
      %v332 = vpop.f32.mrb[0].mxu0
      %333 = vmatprep.mubr.f32.mxu0 0.0
      %334 = vmatmul.mubr.f32.gmra.mrb[0].mxu0 %v247
      %v335 = vpop.f32.mrb[0].mxu0
      %v336 = vadd.f32 0.0, %v335
      %v337 = vpop.f32.mrb[0].mxu0
      %338 = vmatprep.mubr.f32.mxu0 0.0
      %339 = vmatmul.mubr.f32.gmra.mrb[0].mxu0 %v249
      %v340 = vpop.f32.mrb[0].mxu0
      %v341 = vadd.f32 0.0, %v340
      %v342 = vpop.f32.mrb[0].mxu0
      %343 = vmatprep.mubr.f32.mxu0 0.0
      %344 = vmatmul.mubr.f32.gmra.mrb[0].mxu0 %v251
      %v345 = vpop.f32.mrb[0].mxu0
      %v346 = vadd.f32 0.0, %v345
      %v347 = vpop.f32.mrb[0].mxu0
      %348 = vmatprep.mubr.f32.mxu0 0.0
      %349 = vmatmul.mubr.f32.gmra.mrb[0].mxu0 %v253
      %v350 = vpop.f32.mrb[0].mxu0
      %v351 = vadd.f32 0.0, %v350
      %v352 = vpop.f32.mrb[0].mxu0
      %353 = vmatprep.mubr.f32.mxu0 0.0
      %354 = vmatmul.mubr.f32.gmra.mrb[0].mxu0 %v255
      %v355 = vpop.f32.mrb[0].mxu0
      %v356 = vadd.f32 0.0, %v355
      %v357 = vpop.f32.mrb[0].mxu0
      %358 = vmatprep.mubr.f32.mxu0 0.0
      %359 = vmatmul.mubr.f32.gmra.mrb[0].mxu0 %v257
      %v360 = vpop.f32.mrb[0].mxu0
      %v361 = vadd.f32 0.0, %v360
      %v362 = vpop.f32.mrb[0].mxu0
      %363 = vdwg.mxu0
      %v364 = vsel %vm242, %v172, 0
      %v366 = vsel %vm242, %v174, 0
      %v368 = vsel %vm242, %v176, 0
      %v370 = vsel %vm242, %v178, 0
      %v372 = vsel %vm242, %v180, 0
      %v374 = vsel %vm242, %v182, 0
      %v376 = vsel %vm242, %v184, 0
      %v378 = vsel %vm242, %v186, 0
      %380 = vmatprep.subr.mxu0 0.0
      %381 = vmatpush1.msra.mxu0 %v192
      %382 = vmatprep.subr.mxu0 0.0
      %383 = vmatpush1.msra.mxu0 %v193
      %384 = vmatprep.subr.mxu0 0.0
      %385 = vmatpush1.msra.mxu0 %v194
      %386 = vmatprep.subr.mxu0 0.0
      %387 = vmatpush1.msra.mxu0 %v195
      %388 = vmatprep.subr.mxu0 0.0
      %389 = vmatpush1.msra.mxu0 0.0
      %390 = vmatprep.subr.mxu0 0.0
      %391 = vmatpush1.msra.mxu0 0.0
      %392 = vmatprep.subr.mxu0 0.0
      %393 = vmatpush1.msra.mxu0 0.0
      %394 = vmatprep.subr.mxu0 0.0
      %395 = vmatpush1.msra.mxu0 0.0
      %396 = vmatprep.subr.mxu0 0.0
      %397 = vmatpush1.msra.mxu0 0.0
      %398 = vmatprep.subr.mxu0 0.0
      %399 = vmatpush1.msra.mxu0 0.0
      %400 = vmatprep.subr.mxu0 0.0
      %401 = vmatpush1.msra.mxu0 0.0
      %402 = vmatprep.subr.mxu0 0.0
      %403 = vmatpush1.msra.mxu0 0.0
      %404 = vmatprep.subr.mxu0 0.0
      %405 = vmatpush1.msra.mxu0 0.0
      %406 = vmatprep.subr.mxu0 0.0
      %407 = vmatpush1.msra.mxu0 0.0
      %408 = vmatprep.subr.mxu0 0.0
      %409 = vmatpush1.msra.mxu0 0.0
      %410 = vmatprep.subr.mxu0 0.0
      %411 = vmatpush1.msra.mxu0 0.0
      %412 = vmatprep.subr.mxu0 0.0
      %413 = vmatpush1.msra.mxu0 0.0
      %414 = vmatprep.subr.mxu0 0.0
      %415 = vmatpush1.msra.mxu0 0.0
      %416 = vmatprep.subr.mxu0 0.0
      %417 = vmatpush1.msra.mxu0 0.0
      %418 = vmatprep.subr.mxu0 0.0
      %419 = vmatpush1.msra.mxu0 0.0
      %420 = vmatprep.subr.mxu0 0.0
      %421 = vmatpush1.msra.mxu0 0.0
      %422 = vmatprep.subr.mxu0 0.0
      %423 = vmatpush1.msra.mxu0 0.0
      %424 = vmatprep.subr.mxu0 0.0
      %425 = vmatpush1.msra.mxu0 0.0
      %426 = vmatprep.subr.mxu0 0.0
      %427 = vmatpush1.msra.mxu0 0.0
      %428 = vmatprep.subr.mxu0 0.0
      %429 = vmatpush1.msra.mxu0 0.0
      %430 = vmatprep.subr.mxu0 0.0
      %431 = vmatpush1.msra.mxu0 0.0
      %432 = vmatprep.subr.mxu0 0.0
      %433 = vmatpush1.msra.mxu0 0.0
      %434 = vmatprep.subr.mxu0 0.0
      %435 = vmatpush1.msra.mxu0 0.0
      %436 = vmatprep.subr.mxu0 0.0
      %437 = vmatpush1.msra.mxu0 0.0
      %438 = vmatprep.subr.mxu0 0.0
      %439 = vmatpush1.msra.mxu0 0.0
      %440 = vmatprep.subr.mxu0 0.0
      %441 = vmatpush1.msra.mxu0 0.0
      %442 = vmatprep.subr.mxu0 0.0
      %443 = vmatpush1.msra.mxu0 0.0
      %444 = vmatprep.mubr.f32.mxu0 0.0
      %445 = vmatmul.mubr.f32.gmra.mrb[0].mxu0 %v364
      %v446 = vpop.f32.mrb[0].mxu0
      %v447 = vadd.f32 %v326, %v446
      %v448 = vpop.f32.mrb[0].mxu0
      %449 = vmatprep.mubr.f32.mxu0 0.0
      %450 = vmatmul.mubr.f32.gmra.mrb[0].mxu0 %v366
      %v451 = vpop.f32.mrb[0].mxu0
      %v452 = vadd.f32 %v331, %v451
      %v453 = vpop.f32.mrb[0].mxu0
      %454 = vmatprep.mubr.f32.mxu0 0.0
      %455 = vmatmul.mubr.f32.gmra.mrb[0].mxu0 %v368
      %v456 = vpop.f32.mrb[0].mxu0
      %v457 = vadd.f32 %v336, %v456
      %v458 = vpop.f32.mrb[0].mxu0
      %459 = vmatprep.mubr.f32.mxu0 0.0
      %460 = vmatmul.mubr.f32.gmra.mrb[0].mxu0 %v370
      %v461 = vpop.f32.mrb[0].mxu0
      %v462 = vadd.f32 %v341, %v461
      %v463 = vpop.f32.mrb[0].mxu0
      %464 = vmatprep.mubr.f32.mxu0 0.0
      %465 = vmatmul.mubr.f32.gmra.mrb[0].mxu0 %v372
      %v466 = vpop.f32.mrb[0].mxu0
      %v467 = vadd.f32 %v346, %v466
      %v468 = vpop.f32.mrb[0].mxu0
      %469 = vmatprep.mubr.f32.mxu0 0.0
      %470 = vmatmul.mubr.f32.gmra.mrb[0].mxu0 %v374
      %v471 = vpop.f32.mrb[0].mxu0
      %v472 = vadd.f32 %v351, %v471
      %v473 = vpop.f32.mrb[0].mxu0
      %474 = vmatprep.mubr.f32.mxu0 0.0
      %475 = vmatmul.mubr.f32.gmra.mrb[0].mxu0 %v376
      %v476 = vpop.f32.mrb[0].mxu0
      %v477 = vadd.f32 %v356, %v476
      %v478 = vpop.f32.mrb[0].mxu0
      %479 = vmatprep.mubr.f32.mxu0 0.0
      %480 = vmatmul.mubr.f32.gmra.mrb[0].mxu0 %v378
      %v481 = vpop.f32.mrb[0].mxu0
      %v482 = vadd.f32 %v361, %v481
      %v483 = vpop.f32.mrb[0].mxu0
      %484 = vdwg.mxu0
      %vm485 = vcmask 1045504
      %v486 = vrot.slane %v172, 2
      %v487 = vrot.slane %v173, 2
      %v488 = vsel %vm485, %v486, %v487
      %v489 = vrot.slane %v174, 2
      %v490 = vrot.slane %v175, 2
      %v491 = vsel %vm485, %v489, %v490
      %v492 = vrot.slane %v176, 2
      %v493 = vrot.slane %v177, 2
      %v494 = vsel %vm485, %v492, %v493
      %v495 = vrot.slane %v178, 2
      %v496 = vrot.slane %v179, 2
      %v497 = vsel %vm485, %v495, %v496
      %v498 = vrot.slane %v180, 2
      %v499 = vrot.slane %v181, 2
      %v500 = vsel %vm485, %v498, %v499
      %v501 = vrot.slane %v182, 2
      %v502 = vrot.slane %v183, 2
      %v503 = vsel %vm485, %v501, %v502
      %v504 = vrot.slane %v184, 2
      %v505 = vrot.slane %v185, 2
      %v506 = vsel %vm485, %v504, %v505
      %v507 = vrot.slane %v186, 2
      %v508 = vrot.slane %v187, 2
      %v509 = vsel %vm485, %v507, %v508
      %s510 = scalar_lea.vmem %s1, 64
      %v511 = vld [vmem:[%s510] sm:$0xff]
      %v512 = vld [vmem:[%s510 + $0x8] sm:$0xff]
      %v513 = vld [vmem:[%s510 + $0x10] sm:$0xff]
      %v514 = vld [vmem:[%s510 + $0x18] sm:$0xff]
      %v515 = vsel %vm242, %v488, 0
      %v517 = vsel %vm242, %v491, 0
      %v519 = vsel %vm242, %v494, 0
      %v521 = vsel %vm242, %v497, 0
      %v523 = vsel %vm242, %v500, 0
      %v525 = vsel %vm242, %v503, 0
      %v527 = vsel %vm242, %v506, 0
      %v529 = vsel %vm242, %v509, 0
      %531 = vmatprep.subr.mxu0 0.0
      %532 = vmatpush1.msra.mxu0 %v511
      %533 = vmatprep.subr.mxu0 0.0
      %534 = vmatpush1.msra.mxu0 %v512
      %535 = vmatprep.subr.mxu0 0.0
      %536 = vmatpush1.msra.mxu0 %v513
      %537 = vmatprep.subr.mxu0 0.0
      %538 = vmatpush1.msra.mxu0 %v514
      %539 = vmatprep.subr.mxu0 0.0
      %540 = vmatpush1.msra.mxu0 0.0
      %541 = vmatprep.subr.mxu0 0.0
      %542 = vmatpush1.msra.mxu0 0.0
      %543 = vmatprep.subr.mxu0 0.0
      %544 = vmatpush1.msra.mxu0 0.0
      %545 = vmatprep.subr.mxu0 0.0
      %546 = vmatpush1.msra.mxu0 0.0
      %547 = vmatprep.subr.mxu0 0.0
      %548 = vmatpush1.msra.mxu0 0.0
      %549 = vmatprep.subr.mxu0 0.0
      %550 = vmatpush1.msra.mxu0 0.0
      %551 = vmatprep.subr.mxu0 0.0
      %552 = vmatpush1.msra.mxu0 0.0
      %553 = vmatprep.subr.mxu0 0.0
      %554 = vmatpush1.msra.mxu0 0.0
      %555 = vmatprep.subr.mxu0 0.0
      %556 = vmatpush1.msra.mxu0 0.0
      %557 = vmatprep.subr.mxu0 0.0
      %558 = vmatpush1.msra.mxu0 0.0
      %559 = vmatprep.subr.mxu0 0.0
      %560 = vmatpush1.msra.mxu0 0.0
      %561 = vmatprep.subr.mxu0 0.0
      %562 = vmatpush1.msra.mxu0 0.0
      %563 = vmatprep.subr.mxu0 0.0
      %564 = vmatpush1.msra.mxu0 0.0
      %565 = vmatprep.subr.mxu0 0.0
      %566 = vmatpush1.msra.mxu0 0.0
      %567 = vmatprep.subr.mxu0 0.0
      %568 = vmatpush1.msra.mxu0 0.0
      %569 = vmatprep.subr.mxu0 0.0
      %570 = vmatpush1.msra.mxu0 0.0
      %571 = vmatprep.subr.mxu0 0.0
      %572 = vmatpush1.msra.mxu0 0.0
      %573 = vmatprep.subr.mxu0 0.0
      %574 = vmatpush1.msra.mxu0 0.0
      %575 = vmatprep.subr.mxu0 0.0
      %576 = vmatpush1.msra.mxu0 0.0
      %577 = vmatprep.subr.mxu0 0.0
      %578 = vmatpush1.msra.mxu0 0.0
      %579 = vmatprep.subr.mxu0 0.0
      %580 = vmatpush1.msra.mxu0 0.0
      %581 = vmatprep.subr.mxu0 0.0
      %582 = vmatpush1.msra.mxu0 0.0
      %583 = vmatprep.subr.mxu0 0.0
      %584 = vmatpush1.msra.mxu0 0.0
      %585 = vmatprep.subr.mxu0 0.0
      %586 = vmatpush1.msra.mxu0 0.0
      %587 = vmatprep.subr.mxu0 0.0
      %588 = vmatpush1.msra.mxu0 0.0
      %589 = vmatprep.subr.mxu0 0.0
      %590 = vmatpush1.msra.mxu0 0.0
      %591 = vmatprep.subr.mxu0 0.0
      %592 = vmatpush1.msra.mxu0 0.0
      %593 = vmatprep.subr.mxu0 0.0
      %594 = vmatpush1.msra.mxu0 0.0
      %595 = vmatprep.mubr.f32.mxu0 0.0
      %596 = vmatmul.mubr.f32.gmra.mrb[0].mxu0 %v515
      %v597 = vpop.f32.mrb[0].mxu0
      %v598 = vadd.f32 0.0, %v597
      %v599 = vpop.f32.mrb[0].mxu0
      %600 = vmatprep.mubr.f32.mxu0 0.0
      %601 = vmatmul.mubr.f32.gmra.mrb[0].mxu0 %v517
      %v602 = vpop.f32.mrb[0].mxu0
      %v603 = vadd.f32 0.0, %v602
      %v604 = vpop.f32.mrb[0].mxu0
      %605 = vmatprep.mubr.f32.mxu0 0.0
      %606 = vmatmul.mubr.f32.gmra.mrb[0].mxu0 %v519
      %v607 = vpop.f32.mrb[0].mxu0
      %v608 = vadd.f32 0.0, %v607
      %v609 = vpop.f32.mrb[0].mxu0
      %610 = vmatprep.mubr.f32.mxu0 0.0
      %611 = vmatmul.mubr.f32.gmra.mrb[0].mxu0 %v521
      %v612 = vpop.f32.mrb[0].mxu0
      %v613 = vadd.f32 0.0, %v612
      %v614 = vpop.f32.mrb[0].mxu0
      %615 = vmatprep.mubr.f32.mxu0 0.0
      %616 = vmatmul.mubr.f32.gmra.mrb[0].mxu0 %v523
      %v617 = vpop.f32.mrb[0].mxu0
      %v618 = vadd.f32 0.0, %v617
      %v619 = vpop.f32.mrb[0].mxu0
      %620 = vmatprep.mubr.f32.mxu0 0.0
      %621 = vmatmul.mubr.f32.gmra.mrb[0].mxu0 %v525
      %v622 = vpop.f32.mrb[0].mxu0
      %v623 = vadd.f32 0.0, %v622
      %v624 = vpop.f32.mrb[0].mxu0
      %625 = vmatprep.mubr.f32.mxu0 0.0
      %626 = vmatmul.mubr.f32.gmra.mrb[0].mxu0 %v527
      %v627 = vpop.f32.mrb[0].mxu0
      %v628 = vadd.f32 0.0, %v627
      %v629 = vpop.f32.mrb[0].mxu0
      %630 = vmatprep.mubr.f32.mxu0 0.0
      %631 = vmatmul.mubr.f32.gmra.mrb[0].mxu0 %v529
      %v632 = vpop.f32.mrb[0].mxu0
      %v633 = vadd.f32 0.0, %v632
      %v634 = vpop.f32.mrb[0].mxu0
      %635 = vdwg.mxu0
      %v636 = vadd.f32 %v447, %v598
      %v637 = vadd.f32 %v452, %v603
      %v638 = vadd.f32 %v457, %v608
      %v639 = vadd.f32 %v462, %v613
      %v640 = vadd.f32 %v467, %v618
      %v641 = vadd.f32 %v472, %v623
      %v642 = vadd.f32 %v477, %v628
      %v643 = vadd.f32 %v482, %v633
      %s644 = scalar_lea.vmem %s1, 96
      %v645 = vld [vmem:[%s644] sm:$0xff]
      %v646 = vld [vmem:[%s644 + $0x8] sm:$0xff]
      %v647 = vld [vmem:[%s644 + $0x10] sm:$0xff]
      %v648 = vld [vmem:[%s644 + $0x18] sm:$0xff]
      %v650 = vsel %vm242, %v188, 0
      %652 = vmatprep.subr.mxu0 0.0
      %653 = vmatpush1.msra.mxu0 %v645
      %654 = vmatprep.subr.mxu0 0.0
      %655 = vmatpush1.msra.mxu0 %v646
      %656 = vmatprep.subr.mxu0 0.0
      %657 = vmatpush1.msra.mxu0 %v647
      %658 = vmatprep.subr.mxu0 0.0
      %659 = vmatpush1.msra.mxu0 %v648
      %660 = vmatprep.subr.mxu0 0.0
      %661 = vmatpush1.msra.mxu0 0.0
      %662 = vmatprep.subr.mxu0 0.0
      %663 = vmatpush1.msra.mxu0 0.0
      %664 = vmatprep.subr.mxu0 0.0
      %665 = vmatpush1.msra.mxu0 0.0
      %666 = vmatprep.subr.mxu0 0.0
      %667 = vmatpush1.msra.mxu0 0.0
      %668 = vmatprep.subr.mxu0 0.0
      %669 = vmatpush1.msra.mxu0 0.0
      %670 = vmatprep.subr.mxu0 0.0
      %671 = vmatpush1.msra.mxu0 0.0
      %672 = vmatprep.subr.mxu0 0.0
      %673 = vmatpush1.msra.mxu0 0.0
      %674 = vmatprep.subr.mxu0 0.0
      %675 = vmatpush1.msra.mxu0 0.0
      %676 = vmatprep.subr.mxu0 0.0
      %677 = vmatpush1.msra.mxu0 0.0
      %678 = vmatprep.subr.mxu0 0.0
      %679 = vmatpush1.msra.mxu0 0.0
      %680 = vmatprep.subr.mxu0 0.0
      %681 = vmatpush1.msra.mxu0 0.0
      %682 = vmatprep.subr.mxu0 0.0
      %683 = vmatpush1.msra.mxu0 0.0
      %684 = vmatprep.subr.mxu0 0.0
      %685 = vmatpush1.msra.mxu0 0.0
      %686 = vmatprep.subr.mxu0 0.0
      %687 = vmatpush1.msra.mxu0 0.0
      %688 = vmatprep.subr.mxu0 0.0
      %689 = vmatpush1.msra.mxu0 0.0
      %690 = vmatprep.subr.mxu0 0.0
      %691 = vmatpush1.msra.mxu0 0.0
      %692 = vmatprep.subr.mxu0 0.0
      %693 = vmatpush1.msra.mxu0 0.0
      %694 = vmatprep.subr.mxu0 0.0
      %695 = vmatpush1.msra.mxu0 0.0
      %696 = vmatprep.subr.mxu0 0.0
      %697 = vmatpush1.msra.mxu0 0.0
      %698 = vmatprep.subr.mxu0 0.0
      %699 = vmatpush1.msra.mxu0 0.0
      %700 = vmatprep.subr.mxu0 0.0
      %701 = vmatpush1.msra.mxu0 0.0
      %702 = vmatprep.subr.mxu0 0.0
      %703 = vmatpush1.msra.mxu0 0.0
      %704 = vmatprep.subr.mxu0 0.0
      %705 = vmatpush1.msra.mxu0 0.0
      %706 = vmatprep.subr.mxu0 0.0
      %707 = vmatpush1.msra.mxu0 0.0
      %708 = vmatprep.subr.mxu0 0.0
      %709 = vmatpush1.msra.mxu0 0.0
      %710 = vmatprep.subr.mxu0 0.0
      %711 = vmatpush1.msra.mxu0 0.0
      %712 = vmatprep.subr.mxu0 0.0
      %713 = vmatpush1.msra.mxu0 0.0
      %714 = vmatprep.subr.mxu0 0.0
      %715 = vmatpush1.msra.mxu0 0.0
      %716 = vmatprep.mubr.f32.mxu0 0.0
      %717 = vmatmul.mubr.f32.gmra.mrb[0].mxu0 %v366
      %v718 = vpop.f32.mrb[0].mxu0
      %v719 = vadd.f32 0.0, %v718
      %v720 = vpop.f32.mrb[0].mxu0
      %721 = vmatprep.mubr.f32.mxu0 0.0
      %722 = vmatmul.mubr.f32.gmra.mrb[0].mxu0 %v368
      %v723 = vpop.f32.mrb[0].mxu0
      %v724 = vadd.f32 0.0, %v723
      %v725 = vpop.f32.mrb[0].mxu0
      %726 = vmatprep.mubr.f32.mxu0 0.0
      %727 = vmatmul.mubr.f32.gmra.mrb[0].mxu0 %v370
      %v728 = vpop.f32.mrb[0].mxu0
      %v729 = vadd.f32 0.0, %v728
      %v730 = vpop.f32.mrb[0].mxu0
      %731 = vmatprep.mubr.f32.mxu0 0.0
      %732 = vmatmul.mubr.f32.gmra.mrb[0].mxu0 %v372
      %v733 = vpop.f32.mrb[0].mxu0
      %v734 = vadd.f32 0.0, %v733
      %v735 = vpop.f32.mrb[0].mxu0
      %736 = vmatprep.mubr.f32.mxu0 0.0
      %737 = vmatmul.mubr.f32.gmra.mrb[0].mxu0 %v374
      %v738 = vpop.f32.mrb[0].mxu0
      %v739 = vadd.f32 0.0, %v738
      %v740 = vpop.f32.mrb[0].mxu0
      %741 = vmatprep.mubr.f32.mxu0 0.0
      %742 = vmatmul.mubr.f32.gmra.mrb[0].mxu0 %v376
      %v743 = vpop.f32.mrb[0].mxu0
      %v744 = vadd.f32 0.0, %v743
      %v745 = vpop.f32.mrb[0].mxu0
      %746 = vmatprep.mubr.f32.mxu0 0.0
      %747 = vmatmul.mubr.f32.gmra.mrb[0].mxu0 %v378
      %v748 = vpop.f32.mrb[0].mxu0
      %v749 = vadd.f32 0.0, %v748
      %v750 = vpop.f32.mrb[0].mxu0
      %751 = vmatprep.mubr.f32.mxu0 0.0
      %752 = vmatmul.mubr.f32.gmra.mrb[0].mxu0 %v650
      %v753 = vpop.f32.mrb[0].mxu0
      %v754 = vadd.f32 0.0, %v753
      %v755 = vpop.f32.mrb[0].mxu0
      %756 = vdwg.mxu0
      %v757 = vadd.f32 %v636, %v719
      %v758 = vadd.f32 %v637, %v724
      %v759 = vadd.f32 %v638, %v729
      %v760 = vadd.f32 %v639, %v734
      %v761 = vadd.f32 %v640, %v739
      %v762 = vadd.f32 %v641, %v744
      %v763 = vadd.f32 %v642, %v749
      %v764 = vadd.f32 %v643, %v754
      %v766 = vrot.slane %v188, 1
      %v767 = vrot.slane %v189, 1
      %v768 = vsel %vm212, %v766, %v767
      %s769 = scalar_lea.vmem %s1, 128
      %v770 = vld [vmem:[%s769] sm:$0xff]
      %v771 = vld [vmem:[%s769 + $0x8] sm:$0xff]
      %v772 = vld [vmem:[%s769 + $0x10] sm:$0xff]
      %v773 = vld [vmem:[%s769 + $0x18] sm:$0xff]
      %v774 = vsel %vm242, %v768, 0
      %776 = vmatprep.subr.mxu0 0.0
      %777 = vmatpush1.msra.mxu0 %v770
      %778 = vmatprep.subr.mxu0 0.0
      %779 = vmatpush1.msra.mxu0 %v771
      %780 = vmatprep.subr.mxu0 0.0
      %781 = vmatpush1.msra.mxu0 %v772
      %782 = vmatprep.subr.mxu0 0.0
      %783 = vmatpush1.msra.mxu0 %v773
      %784 = vmatprep.subr.mxu0 0.0
      %785 = vmatpush1.msra.mxu0 0.0
      %786 = vmatprep.subr.mxu0 0.0
      %787 = vmatpush1.msra.mxu0 0.0
      %788 = vmatprep.subr.mxu0 0.0
      %789 = vmatpush1.msra.mxu0 0.0
      %790 = vmatprep.subr.mxu0 0.0
      %791 = vmatpush1.msra.mxu0 0.0
      %792 = vmatprep.subr.mxu0 0.0
      %793 = vmatpush1.msra.mxu0 0.0
      %794 = vmatprep.subr.mxu0 0.0
      %795 = vmatpush1.msra.mxu0 0.0
      %796 = vmatprep.subr.mxu0 0.0
      %797 = vmatpush1.msra.mxu0 0.0
      %798 = vmatprep.subr.mxu0 0.0
      %799 = vmatpush1.msra.mxu0 0.0
      %800 = vmatprep.subr.mxu0 0.0
      %801 = vmatpush1.msra.mxu0 0.0
      %802 = vmatprep.subr.mxu0 0.0
      %803 = vmatpush1.msra.mxu0 0.0
      %804 = vmatprep.subr.mxu0 0.0
      %805 = vmatpush1.msra.mxu0 0.0
      %806 = vmatprep.subr.mxu0 0.0
      %807 = vmatpush1.msra.mxu0 0.0
      %808 = vmatprep.subr.mxu0 0.0
      %809 = vmatpush1.msra.mxu0 0.0
      %810 = vmatprep.subr.mxu0 0.0
      %811 = vmatpush1.msra.mxu0 0.0
      %812 = vmatprep.subr.mxu0 0.0
      %813 = vmatpush1.msra.mxu0 0.0
      %814 = vmatprep.subr.mxu0 0.0
      %815 = vmatpush1.msra.mxu0 0.0
      %816 = vmatprep.subr.mxu0 0.0
      %817 = vmatpush1.msra.mxu0 0.0
      %818 = vmatprep.subr.mxu0 0.0
      %819 = vmatpush1.msra.mxu0 0.0
      %820 = vmatprep.subr.mxu0 0.0
      %821 = vmatpush1.msra.mxu0 0.0
      %822 = vmatprep.subr.mxu0 0.0
      %823 = vmatpush1.msra.mxu0 0.0
      %824 = vmatprep.subr.mxu0 0.0
      %825 = vmatpush1.msra.mxu0 0.0
      %826 = vmatprep.subr.mxu0 0.0
      %827 = vmatpush1.msra.mxu0 0.0
      %828 = vmatprep.subr.mxu0 0.0
      %829 = vmatpush1.msra.mxu0 0.0
      %830 = vmatprep.subr.mxu0 0.0
      %831 = vmatpush1.msra.mxu0 0.0
      %832 = vmatprep.subr.mxu0 0.0
      %833 = vmatpush1.msra.mxu0 0.0
      %834 = vmatprep.subr.mxu0 0.0
      %835 = vmatpush1.msra.mxu0 0.0
      %836 = vmatprep.subr.mxu0 0.0
      %837 = vmatpush1.msra.mxu0 0.0
      %838 = vmatprep.subr.mxu0 0.0
      %839 = vmatpush1.msra.mxu0 0.0
      %840 = vmatprep.mubr.f32.mxu0 0.0
      %841 = vmatmul.mubr.f32.gmra.mrb[0].mxu0 %v245
      %v842 = vpop.f32.mrb[0].mxu0
      %v843 = vadd.f32 0.0, %v842
      %v844 = vpop.f32.mrb[0].mxu0
      %845 = vmatprep.mubr.f32.mxu0 0.0
      %846 = vmatmul.mubr.f32.gmra.mrb[0].mxu0 %v247
      %v847 = vpop.f32.mrb[0].mxu0
      %v848 = vadd.f32 0.0, %v847
      %v849 = vpop.f32.mrb[0].mxu0
      %850 = vmatprep.mubr.f32.mxu0 0.0
      %851 = vmatmul.mubr.f32.gmra.mrb[0].mxu0 %v249
      %v852 = vpop.f32.mrb[0].mxu0
      %v853 = vadd.f32 0.0, %v852
      %v854 = vpop.f32.mrb[0].mxu0
      %855 = vmatprep.mubr.f32.mxu0 0.0
      %856 = vmatmul.mubr.f32.gmra.mrb[0].mxu0 %v251
      %v857 = vpop.f32.mrb[0].mxu0
      %v858 = vadd.f32 0.0, %v857
      %v859 = vpop.f32.mrb[0].mxu0
      %860 = vmatprep.mubr.f32.mxu0 0.0
      %861 = vmatmul.mubr.f32.gmra.mrb[0].mxu0 %v253
      %v862 = vpop.f32.mrb[0].mxu0
      %v863 = vadd.f32 0.0, %v862
      %v864 = vpop.f32.mrb[0].mxu0
      %865 = vmatprep.mubr.f32.mxu0 0.0
      %866 = vmatmul.mubr.f32.gmra.mrb[0].mxu0 %v255
      %v867 = vpop.f32.mrb[0].mxu0
      %v868 = vadd.f32 0.0, %v867
      %v869 = vpop.f32.mrb[0].mxu0
      %870 = vmatprep.mubr.f32.mxu0 0.0
      %871 = vmatmul.mubr.f32.gmra.mrb[0].mxu0 %v257
      %v872 = vpop.f32.mrb[0].mxu0
      %v873 = vadd.f32 0.0, %v872
      %v874 = vpop.f32.mrb[0].mxu0
      %875 = vmatprep.mubr.f32.mxu0 0.0
      %876 = vmatmul.mubr.f32.gmra.mrb[0].mxu0 %v774
      %v877 = vpop.f32.mrb[0].mxu0
      %v878 = vadd.f32 0.0, %v877
      %v879 = vpop.f32.mrb[0].mxu0
      %880 = vdwg.mxu0
      %v881 = vadd.f32 %v757, %v843
      %v882 = vadd.f32 %v758, %v848
      %v883 = vadd.f32 %v759, %v853
      %v884 = vadd.f32 %v760, %v858
      %v885 = vadd.f32 %v761, %v863
      %v886 = vadd.f32 %v762, %v868
      %v887 = vadd.f32 %v763, %v873
      %v888 = vadd.f32 %v764, %v878
      %v889 = vrot.slane %v188, 2
      %v890 = vrot.slane %v189, 2
      %v891 = vsel %vm485, %v889, %v890
      %s892 = scalar_lea.vmem %s1, 160
      %v893 = vld [vmem:[%s892] sm:$0xff]
      %v894 = vld [vmem:[%s892 + $0x8] sm:$0xff]
      %v895 = vld [vmem:[%s892 + $0x10] sm:$0xff]
      %v896 = vld [vmem:[%s892 + $0x18] sm:$0xff]
      %v897 = vsel %vm242, %v891, 0
      %899 = vmatprep.subr.mxu0 0.0
      %900 = vmatpush1.msra.mxu0 %v893
      %901 = vmatprep.subr.mxu0 0.0
      %902 = vmatpush1.msra.mxu0 %v894
      %903 = vmatprep.subr.mxu0 0.0
      %904 = vmatpush1.msra.mxu0 %v895
      %905 = vmatprep.subr.mxu0 0.0
      %906 = vmatpush1.msra.mxu0 %v896
      %907 = vmatprep.subr.mxu0 0.0
      %908 = vmatpush1.msra.mxu0 0.0
      %909 = vmatprep.subr.mxu0 0.0
      %910 = vmatpush1.msra.mxu0 0.0
      %911 = vmatprep.subr.mxu0 0.0
      %912 = vmatpush1.msra.mxu0 0.0
      %913 = vmatprep.subr.mxu0 0.0
      %914 = vmatpush1.msra.mxu0 0.0
      %915 = vmatprep.subr.mxu0 0.0
      %916 = vmatpush1.msra.mxu0 0.0
      %917 = vmatprep.subr.mxu0 0.0
      %918 = vmatpush1.msra.mxu0 0.0
      %919 = vmatprep.subr.mxu0 0.0
      %920 = vmatpush1.msra.mxu0 0.0
      %921 = vmatprep.subr.mxu0 0.0
      %922 = vmatpush1.msra.mxu0 0.0
      %923 = vmatprep.subr.mxu0 0.0
      %924 = vmatpush1.msra.mxu0 0.0
      %925 = vmatprep.subr.mxu0 0.0
      %926 = vmatpush1.msra.mxu0 0.0
      %927 = vmatprep.subr.mxu0 0.0
      %928 = vmatpush1.msra.mxu0 0.0
      %929 = vmatprep.subr.mxu0 0.0
      %930 = vmatpush1.msra.mxu0 0.0
      %931 = vmatprep.subr.mxu0 0.0
      %932 = vmatpush1.msra.mxu0 0.0
      %933 = vmatprep.subr.mxu0 0.0
      %934 = vmatpush1.msra.mxu0 0.0
      %935 = vmatprep.subr.mxu0 0.0
      %936 = vmatpush1.msra.mxu0 0.0
      %937 = vmatprep.subr.mxu0 0.0
      %938 = vmatpush1.msra.mxu0 0.0
      %939 = vmatprep.subr.mxu0 0.0
      %940 = vmatpush1.msra.mxu0 0.0
      %941 = vmatprep.subr.mxu0 0.0
      %942 = vmatpush1.msra.mxu0 0.0
      %943 = vmatprep.subr.mxu0 0.0
      %944 = vmatpush1.msra.mxu0 0.0
      %945 = vmatprep.subr.mxu0 0.0
      %946 = vmatpush1.msra.mxu0 0.0
      %947 = vmatprep.subr.mxu0 0.0
      %948 = vmatpush1.msra.mxu0 0.0
      %949 = vmatprep.subr.mxu0 0.0
      %950 = vmatpush1.msra.mxu0 0.0
      %951 = vmatprep.subr.mxu0 0.0
      %952 = vmatpush1.msra.mxu0 0.0
      %953 = vmatprep.subr.mxu0 0.0
      %954 = vmatpush1.msra.mxu0 0.0
      %955 = vmatprep.subr.mxu0 0.0
      %956 = vmatpush1.msra.mxu0 0.0
      %957 = vmatprep.subr.mxu0 0.0
      %958 = vmatpush1.msra.mxu0 0.0
      %959 = vmatprep.subr.mxu0 0.0
      %960 = vmatpush1.msra.mxu0 0.0
      %961 = vmatprep.subr.mxu0 0.0
      %962 = vmatpush1.msra.mxu0 0.0
      %963 = vmatprep.mubr.f32.mxu0 0.0
      %964 = vmatmul.mubr.f32.gmra.mrb[0].mxu0 %v517
      %v965 = vpop.f32.mrb[0].mxu0
      %v966 = vadd.f32 0.0, %v965
      %v967 = vpop.f32.mrb[0].mxu0
      %968 = vmatprep.mubr.f32.mxu0 0.0
      %969 = vmatmul.mubr.f32.gmra.mrb[0].mxu0 %v519
      %v970 = vpop.f32.mrb[0].mxu0
      %v971 = vadd.f32 0.0, %v970
      %v972 = vpop.f32.mrb[0].mxu0
      %973 = vmatprep.mubr.f32.mxu0 0.0
      %974 = vmatmul.mubr.f32.gmra.mrb[0].mxu0 %v521
      %v975 = vpop.f32.mrb[0].mxu0
      %v976 = vadd.f32 0.0, %v975
      %v977 = vpop.f32.mrb[0].mxu0
      %978 = vmatprep.mubr.f32.mxu0 0.0
      %979 = vmatmul.mubr.f32.gmra.mrb[0].mxu0 %v523
      %v980 = vpop.f32.mrb[0].mxu0
      %v981 = vadd.f32 0.0, %v980
      %v982 = vpop.f32.mrb[0].mxu0
      %983 = vmatprep.mubr.f32.mxu0 0.0
      %984 = vmatmul.mubr.f32.gmra.mrb[0].mxu0 %v525
      %v985 = vpop.f32.mrb[0].mxu0
      %v986 = vadd.f32 0.0, %v985
      %v987 = vpop.f32.mrb[0].mxu0
      %988 = vmatprep.mubr.f32.mxu0 0.0
      %989 = vmatmul.mubr.f32.gmra.mrb[0].mxu0 %v527
      %v990 = vpop.f32.mrb[0].mxu0
      %v991 = vadd.f32 0.0, %v990
      %v992 = vpop.f32.mrb[0].mxu0
      %993 = vmatprep.mubr.f32.mxu0 0.0
      %994 = vmatmul.mubr.f32.gmra.mrb[0].mxu0 %v529
      %v995 = vpop.f32.mrb[0].mxu0
      %v996 = vadd.f32 0.0, %v995
      %v997 = vpop.f32.mrb[0].mxu0
      %998 = vmatprep.mubr.f32.mxu0 0.0
      %999 = vmatmul.mubr.f32.gmra.mrb[0].mxu0 %v897
      %v1000 = vpop.f32.mrb[0].mxu0
      %v1001 = vadd.f32 0.0, %v1000
      %v1002 = vpop.f32.mrb[0].mxu0
      %1003 = vdwg.mxu0
      %v1004 = vadd.f32 %v881, %v966
      %v1005 = vadd.f32 %v882, %v971
      %v1006 = vadd.f32 %v883, %v976
      %v1007 = vadd.f32 %v884, %v981
      %v1008 = vadd.f32 %v885, %v986
      %v1009 = vadd.f32 %v886, %v991
      %v1010 = vadd.f32 %v887, %v996
      %v1011 = vadd.f32 %v888, %v1001
      %s1012 = scalar_lea.vmem %s1, 192
      %v1013 = vld [vmem:[%s1012] sm:$0xff]
      %v1014 = vld [vmem:[%s1012 + $0x8] sm:$0xff]
      %v1015 = vld [vmem:[%s1012 + $0x10] sm:$0xff]
      %v1016 = vld [vmem:[%s1012 + $0x18] sm:$0xff]
      %v1018 = vsel %vm242, %v190, 0
      %1020 = vmatprep.subr.mxu0 0.0
      %1021 = vmatpush1.msra.mxu0 %v1013
      %1022 = vmatprep.subr.mxu0 0.0
      %1023 = vmatpush1.msra.mxu0 %v1014
      %1024 = vmatprep.subr.mxu0 0.0
      %1025 = vmatpush1.msra.mxu0 %v1015
      %1026 = vmatprep.subr.mxu0 0.0
      %1027 = vmatpush1.msra.mxu0 %v1016
      %1028 = vmatprep.subr.mxu0 0.0
      %1029 = vmatpush1.msra.mxu0 0.0
      %1030 = vmatprep.subr.mxu0 0.0
      %1031 = vmatpush1.msra.mxu0 0.0
      %1032 = vmatprep.subr.mxu0 0.0
      %1033 = vmatpush1.msra.mxu0 0.0
      %1034 = vmatprep.subr.mxu0 0.0
      %1035 = vmatpush1.msra.mxu0 0.0
      %1036 = vmatprep.subr.mxu0 0.0
      %1037 = vmatpush1.msra.mxu0 0.0
      %1038 = vmatprep.subr.mxu0 0.0
      %1039 = vmatpush1.msra.mxu0 0.0
      %1040 = vmatprep.subr.mxu0 0.0
      %1041 = vmatpush1.msra.mxu0 0.0
      %1042 = vmatprep.subr.mxu0 0.0
      %1043 = vmatpush1.msra.mxu0 0.0
      %1044 = vmatprep.subr.mxu0 0.0
      %1045 = vmatpush1.msra.mxu0 0.0
      %1046 = vmatprep.subr.mxu0 0.0
      %1047 = vmatpush1.msra.mxu0 0.0
      %1048 = vmatprep.subr.mxu0 0.0
      %1049 = vmatpush1.msra.mxu0 0.0
      %1050 = vmatprep.subr.mxu0 0.0
      %1051 = vmatpush1.msra.mxu0 0.0
      %1052 = vmatprep.subr.mxu0 0.0
      %1053 = vmatpush1.msra.mxu0 0.0
      %1054 = vmatprep.subr.mxu0 0.0
      %1055 = vmatpush1.msra.mxu0 0.0
      %1056 = vmatprep.subr.mxu0 0.0
      %1057 = vmatpush1.msra.mxu0 0.0
      %1058 = vmatprep.subr.mxu0 0.0
      %1059 = vmatpush1.msra.mxu0 0.0
      %1060 = vmatprep.subr.mxu0 0.0
      %1061 = vmatpush1.msra.mxu0 0.0
      %1062 = vmatprep.subr.mxu0 0.0
      %1063 = vmatpush1.msra.mxu0 0.0
      %1064 = vmatprep.subr.mxu0 0.0
      %1065 = vmatpush1.msra.mxu0 0.0
      %1066 = vmatprep.subr.mxu0 0.0
      %1067 = vmatpush1.msra.mxu0 0.0
      %1068 = vmatprep.subr.mxu0 0.0
      %1069 = vmatpush1.msra.mxu0 0.0
      %1070 = vmatprep.subr.mxu0 0.0
      %1071 = vmatpush1.msra.mxu0 0.0
      %1072 = vmatprep.subr.mxu0 0.0
      %1073 = vmatpush1.msra.mxu0 0.0
      %1074 = vmatprep.subr.mxu0 0.0
      %1075 = vmatpush1.msra.mxu0 0.0
      %1076 = vmatprep.subr.mxu0 0.0
      %1077 = vmatpush1.msra.mxu0 0.0
      %1078 = vmatprep.subr.mxu0 0.0
      %1079 = vmatpush1.msra.mxu0 0.0
      %1080 = vmatprep.subr.mxu0 0.0
      %1081 = vmatpush1.msra.mxu0 0.0
      %1082 = vmatprep.subr.mxu0 0.0
      %1083 = vmatpush1.msra.mxu0 0.0
      %1084 = vmatprep.mubr.f32.mxu0 0.0
      %1085 = vmatmul.mubr.f32.gmra.mrb[0].mxu0 %v368
      %v1086 = vpop.f32.mrb[0].mxu0
      %v1087 = vadd.f32 0.0, %v1086
      %v1088 = vpop.f32.mrb[0].mxu0
      %1089 = vmatprep.mubr.f32.mxu0 0.0
      %1090 = vmatmul.mubr.f32.gmra.mrb[0].mxu0 %v370
      %v1091 = vpop.f32.mrb[0].mxu0
      %v1092 = vadd.f32 0.0, %v1091
      %v1093 = vpop.f32.mrb[0].mxu0
      %1094 = vmatprep.mubr.f32.mxu0 0.0
      %1095 = vmatmul.mubr.f32.gmra.mrb[0].mxu0 %v372
      %v1096 = vpop.f32.mrb[0].mxu0
      %v1097 = vadd.f32 0.0, %v1096
      %v1098 = vpop.f32.mrb[0].mxu0
      %1099 = vmatprep.mubr.f32.mxu0 0.0
      %1100 = vmatmul.mubr.f32.gmra.mrb[0].mxu0 %v374
      %v1101 = vpop.f32.mrb[0].mxu0
      %v1102 = vadd.f32 0.0, %v1101
      %v1103 = vpop.f32.mrb[0].mxu0
      %1104 = vmatprep.mubr.f32.mxu0 0.0
      %1105 = vmatmul.mubr.f32.gmra.mrb[0].mxu0 %v376
      %v1106 = vpop.f32.mrb[0].mxu0
      %v1107 = vadd.f32 0.0, %v1106
      %v1108 = vpop.f32.mrb[0].mxu0
      %1109 = vmatprep.mubr.f32.mxu0 0.0
      %1110 = vmatmul.mubr.f32.gmra.mrb[0].mxu0 %v378
      %v1111 = vpop.f32.mrb[0].mxu0
      %v1112 = vadd.f32 0.0, %v1111
      %v1113 = vpop.f32.mrb[0].mxu0
      %1114 = vmatprep.mubr.f32.mxu0 0.0
      %1115 = vmatmul.mubr.f32.gmra.mrb[0].mxu0 %v650
      %v1116 = vpop.f32.mrb[0].mxu0
      %v1117 = vadd.f32 0.0, %v1116
      %v1118 = vpop.f32.mrb[0].mxu0
      %1119 = vmatprep.mubr.f32.mxu0 0.0
      %1120 = vmatmul.mubr.f32.gmra.mrb[0].mxu0 %v1018
      %v1121 = vpop.f32.mrb[0].mxu0
      %v1122 = vadd.f32 0.0, %v1121
      %v1123 = vpop.f32.mrb[0].mxu0
      %1124 = vdwg.mxu0
      %v1125 = vadd.f32 %v1004, %v1087
      %v1126 = vadd.f32 %v1005, %v1092
      %v1127 = vadd.f32 %v1006, %v1097
      %v1128 = vadd.f32 %v1007, %v1102
      %v1129 = vadd.f32 %v1008, %v1107
      %v1130 = vadd.f32 %v1009, %v1112
      %v1131 = vadd.f32 %v1010, %v1117
      %v1132 = vadd.f32 %v1011, %v1122
      %v1134 = vrot.slane %v190, 1
      %v1135 = vrot.slane %v191, 1
      %v1136 = vsel %vm212, %v1134, %v1135
      %s1137 = scalar_lea.vmem %s1, 224
      %v1138 = vld [vmem:[%s1137] sm:$0xff]
      %v1139 = vld [vmem:[%s1137 + $0x8] sm:$0xff]
      %v1140 = vld [vmem:[%s1137 + $0x10] sm:$0xff]
      %v1141 = vld [vmem:[%s1137 + $0x18] sm:$0xff]
      %v1142 = vsel %vm242, %v1136, 0
      %1144 = vmatprep.subr.mxu0 0.0
      %1145 = vmatpush1.msra.mxu0 %v1138
      %1146 = vmatprep.subr.mxu0 0.0
      %1147 = vmatpush1.msra.mxu0 %v1139
      %1148 = vmatprep.subr.mxu0 0.0
      %1149 = vmatpush1.msra.mxu0 %v1140
      %1150 = vmatprep.subr.mxu0 0.0
      %1151 = vmatpush1.msra.mxu0 %v1141
      %1152 = vmatprep.subr.mxu0 0.0
      %1153 = vmatpush1.msra.mxu0 0.0
      %1154 = vmatprep.subr.mxu0 0.0
      %1155 = vmatpush1.msra.mxu0 0.0
      %1156 = vmatprep.subr.mxu0 0.0
      %1157 = vmatpush1.msra.mxu0 0.0
      %1158 = vmatprep.subr.mxu0 0.0
      %1159 = vmatpush1.msra.mxu0 0.0
      %1160 = vmatprep.subr.mxu0 0.0
      %1161 = vmatpush1.msra.mxu0 0.0
      %1162 = vmatprep.subr.mxu0 0.0
      %1163 = vmatpush1.msra.mxu0 0.0
      %1164 = vmatprep.subr.mxu0 0.0
      %1165 = vmatpush1.msra.mxu0 0.0
      %1166 = vmatprep.subr.mxu0 0.0
      %1167 = vmatpush1.msra.mxu0 0.0
      %1168 = vmatprep.subr.mxu0 0.0
      %1169 = vmatpush1.msra.mxu0 0.0
      %1170 = vmatprep.subr.mxu0 0.0
      %1171 = vmatpush1.msra.mxu0 0.0
      %1172 = vmatprep.subr.mxu0 0.0
      %1173 = vmatpush1.msra.mxu0 0.0
      %1174 = vmatprep.subr.mxu0 0.0
      %1175 = vmatpush1.msra.mxu0 0.0
      %1176 = vmatprep.subr.mxu0 0.0
      %1177 = vmatpush1.msra.mxu0 0.0
      %1178 = vmatprep.subr.mxu0 0.0
      %1179 = vmatpush1.msra.mxu0 0.0
      %1180 = vmatprep.subr.mxu0 0.0
      %1181 = vmatpush1.msra.mxu0 0.0
      %1182 = vmatprep.subr.mxu0 0.0
      %1183 = vmatpush1.msra.mxu0 0.0
      %1184 = vmatprep.subr.mxu0 0.0
      %1185 = vmatpush1.msra.mxu0 0.0
      %1186 = vmatprep.subr.mxu0 0.0
      %1187 = vmatpush1.msra.mxu0 0.0
      %1188 = vmatprep.subr.mxu0 0.0
      %1189 = vmatpush1.msra.mxu0 0.0
      %1190 = vmatprep.subr.mxu0 0.0
      %1191 = vmatpush1.msra.mxu0 0.0
      %1192 = vmatprep.subr.mxu0 0.0
      %1193 = vmatpush1.msra.mxu0 0.0
      %1194 = vmatprep.subr.mxu0 0.0
      %1195 = vmatpush1.msra.mxu0 0.0
      %1196 = vmatprep.subr.mxu0 0.0
      %1197 = vmatpush1.msra.mxu0 0.0
      %1198 = vmatprep.subr.mxu0 0.0
      %1199 = vmatpush1.msra.mxu0 0.0
      %1200 = vmatprep.subr.mxu0 0.0
      %1201 = vmatpush1.msra.mxu0 0.0
      %1202 = vmatprep.subr.mxu0 0.0
      %1203 = vmatpush1.msra.mxu0 0.0
      %1204 = vmatprep.subr.mxu0 0.0
      %1205 = vmatpush1.msra.mxu0 0.0
      %1206 = vmatprep.subr.mxu0 0.0
      %1207 = vmatpush1.msra.mxu0 0.0
      %1208 = vmatprep.mubr.f32.mxu0 0.0
      %1209 = vmatmul.mubr.f32.gmra.mrb[0].mxu0 %v247
      %v1210 = vpop.f32.mrb[0].mxu0
      %v1211 = vadd.f32 0.0, %v1210
      %v1212 = vpop.f32.mrb[0].mxu0
      %1213 = vmatprep.mubr.f32.mxu0 0.0
      %1214 = vmatmul.mubr.f32.gmra.mrb[0].mxu0 %v249
      %v1215 = vpop.f32.mrb[0].mxu0
      %v1216 = vadd.f32 0.0, %v1215
      %v1217 = vpop.f32.mrb[0].mxu0
      %1218 = vmatprep.mubr.f32.mxu0 0.0
      %1219 = vmatmul.mubr.f32.gmra.mrb[0].mxu0 %v251
      %v1220 = vpop.f32.mrb[0].mxu0
      %v1221 = vadd.f32 0.0, %v1220
      %v1222 = vpop.f32.mrb[0].mxu0
      %1223 = vmatprep.mubr.f32.mxu0 0.0
      %1224 = vmatmul.mubr.f32.gmra.mrb[0].mxu0 %v253
      %v1225 = vpop.f32.mrb[0].mxu0
      %v1226 = vadd.f32 0.0, %v1225
      %v1227 = vpop.f32.mrb[0].mxu0
      %1228 = vmatprep.mubr.f32.mxu0 0.0
      %1229 = vmatmul.mubr.f32.gmra.mrb[0].mxu0 %v255
      %v1230 = vpop.f32.mrb[0].mxu0
      %v1231 = vadd.f32 0.0, %v1230
      %v1232 = vpop.f32.mrb[0].mxu0
      %1233 = vmatprep.mubr.f32.mxu0 0.0
      %1234 = vmatmul.mubr.f32.gmra.mrb[0].mxu0 %v257
      %v1235 = vpop.f32.mrb[0].mxu0
      %v1236 = vadd.f32 0.0, %v1235
      %v1237 = vpop.f32.mrb[0].mxu0
      %1238 = vmatprep.mubr.f32.mxu0 0.0
      %1239 = vmatmul.mubr.f32.gmra.mrb[0].mxu0 %v774
      %v1240 = vpop.f32.mrb[0].mxu0
      %v1241 = vadd.f32 0.0, %v1240
      %v1242 = vpop.f32.mrb[0].mxu0
      %1243 = vmatprep.mubr.f32.mxu0 0.0
      %1244 = vmatmul.mubr.f32.gmra.mrb[0].mxu0 %v1142
      %v1245 = vpop.f32.mrb[0].mxu0
      %v1246 = vadd.f32 0.0, %v1245
      %v1247 = vpop.f32.mrb[0].mxu0
      %1248 = vdwg.mxu0
      %v1249 = vadd.f32 %v1125, %v1211
      %v1250 = vadd.f32 %v1126, %v1216
      %v1251 = vadd.f32 %v1127, %v1221
      %v1252 = vadd.f32 %v1128, %v1226
      %v1253 = vadd.f32 %v1129, %v1231
      %v1254 = vadd.f32 %v1130, %v1236
      %v1255 = vadd.f32 %v1131, %v1241
      %v1256 = vadd.f32 %v1132, %v1246
      %v1257 = vrot.slane %v190, 2
      %v1258 = vrot.slane %v191, 2
      %v1259 = vsel %vm485, %v1257, %v1258
      %s1260 = scalar_lea.vmem %s1, 256
      %v1261 = vld [vmem:[%s1260] sm:$0xff]
      %v1262 = vld [vmem:[%s1260 + $0x8] sm:$0xff]
      %v1263 = vld [vmem:[%s1260 + $0x10] sm:$0xff]
      %v1264 = vld [vmem:[%s1260 + $0x18] sm:$0xff]
      %v1265 = vsel %vm242, %v1259, 0
      %1267 = vmatprep.subr.mxu0 0.0
      %1268 = vmatpush1.msra.mxu0 %v1261
      %1269 = vmatprep.subr.mxu0 0.0
      %1270 = vmatpush1.msra.mxu0 %v1262
      %1271 = vmatprep.subr.mxu0 0.0
      %1272 = vmatpush1.msra.mxu0 %v1263
      %1273 = vmatprep.subr.mxu0 0.0
      %1274 = vmatpush1.msra.mxu0 %v1264
      %1275 = vmatprep.subr.mxu0 0.0
      %1276 = vmatpush1.msra.mxu0 0.0
      %1277 = vmatprep.subr.mxu0 0.0
      %1278 = vmatpush1.msra.mxu0 0.0
      %1279 = vmatprep.subr.mxu0 0.0
      %1280 = vmatpush1.msra.mxu0 0.0
      %1281 = vmatprep.subr.mxu0 0.0
      %1282 = vmatpush1.msra.mxu0 0.0
      %1283 = vmatprep.subr.mxu0 0.0
      %1284 = vmatpush1.msra.mxu0 0.0
      %1285 = vmatprep.subr.mxu0 0.0
      %1286 = vmatpush1.msra.mxu0 0.0
      %1287 = vmatprep.subr.mxu0 0.0
      %1288 = vmatpush1.msra.mxu0 0.0
      %1289 = vmatprep.subr.mxu0 0.0
      %1290 = vmatpush1.msra.mxu0 0.0
      %1291 = vmatprep.subr.mxu0 0.0
      %1292 = vmatpush1.msra.mxu0 0.0
      %1293 = vmatprep.subr.mxu0 0.0
      %1294 = vmatpush1.msra.mxu0 0.0
      %1295 = vmatprep.subr.mxu0 0.0
      %1296 = vmatpush1.msra.mxu0 0.0
      %1297 = vmatprep.subr.mxu0 0.0
      %1298 = vmatpush1.msra.mxu0 0.0
      %1299 = vmatprep.subr.mxu0 0.0
      %1300 = vmatpush1.msra.mxu0 0.0
      %1301 = vmatprep.subr.mxu0 0.0
      %1302 = vmatpush1.msra.mxu0 0.0
      %1303 = vmatprep.subr.mxu0 0.0
      %1304 = vmatpush1.msra.mxu0 0.0
      %1305 = vmatprep.subr.mxu0 0.0
      %1306 = vmatpush1.msra.mxu0 0.0
      %1307 = vmatprep.subr.mxu0 0.0
      %1308 = vmatpush1.msra.mxu0 0.0
      %1309 = vmatprep.subr.mxu0 0.0
      %1310 = vmatpush1.msra.mxu0 0.0
      %1311 = vmatprep.subr.mxu0 0.0
      %1312 = vmatpush1.msra.mxu0 0.0
      %1313 = vmatprep.subr.mxu0 0.0
      %1314 = vmatpush1.msra.mxu0 0.0
      %1315 = vmatprep.subr.mxu0 0.0
      %1316 = vmatpush1.msra.mxu0 0.0
      %1317 = vmatprep.subr.mxu0 0.0
      %1318 = vmatpush1.msra.mxu0 0.0
      %1319 = vmatprep.subr.mxu0 0.0
      %1320 = vmatpush1.msra.mxu0 0.0
      %1321 = vmatprep.subr.mxu0 0.0
      %1322 = vmatpush1.msra.mxu0 0.0
      %1323 = vmatprep.subr.mxu0 0.0
      %1324 = vmatpush1.msra.mxu0 0.0
      %1325 = vmatprep.subr.mxu0 0.0
      %1326 = vmatpush1.msra.mxu0 0.0
      %1327 = vmatprep.subr.mxu0 0.0
      %1328 = vmatpush1.msra.mxu0 0.0
      %1329 = vmatprep.subr.mxu0 0.0
      %1330 = vmatpush1.msra.mxu0 0.0
      %1331 = vmatprep.mubr.f32.mxu0 0.0
      %1332 = vmatmul.mubr.f32.gmra.mrb[0].mxu0 %v519
      %v1333 = vpop.f32.mrb[0].mxu0
      %v1334 = vadd.f32 0.0, %v1333
      %v1335 = vpop.f32.mrb[0].mxu0
      %1336 = vmatprep.mubr.f32.mxu0 0.0
      %1337 = vmatmul.mubr.f32.gmra.mrb[0].mxu0 %v521
      %v1338 = vpop.f32.mrb[0].mxu0
      %v1339 = vadd.f32 0.0, %v1338
      %v1340 = vpop.f32.mrb[0].mxu0
      %1341 = vmatprep.mubr.f32.mxu0 0.0
      %1342 = vmatmul.mubr.f32.gmra.mrb[0].mxu0 %v523
      %v1343 = vpop.f32.mrb[0].mxu0
      %v1344 = vadd.f32 0.0, %v1343
      %v1345 = vpop.f32.mrb[0].mxu0
      %1346 = vmatprep.mubr.f32.mxu0 0.0
      %1347 = vmatmul.mubr.f32.gmra.mrb[0].mxu0 %v525
      %v1348 = vpop.f32.mrb[0].mxu0
      %v1349 = vadd.f32 0.0, %v1348
      %v1350 = vpop.f32.mrb[0].mxu0
      %1351 = vmatprep.mubr.f32.mxu0 0.0
      %1352 = vmatmul.mubr.f32.gmra.mrb[0].mxu0 %v527
      %v1353 = vpop.f32.mrb[0].mxu0
      %v1354 = vadd.f32 0.0, %v1353
      %v1355 = vpop.f32.mrb[0].mxu0
      %1356 = vmatprep.mubr.f32.mxu0 0.0
      %1357 = vmatmul.mubr.f32.gmra.mrb[0].mxu0 %v529
      %v1358 = vpop.f32.mrb[0].mxu0
      %v1359 = vadd.f32 0.0, %v1358
      %v1360 = vpop.f32.mrb[0].mxu0
      %1361 = vmatprep.mubr.f32.mxu0 0.0
      %1362 = vmatmul.mubr.f32.gmra.mrb[0].mxu0 %v897
      %v1363 = vpop.f32.mrb[0].mxu0
      %v1364 = vadd.f32 0.0, %v1363
      %v1365 = vpop.f32.mrb[0].mxu0
      %1366 = vmatprep.mubr.f32.mxu0 0.0
      %1367 = vmatmul.mubr.f32.gmra.mrb[0].mxu0 %v1265
      %v1368 = vpop.f32.mrb[0].mxu0
      %v1369 = vadd.f32 0.0, %v1368
      %v1370 = vpop.f32.mrb[0].mxu0
      %1371 = vdwg.mxu0
      %v1372 = vadd.f32 %v1249, %v1334
      %v1373 = vadd.f32 %v1250, %v1339
      %v1374 = vadd.f32 %v1251, %v1344
      %v1375 = vadd.f32 %v1252, %v1349
      %v1376 = vadd.f32 %v1253, %v1354
      %v1377 = vadd.f32 %v1254, %v1359
      %v1378 = vadd.f32 %v1255, %v1364
      %v1379 = vadd.f32 %v1256, %v1369
      %v1380 = vld [vmem:[%s2] sm:$0x1]
      %v1382 = vlaneseq
      %v1383 = vshrl.u32 %v1382, 7
      %v1384 = vsub.s32 0, %v1383
      %v1385 = vrot.slane %v1380, %v1384
      %v1387 = vadd.f32 %v1372, %v1385
      %v1388 = vadd.f32 %v1373, %v1385
      %v1389 = vadd.f32 %v1374, %v1385
      %v1390 = vadd.f32 %v1375, %v1385
      %v1391 = vadd.f32 %v1376, %v1385
      %v1392 = vadd.f32 %v1377, %v1385
      %v1393 = vadd.f32 %v1378, %v1385
      %v1394 = vadd.f32 %v1379, %v1385
      %v1395 = vmax.f32 %v1387, 0.0
      %v1396 = vmax.f32 %v1388, 0.0
      %v1397 = vmax.f32 %v1389, 0.0
      %v1398 = vmax.f32 %v1390, 0.0
      %v1399 = vmax.f32 %v1391, 0.0
      %v1400 = vmax.f32 %v1392, 0.0
      %v1401 = vmax.f32 %v1393, 0.0
      %v1402 = vmax.f32 %v1394, 0.0
      %v1411 = vshrl.u32 %v1395, 13
      %v1412 = vshrl.u32 %v1396, 13
      %v1413 = vshrl.u32 %v1397, 13
      %v1414 = vshrl.u32 %v1398, 13
      %v1415 = vshrl.u32 %v1399, 13
      %v1416 = vshrl.u32 %v1400, 13
      %v1417 = vshrl.u32 %v1401, 13
      %v1418 = vshrl.u32 %v1402, 13
      %v1419 = vand.u32 %v1411, 1
      %v1420 = vand.u32 %v1412, 1
      %v1421 = vand.u32 %v1413, 1
      %v1422 = vand.u32 %v1414, 1
      %v1423 = vand.u32 %v1415, 1
      %v1424 = vand.u32 %v1416, 1
      %v1425 = vand.u32 %v1417, 1
      %v1426 = vand.u32 %v1418, 1
      %v1427 = vadd.s32 %v1395, %v1419
      %v1428 = vadd.s32 %v1396, %v1420
      %v1429 = vadd.s32 %v1397, %v1421
      %v1430 = vadd.s32 %v1398, %v1422
      %v1431 = vadd.s32 %v1399, %v1423
      %v1432 = vadd.s32 %v1400, %v1424
      %v1433 = vadd.s32 %v1401, %v1425
      %v1434 = vadd.s32 %v1402, %v1426
      %v1435 = vadd.s32 %v1427, 4095
      %v1436 = vadd.s32 %v1428, 4095
      %v1437 = vadd.s32 %v1429, 4095
      %v1438 = vadd.s32 %v1430, 4095
      %v1439 = vadd.s32 %v1431, 4095
      %v1440 = vadd.s32 %v1432, 4095
      %v1441 = vadd.s32 %v1433, 4095
      %v1442 = vadd.s32 %v1434, 4095
      %v1443 = vand.u32 %v1435, 4294959104
      %v1444 = vand.u32 %v1436, 4294959104
      %v1445 = vand.u32 %v1437, 4294959104
      %v1446 = vand.u32 %v1438, 4294959104
      %v1447 = vand.u32 %v1439, 4294959104
      %v1448 = vand.u32 %v1440, 4294959104
      %v1449 = vand.u32 %v1441, 4294959104
      %v1450 = vand.u32 %v1442, 4294959104
      %1459 = vst.msk [vmem:[%s170] sm:$0xff] %vm242, %v1443
      %1460 = vst.msk [vmem:[%s170 + $0x8] sm:$0xff] %vm242, %v1444
      %1461 = vst.msk [vmem:[%s170 + $0x10] sm:$0xff] %vm242, %v1445
      %1462 = vst.msk [vmem:[%s170 + $0x18] sm:$0xff] %vm242, %v1446
      %1463 = vst.msk [vmem:[%s170 + $0x20] sm:$0xff] %vm242, %v1447
      %1464 = vst.msk [vmem:[%s170 + $0x28] sm:$0xff] %vm242, %v1448
      %1465 = vst.msk [vmem:[%s170 + $0x30] sm:$0xff] %vm242, %v1449
      %1466 = vst.msk [vmem:[%s170 + $0x38] sm:$0xff] %vm242, %v1450
      %s1467 = smul.u32 8, %s14
      %p1468 = scmp.lt.s32.totalorder %s1467, 15
      %s1469 = scalar_select %p1468, %s1467, 15
      %s1470 = smul.addr %s1469, 8
      %s1471 = scalar_lea.vmem %s3, %s1470
      // Predicated region
      $region33: #{wave_attention_forward.8} parent=31 // pred_check
        %p1472 = pneg %p100
      $region34: #{wave_attention_forward.8} parent=31 // pred_check_branch
        %1474 = sbr.rel (%p1472) target = $region36
      $region35: #{wave_attention_forward.8} parent=31 // pred_region
        %s1475 = smul.u32 8, %s14
      $region36: #{wave_attention_forward.8} parent=31 // pred_fallthru
        _
    $region32: #{wave_attention_forward.8} parent=5 // pred_fallthru
      _
    %p1476 = scmp.le.s32.totalorder 2, %s9
    // Predicated region
    $region37: #{wave_attention_forward.8} parent=5 // pred_check
      %p1477 = pneg %p1476
    $region38: #{wave_attention_forward.8} parent=5 // pred_check_branch
      %1479 = sbr.rel (%p1477) target = $region40
    $region39: #{wave_attention_forward.8} parent=5 // pred_region
      %s1480 = ssub.s32 %s9, 2
      // Predicated region
      $region41: #{wave_attention_forward.8} parent=39 // pred_check
        %p1481 = pneg %p106
      $region42: #{wave_attention_forward.8} parent=39 // pred_check_branch
        %1483 = sbr.rel (%p1481) target = $region44
      $region43: #{wave_attention_forward.8} parent=39 // pred_region
        %s1484 = smul.u32 8, %s15
        %p1485 = scmp.lt.s32.totalorder %s1484, 15
        %s1486 = scalar_select %p1485, %s1484, 15
        %s1487 = smul.addr %s1486, 8
        %s1488 = scalar_lea.vmem %s3, %s1487
      $region44: #{wave_attention_forward.8} parent=39 // pred_fallthru
        _
    $region40: #{wave_attention_forward.8} parent=5 // pred_fallthru
      _
  $region6: #{wave_attention_forward.8} parent=0 // loop_footer
    %s13 = sadd.s32 1, %s9
  $region7: #{wave_attention_forward.8} parent=0 // loop_footer_branch
    %8 = sbr.rel target = $region3
  $region8: #{wave_attention_forward.8} parent=0 // loop_exit
    _

// kernel: wave_attention_forward.10
$region0: #{wave_attention_forward.10}
  #allocation0 [shape = 'u32[]', space=smem, size = 0x4, offset = 0x4, fixed_abs, tag = 'smem constant byte address 0x4 - core index']
  #allocation1 [shape = 'u32[144,128]{1,0:T(1,128)}', space=vmem, size = 0x12000, scoped, tag = 'internal scratch']
  %s0 = inlined_call_operand.vmem [shape: f32[32,128], index: 0, kind: input, shape index: {}]
  %s1 = inlined_call_operand.vmem [shape: f32[128,32], index: 1, kind: input, shape index: {}]
  %s2 = inlined_call_operand.vmem [shape: f32[1,32], index: 2, kind: input, shape index: {}]
  %s3 = inlined_call_operand.vmem [shape: f32[1,32], index: 3, kind: input, shape index: {}]
  %s4 = inlined_call_operand.vmem [shape: f32[1,32], index: 4, kind: input, shape index: {}]
  %s5 = inlined_call_operand.vmem [shape: f32[32,64], index: 5, kind: input, shape index: {}]
  %s6 = inlined_call_operand.vmem [shape: f32[1,64], index: 6, kind: input, shape index: {}]
  %s7 = inlined_call_operand.vmem [shape: f32[32,64], index: 7, kind: output, shape index: {}]
  %s8 = sld [smem:[#allocation0]]
  $region61: #{wave_attention_forward.10} parent=0
    _
  %s10 = ssub.s32 1, %s8
  %s11 = scalar_select 0, %s10, %s8
  loop: start=0, step=1, limit=4
  $region2: #{wave_attention_forward.10} parent=0 // loop_pre_header
    _
  $region3: #{wave_attention_forward.10} parent=0 // loop_header
    %s13 = sphi 0, %s17
    %p14 = scmp.ge.s32.totalorder %s13, 4
    %s23 = sphi 0, %s25
    %s26 = sphi 0, %s23
    %s27 = sphi 0, %s26
    %s43 = sphi 0, %s27
    %s47 = sphi 0, %s47
    %s49 = sphi 0, %s47
    %s50 = sphi 0, %s49
    %s64 = sphi 0, %s50
    %s68 = sphi 0, %s68
    %s70 = sphi 0, %s68
    %s71 = sphi 0, %s70
    %s85 = sphi 0, %s71
    %s89 = sphi 0, %s89
    %s91 = sphi 0, %s89
    %s92 = sphi 0, %s91
    %s106 = sphi 0, %s92
    %s110 = sphi 0, %s110
    %s112 = sphi 0, %s110
    %s113 = sphi 0, %s112
    %s127 = sphi 0, %s113
    %s131 = sphi 0, %s131
    %s133 = sphi 0, %s131
    %s134 = sphi 0, %s133
    %s148 = sphi 0, %s134
    %s152 = sphi 0, %s152
    %s154 = sphi 0, %s152
    %s155 = sphi 0, %s154
    %s169 = sphi 0, %s155
    %s175 = sphi 0, %s177
    %s178 = sphi 0, %s175
    %s179 = sphi 0, %s178
    %s195 = sphi 0, %s179
  $region4: #{wave_attention_forward.10} parent=0 // loop_header_branch
    %16 = sbr.rel (%p14) target = $region8
  $region5: #{wave_attention_forward.10} parent=0 // loop_body
    %s18 = ssub.s32 %s13, 1
    %s19 = ssub.s32 %s13, 2
    %s20 = sadd.s32 %s13, 1
    %s21 = ssub.s32 %s13, %s20
    %p22 = scmp.eq.s32.totalorder %s21, 0
    %s24 = sadd.s32 %s23, 1
    %s25 = scalar_select %p22, %s23, %s24
    %p28 = pneg %p22
    %p29 = scmp.eq.s32.totalorder %s13, 1
    %p30 = por %p28, %p29
    %p31 = scmp.ne.s32.totalorder %s23, %s26
    %p32 = scmp.eq.s32.totalorder %s13, 0
    %p33 = por %p31, %p32
    %p34 = scmp.ne.s32.totalorder %s23, %s26
    %p35 = scmp.eq.s32.totalorder %s18, 1
    %p36 = por %p34, %p35
    %p37 = scmp.ne.s32.totalorder %s26, %s27
    %p38 = scmp.eq.s32.totalorder %s18, 0
    %p39 = por %p37, %p38
    %p40 = scmp.ne.s32.totalorder %s26, %s27
    %p41 = scmp.eq.s32.totalorder %s19, 1
    %p42 = por %p40, %p41
    %p44 = scmp.ne.s32.totalorder %s27, %s43
    %p45 = scmp.eq.s32.totalorder %s19, 0
    %p46 = por %p44, %p45
    %s48 = sadd.s32 %s47, 1
    %p51 = scmp.eq.s32.totalorder %s13, 1
    %p52 = scmp.ne.s32.totalorder %s47, %s49
    %p53 = scmp.eq.s32.totalorder %s13, 0
    %p54 = por %p52, %p53
    %p55 = scmp.ne.s32.totalorder %s47, %s49
    %p56 = scmp.eq.s32.totalorder %s18, 1
    %p57 = por %p55, %p56
    %p58 = scmp.ne.s32.totalorder %s49, %s50
    %p59 = scmp.eq.s32.totalorder %s18, 0
    %p60 = por %p58, %p59
    %p61 = scmp.ne.s32.totalorder %s49, %s50
    %p62 = scmp.eq.s32.totalorder %s19, 1
    %p63 = por %p61, %p62
    %p65 = scmp.ne.s32.totalorder %s50, %s64
    %p66 = scmp.eq.s32.totalorder %s19, 0
    %p67 = por %p65, %p66
    %s69 = sadd.s32 %s68, 1
    %p72 = scmp.eq.s32.totalorder %s13, 1
    %p73 = scmp.ne.s32.totalorder %s68, %s70
    %p74 = scmp.eq.s32.totalorder %s13, 0
    %p75 = por %p73, %p74
    %p76 = scmp.ne.s32.totalorder %s68, %s70
    %p77 = scmp.eq.s32.totalorder %s18, 1
    %p78 = por %p76, %p77
    %p79 = scmp.ne.s32.totalorder %s70, %s71
    %p80 = scmp.eq.s32.totalorder %s18, 0
    %p81 = por %p79, %p80
    %p82 = scmp.ne.s32.totalorder %s70, %s71
    %p83 = scmp.eq.s32.totalorder %s19, 1
    %p84 = por %p82, %p83
    %p86 = scmp.ne.s32.totalorder %s71, %s85
    %p87 = scmp.eq.s32.totalorder %s19, 0
    %p88 = por %p86, %p87
    %s90 = sadd.s32 %s89, 1
    %p93 = scmp.eq.s32.totalorder %s13, 1
    %p94 = scmp.ne.s32.totalorder %s89, %s91
    %p95 = scmp.eq.s32.totalorder %s13, 0
    %p96 = por %p94, %p95
    %p97 = scmp.ne.s32.totalorder %s89, %s91
    %p98 = scmp.eq.s32.totalorder %s18, 1
    %p99 = por %p97, %p98
    %p100 = scmp.ne.s32.totalorder %s91, %s92
    %p101 = scmp.eq.s32.totalorder %s18, 0
    %p102 = por %p100, %p101
    %p103 = scmp.ne.s32.totalorder %s91, %s92
    %p104 = scmp.eq.s32.totalorder %s19, 1
    %p105 = por %p103, %p104
    %p107 = scmp.ne.s32.totalorder %s92, %s106
    %p108 = scmp.eq.s32.totalorder %s19, 0
    %p109 = por %p107, %p108
    %s111 = sadd.s32 %s110, 1
    %p114 = scmp.eq.s32.totalorder %s13, 1
    %p115 = scmp.ne.s32.totalorder %s110, %s112
    %p116 = scmp.eq.s32.totalorder %s13, 0
    %p117 = por %p115, %p116
    %p118 = scmp.ne.s32.totalorder %s110, %s112
    %p119 = scmp.eq.s32.totalorder %s18, 1
    %p120 = por %p118, %p119
    %p121 = scmp.ne.s32.totalorder %s112, %s113
    %p122 = scmp.eq.s32.totalorder %s18, 0
    %p123 = por %p121, %p122
    %p124 = scmp.ne.s32.totalorder %s112, %s113
    %p125 = scmp.eq.s32.totalorder %s19, 1
    %p126 = por %p124, %p125
    %p128 = scmp.ne.s32.totalorder %s113, %s127
    %p129 = scmp.eq.s32.totalorder %s19, 0
    %p130 = por %p128, %p129
    %s132 = sadd.s32 %s131, 1
    %p135 = scmp.eq.s32.totalorder %s13, 1
    %p136 = scmp.ne.s32.totalorder %s131, %s133
    %p137 = scmp.eq.s32.totalorder %s13, 0
    %p138 = por %p136, %p137
    %p139 = scmp.ne.s32.totalorder %s131, %s133
    %p140 = scmp.eq.s32.totalorder %s18, 1
    %p141 = por %p139, %p140
    %p142 = scmp.ne.s32.totalorder %s133, %s134
    %p143 = scmp.eq.s32.totalorder %s18, 0
    %p144 = por %p142, %p143
    %p145 = scmp.ne.s32.totalorder %s133, %s134
    %p146 = scmp.eq.s32.totalorder %s19, 1
    %p147 = por %p145, %p146
    %p149 = scmp.ne.s32.totalorder %s134, %s148
    %p150 = scmp.eq.s32.totalorder %s19, 0
    %p151 = por %p149, %p150
    %s153 = sadd.s32 %s152, 1
    %p156 = scmp.eq.s32.totalorder %s13, 1
    %p157 = scmp.ne.s32.totalorder %s152, %s154
    %p158 = scmp.eq.s32.totalorder %s13, 0
    %p159 = por %p157, %p158
    %p160 = scmp.ne.s32.totalorder %s152, %s154
    %p161 = scmp.eq.s32.totalorder %s18, 1
    %p162 = por %p160, %p161
    %p163 = scmp.ne.s32.totalorder %s154, %s155
    %p164 = scmp.eq.s32.totalorder %s18, 0
    %p165 = por %p163, %p164
    %p166 = scmp.ne.s32.totalorder %s154, %s155
    %p167 = scmp.eq.s32.totalorder %s19, 1
    %p168 = por %p166, %p167
    %p170 = scmp.ne.s32.totalorder %s155, %s169
    %p171 = scmp.eq.s32.totalorder %s19, 0
    %p172 = por %p170, %p171
    %s173 = ssub.s32 %s13, %s20
    %p174 = scmp.eq.s32.totalorder %s173, 0
    %s176 = sadd.s32 %s175, 1
    %s177 = scalar_select %p174, %s175, %s176
    %p180 = pneg %p174
    %p181 = scmp.eq.s32.totalorder %s13, 1
    %p182 = por %p180, %p181
    %p183 = scmp.ne.s32.totalorder %s175, %s178
    %p184 = scmp.eq.s32.totalorder %s13, 0
    %p185 = por %p183, %p184
    %p186 = scmp.ne.s32.totalorder %s175, %s178
    %p187 = scmp.eq.s32.totalorder %s18, 1
    %p188 = por %p186, %p187
    %p189 = scmp.ne.s32.totalorder %s178, %s179
    %p190 = scmp.eq.s32.totalorder %s18, 0
    %p191 = por %p189, %p190
    %p192 = scmp.ne.s32.totalorder %s178, %s179
    %p193 = scmp.eq.s32.totalorder %s19, 1
    %p194 = por %p192, %p193
    %p196 = scmp.ne.s32.totalorder %s179, %s195
    %p197 = scmp.eq.s32.totalorder %s19, 0
    %p198 = por %p196, %p197
    %p199 = scmp.le.s32.totalorder 1, %s13
    %p200 = scmp.lt.s32.totalorder %s13, 3
    %p201 = pnand %p199, %p200
    %p202 = pneg %p201
    // Predicated region
    $region9: #{wave_attention_forward.10} parent=5 // pred_check
      _
    $region10: #{wave_attention_forward.10} parent=5 // pred_check_branch
      %204 = sbr.rel (%p201) target = $region12
    $region11: #{wave_attention_forward.10} parent=5 // pred_region
      %s205 = ssub.s32 %s13, 1
      // Predicated region
      $region13: #{wave_attention_forward.10} parent=11 // pred_check
        %p206 = pneg %p60
      $region14: #{wave_attention_forward.10} parent=11 // pred_check_branch
        %208 = sbr.rel (%p206) target = $region16
      $region15: #{wave_attention_forward.10} parent=11 // pred_region
        _
      $region16: #{wave_attention_forward.10} parent=11 // pred_fallthru
        _
      // Predicated region
      $region17: #{wave_attention_forward.10} parent=11 // pred_check
        %p209 = pneg %p81
      $region18: #{wave_attention_forward.10} parent=11 // pred_check_branch
        %211 = sbr.rel (%p209) target = $region20
      $region19: #{wave_attention_forward.10} parent=11 // pred_region
        _
      $region20: #{wave_attention_forward.10} parent=11 // pred_fallthru
        _
      // Predicated region
      $region21: #{wave_attention_forward.10} parent=11 // pred_check
        %p212 = pneg %p102
      $region22: #{wave_attention_forward.10} parent=11 // pred_check_branch
        %214 = sbr.rel (%p212) target = $region24
      $region23: #{wave_attention_forward.10} parent=11 // pred_region
        _
      $region24: #{wave_attention_forward.10} parent=11 // pred_fallthru
        _
      // Predicated region
      $region25: #{wave_attention_forward.10} parent=11 // pred_check
        %p215 = pneg %p123
      $region26: #{wave_attention_forward.10} parent=11 // pred_check_branch
        %217 = sbr.rel (%p215) target = $region28
      $region27: #{wave_attention_forward.10} parent=11 // pred_region
        _
      $region28: #{wave_attention_forward.10} parent=11 // pred_fallthru
        _
      // Predicated region
      $region29: #{wave_attention_forward.10} parent=11 // pred_check
        %p218 = pneg %p144
      $region30: #{wave_attention_forward.10} parent=11 // pred_check_branch
        %220 = sbr.rel (%p218) target = $region32
      $region31: #{wave_attention_forward.10} parent=11 // pred_region
        _
      $region32: #{wave_attention_forward.10} parent=11 // pred_fallthru
        _
      // Predicated region
      $region33: #{wave_attention_forward.10} parent=11 // pred_check
        %p221 = pneg %p165
      $region34: #{wave_attention_forward.10} parent=11 // pred_check_branch
        %223 = sbr.rel (%p221) target = $region36
      $region35: #{wave_attention_forward.10} parent=11 // pred_region
        _
      $region36: #{wave_attention_forward.10} parent=11 // pred_fallthru
        _
    $region12: #{wave_attention_forward.10} parent=5 // pred_fallthru
      _
    %p224 = scmp.lt.s32.totalorder %s13, 2
    // Predicated region
    $region37: #{wave_attention_forward.10} parent=5 // pred_check
      %p225 = pneg %p224
    $region38: #{wave_attention_forward.10} parent=5 // pred_check_branch
      %227 = sbr.rel (%p225) target = $region40
    $region39: #{wave_attention_forward.10} parent=5 // pred_region
      // Predicated region
      $region41: #{wave_attention_forward.10} parent=39 // pred_check
        %p228 = pneg %p33
      $region42: #{wave_attention_forward.10} parent=39 // pred_check_branch
        %230 = sbr.rel (%p228) target = $region44
      $region43: #{wave_attention_forward.10} parent=39 // pred_region
        %s231 = smul.u32 2, %s13
        %p232 = scmp.lt.s32.totalorder %s231, 3
        %s233 = scalar_select %p232, %s231, 3
        %s234 = smul.addr %s233, 8
        %s235 = scalar_lea.vmem %s0, %s234
        %s236 = smul.u32 2, %s13
      $region44: #{wave_attention_forward.10} parent=39 // pred_fallthru
        _
    $region40: #{wave_attention_forward.10} parent=5 // pred_fallthru
      _
    %p237 = scmp.le.s32.totalorder 1, %s13
    %p238 = scmp.lt.s32.totalorder %s13, 3
    %p239 = pnand %p237, %p238
    %p240 = pneg %p239
    // Predicated region
    $region45: #{wave_attention_forward.10} parent=5 // pred_check
      _
    $region46: #{wave_attention_forward.10} parent=5 // pred_check_branch
      %242 = sbr.rel (%p239) target = $region48
    $region47: #{wave_attention_forward.10} parent=5 // pred_region
      %s243 = ssub.s32 %s13, 1
      %s244 = smul.u32 2, %s18
      %p245 = scmp.lt.s32.totalorder %s244, 3
      %s246 = scalar_select %p245, %s244, 3
      %s247 = smul.addr %s246, 8
      %s248 = scalar_lea.vmem %s0, %s247
      %p249 = pneg %p39
      %p250 = pneg %p36
      %p251 = pneg %p60
      %p252 = pneg %p57
      %p253 = pneg %p81
      %p254 = pneg %p78
      %p255 = pneg %p102
      %p256 = pneg %p99
      %p257 = pneg %p123
      %p258 = pneg %p120
      %p259 = pneg %p144
      %p260 = pneg %p141
      %p261 = pneg %p165
      %p262 = pneg %p162
      %p263 = pneg %p191
      %p264 = pneg %p188
      %s265 = smul.u32 2, %s18
      %p266 = scmp.lt.s32.totalorder %s265, 3
      %s267 = scalar_select %p266, %s265, 3
      %s268 = smul.addr %s267, 8
      %s269 = scalar_lea.vmem %s7, %s268
      %s270 = smul.u32 2, %s18
      %p271 = scmp.lt.s32.totalorder %s270, 3
      %s272 = scalar_select %p271, %s270, 3
      %s273 = smul.addr %s272, 8
      %s274 = scalar_lea.vmem %s0, %s273
      %s275 = smul.u32 2, %s18
      %s276 = smul.u32 2, %s18
      %p277 = scmp.lt.s32.totalorder %s276, 3
      %s278 = scalar_select %p277, %s276, 3
      %s279 = smul.addr %s278, 8
      %s280 = scalar_lea.vmem %s7, %s279
      %s281 = smul.u32 2, %s18
      %v282 = vld [vmem:[%s274] sm:$0xff]
      %v283 = vld [vmem:[%s274 + $0x8] sm:$0xff]
      %v284 = vld [vmem:[%s1] sm:$0xff]
      %v285 = vld [vmem:[%s1 + $0x8] sm:$0xff]
      %v286 = vld [vmem:[%s1 + $0x10] sm:$0xff]
      %v287 = vld [vmem:[%s1 + $0x18] sm:$0xff]
      %v288 = vld [vmem:[%s1 + $0x20] sm:$0xff]
      %v289 = vld [vmem:[%s1 + $0x28] sm:$0xff]
      %v290 = vld [vmem:[%s1 + $0x30] sm:$0xff]
      %v291 = vld [vmem:[%s1 + $0x38] sm:$0xff]
      %v292 = vld [vmem:[%s1 + $0x40] sm:$0xff]
      %v293 = vld [vmem:[%s1 + $0x48] sm:$0xff]
      %v294 = vld [vmem:[%s1 + $0x50] sm:$0xff]
      %v295 = vld [vmem:[%s1 + $0x58] sm:$0xff]
      %v296 = vld [vmem:[%s1 + $0x60] sm:$0xff]
      %v297 = vld [vmem:[%s1 + $0x68] sm:$0xff]
      %v298 = vld [vmem:[%s1 + $0x70] sm:$0xff]
      %v299 = vld [vmem:[%s1 + $0x78] sm:$0xff]
      %v300 = vld [vmem:[%s2] sm:$0x1]
      %v302 = vlaneseq
      %v303 = vshrl.u32 %v302, 7
      %v304 = vsub.s32 0, %v303
      %v305 = vrot.slane %v300, %v304
      %307 = vmatprep.subr.mxu0 0.0
      %308 = vmatpush1.msra.mxu0 %v284
      %309 = vmatprep.subr.mxu0 0.0
      %310 = vmatpush1.msra.mxu0 %v285
      %311 = vmatprep.subr.mxu0 0.0
      %312 = vmatpush1.msra.mxu0 %v286
      %313 = vmatprep.subr.mxu0 0.0
      %314 = vmatpush1.msra.mxu0 %v287
      %315 = vmatprep.subr.mxu0 0.0
      %316 = vmatpush1.msra.mxu0 %v288
      %317 = vmatprep.subr.mxu0 0.0
      %318 = vmatpush1.msra.mxu0 %v289
      %319 = vmatprep.subr.mxu0 0.0
      %320 = vmatpush1.msra.mxu0 %v290
      %321 = vmatprep.subr.mxu0 0.0
      %322 = vmatpush1.msra.mxu0 %v291
      %323 = vmatprep.subr.mxu0 0.0
      %324 = vmatpush1.msra.mxu0 %v292
      %325 = vmatprep.subr.mxu0 0.0
      %326 = vmatpush1.msra.mxu0 %v293
      %327 = vmatprep.subr.mxu0 0.0
      %328 = vmatpush1.msra.mxu0 %v294
      %329 = vmatprep.subr.mxu0 0.0
      %330 = vmatpush1.msra.mxu0 %v295
      %331 = vmatprep.subr.mxu0 0.0
      %332 = vmatpush1.msra.mxu0 %v296
      %333 = vmatprep.subr.mxu0 0.0
      %334 = vmatpush1.msra.mxu0 %v297
      %335 = vmatprep.subr.mxu0 0.0
      %336 = vmatpush1.msra.mxu0 %v298
      %337 = vmatprep.subr.mxu0 0.0
      %338 = vmatpush1.msra.mxu0 %v299
      %339 = vmatprep.subr.mxu0 0.0
      %340 = vmatpush1.msra.mxu0 0.0
      %341 = vmatprep.subr.mxu0 0.0
      %342 = vmatpush1.msra.mxu0 0.0
      %343 = vmatprep.subr.mxu0 0.0
      %344 = vmatpush1.msra.mxu0 0.0
      %345 = vmatprep.subr.mxu0 0.0
      %346 = vmatpush1.msra.mxu0 0.0
      %347 = vmatprep.subr.mxu0 0.0
      %348 = vmatpush1.msra.mxu0 0.0
      %349 = vmatprep.subr.mxu0 0.0
      %350 = vmatpush1.msra.mxu0 0.0
      %351 = vmatprep.subr.mxu0 0.0
      %352 = vmatpush1.msra.mxu0 0.0
      %353 = vmatprep.subr.mxu0 0.0
      %354 = vmatpush1.msra.mxu0 0.0
      %355 = vmatprep.subr.mxu0 0.0
      %356 = vmatpush1.msra.mxu0 0.0
      %357 = vmatprep.subr.mxu0 0.0
      %358 = vmatpush1.msra.mxu0 0.0
      %359 = vmatprep.subr.mxu0 0.0
      %360 = vmatpush1.msra.mxu0 0.0
      %361 = vmatprep.subr.mxu0 0.0
      %362 = vmatpush1.msra.mxu0 0.0
      %363 = vmatprep.subr.mxu0 0.0
      %364 = vmatpush1.msra.mxu0 0.0
      %365 = vmatprep.subr.mxu0 0.0
      %366 = vmatpush1.msra.mxu0 0.0
      %367 = vmatprep.subr.mxu0 0.0
      %368 = vmatpush1.msra.mxu0 0.0
      %369 = vmatprep.subr.mxu0 0.0
      %370 = vmatpush1.msra.mxu0 0.0
      %371 = vmatprep.mubr.f32.mxu0 0.0
      %372 = vmatmul.mubr.f32.gmra.mrb[0].mxu0 %v282
      %v373 = vpop.f32.mrb[0].mxu0
      %v374 = vadd.f32 %v305, %v373
      %v375 = vpop.f32.mrb[0].mxu0
      %376 = vmatprep.mubr.f32.mxu0 0.0
      %377 = vmatmul.mubr.f32.gmra.mrb[0].mxu0 %v283
      %v378 = vpop.f32.mrb[0].mxu0
      %v379 = vadd.f32 %v305, %v378
      %v380 = vpop.f32.mrb[0].mxu0
      %381 = vdwg.mxu0
      %vm382 = vcmask 261120
      %v383 = vsel %vm382, %v374, 0.0
      %384 = vadd.xlane.f32.xlu0 %v383
      %v385 = vpop.xlane.xlu0 %384
      %v386 = vsel %vm382, %v379, 0.0
      %387 = vadd.xlane.f32.xlu0 %v386
      %v388 = vpop.xlane.xlu0 %387
      %v389 = vrcp.pop 32.0
      %v390 = vmul.f32 %v385, %v389
      %v391 = vmul.f32 %v388, %v389
      %v392 = vsub.f32 %v374, %v390
      %v393 = vsub.f32 %v379, %v391
      %v394 = vmul.f32 %v392, %v392
      %v395 = vmul.f32 %v393, %v393
      %v396 = vsel %vm382, %v394, 0.0
      %397 = vadd.xlane.f32.xlu0 %v396
      %v398 = vpop.xlane.xlu0 %397
      %v399 = vsel %vm382, %v395, 0.0
      %400 = vadd.xlane.f32.xlu0 %v399
      %v401 = vpop.xlane.xlu0 %400
      %v402 = vmul.f32 %v398, %v389
      %v403 = vmul.f32 %v401, %v389
      %v404 = vadd.f32 %v402, 1e-05
      %v405 = vadd.f32 %v403, 1e-05
      %v406 = vrsqrt.pop %v404
      %v407 = vrsqrt.pop %v405
      %v408 = vmul.f32 %v392, %v406
      %v409 = vmul.f32 %v393, %v407
      %v410 = vld [vmem:[%s3] sm:$0x1]
      %v412 = vlaneseq
      %v413 = vshrl.u32 %v412, 7
      %v414 = vsub.s32 0, %v413
      %v415 = vrot.slane %v410, %v414
      %v417 = vmul.f32 %v408, %v415
      %v418 = vmul.f32 %v409, %v415
      %v419 = vld [vmem:[%s4] sm:$0x1]
      %v421 = vlaneseq
      %v422 = vshrl.u32 %v421, 7
      %v423 = vsub.s32 0, %v422
      %v424 = vrot.slane %v419, %v423
      %v426 = vadd.f32 %v417, %v424
      %v427 = vadd.f32 %v418, %v424
      %v428 = vld [vmem:[%s5] sm:$0xff]
      %v429 = vld [vmem:[%s5 + $0x8] sm:$0xff]
      %v430 = vld [vmem:[%s5 + $0x10] sm:$0xff]
      %v431 = vld [vmem:[%s5 + $0x18] sm:$0xff]
      %v432 = vld [vmem:[%s6] sm:$0x1]
      %v434 = vlaneseq
      %v435 = vshrl.u32 %v434, 7
      %v436 = vsub.s32 0, %v435
      %v437 = vrot.slane %v432, %v436
      %v440 = vsel %vm382, %v426, 0
      %v443 = vsel %vm382, %v427, 0
      %445 = vmatprep.subr.mxu0 0.0
      %446 = vmatpush1.msra.mxu0 %v428
      %447 = vmatprep.subr.mxu0 0.0
      %448 = vmatpush1.msra.mxu0 %v429
      %449 = vmatprep.subr.mxu0 0.0
      %450 = vmatpush1.msra.mxu0 %v430
      %451 = vmatprep.subr.mxu0 0.0
      %452 = vmatpush1.msra.mxu0 %v431
      %453 = vmatprep.subr.mxu0 0.0
      %454 = vmatpush1.msra.mxu0 0.0
      %455 = vmatprep.subr.mxu0 0.0
      %456 = vmatpush1.msra.mxu0 0.0
      %457 = vmatprep.subr.mxu0 0.0
      %458 = vmatpush1.msra.mxu0 0.0
      %459 = vmatprep.subr.mxu0 0.0
      %460 = vmatpush1.msra.mxu0 0.0
      %461 = vmatprep.subr.mxu0 0.0
      %462 = vmatpush1.msra.mxu0 0.0
      %463 = vmatprep.subr.mxu0 0.0
      %464 = vmatpush1.msra.mxu0 0.0
      %465 = vmatprep.subr.mxu0 0.0
      %466 = vmatpush1.msra.mxu0 0.0
      %467 = vmatprep.subr.mxu0 0.0
      %468 = vmatpush1.msra.mxu0 0.0
      %469 = vmatprep.subr.mxu0 0.0
      %470 = vmatpush1.msra.mxu0 0.0
      %471 = vmatprep.subr.mxu0 0.0
      %472 = vmatpush1.msra.mxu0 0.0
      %473 = vmatprep.subr.mxu0 0.0
      %474 = vmatpush1.msra.mxu0 0.0
      %475 = vmatprep.subr.mxu0 0.0
      %476 = vmatpush1.msra.mxu0 0.0
      %477 = vmatprep.subr.mxu0 0.0
      %478 = vmatpush1.msra.mxu0 0.0
      %479 = vmatprep.subr.mxu0 0.0
      %480 = vmatpush1.msra.mxu0 0.0
      %481 = vmatprep.subr.mxu0 0.0
      %482 = vmatpush1.msra.mxu0 0.0
      %483 = vmatprep.subr.mxu0 0.0
      %484 = vmatpush1.msra.mxu0 0.0
      %485 = vmatprep.subr.mxu0 0.0
      %486 = vmatpush1.msra.mxu0 0.0
      %487 = vmatprep.subr.mxu0 0.0
      %488 = vmatpush1.msra.mxu0 0.0
      %489 = vmatprep.subr.mxu0 0.0
      %490 = vmatpush1.msra.mxu0 0.0
      %491 = vmatprep.subr.mxu0 0.0
      %492 = vmatpush1.msra.mxu0 0.0
      %493 = vmatprep.subr.mxu0 0.0
      %494 = vmatpush1.msra.mxu0 0.0
      %495 = vmatprep.subr.mxu0 0.0
      %496 = vmatpush1.msra.mxu0 0.0
      %497 = vmatprep.subr.mxu0 0.0
      %498 = vmatpush1.msra.mxu0 0.0
      %499 = vmatprep.subr.mxu0 0.0
      %500 = vmatpush1.msra.mxu0 0.0
      %501 = vmatprep.subr.mxu0 0.0
      %502 = vmatpush1.msra.mxu0 0.0
      %503 = vmatprep.subr.mxu0 0.0
      %504 = vmatpush1.msra.mxu0 0.0
      %505 = vmatprep.subr.mxu0 0.0
      %506 = vmatpush1.msra.mxu0 0.0
      %507 = vmatprep.subr.mxu0 0.0
      %508 = vmatpush1.msra.mxu0 0.0
      %509 = vmatprep.mubr.f32.mxu0 0.0
      %510 = vmatmul.mubr.f32.gmra.mrb[0].mxu0 %v440
      %v511 = vpop.f32.mrb[0].mxu0
      %v512 = vadd.f32 %v437, %v511
      %v513 = vpop.f32.mrb[0].mxu0
      %514 = vmatprep.mubr.f32.mxu0 0.0
      %515 = vmatmul.mubr.f32.gmra.mrb[0].mxu0 %v443
      %v516 = vpop.f32.mrb[0].mxu0
      %v517 = vadd.f32 %v437, %v516
      %v518 = vpop.f32.mrb[0].mxu0
      %519 = vdwg.mxu0
      %vm520 = vcmask 523264
      %521 = vst.msk [vmem:[%s280] sm:$0xff] %vm520, %v512
      %522 = vst.msk [vmem:[%s280 + $0x8] sm:$0xff] %vm520, %v517
      %s523 = smul.u32 2, %s18
      %p524 = scmp.lt.s32.totalorder %s523, 3
      %s525 = scalar_select %p524, %s523, 3
      %s526 = smul.addr %s525, 8
      %s527 = scalar_lea.vmem %s7, %s526
      // Predicated region
      $region49: #{wave_attention_forward.10} parent=47 // pred_check
        %p528 = pneg %p188
      $region50: #{wave_attention_forward.10} parent=47 // pred_check_branch
        %530 = sbr.rel (%p528) target = $region52
      $region51: #{wave_attention_forward.10} parent=47 // pred_region
        %s531 = smul.u32 2, %s18
      $region52: #{wave_attention_forward.10} parent=47 // pred_fallthru
        _
    $region48: #{wave_attention_forward.10} parent=5 // pred_fallthru
      _
    %p532 = scmp.le.s32.totalorder 2, %s13
    // Predicated region
    $region53: #{wave_attention_forward.10} parent=5 // pred_check
      %p533 = pneg %p532
    $region54: #{wave_attention_forward.10} parent=5 // pred_check_branch
      %535 = sbr.rel (%p533) target = $region56
    $region55: #{wave_attention_forward.10} parent=5 // pred_region
      %s536 = ssub.s32 %s13, 2
      // Predicated region
      $region57: #{wave_attention_forward.10} parent=55 // pred_check
        %p537 = pneg %p194
      $region58: #{wave_attention_forward.10} parent=55 // pred_check_branch
        %539 = sbr.rel (%p537) target = $region60
      $region59: #{wave_attention_forward.10} parent=55 // pred_region
        %s540 = smul.u32 2, %s19
        %p541 = scmp.lt.s32.totalorder %s540, 3
        %s542 = scalar_select %p541, %s540, 3
        %s543 = smul.addr %s542, 8
        %s544 = scalar_lea.vmem %s7, %s543
      $region60: #{wave_attention_forward.10} parent=55 // pred_fallthru
        _
    $region56: #{wave_attention_forward.10} parent=5 // pred_fallthru
      _
  $region6: #{wave_attention_forward.10} parent=0 // loop_footer
    %s17 = sadd.s32 1, %s13
  $region7: #{wave_attention_forward.10} parent=0 // loop_footer_branch
    %12 = sbr.rel target = $region3
  $region8: #{wave_attention_forward.10} parent=0 // loop_exit
    _

// kernel: wave_attention_forward.9
$region0: #{wave_attention_forward.9}
  #allocation0 [shape = 'u32[]', space=smem, size = 0x4, offset = 0x4, fixed_abs, tag = 'smem constant byte address 0x4 - core index']
  #allocation1 [shape = 'u32[144,128]{1,0:T(1,128)}', space=vmem, size = 0x12000, scoped, tag = 'internal scratch']
  %s0 = inlined_call_operand.vmem [shape: f32[128,32], index: 0, kind: input, shape index: {}]
  %s1 = inlined_call_operand.vmem [shape: f32[128,32], index: 1, kind: output, shape index: {}]
  %s2 = sld [smem:[#allocation0]]
  $region37: #{wave_attention_forward.9} parent=0
    _
  %s4 = ssub.s32 1, %s2
  %s5 = scalar_select 0, %s4, %s2
  loop: start=0, step=1, limit=4
  $region2: #{wave_attention_forward.9} parent=0 // loop_pre_header
    _
  $region3: #{wave_attention_forward.9} parent=0 // loop_header
    %s7 = sphi 0, %s11
    %p8 = scmp.ge.s32.totalorder %s7, 4
    %s17 = sphi 0, %s19
    %s20 = sphi 0, %s17
    %s21 = sphi 0, %s20
    %s37 = sphi 0, %s21
    %s43 = sphi 0, %s45
    %s46 = sphi 0, %s43
    %s47 = sphi 0, %s46
    %s63 = sphi 0, %s47
  $region4: #{wave_attention_forward.9} parent=0 // loop_header_branch
    %10 = sbr.rel (%p8) target = $region8
  $region5: #{wave_attention_forward.9} parent=0 // loop_body
    %s12 = ssub.s32 %s7, 1
    %s13 = ssub.s32 %s7, 2
    %s14 = sadd.s32 %s7, 1
    %s15 = ssub.s32 %s7, %s14
    %p16 = scmp.eq.s32.totalorder %s15, 0
    %s18 = sadd.s32 %s17, 1
    %s19 = scalar_select %p16, %s17, %s18
    %p22 = pneg %p16
    %p23 = scmp.eq.s32.totalorder %s7, 1
    %p24 = por %p22, %p23
    %p25 = scmp.ne.s32.totalorder %s17, %s20
    %p26 = scmp.eq.s32.totalorder %s7, 0
    %p27 = por %p25, %p26
    %p28 = scmp.ne.s32.totalorder %s17, %s20
    %p29 = scmp.eq.s32.totalorder %s12, 1
    %p30 = por %p28, %p29
    %p31 = scmp.ne.s32.totalorder %s20, %s21
    %p32 = scmp.eq.s32.totalorder %s12, 0
    %p33 = por %p31, %p32
    %p34 = scmp.ne.s32.totalorder %s20, %s21
    %p35 = scmp.eq.s32.totalorder %s13, 1
    %p36 = por %p34, %p35
    %p38 = scmp.ne.s32.totalorder %s21, %s37
    %p39 = scmp.eq.s32.totalorder %s13, 0
    %p40 = por %p38, %p39
    %s41 = ssub.s32 %s7, %s14
    %p42 = scmp.eq.s32.totalorder %s41, 0
    %s44 = sadd.s32 %s43, 1
    %s45 = scalar_select %p42, %s43, %s44
    %p48 = pneg %p42
    %p49 = scmp.eq.s32.totalorder %s7, 1
    %p50 = por %p48, %p49
    %p51 = scmp.ne.s32.totalorder %s43, %s46
    %p52 = scmp.eq.s32.totalorder %s7, 0
    %p53 = por %p51, %p52
    %p54 = scmp.ne.s32.totalorder %s43, %s46
    %p55 = scmp.eq.s32.totalorder %s12, 1
    %p56 = por %p54, %p55
    %p57 = scmp.ne.s32.totalorder %s46, %s47
    %p58 = scmp.eq.s32.totalorder %s12, 0
    %p59 = por %p57, %p58
    %p60 = scmp.ne.s32.totalorder %s46, %s47
    %p61 = scmp.eq.s32.totalorder %s13, 1
    %p62 = por %p60, %p61
    %p64 = scmp.ne.s32.totalorder %s47, %s63
    %p65 = scmp.eq.s32.totalorder %s13, 0
    %p66 = por %p64, %p65
    %p67 = scmp.le.s32.totalorder 1, %s7
    %p68 = scmp.lt.s32.totalorder %s7, 3
    %p69 = pnand %p67, %p68
    %p70 = pneg %p69
    // Predicated region
    $region9: #{wave_attention_forward.9} parent=5 // pred_check
      _
    $region10: #{wave_attention_forward.9} parent=5 // pred_check_branch
      %72 = sbr.rel (%p69) target = $region12
    $region11: #{wave_attention_forward.9} parent=5 // pred_region
      %s73 = ssub.s32 %s7, 1
    $region12: #{wave_attention_forward.9} parent=5 // pred_fallthru
      _
    %p74 = scmp.lt.s32.totalorder %s7, 2
    // Predicated region
    $region13: #{wave_attention_forward.9} parent=5 // pred_check
      %p75 = pneg %p74
    $region14: #{wave_attention_forward.9} parent=5 // pred_check_branch
      %77 = sbr.rel (%p75) target = $region16
    $region15: #{wave_attention_forward.9} parent=5 // pred_region
      // Predicated region
      $region17: #{wave_attention_forward.9} parent=15 // pred_check
        %p78 = pneg %p27
      $region18: #{wave_attention_forward.9} parent=15 // pred_check_branch
        %80 = sbr.rel (%p78) target = $region20
      $region19: #{wave_attention_forward.9} parent=15 // pred_region
        %s81 = smul.u32 8, %s7
        %p82 = scmp.lt.s32.totalorder %s81, 15
        %s83 = scalar_select %p82, %s81, 15
        %s84 = smul.addr %s83, 8
        %s85 = scalar_lea.vmem %s0, %s84
        %s86 = smul.u32 8, %s7
      $region20: #{wave_attention_forward.9} parent=15 // pred_fallthru
        _
    $region16: #{wave_attention_forward.9} parent=5 // pred_fallthru
      _
    %p87 = scmp.le.s32.totalorder 1, %s7
    %p88 = scmp.lt.s32.totalorder %s7, 3
    %p89 = pnand %p87, %p88
    %p90 = pneg %p89
    // Predicated region
    $region21: #{wave_attention_forward.9} parent=5 // pred_check
      _
    $region22: #{wave_attention_forward.9} parent=5 // pred_check_branch
      %92 = sbr.rel (%p89) target = $region24
    $region23: #{wave_attention_forward.9} parent=5 // pred_region
      %s93 = ssub.s32 %s7, 1
      %s94 = smul.u32 8, %s12
      %p95 = scmp.lt.s32.totalorder %s94, 15
      %s96 = scalar_select %p95, %s94, 15
      %s97 = smul.addr %s96, 8
      %s98 = scalar_lea.vmem %s0, %s97
      %p99 = pneg %p33
      %p100 = pneg %p30
      %p101 = pneg %p59
      %p102 = pneg %p56
      %s103 = smul.u32 8, %s12
      %p104 = scmp.lt.s32.totalorder %s103, 15
      %s105 = scalar_select %p104, %s103, 15
      %s106 = smul.addr %s105, 8
      %s107 = scalar_lea.vmem %s1, %s106
      %s108 = smul.u32 8, %s12
      %p109 = scmp.lt.s32.totalorder %s108, 15
      %s110 = scalar_select %p109, %s108, 15
      %s111 = smul.addr %s110, 8
      %s112 = scalar_lea.vmem %s0, %s111
      %s113 = smul.u32 8, %s12
      %s114 = smul.u32 8, %s12
      %p115 = scmp.lt.s32.totalorder %s114, 15
      %s116 = scalar_select %p115, %s114, 15
      %s117 = smul.addr %s116, 8
      %s118 = scalar_lea.vmem %s1, %s117
      %s119 = smul.u32 8, %s12
      %v120 = vld [vmem:[%s112] sm:$0xff]
      %v121 = vld [vmem:[%s112 + $0x8] sm:$0xff]
      %v122 = vld [vmem:[%s112 + $0x10] sm:$0xff]
      %v123 = vld [vmem:[%s112 + $0x18] sm:$0xff]
      %v124 = vld [vmem:[%s112 + $0x20] sm:$0xff]
      %v125 = vld [vmem:[%s112 + $0x28] sm:$0xff]
      %v126 = vld [vmem:[%s112 + $0x30] sm:$0xff]
      %v127 = vld [vmem:[%s112 + $0x38] sm:$0xff]
      %136 = vrot.lane.b32.xlu0 %v120, 120
      %v137 = vpop.permute.xlu0 %136
      %138 = vrot.lane.b32.xlu0 %v121, 120
      %v139 = vpop.permute.xlu0 %138
      %140 = vrot.lane.b32.xlu0 %v122, 120
      %v141 = vpop.permute.xlu0 %140
      %142 = vrot.lane.b32.xlu0 %v123, 120
      %v143 = vpop.permute.xlu0 %142
      %144 = vrot.lane.b32.xlu0 %v124, 120
      %v145 = vpop.permute.xlu0 %144
      %146 = vrot.lane.b32.xlu0 %v125, 120
      %v147 = vpop.permute.xlu0 %146
      %148 = vrot.lane.b32.xlu0 %v126, 120
      %v149 = vpop.permute.xlu0 %148
      %150 = vrot.lane.b32.xlu0 %v127, 120
      %v151 = vpop.permute.xlu0 %150
      %v160 = vadd.f32 %v120, %v137
      %v161 = vadd.f32 %v121, %v139
      %v162 = vadd.f32 %v122, %v141
      %v163 = vadd.f32 %v123, %v143
      %v164 = vadd.f32 %v124, %v145
      %v165 = vadd.f32 %v125, %v147
      %v166 = vadd.f32 %v126, %v149
      %v167 = vadd.f32 %v127, %v151
      %168 = vrot.lane.b32.xlu0 %v120, 112
      %v169 = vpop.permute.xlu0 %168
      %170 = vrot.lane.b32.xlu0 %v121, 112
      %v171 = vpop.permute.xlu0 %170
      %172 = vrot.lane.b32.xlu0 %v122, 112
      %v173 = vpop.permute.xlu0 %172
      %174 = vrot.lane.b32.xlu0 %v123, 112
      %v175 = vpop.permute.xlu0 %174
      %176 = vrot.lane.b32.xlu0 %v124, 112
      %v177 = vpop.permute.xlu0 %176
      %178 = vrot.lane.b32.xlu0 %v125, 112
      %v179 = vpop.permute.xlu0 %178
      %180 = vrot.lane.b32.xlu0 %v126, 112
      %v181 = vpop.permute.xlu0 %180
      %182 = vrot.lane.b32.xlu0 %v127, 112
      %v183 = vpop.permute.xlu0 %182
      %v192 = vadd.f32 %v160, %v169
      %v193 = vadd.f32 %v161, %v171
      %v194 = vadd.f32 %v162, %v173
      %v195 = vadd.f32 %v163, %v175
      %v196 = vadd.f32 %v164, %v177
      %v197 = vadd.f32 %v165, %v179
      %v198 = vadd.f32 %v166, %v181
      %v199 = vadd.f32 %v167, %v183
      %200 = vrot.lane.b32.xlu0 %v120, 104
      %v201 = vpop.permute.xlu0 %200
      %202 = vrot.lane.b32.xlu0 %v121, 104
      %v203 = vpop.permute.xlu0 %202
      %204 = vrot.lane.b32.xlu0 %v122, 104
      %v205 = vpop.permute.xlu0 %204
      %206 = vrot.lane.b32.xlu0 %v123, 104
      %v207 = vpop.permute.xlu0 %206
      %208 = vrot.lane.b32.xlu0 %v124, 104
      %v209 = vpop.permute.xlu0 %208
      %210 = vrot.lane.b32.xlu0 %v125, 104
      %v211 = vpop.permute.xlu0 %210
      %212 = vrot.lane.b32.xlu0 %v126, 104
      %v213 = vpop.permute.xlu0 %212
      %214 = vrot.lane.b32.xlu0 %v127, 104
      %v215 = vpop.permute.xlu0 %214
      %v224 = vadd.f32 %v192, %v201
      %v225 = vadd.f32 %v193, %v203
      %v226 = vadd.f32 %v194, %v205
      %v227 = vadd.f32 %v195, %v207
      %v228 = vadd.f32 %v196, %v209
      %v229 = vadd.f32 %v197, %v211
      %v230 = vadd.f32 %v198, %v213
      %v231 = vadd.f32 %v199, %v215
      %v232 = vmul.f32 %v224, 0.5
      %v233 = vmul.f32 %v225, 0.5
      %v234 = vmul.f32 %v226, 0.5
      %v235 = vmul.f32 %v227, 0.5
      %v236 = vmul.f32 %v228, 0.5
      %v237 = vmul.f32 %v229, 0.5
      %v238 = vmul.f32 %v230, 0.5
      %v239 = vmul.f32 %v231, 0.5
      %v240 = vsub.f32 %v160, %v169
      %v241 = vsub.f32 %v161, %v171
      %v242 = vsub.f32 %v162, %v173
      %v243 = vsub.f32 %v163, %v175
      %v244 = vsub.f32 %v164, %v177
      %v245 = vsub.f32 %v165, %v179
      %v246 = vsub.f32 %v166, %v181
      %v247 = vsub.f32 %v167, %v183
      %v248 = vsub.f32 %v240, %v201
      %v249 = vsub.f32 %v241, %v203
      %v250 = vsub.f32 %v242, %v205
      %v251 = vsub.f32 %v243, %v207
      %v252 = vsub.f32 %v244, %v209
      %v253 = vsub.f32 %v245, %v211
      %v254 = vsub.f32 %v246, %v213
      %v255 = vsub.f32 %v247, %v215
      %v256 = vmul.f32 %v248, 0.5
      %v257 = vmul.f32 %v249, 0.5
      %v258 = vmul.f32 %v250, 0.5
      %v259 = vmul.f32 %v251, 0.5
      %v260 = vmul.f32 %v252, 0.5
      %v261 = vmul.f32 %v253, 0.5
      %v262 = vmul.f32 %v254, 0.5
      %v263 = vmul.f32 %v255, 0.5
      %v264 = vsub.f32 %v120, %v137
      %v265 = vsub.f32 %v121, %v139
      %v266 = vsub.f32 %v122, %v141
      %v267 = vsub.f32 %v123, %v143
      %v268 = vsub.f32 %v124, %v145
      %v269 = vsub.f32 %v125, %v147
      %v270 = vsub.f32 %v126, %v149
      %v271 = vsub.f32 %v127, %v151
      %v272 = vadd.f32 %v264, %v169
      %v273 = vadd.f32 %v265, %v171
      %v274 = vadd.f32 %v266, %v173
      %v275 = vadd.f32 %v267, %v175
      %v276 = vadd.f32 %v268, %v177
      %v277 = vadd.f32 %v269, %v179
      %v278 = vadd.f32 %v270, %v181
      %v279 = vadd.f32 %v271, %v183
      %v280 = vsub.f32 %v272, %v201
      %v281 = vsub.f32 %v273, %v203
      %v282 = vsub.f32 %v274, %v205
      %v283 = vsub.f32 %v275, %v207
      %v284 = vsub.f32 %v276, %v209
      %v285 = vsub.f32 %v277, %v211
      %v286 = vsub.f32 %v278, %v213
      %v287 = vsub.f32 %v279, %v215
      %v288 = vmul.f32 %v280, 0.5
      %v289 = vmul.f32 %v281, 0.5
      %v290 = vmul.f32 %v282, 0.5
      %v291 = vmul.f32 %v283, 0.5
      %v292 = vmul.f32 %v284, 0.5
      %v293 = vmul.f32 %v285, 0.5
      %v294 = vmul.f32 %v286, 0.5
      %v295 = vmul.f32 %v287, 0.5
      %v296 = vsub.f32 %v264, %v169
      %v297 = vsub.f32 %v265, %v171
      %v298 = vsub.f32 %v266, %v173
      %v299 = vsub.f32 %v267, %v175
      %v300 = vsub.f32 %v268, %v177
      %v301 = vsub.f32 %v269, %v179
      %v302 = vsub.f32 %v270, %v181
      %v303 = vsub.f32 %v271, %v183
      %v304 = vadd.f32 %v296, %v201
      %v305 = vadd.f32 %v297, %v203
      %v306 = vadd.f32 %v298, %v205
      %v307 = vadd.f32 %v299, %v207
      %v308 = vadd.f32 %v300, %v209
      %v309 = vadd.f32 %v301, %v211
      %v310 = vadd.f32 %v302, %v213
      %v311 = vadd.f32 %v303, %v215
      %v312 = vmul.f32 %v304, 0.5
      %v313 = vmul.f32 %v305, 0.5
      %v314 = vmul.f32 %v306, 0.5
      %v315 = vmul.f32 %v307, 0.5
      %v316 = vmul.f32 %v308, 0.5
      %v317 = vmul.f32 %v309, 0.5
      %v318 = vmul.f32 %v310, 0.5
      %v319 = vmul.f32 %v311, 0.5
      %v328 = vshrl.u32 %v232, 13
      %v329 = vshrl.u32 %v233, 13
      %v330 = vshrl.u32 %v234, 13
      %v331 = vshrl.u32 %v235, 13
      %v332 = vshrl.u32 %v236, 13
      %v333 = vshrl.u32 %v237, 13
      %v334 = vshrl.u32 %v238, 13
      %v335 = vshrl.u32 %v239, 13
      %v336 = vand.u32 %v328, 1
      %v337 = vand.u32 %v329, 1
      %v338 = vand.u32 %v330, 1
      %v339 = vand.u32 %v331, 1
      %v340 = vand.u32 %v332, 1
      %v341 = vand.u32 %v333, 1
      %v342 = vand.u32 %v334, 1
      %v343 = vand.u32 %v335, 1
      %v344 = vadd.s32 %v232, %v336
      %v345 = vadd.s32 %v233, %v337
      %v346 = vadd.s32 %v234, %v338
      %v347 = vadd.s32 %v235, %v339
      %v348 = vadd.s32 %v236, %v340
      %v349 = vadd.s32 %v237, %v341
      %v350 = vadd.s32 %v238, %v342
      %v351 = vadd.s32 %v239, %v343
      %v352 = vadd.s32 %v344, 4095
      %v353 = vadd.s32 %v345, 4095
      %v354 = vadd.s32 %v346, 4095
      %v355 = vadd.s32 %v347, 4095
      %v356 = vadd.s32 %v348, 4095
      %v357 = vadd.s32 %v349, 4095
      %v358 = vadd.s32 %v350, 4095
      %v359 = vadd.s32 %v351, 4095
      %v360 = vand.u32 %v352, 4294959104
      %v361 = vand.u32 %v353, 4294959104
      %v362 = vand.u32 %v354, 4294959104
      %v363 = vand.u32 %v355, 4294959104
      %v364 = vand.u32 %v356, 4294959104
      %v365 = vand.u32 %v357, 4294959104
      %v366 = vand.u32 %v358, 4294959104
      %v367 = vand.u32 %v359, 4294959104
      %vm376 = vcmask 64512
      %377 = vst.msk [vmem:[%s118] sm:$0xff] %vm376, %v360
      %378 = vst.msk [vmem:[%s118 + $0x8] sm:$0xff] %vm376, %v361
      %379 = vst.msk [vmem:[%s118 + $0x10] sm:$0xff] %vm376, %v362
      %380 = vst.msk [vmem:[%s118 + $0x18] sm:$0xff] %vm376, %v363
      %381 = vst.msk [vmem:[%s118 + $0x20] sm:$0xff] %vm376, %v364
      %382 = vst.msk [vmem:[%s118 + $0x28] sm:$0xff] %vm376, %v365
      %383 = vst.msk [vmem:[%s118 + $0x30] sm:$0xff] %vm376, %v366
      %384 = vst.msk [vmem:[%s118 + $0x38] sm:$0xff] %vm376, %v367
      %v393 = vshrl.u32 %v256, 13
      %v394 = vshrl.u32 %v257, 13
      %v395 = vshrl.u32 %v258, 13
      %v396 = vshrl.u32 %v259, 13
      %v397 = vshrl.u32 %v260, 13
      %v398 = vshrl.u32 %v261, 13
      %v399 = vshrl.u32 %v262, 13
      %v400 = vshrl.u32 %v263, 13
      %v401 = vand.u32 %v393, 1
      %v402 = vand.u32 %v394, 1
      %v403 = vand.u32 %v395, 1
      %v404 = vand.u32 %v396, 1
      %v405 = vand.u32 %v397, 1
      %v406 = vand.u32 %v398, 1
      %v407 = vand.u32 %v399, 1
      %v408 = vand.u32 %v400, 1
      %v409 = vadd.s32 %v256, %v401
      %v410 = vadd.s32 %v257, %v402
      %v411 = vadd.s32 %v258, %v403
      %v412 = vadd.s32 %v259, %v404
      %v413 = vadd.s32 %v260, %v405
      %v414 = vadd.s32 %v261, %v406
      %v415 = vadd.s32 %v262, %v407
      %v416 = vadd.s32 %v263, %v408
      %v417 = vadd.s32 %v409, 4095
      %v418 = vadd.s32 %v410, 4095
      %v419 = vadd.s32 %v411, 4095
      %v420 = vadd.s32 %v412, 4095
      %v421 = vadd.s32 %v413, 4095
      %v422 = vadd.s32 %v414, 4095
      %v423 = vadd.s32 %v415, 4095
      %v424 = vadd.s32 %v416, 4095
      %v425 = vand.u32 %v417, 4294959104
      %v426 = vand.u32 %v418, 4294959104
      %v427 = vand.u32 %v419, 4294959104
      %v428 = vand.u32 %v420, 4294959104
      %v429 = vand.u32 %v421, 4294959104
      %v430 = vand.u32 %v422, 4294959104
      %v431 = vand.u32 %v423, 4294959104
      %v432 = vand.u32 %v424, 4294959104
      %433 = vrot.lane.b32.xlu0 %v425, 8
      %v434 = vpop.permute.xlu0 %433
      %435 = vrot.lane.b32.xlu0 %v426, 8
      %v436 = vpop.permute.xlu0 %435
      %437 = vrot.lane.b32.xlu0 %v427, 8
      %v438 = vpop.permute.xlu0 %437
      %439 = vrot.lane.b32.xlu0 %v428, 8
      %v440 = vpop.permute.xlu0 %439
      %441 = vrot.lane.b32.xlu0 %v429, 8
      %v442 = vpop.permute.xlu0 %441
      %443 = vrot.lane.b32.xlu0 %v430, 8
      %v444 = vpop.permute.xlu0 %443
      %445 = vrot.lane.b32.xlu0 %v431, 8
      %v446 = vpop.permute.xlu0 %445
      %447 = vrot.lane.b32.xlu0 %v432, 8
      %v448 = vpop.permute.xlu0 %447
      %vm457 = vcmask 130112
      %458 = vst.msk [vmem:[%s118] sm:$0xff] %vm457, %v434
      %459 = vst.msk [vmem:[%s118 + $0x8] sm:$0xff] %vm457, %v436
      %460 = vst.msk [vmem:[%s118 + $0x10] sm:$0xff] %vm457, %v438
      %461 = vst.msk [vmem:[%s118 + $0x18] sm:$0xff] %vm457, %v440
      %462 = vst.msk [vmem:[%s118 + $0x20] sm:$0xff] %vm457, %v442
      %463 = vst.msk [vmem:[%s118 + $0x28] sm:$0xff] %vm457, %v444
      %464 = vst.msk [vmem:[%s118 + $0x30] sm:$0xff] %vm457, %v446
      %465 = vst.msk [vmem:[%s118 + $0x38] sm:$0xff] %vm457, %v448
      %v474 = vshrl.u32 %v288, 13
      %v475 = vshrl.u32 %v289, 13
      %v476 = vshrl.u32 %v290, 13
      %v477 = vshrl.u32 %v291, 13
      %v478 = vshrl.u32 %v292, 13
      %v479 = vshrl.u32 %v293, 13
      %v480 = vshrl.u32 %v294, 13
      %v481 = vshrl.u32 %v295, 13
      %v482 = vand.u32 %v474, 1
      %v483 = vand.u32 %v475, 1
      %v484 = vand.u32 %v476, 1
      %v485 = vand.u32 %v477, 1
      %v486 = vand.u32 %v478, 1
      %v487 = vand.u32 %v479, 1
      %v488 = vand.u32 %v480, 1
      %v489 = vand.u32 %v481, 1
      %v490 = vadd.s32 %v288, %v482
      %v491 = vadd.s32 %v289, %v483
      %v492 = vadd.s32 %v290, %v484
      %v493 = vadd.s32 %v291, %v485
      %v494 = vadd.s32 %v292, %v486
      %v495 = vadd.s32 %v293, %v487
      %v496 = vadd.s32 %v294, %v488
      %v497 = vadd.s32 %v295, %v489
      %v498 = vadd.s32 %v490, 4095
      %v499 = vadd.s32 %v491, 4095
      %v500 = vadd.s32 %v492, 4095
      %v501 = vadd.s32 %v493, 4095
      %v502 = vadd.s32 %v494, 4095
      %v503 = vadd.s32 %v495, 4095
      %v504 = vadd.s32 %v496, 4095
      %v505 = vadd.s32 %v497, 4095
      %v506 = vand.u32 %v498, 4294959104
      %v507 = vand.u32 %v499, 4294959104
      %v508 = vand.u32 %v500, 4294959104
      %v509 = vand.u32 %v501, 4294959104
      %v510 = vand.u32 %v502, 4294959104
      %v511 = vand.u32 %v503, 4294959104
      %v512 = vand.u32 %v504, 4294959104
      %v513 = vand.u32 %v505, 4294959104
      %514 = vrot.lane.b32.xlu0 %v506, 16
      %v515 = vpop.permute.xlu0 %514
      %516 = vrot.lane.b32.xlu0 %v507, 16
      %v517 = vpop.permute.xlu0 %516
      %518 = vrot.lane.b32.xlu0 %v508, 16
      %v519 = vpop.permute.xlu0 %518
      %520 = vrot.lane.b32.xlu0 %v509, 16
      %v521 = vpop.permute.xlu0 %520
      %522 = vrot.lane.b32.xlu0 %v510, 16
      %v523 = vpop.permute.xlu0 %522
      %524 = vrot.lane.b32.xlu0 %v511, 16
      %v525 = vpop.permute.xlu0 %524
      %526 = vrot.lane.b32.xlu0 %v512, 16
      %v527 = vpop.permute.xlu0 %526
      %528 = vrot.lane.b32.xlu0 %v513, 16
      %v529 = vpop.permute.xlu0 %528
      %vm538 = vcmask 195712
      %539 = vst.msk [vmem:[%s118] sm:$0xff] %vm538, %v515
      %540 = vst.msk [vmem:[%s118 + $0x8] sm:$0xff] %vm538, %v517
      %541 = vst.msk [vmem:[%s118 + $0x10] sm:$0xff] %vm538, %v519
      %542 = vst.msk [vmem:[%s118 + $0x18] sm:$0xff] %vm538, %v521
      %543 = vst.msk [vmem:[%s118 + $0x20] sm:$0xff] %vm538, %v523
      %544 = vst.msk [vmem:[%s118 + $0x28] sm:$0xff] %vm538, %v525
      %545 = vst.msk [vmem:[%s118 + $0x30] sm:$0xff] %vm538, %v527
      %546 = vst.msk [vmem:[%s118 + $0x38] sm:$0xff] %vm538, %v529
      %v555 = vshrl.u32 %v312, 13
      %v556 = vshrl.u32 %v313, 13
      %v557 = vshrl.u32 %v314, 13
      %v558 = vshrl.u32 %v315, 13
      %v559 = vshrl.u32 %v316, 13
      %v560 = vshrl.u32 %v317, 13
      %v561 = vshrl.u32 %v318, 13
      %v562 = vshrl.u32 %v319, 13
      %v563 = vand.u32 %v555, 1
      %v564 = vand.u32 %v556, 1
      %v565 = vand.u32 %v557, 1
      %v566 = vand.u32 %v558, 1
      %v567 = vand.u32 %v559, 1
      %v568 = vand.u32 %v560, 1
      %v569 = vand.u32 %v561, 1
      %v570 = vand.u32 %v562, 1
      %v571 = vadd.s32 %v312, %v563
      %v572 = vadd.s32 %v313, %v564
      %v573 = vadd.s32 %v314, %v565
      %v574 = vadd.s32 %v315, %v566
      %v575 = vadd.s32 %v316, %v567
      %v576 = vadd.s32 %v317, %v568
      %v577 = vadd.s32 %v318, %v569
      %v578 = vadd.s32 %v319, %v570
      %v579 = vadd.s32 %v571, 4095
      %v580 = vadd.s32 %v572, 4095
      %v581 = vadd.s32 %v573, 4095
      %v582 = vadd.s32 %v574, 4095
      %v583 = vadd.s32 %v575, 4095
      %v584 = vadd.s32 %v576, 4095
      %v585 = vadd.s32 %v577, 4095
      %v586 = vadd.s32 %v578, 4095
      %v587 = vand.u32 %v579, 4294959104
      %v588 = vand.u32 %v580, 4294959104
      %v589 = vand.u32 %v581, 4294959104
      %v590 = vand.u32 %v582, 4294959104
      %v591 = vand.u32 %v583, 4294959104
      %v592 = vand.u32 %v584, 4294959104
      %v593 = vand.u32 %v585, 4294959104
      %v594 = vand.u32 %v586, 4294959104
      %595 = vrot.lane.b32.xlu0 %v587, 24
      %v596 = vpop.permute.xlu0 %595
      %597 = vrot.lane.b32.xlu0 %v588, 24
      %v598 = vpop.permute.xlu0 %597
      %599 = vrot.lane.b32.xlu0 %v589, 24
      %v600 = vpop.permute.xlu0 %599
      %601 = vrot.lane.b32.xlu0 %v590, 24
      %v602 = vpop.permute.xlu0 %601
      %603 = vrot.lane.b32.xlu0 %v591, 24
      %v604 = vpop.permute.xlu0 %603
      %605 = vrot.lane.b32.xlu0 %v592, 24
      %v606 = vpop.permute.xlu0 %605
      %607 = vrot.lane.b32.xlu0 %v593, 24
      %v608 = vpop.permute.xlu0 %607
      %609 = vrot.lane.b32.xlu0 %v594, 24
      %v610 = vpop.permute.xlu0 %609
      %vm619 = vcmask 261312
      %620 = vst.msk [vmem:[%s118] sm:$0xff] %vm619, %v596
      %621 = vst.msk [vmem:[%s118 + $0x8] sm:$0xff] %vm619, %v598
      %622 = vst.msk [vmem:[%s118 + $0x10] sm:$0xff] %vm619, %v600
      %623 = vst.msk [vmem:[%s118 + $0x18] sm:$0xff] %vm619, %v602
      %624 = vst.msk [vmem:[%s118 + $0x20] sm:$0xff] %vm619, %v604
      %625 = vst.msk [vmem:[%s118 + $0x28] sm:$0xff] %vm619, %v606
      %626 = vst.msk [vmem:[%s118 + $0x30] sm:$0xff] %vm619, %v608
      %627 = vst.msk [vmem:[%s118 + $0x38] sm:$0xff] %vm619, %v610
      %s628 = smul.u32 8, %s12
      %p629 = scmp.lt.s32.totalorder %s628, 15
      %s630 = scalar_select %p629, %s628, 15
      %s631 = smul.addr %s630, 8
      %s632 = scalar_lea.vmem %s1, %s631
      // Predicated region
      $region25: #{wave_attention_forward.9} parent=23 // pred_check
        %p633 = pneg %p56
      $region26: #{wave_attention_forward.9} parent=23 // pred_check_branch
        %635 = sbr.rel (%p633) target = $region28
      $region27: #{wave_attention_forward.9} parent=23 // pred_region
        %s636 = smul.u32 8, %s12
      $region28: #{wave_attention_forward.9} parent=23 // pred_fallthru
        _
    $region24: #{wave_attention_forward.9} parent=5 // pred_fallthru
      _
    %p637 = scmp.le.s32.totalorder 2, %s7
    // Predicated region
    $region29: #{wave_attention_forward.9} parent=5 // pred_check
      %p638 = pneg %p637
    $region30: #{wave_attention_forward.9} parent=5 // pred_check_branch
      %640 = sbr.rel (%p638) target = $region32
    $region31: #{wave_attention_forward.9} parent=5 // pred_region
      %s641 = ssub.s32 %s7, 2
      // Predicated region
      $region33: #{wave_attention_forward.9} parent=31 // pred_check
        %p642 = pneg %p62
      $region34: #{wave_attention_forward.9} parent=31 // pred_check_branch
        %644 = sbr.rel (%p642) target = $region36
      $region35: #{wave_attention_forward.9} parent=31 // pred_region
        %s645 = smul.u32 8, %s13
        %p646 = scmp.lt.s32.totalorder %s645, 15
        %s647 = scalar_select %p646, %s645, 15
        %s648 = smul.addr %s647, 8
        %s649 = scalar_lea.vmem %s1, %s648
      $region36: #{wave_attention_forward.9} parent=31 // pred_fallthru
        _
    $region32: #{wave_attention_forward.9} parent=5 // pred_fallthru
      _
  $region6: #{wave_attention_forward.9} parent=0 // loop_footer
    %s11 = sadd.s32 1, %s7
  $region7: #{wave_attention_forward.9} parent=0 // loop_footer_branch
    %6 = sbr.rel target = $region3
  $region8: #{wave_attention_forward.9} parent=0 // loop_exit
    _

// kernel: wave_attention_forward.11
$region0: #{wave_attention_forward.11}
  #allocation0 [shape = 'u32[]', space=smem, size = 0x4, offset = 0x4, fixed_abs, tag = 'smem constant byte address 0x4 - core index']
  #allocation1 [shape = 'u32[144,128]{1,0:T(1,128)}', space=vmem, size = 0x12000, scoped, tag = 'internal scratch']
  %s0 = inlined_call_operand.vmem [shape: f32[2,256,32], index: 0, kind: input, shape index: {}]
  %s1 = inlined_call_operand.vmem [shape: f32[2,16,64], index: 1, kind: input, shape index: {}]
  %s2 = inlined_call_operand.vmem [shape: f32[2,256,8], index: 2, kind: input, shape index: {}]
  %s3 = inlined_call_operand.vmem [shape: f32[32,32], index: 3, kind: input, shape index: {}]
  %s4 = inlined_call_operand.vmem [shape: f32[8,32], index: 4, kind: input, shape index: {}]
  %s5 = inlined_call_operand.vmem [shape: f32[1,32], index: 5, kind: input, shape index: {}]
  %s6 = inlined_call_operand.vmem [shape: f32[2,256,32], index: 6, kind: output, shape index: {}]
  %s7 = sld [smem:[#allocation0]]
  $region57: #{wave_attention_forward.11} parent=0
    _
  %s9 = ssub.s32 1, %s7
  %s10 = scalar_select 0, %s9, %s7
  loop: start=0, step=1, limit=4
  $region2: #{wave_attention_forward.11} parent=0 // loop_pre_header
    _
  $region3: #{wave_attention_forward.11} parent=0 // loop_header
    %s12 = sphi 0, %s16
    %p13 = scmp.ge.s32.totalorder %s12, 4
    %s22 = sphi 0, %s24
    %s25 = sphi 0, %s22
    %s26 = sphi 0, %s25
    %s42 = sphi 0, %s26
    %s48 = sphi 0, %s50
    %s51 = sphi 0, %s48
    %s52 = sphi 0, %s51
    %s68 = sphi 0, %s52
    %s74 = sphi 0, %s76
    %s77 = sphi 0, %s74
    %s78 = sphi 0, %s77
    %s94 = sphi 0, %s78
    %s98 = sphi 0, %s98
    %s100 = sphi 0, %s98
    %s101 = sphi 0, %s100
    %s115 = sphi 0, %s101
    %s119 = sphi 0, %s119
    %s121 = sphi 0, %s119
    %s122 = sphi 0, %s121
    %s136 = sphi 0, %s122
    %s140 = sphi 0, %s140
    %s142 = sphi 0, %s140
    %s143 = sphi 0, %s142
    %s157 = sphi 0, %s143
    %s163 = sphi 0, %s165
    %s166 = sphi 0, %s163
    %s167 = sphi 0, %s166
    %s183 = sphi 0, %s167
  $region4: #{wave_attention_forward.11} parent=0 // loop_header_branch
    %15 = sbr.rel (%p13) target = $region8
  $region5: #{wave_attention_forward.11} parent=0 // loop_body
    %s17 = ssub.s32 %s12, 1
    %s18 = ssub.s32 %s12, 2
    %s19 = sadd.s32 %s12, 1
    %s20 = ssub.s32 %s12, %s19
    %p21 = scmp.eq.s32.totalorder %s20, 0
    %s23 = sadd.s32 %s22, 1
    %s24 = scalar_select %p21, %s22, %s23
    %p27 = pneg %p21
    %p28 = scmp.eq.s32.totalorder %s12, 1
    %p29 = por %p27, %p28
    %p30 = scmp.ne.s32.totalorder %s22, %s25
    %p31 = scmp.eq.s32.totalorder %s12, 0
    %p32 = por %p30, %p31
    %p33 = scmp.ne.s32.totalorder %s22, %s25
    %p34 = scmp.eq.s32.totalorder %s17, 1
    %p35 = por %p33, %p34
    %p36 = scmp.ne.s32.totalorder %s25, %s26
    %p37 = scmp.eq.s32.totalorder %s17, 0
    %p38 = por %p36, %p37
    %p39 = scmp.ne.s32.totalorder %s25, %s26
    %p40 = scmp.eq.s32.totalorder %s18, 1
    %p41 = por %p39, %p40
    %p43 = scmp.ne.s32.totalorder %s26, %s42
    %p44 = scmp.eq.s32.totalorder %s18, 0
    %p45 = por %p43, %p44
    %s46 = ssub.s32 %s12, %s19
    %p47 = scmp.eq.s32.totalorder %s46, 0
    %s49 = sadd.s32 %s48, 1
    %s50 = scalar_select %p47, %s48, %s49
    %p53 = pneg %p47
    %p54 = scmp.eq.s32.totalorder %s12, 1
    %p55 = por %p53, %p54
    %p56 = scmp.ne.s32.totalorder %s48, %s51
    %p57 = scmp.eq.s32.totalorder %s12, 0
    %p58 = por %p56, %p57
    %p59 = scmp.ne.s32.totalorder %s48, %s51
    %p60 = scmp.eq.s32.totalorder %s17, 1
    %p61 = por %p59, %p60
    %p62 = scmp.ne.s32.totalorder %s51, %s52
    %p63 = scmp.eq.s32.totalorder %s17, 0
    %p64 = por %p62, %p63
    %p65 = scmp.ne.s32.totalorder %s51, %s52
    %p66 = scmp.eq.s32.totalorder %s18, 1
    %p67 = por %p65, %p66
    %p69 = scmp.ne.s32.totalorder %s52, %s68
    %p70 = scmp.eq.s32.totalorder %s18, 0
    %p71 = por %p69, %p70
    %s72 = ssub.s32 %s12, %s19
    %p73 = scmp.eq.s32.totalorder %s72, 0
    %s75 = sadd.s32 %s74, 1
    %s76 = scalar_select %p73, %s74, %s75
    %p79 = pneg %p73
    %p80 = scmp.eq.s32.totalorder %s12, 1
    %p81 = por %p79, %p80
    %p82 = scmp.ne.s32.totalorder %s74, %s77
    %p83 = scmp.eq.s32.totalorder %s12, 0
    %p84 = por %p82, %p83
    %p85 = scmp.ne.s32.totalorder %s74, %s77
    %p86 = scmp.eq.s32.totalorder %s17, 1
    %p87 = por %p85, %p86
    %p88 = scmp.ne.s32.totalorder %s77, %s78
    %p89 = scmp.eq.s32.totalorder %s17, 0
    %p90 = por %p88, %p89
    %p91 = scmp.ne.s32.totalorder %s77, %s78
    %p92 = scmp.eq.s32.totalorder %s18, 1
    %p93 = por %p91, %p92
    %p95 = scmp.ne.s32.totalorder %s78, %s94
    %p96 = scmp.eq.s32.totalorder %s18, 0
    %p97 = por %p95, %p96
    %s99 = sadd.s32 %s98, 1
    %p102 = scmp.eq.s32.totalorder %s12, 1
    %p103 = scmp.ne.s32.totalorder %s98, %s100
    %p104 = scmp.eq.s32.totalorder %s12, 0
    %p105 = por %p103, %p104
    %p106 = scmp.ne.s32.totalorder %s98, %s100
    %p107 = scmp.eq.s32.totalorder %s17, 1
    %p108 = por %p106, %p107
    %p109 = scmp.ne.s32.totalorder %s100, %s101
    %p110 = scmp.eq.s32.totalorder %s17, 0
    %p111 = por %p109, %p110
    %p112 = scmp.ne.s32.totalorder %s100, %s101
    %p113 = scmp.eq.s32.totalorder %s18, 1
    %p114 = por %p112, %p113
    %p116 = scmp.ne.s32.totalorder %s101, %s115
    %p117 = scmp.eq.s32.totalorder %s18, 0
    %p118 = por %p116, %p117
    %s120 = sadd.s32 %s119, 1
    %p123 = scmp.eq.s32.totalorder %s12, 1
    %p124 = scmp.ne.s32.totalorder %s119, %s121
    %p125 = scmp.eq.s32.totalorder %s12, 0
    %p126 = por %p124, %p125
    %p127 = scmp.ne.s32.totalorder %s119, %s121
    %p128 = scmp.eq.s32.totalorder %s17, 1
    %p129 = por %p127, %p128
    %p130 = scmp.ne.s32.totalorder %s121, %s122
    %p131 = scmp.eq.s32.totalorder %s17, 0
    %p132 = por %p130, %p131
    %p133 = scmp.ne.s32.totalorder %s121, %s122
    %p134 = scmp.eq.s32.totalorder %s18, 1
    %p135 = por %p133, %p134
    %p137 = scmp.ne.s32.totalorder %s122, %s136
    %p138 = scmp.eq.s32.totalorder %s18, 0
    %p139 = por %p137, %p138
    %s141 = sadd.s32 %s140, 1
    %p144 = scmp.eq.s32.totalorder %s12, 1
    %p145 = scmp.ne.s32.totalorder %s140, %s142
    %p146 = scmp.eq.s32.totalorder %s12, 0
    %p147 = por %p145, %p146
    %p148 = scmp.ne.s32.totalorder %s140, %s142
    %p149 = scmp.eq.s32.totalorder %s17, 1
    %p150 = por %p148, %p149
    %p151 = scmp.ne.s32.totalorder %s142, %s143
    %p152 = scmp.eq.s32.totalorder %s17, 0
    %p153 = por %p151, %p152
    %p154 = scmp.ne.s32.totalorder %s142, %s143
    %p155 = scmp.eq.s32.totalorder %s18, 1
    %p156 = por %p154, %p155
    %p158 = scmp.ne.s32.totalorder %s143, %s157
    %p159 = scmp.eq.s32.totalorder %s18, 0
    %p160 = por %p158, %p159
    %s161 = ssub.s32 %s12, %s19
    %p162 = scmp.eq.s32.totalorder %s161, 0
    %s164 = sadd.s32 %s163, 1
    %s165 = scalar_select %p162, %s163, %s164
    %p168 = pneg %p162
    %p169 = scmp.eq.s32.totalorder %s12, 1
    %p170 = por %p168, %p169
    %p171 = scmp.ne.s32.totalorder %s163, %s166
    %p172 = scmp.eq.s32.totalorder %s12, 0
    %p173 = por %p171, %p172
    %p174 = scmp.ne.s32.totalorder %s163, %s166
    %p175 = scmp.eq.s32.totalorder %s17, 1
    %p176 = por %p174, %p175
    %p177 = scmp.ne.s32.totalorder %s166, %s167
    %p178 = scmp.eq.s32.totalorder %s17, 0
    %p179 = por %p177, %p178
    %p180 = scmp.ne.s32.totalorder %s166, %s167
    %p181 = scmp.eq.s32.totalorder %s18, 1
    %p182 = por %p180, %p181
    %p184 = scmp.ne.s32.totalorder %s167, %s183
    %p185 = scmp.eq.s32.totalorder %s18, 0
    %p186 = por %p184, %p185
    %p187 = scmp.le.s32.totalorder 1, %s12
    %p188 = scmp.lt.s32.totalorder %s12, 3
    %p189 = pnand %p187, %p188
    %p190 = pneg %p189
    // Predicated region
    $region9: #{wave_attention_forward.11} parent=5 // pred_check
      _
    $region10: #{wave_attention_forward.11} parent=5 // pred_check_branch
      %192 = sbr.rel (%p189) target = $region12
    $region11: #{wave_attention_forward.11} parent=5 // pred_region
      %s193 = ssub.s32 %s12, 1
      // Predicated region
      $region13: #{wave_attention_forward.11} parent=11 // pred_check
        %p194 = pneg %p111
      $region14: #{wave_attention_forward.11} parent=11 // pred_check_branch
        %196 = sbr.rel (%p194) target = $region16
      $region15: #{wave_attention_forward.11} parent=11 // pred_region
        _
      $region16: #{wave_attention_forward.11} parent=11 // pred_fallthru
        _
      // Predicated region
      $region17: #{wave_attention_forward.11} parent=11 // pred_check
        %p197 = pneg %p132
      $region18: #{wave_attention_forward.11} parent=11 // pred_check_branch
        %199 = sbr.rel (%p197) target = $region20
      $region19: #{wave_attention_forward.11} parent=11 // pred_region
        _
      $region20: #{wave_attention_forward.11} parent=11 // pred_fallthru
        _
      // Predicated region
      $region21: #{wave_attention_forward.11} parent=11 // pred_check
        %p200 = pneg %p153
      $region22: #{wave_attention_forward.11} parent=11 // pred_check_branch
        %202 = sbr.rel (%p200) target = $region24
      $region23: #{wave_attention_forward.11} parent=11 // pred_region
        _
      $region24: #{wave_attention_forward.11} parent=11 // pred_fallthru
        _
    $region12: #{wave_attention_forward.11} parent=5 // pred_fallthru
      _
    %p203 = scmp.lt.s32.totalorder %s12, 2
    // Predicated region
    $region25: #{wave_attention_forward.11} parent=5 // pred_check
      %p204 = pneg %p203
    $region26: #{wave_attention_forward.11} parent=5 // pred_check_branch
      %206 = sbr.rel (%p204) target = $region28
    $region27: #{wave_attention_forward.11} parent=5 // pred_region
      // Predicated region
      $region29: #{wave_attention_forward.11} parent=27 // pred_check
        %p207 = pneg %p32
      $region30: #{wave_attention_forward.11} parent=27 // pred_check_branch
        %209 = sbr.rel (%p207) target = $region32
      $region31: #{wave_attention_forward.11} parent=27 // pred_region
        %p210 = scmp.lt.s32.totalorder %s12, 1
        %s211 = scalar_select %p210, %s12, 1
        %s212 = smul.addr %s211, 32
        %s213 = smul.addr %s212, 8
        %s214 = scalar_lea.vmem %s0, %s213
      $region32: #{wave_attention_forward.11} parent=27 // pred_fallthru
        _
      // Predicated region
      $region33: #{wave_attention_forward.11} parent=27 // pred_check
        %p215 = pneg %p58
      $region34: #{wave_attention_forward.11} parent=27 // pred_check_branch
        %217 = sbr.rel (%p215) target = $region36
      $region35: #{wave_attention_forward.11} parent=27 // pred_region
        %p218 = scmp.lt.s32.totalorder %s12, 1
        %s219 = scalar_select %p218, %s12, 1
        %s220 = smul.addr %s219, 2
        %s221 = smul.addr %s220, 8
        %s222 = scalar_lea.vmem %s1, %s221
      $region36: #{wave_attention_forward.11} parent=27 // pred_fallthru
        _
      // Predicated region
      $region37: #{wave_attention_forward.11} parent=27 // pred_check
        %p223 = pneg %p84
      $region38: #{wave_attention_forward.11} parent=27 // pred_check_branch
        %225 = sbr.rel (%p223) target = $region40
      $region39: #{wave_attention_forward.11} parent=27 // pred_region
        %p226 = scmp.lt.s32.totalorder %s12, 1
        %s227 = scalar_select %p226, %s12, 1
        %s228 = smul.addr %s227, 32
        %s229 = smul.addr %s228, 8
        %s230 = scalar_lea.vmem %s2, %s229
      $region40: #{wave_attention_forward.11} parent=27 // pred_fallthru
        _
    $region28: #{wave_attention_forward.11} parent=5 // pred_fallthru
      _
    %p231 = scmp.le.s32.totalorder 1, %s12
    %p232 = scmp.lt.s32.totalorder %s12, 3
    %p233 = pnand %p231, %p232
    %p234 = pneg %p233
    // Predicated region
    $region41: #{wave_attention_forward.11} parent=5 // pred_check
      _
    $region42: #{wave_attention_forward.11} parent=5 // pred_check_branch
      %236 = sbr.rel (%p233) target = $region44
    $region43: #{wave_attention_forward.11} parent=5 // pred_region
      %s237 = ssub.s32 %s12, 1
      %p238 = scmp.lt.s32.totalorder %s17, 1
      %s239 = scalar_select %p238, %s17, 1
      %s240 = smul.addr %s239, 32
      %s241 = smul.addr %s240, 8
      %s242 = scalar_lea.vmem %s0, %s241
      %p243 = pneg %p38
      %p244 = pneg %p35
      %p245 = scmp.lt.s32.totalorder %s17, 1
      %s246 = scalar_select %p245, %s17, 1
      %s247 = smul.addr %s246, 2
      %s248 = smul.addr %s247, 8
      %s249 = scalar_lea.vmem %s1, %s248
      %p250 = pneg %p64
      %p251 = pneg %p61
      %p252 = scmp.lt.s32.totalorder %s17, 1
      %s253 = scalar_select %p252, %s17, 1
      %s254 = smul.addr %s253, 32
      %s255 = smul.addr %s254, 8
      %s256 = scalar_lea.vmem %s2, %s255
      %p257 = pneg %p90
      %p258 = pneg %p87
      %p259 = pneg %p111
      %p260 = pneg %p108
      %p261 = pneg %p132
      %p262 = pneg %p129
      %p263 = pneg %p153
      %p264 = pneg %p150
      %p265 = pneg %p179
      %p266 = pneg %p176
      %p267 = scmp.lt.s32.totalorder %s17, 1
      %s268 = scalar_select %p267, %s17, 1
      %s269 = smul.addr %s268, 32
      %s270 = smul.addr %s269, 8
      %s271 = scalar_lea.vmem %s6, %s270
      %p272 = scmp.lt.s32.totalorder %s17, 1
      %s273 = scalar_select %p272, %s17, 1
      %s274 = smul.addr %s273, 32
      %s275 = smul.addr %s274, 8
      %s276 = scalar_lea.vmem %s0, %s275
      %p277 = scmp.lt.s32.totalorder %s17, 1
      %s278 = scalar_select %p277, %s17, 1
      %s279 = smul.addr %s278, 2
      %s280 = smul.addr %s279, 8
      %s281 = scalar_lea.vmem %s1, %s280
      %p282 = scmp.lt.s32.totalorder %s17, 1
      %s283 = scalar_select %p282, %s17, 1
      %s284 = smul.addr %s283, 32
      %s285 = smul.addr %s284, 8
      %s286 = scalar_lea.vmem %s2, %s285
      %p287 = scmp.lt.s32.totalorder %s17, 1
      %s288 = scalar_select %p287, %s17, 1
      %s289 = smul.addr %s288, 32
      %s290 = smul.addr %s289, 8
      %s291 = scalar_lea.vmem %s6, %s290
      %v292 = vld [vmem:[%s276] sm:$0xff]
      %v293 = vld [vmem:[%s276 + $0x8] sm:$0xff]
      %v294 = vld [vmem:[%s276 + $0x10] sm:$0xff]
      %v295 = vld [vmem:[%s276 + $0x18] sm:$0xff]
      %v296 = vld [vmem:[%s276 + $0x20] sm:$0xff]
      %v297 = vld [vmem:[%s276 + $0x28] sm:$0xff]
      %v298 = vld [vmem:[%s276 + $0x30] sm:$0xff]
      %v299 = vld [vmem:[%s276 + $0x38] sm:$0xff]
      %v300 = vld [vmem:[%s276 + $0x40] sm:$0xff]
      %v301 = vld [vmem:[%s276 + $0x48] sm:$0xff]
      %v302 = vld [vmem:[%s276 + $0x50] sm:$0xff]
      %v303 = vld [vmem:[%s276 + $0x58] sm:$0xff]
      %v304 = vld [vmem:[%s276 + $0x60] sm:$0xff]
      %v305 = vld [vmem:[%s276 + $0x68] sm:$0xff]
      %v306 = vld [vmem:[%s276 + $0x70] sm:$0xff]
      %v307 = vld [vmem:[%s276 + $0x78] sm:$0xff]
      %v308 = vld [vmem:[%s276 + $0x80] sm:$0xff]
      %v309 = vld [vmem:[%s276 + $0x88] sm:$0xff]
      %v310 = vld [vmem:[%s276 + $0x90] sm:$0xff]
      %v311 = vld [vmem:[%s276 + $0x98] sm:$0xff]
      %v312 = vld [vmem:[%s276 + $0xa0] sm:$0xff]
      %v313 = vld [vmem:[%s276 + $0xa8] sm:$0xff]
      %v314 = vld [vmem:[%s276 + $0xb0] sm:$0xff]
      %v315 = vld [vmem:[%s276 + $0xb8] sm:$0xff]
      %v316 = vld [vmem:[%s276 + $0xc0] sm:$0xff]
      %v317 = vld [vmem:[%s276 + $0xc8] sm:$0xff]
      %v318 = vld [vmem:[%s276 + $0xd0] sm:$0xff]
      %v319 = vld [vmem:[%s276 + $0xd8] sm:$0xff]
      %v320 = vld [vmem:[%s276 + $0xe0] sm:$0xff]
      %v321 = vld [vmem:[%s276 + $0xe8] sm:$0xff]
      %v322 = vld [vmem:[%s276 + $0xf0] sm:$0xff]
      %v323 = vld [vmem:[%s276 + $0xf8] sm:$0xff]
      %v324 = vld [vmem:[%s281] sm:$0xff]
      %v325 = vld [vmem:[%s281 + $0x8] sm:$0xff]
      %v326 = vld [vmem:[%s3] sm:$0xff]
      %v327 = vld [vmem:[%s3 + $0x8] sm:$0xff]
      %v328 = vld [vmem:[%s3 + $0x10] sm:$0xff]
      %v329 = vld [vmem:[%s3 + $0x18] sm:$0xff]
      %v330 = vld [vmem:[%s286] sm:$0xff]
      %v331 = vld [vmem:[%s286 + $0x8] sm:$0xff]
      %v332 = vld [vmem:[%s286 + $0x10] sm:$0xff]
      %v333 = vld [vmem:[%s286 + $0x18] sm:$0xff]
      %v334 = vld [vmem:[%s286 + $0x20] sm:$0xff]
      %v335 = vld [vmem:[%s286 + $0x28] sm:$0xff]
      %v336 = vld [vmem:[%s286 + $0x30] sm:$0xff]
      %v337 = vld [vmem:[%s286 + $0x38] sm:$0xff]
      %v338 = vld [vmem:[%s286 + $0x40] sm:$0xff]
      %v339 = vld [vmem:[%s286 + $0x48] sm:$0xff]
      %v340 = vld [vmem:[%s286 + $0x50] sm:$0xff]
      %v341 = vld [vmem:[%s286 + $0x58] sm:$0xff]
      %v342 = vld [vmem:[%s286 + $0x60] sm:$0xff]
      %v343 = vld [vmem:[%s286 + $0x68] sm:$0xff]
      %v344 = vld [vmem:[%s286 + $0x70] sm:$0xff]
      %v345 = vld [vmem:[%s286 + $0x78] sm:$0xff]
      %v346 = vld [vmem:[%s286 + $0x80] sm:$0xff]
      %v347 = vld [vmem:[%s286 + $0x88] sm:$0xff]
      %v348 = vld [vmem:[%s286 + $0x90] sm:$0xff]
      %v349 = vld [vmem:[%s286 + $0x98] sm:$0xff]
      %v350 = vld [vmem:[%s286 + $0xa0] sm:$0xff]
      %v351 = vld [vmem:[%s286 + $0xa8] sm:$0xff]
      %v352 = vld [vmem:[%s286 + $0xb0] sm:$0xff]
      %v353 = vld [vmem:[%s286 + $0xb8] sm:$0xff]
      %v354 = vld [vmem:[%s286 + $0xc0] sm:$0xff]
      %v355 = vld [vmem:[%s286 + $0xc8] sm:$0xff]
      %v356 = vld [vmem:[%s286 + $0xd0] sm:$0xff]
      %v357 = vld [vmem:[%s286 + $0xd8] sm:$0xff]
      %v358 = vld [vmem:[%s286 + $0xe0] sm:$0xff]
      %v359 = vld [vmem:[%s286 + $0xe8] sm:$0xff]
      %v360 = vld [vmem:[%s286 + $0xf0] sm:$0xff]
      %v361 = vld [vmem:[%s286 + $0xf8] sm:$0xff]
      %v362 = vld [vmem:[%s4] sm:$0xff]
      %v363 = vld [vmem:[%s5] sm:$0x1]
      %v365 = vlaneseq
      %v366 = vshrl.u32 %v365, 7
      %v367 = vsub.s32 0, %v366
      %v368 = vrot.slane %v363, %v367
      %vm370 = vcmask 64512
      %v372 = vsel %vm370, %v330, 0
      %v375 = vsel %vm370, %v331, 0
      %v378 = vsel %vm370, %v332, 0
      %v381 = vsel %vm370, %v333, 0
      %v384 = vsel %vm370, %v334, 0
      %v387 = vsel %vm370, %v335, 0
      %v390 = vsel %vm370, %v336, 0
      %v393 = vsel %vm370, %v337, 0
      %v396 = vsel %vm370, %v338, 0
      %v399 = vsel %vm370, %v339, 0
      %v402 = vsel %vm370, %v340, 0
      %v405 = vsel %vm370, %v341, 0
      %v408 = vsel %vm370, %v342, 0
      %v411 = vsel %vm370, %v343, 0
      %v414 = vsel %vm370, %v344, 0
      %v417 = vsel %vm370, %v345, 0
      %v420 = vsel %vm370, %v346, 0
      %v423 = vsel %vm370, %v347, 0
      %v426 = vsel %vm370, %v348, 0
      %v429 = vsel %vm370, %v349, 0
      %v432 = vsel %vm370, %v350, 0
      %v435 = vsel %vm370, %v351, 0
      %v438 = vsel %vm370, %v352, 0
      %v441 = vsel %vm370, %v353, 0
      %v444 = vsel %vm370, %v354, 0
      %v447 = vsel %vm370, %v355, 0
      %v450 = vsel %vm370, %v356, 0
      %v453 = vsel %vm370, %v357, 0
      %v456 = vsel %vm370, %v358, 0
      %v459 = vsel %vm370, %v359, 0
      %v462 = vsel %vm370, %v360, 0
      %v465 = vsel %vm370, %v361, 0
      %467 = vmatprep.subr.mxu0 0.0
      %468 = vmatpush1.msra.mxu0 %v362
      %469 = vmatprep.subr.mxu0 0.0
      %470 = vmatpush1.msra.mxu0 0.0
      %471 = vmatprep.subr.mxu0 0.0
      %472 = vmatpush1.msra.mxu0 0.0
      %473 = vmatprep.subr.mxu0 0.0
      %474 = vmatpush1.msra.mxu0 0.0
      %475 = vmatprep.subr.mxu0 0.0
      %476 = vmatpush1.msra.mxu0 0.0
      %477 = vmatprep.subr.mxu0 0.0
      %478 = vmatpush1.msra.mxu0 0.0
      %479 = vmatprep.subr.mxu0 0.0
      %480 = vmatpush1.msra.mxu0 0.0
      %481 = vmatprep.subr.mxu0 0.0
      %482 = vmatpush1.msra.mxu0 0.0
      %483 = vmatprep.subr.mxu0 0.0
      %484 = vmatpush1.msra.mxu0 0.0
      %485 = vmatprep.subr.mxu0 0.0
      %486 = vmatpush1.msra.mxu0 0.0
      %487 = vmatprep.subr.mxu0 0.0
      %488 = vmatpush1.msra.mxu0 0.0
      %489 = vmatprep.subr.mxu0 0.0
      %490 = vmatpush1.msra.mxu0 0.0
      %491 = vmatprep.subr.mxu0 0.0
      %492 = vmatpush1.msra.mxu0 0.0
      %493 = vmatprep.subr.mxu0 0.0
      %494 = vmatpush1.msra.mxu0 0.0
      %495 = vmatprep.subr.mxu0 0.0
      %496 = vmatpush1.msra.mxu0 0.0
      %497 = vmatprep.subr.mxu0 0.0
      %498 = vmatpush1.msra.mxu0 0.0
      %499 = vmatprep.subr.mxu0 0.0
      %500 = vmatpush1.msra.mxu0 0.0
      %501 = vmatprep.subr.mxu0 0.0
      %502 = vmatpush1.msra.mxu0 0.0
      %503 = vmatprep.subr.mxu0 0.0
      %504 = vmatpush1.msra.mxu0 0.0
      %505 = vmatprep.subr.mxu0 0.0
      %506 = vmatpush1.msra.mxu0 0.0
      %507 = vmatprep.subr.mxu0 0.0
      %508 = vmatpush1.msra.mxu0 0.0
      %509 = vmatprep.subr.mxu0 0.0
      %510 = vmatpush1.msra.mxu0 0.0
      %511 = vmatprep.subr.mxu0 0.0
      %512 = vmatpush1.msra.mxu0 0.0
      %513 = vmatprep.subr.mxu0 0.0
      %514 = vmatpush1.msra.mxu0 0.0
      %515 = vmatprep.subr.mxu0 0.0
      %516 = vmatpush1.msra.mxu0 0.0
      %517 = vmatprep.subr.mxu0 0.0
      %518 = vmatpush1.msra.mxu0 0.0
      %519 = vmatprep.subr.mxu0 0.0
      %520 = vmatpush1.msra.mxu0 0.0
      %521 = vmatprep.subr.mxu0 0.0
      %522 = vmatpush1.msra.mxu0 0.0
      %523 = vmatprep.subr.mxu0 0.0
      %524 = vmatpush1.msra.mxu0 0.0
      %525 = vmatprep.subr.mxu0 0.0
      %526 = vmatpush1.msra.mxu0 0.0
      %527 = vmatprep.subr.mxu0 0.0
      %528 = vmatpush1.msra.mxu0 0.0
      %529 = vmatprep.subr.mxu0 0.0
      %530 = vmatpush1.msra.mxu0 0.0
      %531 = vmatprep.mubr.f32.mxu0 0.0
      %532 = vmatmul.mubr.f32.gmra.mrb[0].mxu0 %v372
      %v533 = vpop.f32.mrb[0].mxu0
      %v534 = vadd.f32 %v368, %v533
      %v535 = vpop.f32.mrb[0].mxu0
      %536 = vmatprep.mubr.f32.mxu0 0.0
      %537 = vmatmul.mubr.f32.gmra.mrb[0].mxu0 %v375
      %v538 = vpop.f32.mrb[0].mxu0
      %v539 = vadd.f32 %v368, %v538
      %v540 = vpop.f32.mrb[0].mxu0
      %541 = vmatprep.mubr.f32.mxu0 0.0
      %542 = vmatmul.mubr.f32.gmra.mrb[0].mxu0 %v378
      %v543 = vpop.f32.mrb[0].mxu0
      %v544 = vadd.f32 %v368, %v543
      %v545 = vpop.f32.mrb[0].mxu0
      %546 = vmatprep.mubr.f32.mxu0 0.0
      %547 = vmatmul.mubr.f32.gmra.mrb[0].mxu0 %v381
      %v548 = vpop.f32.mrb[0].mxu0
      %v549 = vadd.f32 %v368, %v548
      %v550 = vpop.f32.mrb[0].mxu0
      %551 = vmatprep.mubr.f32.mxu0 0.0
      %552 = vmatmul.mubr.f32.gmra.mrb[0].mxu0 %v384
      %v553 = vpop.f32.mrb[0].mxu0
      %v554 = vadd.f32 %v368, %v553
      %v555 = vpop.f32.mrb[0].mxu0
      %556 = vmatprep.mubr.f32.mxu0 0.0
      %557 = vmatmul.mubr.f32.gmra.mrb[0].mxu0 %v387
      %v558 = vpop.f32.mrb[0].mxu0
      %v559 = vadd.f32 %v368, %v558
      %v560 = vpop.f32.mrb[0].mxu0
      %561 = vmatprep.mubr.f32.mxu0 0.0
      %562 = vmatmul.mubr.f32.gmra.mrb[0].mxu0 %v390
      %v563 = vpop.f32.mrb[0].mxu0
      %v564 = vadd.f32 %v368, %v563
      %v565 = vpop.f32.mrb[0].mxu0
      %566 = vmatprep.mubr.f32.mxu0 0.0
      %567 = vmatmul.mubr.f32.gmra.mrb[0].mxu0 %v393
      %v568 = vpop.f32.mrb[0].mxu0
      %v569 = vadd.f32 %v368, %v568
      %v570 = vpop.f32.mrb[0].mxu0
      %571 = vmatprep.mubr.f32.mxu0 0.0
      %572 = vmatmul.mubr.f32.gmra.mrb[0].mxu0 %v396
      %v573 = vpop.f32.mrb[0].mxu0
      %v574 = vadd.f32 %v368, %v573
      %v575 = vpop.f32.mrb[0].mxu0
      %576 = vmatprep.mubr.f32.mxu0 0.0
      %577 = vmatmul.mubr.f32.gmra.mrb[0].mxu0 %v399
      %v578 = vpop.f32.mrb[0].mxu0
      %v579 = vadd.f32 %v368, %v578
      %v580 = vpop.f32.mrb[0].mxu0
      %581 = vmatprep.mubr.f32.mxu0 0.0
      %582 = vmatmul.mubr.f32.gmra.mrb[0].mxu0 %v402
      %v583 = vpop.f32.mrb[0].mxu0
      %v584 = vadd.f32 %v368, %v583
      %v585 = vpop.f32.mrb[0].mxu0
      %586 = vmatprep.mubr.f32.mxu0 0.0
      %587 = vmatmul.mubr.f32.gmra.mrb[0].mxu0 %v405
      %v588 = vpop.f32.mrb[0].mxu0
      %v589 = vadd.f32 %v368, %v588
      %v590 = vpop.f32.mrb[0].mxu0
      %591 = vmatprep.mubr.f32.mxu0 0.0
      %592 = vmatmul.mubr.f32.gmra.mrb[0].mxu0 %v408
      %v593 = vpop.f32.mrb[0].mxu0
      %v594 = vadd.f32 %v368, %v593
      %v595 = vpop.f32.mrb[0].mxu0
      %596 = vmatprep.mubr.f32.mxu0 0.0
      %597 = vmatmul.mubr.f32.gmra.mrb[0].mxu0 %v411
      %v598 = vpop.f32.mrb[0].mxu0
      %v599 = vadd.f32 %v368, %v598
      %v600 = vpop.f32.mrb[0].mxu0
      %601 = vmatprep.mubr.f32.mxu0 0.0
      %602 = vmatmul.mubr.f32.gmra.mrb[0].mxu0 %v414
      %v603 = vpop.f32.mrb[0].mxu0
      %v604 = vadd.f32 %v368, %v603
      %v605 = vpop.f32.mrb[0].mxu0
      %606 = vmatprep.mubr.f32.mxu0 0.0
      %607 = vmatmul.mubr.f32.gmra.mrb[0].mxu0 %v417
      %v608 = vpop.f32.mrb[0].mxu0
      %v609 = vadd.f32 %v368, %v608
      %v610 = vpop.f32.mrb[0].mxu0
      %611 = vmatprep.mubr.f32.mxu0 0.0
      %612 = vmatmul.mubr.f32.gmra.mrb[0].mxu0 %v420
      %v613 = vpop.f32.mrb[0].mxu0
      %v614 = vadd.f32 %v368, %v613
      %v615 = vpop.f32.mrb[0].mxu0
      %616 = vmatprep.mubr.f32.mxu0 0.0
      %617 = vmatmul.mubr.f32.gmra.mrb[0].mxu0 %v423
      %v618 = vpop.f32.mrb[0].mxu0
      %v619 = vadd.f32 %v368, %v618
      %v620 = vpop.f32.mrb[0].mxu0
      %621 = vmatprep.mubr.f32.mxu0 0.0
      %622 = vmatmul.mubr.f32.gmra.mrb[0].mxu0 %v426
      %v623 = vpop.f32.mrb[0].mxu0
      %v624 = vadd.f32 %v368, %v623
      %v625 = vpop.f32.mrb[0].mxu0
      %626 = vmatprep.mubr.f32.mxu0 0.0
      %627 = vmatmul.mubr.f32.gmra.mrb[0].mxu0 %v429
      %v628 = vpop.f32.mrb[0].mxu0
      %v629 = vadd.f32 %v368, %v628
      %v630 = vpop.f32.mrb[0].mxu0
      %631 = vmatprep.mubr.f32.mxu0 0.0
      %632 = vmatmul.mubr.f32.gmra.mrb[0].mxu0 %v432
      %v633 = vpop.f32.mrb[0].mxu0
      %v634 = vadd.f32 %v368, %v633
      %v635 = vpop.f32.mrb[0].mxu0
      %636 = vmatprep.mubr.f32.mxu0 0.0
      %637 = vmatmul.mubr.f32.gmra.mrb[0].mxu0 %v435
      %v638 = vpop.f32.mrb[0].mxu0
      %v639 = vadd.f32 %v368, %v638
      %v640 = vpop.f32.mrb[0].mxu0
      %641 = vmatprep.mubr.f32.mxu0 0.0
      %642 = vmatmul.mubr.f32.gmra.mrb[0].mxu0 %v438
      %v643 = vpop.f32.mrb[0].mxu0
      %v644 = vadd.f32 %v368, %v643
      %v645 = vpop.f32.mrb[0].mxu0
      %646 = vmatprep.mubr.f32.mxu0 0.0
      %647 = vmatmul.mubr.f32.gmra.mrb[0].mxu0 %v441
      %v648 = vpop.f32.mrb[0].mxu0
      %v649 = vadd.f32 %v368, %v648
      %v650 = vpop.f32.mrb[0].mxu0
      %651 = vmatprep.mubr.f32.mxu0 0.0
      %652 = vmatmul.mubr.f32.gmra.mrb[0].mxu0 %v444
      %v653 = vpop.f32.mrb[0].mxu0
      %v654 = vadd.f32 %v368, %v653
      %v655 = vpop.f32.mrb[0].mxu0
      %656 = vmatprep.mubr.f32.mxu0 0.0
      %657 = vmatmul.mubr.f32.gmra.mrb[0].mxu0 %v447
      %v658 = vpop.f32.mrb[0].mxu0
      %v659 = vadd.f32 %v368, %v658
      %v660 = vpop.f32.mrb[0].mxu0
      %661 = vmatprep.mubr.f32.mxu0 0.0
      %662 = vmatmul.mubr.f32.gmra.mrb[0].mxu0 %v450
      %v663 = vpop.f32.mrb[0].mxu0
      %v664 = vadd.f32 %v368, %v663
      %v665 = vpop.f32.mrb[0].mxu0
      %666 = vmatprep.mubr.f32.mxu0 0.0
      %667 = vmatmul.mubr.f32.gmra.mrb[0].mxu0 %v453
      %v668 = vpop.f32.mrb[0].mxu0
      %v669 = vadd.f32 %v368, %v668
      %v670 = vpop.f32.mrb[0].mxu0
      %671 = vmatprep.mubr.f32.mxu0 0.0
      %672 = vmatmul.mubr.f32.gmra.mrb[0].mxu0 %v456
      %v673 = vpop.f32.mrb[0].mxu0
      %v674 = vadd.f32 %v368, %v673
      %v675 = vpop.f32.mrb[0].mxu0
      %676 = vmatprep.mubr.f32.mxu0 0.0
      %677 = vmatmul.mubr.f32.gmra.mrb[0].mxu0 %v459
      %v678 = vpop.f32.mrb[0].mxu0
      %v679 = vadd.f32 %v368, %v678
      %v680 = vpop.f32.mrb[0].mxu0
      %681 = vmatprep.mubr.f32.mxu0 0.0
      %682 = vmatmul.mubr.f32.gmra.mrb[0].mxu0 %v462
      %v683 = vpop.f32.mrb[0].mxu0
      %v684 = vadd.f32 %v368, %v683
      %v685 = vpop.f32.mrb[0].mxu0
      %686 = vmatprep.mubr.f32.mxu0 0.0
      %687 = vmatmul.mubr.f32.gmra.mrb[0].mxu0 %v465
      %v688 = vpop.f32.mrb[0].mxu0
      %v689 = vadd.f32 %v368, %v688
      %v690 = vpop.f32.mrb[0].mxu0
      %691 = vdwg.mxu0
      %v693 = vsel %vm370, %v292, 0
      %v696 = vsel %vm370, %v293, 0
      %v699 = vsel %vm370, %v294, 0
      %v702 = vsel %vm370, %v295, 0
      %v705 = vsel %vm370, %v296, 0
      %v708 = vsel %vm370, %v297, 0
      %v711 = vsel %vm370, %v298, 0
      %v714 = vsel %vm370, %v299, 0
      %v717 = vsel %vm370, %v300, 0
      %v720 = vsel %vm370, %v301, 0
      %v723 = vsel %vm370, %v302, 0
      %v726 = vsel %vm370, %v303, 0
      %v729 = vsel %vm370, %v304, 0
      %v732 = vsel %vm370, %v305, 0
      %v735 = vsel %vm370, %v306, 0
      %v738 = vsel %vm370, %v307, 0
      %v741 = vsel %vm370, %v308, 0
      %v744 = vsel %vm370, %v309, 0
      %v747 = vsel %vm370, %v310, 0
      %v750 = vsel %vm370, %v311, 0
      %v753 = vsel %vm370, %v312, 0
      %v756 = vsel %vm370, %v313, 0
      %v759 = vsel %vm370, %v314, 0
      %v762 = vsel %vm370, %v315, 0
      %v765 = vsel %vm370, %v316, 0
      %v768 = vsel %vm370, %v317, 0
      %v771 = vsel %vm370, %v318, 0
      %v774 = vsel %vm370, %v319, 0
      %v777 = vsel %vm370, %v320, 0
      %v780 = vsel %vm370, %v321, 0
      %v783 = vsel %vm370, %v322, 0
      %v786 = vsel %vm370, %v323, 0
      %v789 = vsel %vm370, %v324, 0
      %v792 = vsel %vm370, %v325, 0
      %794 = vmatprep.subr.mxu0 0.0
      %795 = vmatpush1.xpose.msra.mxu0 %v789
      %796 = vmatprep.subr.mxu0 0.0
      %797 = vmatpush1.xpose.msra.mxu0 %v792
      %798 = vmatprep.subr.mxu0 0.0
      %799 = vmatpush1.xpose.msra.mxu0 0.0
      %800 = vmatprep.subr.mxu0 0.0
      %801 = vmatpush1.xpose.msra.mxu0 0.0
      %802 = vmatprep.subr.mxu0 0.0
      %803 = vmatpush1.xpose.msra.mxu0 0.0
      %804 = vmatprep.subr.mxu0 0.0
      %805 = vmatpush1.xpose.msra.mxu0 0.0
      %806 = vmatprep.subr.mxu0 0.0
      %807 = vmatpush1.xpose.msra.mxu0 0.0
      %808 = vmatprep.subr.mxu0 0.0
      %809 = vmatpush1.xpose.msra.mxu0 0.0
      %810 = vmatprep.subr.mxu0 0.0
      %811 = vmatpush1.xpose.msra.mxu0 0.0
      %812 = vmatprep.subr.mxu0 0.0
      %813 = vmatpush1.xpose.msra.mxu0 0.0
      %814 = vmatprep.subr.mxu0 0.0
      %815 = vmatpush1.xpose.msra.mxu0 0.0
      %816 = vmatprep.subr.mxu0 0.0
      %817 = vmatpush1.xpose.msra.mxu0 0.0
      %818 = vmatprep.subr.mxu0 0.0
      %819 = vmatpush1.xpose.msra.mxu0 0.0
      %820 = vmatprep.subr.mxu0 0.0
      %821 = vmatpush1.xpose.msra.mxu0 0.0
      %822 = vmatprep.subr.mxu0 0.0
      %823 = vmatpush1.xpose.msra.mxu0 0.0
      %824 = vmatprep.subr.mxu0 0.0
      %825 = vmatpush1.xpose.msra.mxu0 0.0
      %826 = vmatprep.subr.mxu0 0.0
      %827 = vmatpush1.xpose.msra.mxu0 0.0
      %828 = vmatprep.subr.mxu0 0.0
      %829 = vmatpush1.xpose.msra.mxu0 0.0
      %830 = vmatprep.subr.mxu0 0.0
      %831 = vmatpush1.xpose.msra.mxu0 0.0
      %832 = vmatprep.subr.mxu0 0.0
      %833 = vmatpush1.xpose.msra.mxu0 0.0
      %834 = vmatprep.subr.mxu0 0.0
      %835 = vmatpush1.xpose.msra.mxu0 0.0
      %836 = vmatprep.subr.mxu0 0.0
      %837 = vmatpush1.xpose.msra.mxu0 0.0
      %838 = vmatprep.subr.mxu0 0.0
      %839 = vmatpush1.xpose.msra.mxu0 0.0
      %840 = vmatprep.subr.mxu0 0.0
      %841 = vmatpush1.xpose.msra.mxu0 0.0
      %842 = vmatprep.subr.mxu0 0.0
      %843 = vmatpush1.xpose.msra.mxu0 0.0
      %844 = vmatprep.subr.mxu0 0.0
      %845 = vmatpush1.xpose.msra.mxu0 0.0
      %846 = vmatprep.subr.mxu0 0.0
      %847 = vmatpush1.xpose.msra.mxu0 0.0
      %848 = vmatprep.subr.mxu0 0.0
      %849 = vmatpush1.xpose.msra.mxu0 0.0
      %850 = vmatprep.subr.mxu0 0.0
      %851 = vmatpush1.xpose.msra.mxu0 0.0
      %852 = vmatprep.subr.mxu0 0.0
      %853 = vmatpush1.xpose.msra.mxu0 0.0
      %854 = vmatprep.subr.mxu0 0.0
      %855 = vmatpush1.xpose.msra.mxu0 0.0
      %856 = vmatprep.subr.mxu0 0.0
      %857 = vmatpush1.xpose.msra.mxu0 0.0
      %858 = vmatprep.mubr.f32.mxu0 0.0
      %859 = vmatmul.mubr.f32.gmra.mrb[0].mxu0 %v693
      %v860 = vpop.f32.mrb[0].mxu0
      %v861 = vadd.f32 0.0, %v860
      %v862 = vpop.f32.mrb[0].mxu0
      %863 = vmatprep.mubr.f32.mxu0 0.0
      %864 = vmatmul.mubr.f32.gmra.mrb[0].mxu0 %v696
      %v865 = vpop.f32.mrb[0].mxu0
      %v866 = vadd.f32 0.0, %v865
      %v867 = vpop.f32.mrb[0].mxu0
      %868 = vmatprep.mubr.f32.mxu0 0.0
      %869 = vmatmul.mubr.f32.gmra.mrb[0].mxu0 %v699
      %v870 = vpop.f32.mrb[0].mxu0
      %v871 = vadd.f32 0.0, %v870
      %v872 = vpop.f32.mrb[0].mxu0
      %873 = vmatprep.mubr.f32.mxu0 0.0
      %874 = vmatmul.mubr.f32.gmra.mrb[0].mxu0 %v702
      %v875 = vpop.f32.mrb[0].mxu0
      %v876 = vadd.f32 0.0, %v875
      %v877 = vpop.f32.mrb[0].mxu0
      %878 = vmatprep.mubr.f32.mxu0 0.0
      %879 = vmatmul.mubr.f32.gmra.mrb[0].mxu0 %v705
      %v880 = vpop.f32.mrb[0].mxu0
      %v881 = vadd.f32 0.0, %v880
      %v882 = vpop.f32.mrb[0].mxu0
      %883 = vmatprep.mubr.f32.mxu0 0.0
      %884 = vmatmul.mubr.f32.gmra.mrb[0].mxu0 %v708
      %v885 = vpop.f32.mrb[0].mxu0
      %v886 = vadd.f32 0.0, %v885
      %v887 = vpop.f32.mrb[0].mxu0
      %888 = vmatprep.mubr.f32.mxu0 0.0
      %889 = vmatmul.mubr.f32.gmra.mrb[0].mxu0 %v711
      %v890 = vpop.f32.mrb[0].mxu0
      %v891 = vadd.f32 0.0, %v890
      %v892 = vpop.f32.mrb[0].mxu0
      %893 = vmatprep.mubr.f32.mxu0 0.0
      %894 = vmatmul.mubr.f32.gmra.mrb[0].mxu0 %v714
      %v895 = vpop.f32.mrb[0].mxu0
      %v896 = vadd.f32 0.0, %v895
      %v897 = vpop.f32.mrb[0].mxu0
      %898 = vmatprep.mubr.f32.mxu0 0.0
      %899 = vmatmul.mubr.f32.gmra.mrb[0].mxu0 %v717
      %v900 = vpop.f32.mrb[0].mxu0
      %v901 = vadd.f32 0.0, %v900
      %v902 = vpop.f32.mrb[0].mxu0
      %903 = vmatprep.mubr.f32.mxu0 0.0
      %904 = vmatmul.mubr.f32.gmra.mrb[0].mxu0 %v720
      %v905 = vpop.f32.mrb[0].mxu0
      %v906 = vadd.f32 0.0, %v905
      %v907 = vpop.f32.mrb[0].mxu0
      %908 = vmatprep.mubr.f32.mxu0 0.0
      %909 = vmatmul.mubr.f32.gmra.mrb[0].mxu0 %v723
      %v910 = vpop.f32.mrb[0].mxu0
      %v911 = vadd.f32 0.0, %v910
      %v912 = vpop.f32.mrb[0].mxu0
      %913 = vmatprep.mubr.f32.mxu0 0.0
      %914 = vmatmul.mubr.f32.gmra.mrb[0].mxu0 %v726
      %v915 = vpop.f32.mrb[0].mxu0
      %v916 = vadd.f32 0.0, %v915
      %v917 = vpop.f32.mrb[0].mxu0
      %918 = vmatprep.mubr.f32.mxu0 0.0
      %919 = vmatmul.mubr.f32.gmra.mrb[0].mxu0 %v729
      %v920 = vpop.f32.mrb[0].mxu0
      %v921 = vadd.f32 0.0, %v920
      %v922 = vpop.f32.mrb[0].mxu0
      %923 = vmatprep.mubr.f32.mxu0 0.0
      %924 = vmatmul.mubr.f32.gmra.mrb[0].mxu0 %v732
      %v925 = vpop.f32.mrb[0].mxu0
      %v926 = vadd.f32 0.0, %v925
      %v927 = vpop.f32.mrb[0].mxu0
      %928 = vmatprep.mubr.f32.mxu0 0.0
      %929 = vmatmul.mubr.f32.gmra.mrb[0].mxu0 %v735
      %v930 = vpop.f32.mrb[0].mxu0
      %v931 = vadd.f32 0.0, %v930
      %v932 = vpop.f32.mrb[0].mxu0
      %933 = vmatprep.mubr.f32.mxu0 0.0
      %934 = vmatmul.mubr.f32.gmra.mrb[0].mxu0 %v738
      %v935 = vpop.f32.mrb[0].mxu0
      %v936 = vadd.f32 0.0, %v935
      %v937 = vpop.f32.mrb[0].mxu0
      %938 = vmatprep.mubr.f32.mxu0 0.0
      %939 = vmatmul.mubr.f32.gmra.mrb[0].mxu0 %v741
      %v940 = vpop.f32.mrb[0].mxu0
      %v941 = vadd.f32 0.0, %v940
      %v942 = vpop.f32.mrb[0].mxu0
      %943 = vmatprep.mubr.f32.mxu0 0.0
      %944 = vmatmul.mubr.f32.gmra.mrb[0].mxu0 %v744
      %v945 = vpop.f32.mrb[0].mxu0
      %v946 = vadd.f32 0.0, %v945
      %v947 = vpop.f32.mrb[0].mxu0
      %948 = vmatprep.mubr.f32.mxu0 0.0
      %949 = vmatmul.mubr.f32.gmra.mrb[0].mxu0 %v747
      %v950 = vpop.f32.mrb[0].mxu0
      %v951 = vadd.f32 0.0, %v950
      %v952 = vpop.f32.mrb[0].mxu0
      %953 = vmatprep.mubr.f32.mxu0 0.0
      %954 = vmatmul.mubr.f32.gmra.mrb[0].mxu0 %v750
      %v955 = vpop.f32.mrb[0].mxu0
      %v956 = vadd.f32 0.0, %v955
      %v957 = vpop.f32.mrb[0].mxu0
      %958 = vmatprep.mubr.f32.mxu0 0.0
      %959 = vmatmul.mubr.f32.gmra.mrb[0].mxu0 %v753
      %v960 = vpop.f32.mrb[0].mxu0
      %v961 = vadd.f32 0.0, %v960
      %v962 = vpop.f32.mrb[0].mxu0
      %963 = vmatprep.mubr.f32.mxu0 0.0
      %964 = vmatmul.mubr.f32.gmra.mrb[0].mxu0 %v756
      %v965 = vpop.f32.mrb[0].mxu0
      %v966 = vadd.f32 0.0, %v965
      %v967 = vpop.f32.mrb[0].mxu0
      %968 = vmatprep.mubr.f32.mxu0 0.0
      %969 = vmatmul.mubr.f32.gmra.mrb[0].mxu0 %v759
      %v970 = vpop.f32.mrb[0].mxu0
      %v971 = vadd.f32 0.0, %v970
      %v972 = vpop.f32.mrb[0].mxu0
      %973 = vmatprep.mubr.f32.mxu0 0.0
      %974 = vmatmul.mubr.f32.gmra.mrb[0].mxu0 %v762
      %v975 = vpop.f32.mrb[0].mxu0
      %v976 = vadd.f32 0.0, %v975
      %v977 = vpop.f32.mrb[0].mxu0
      %978 = vmatprep.mubr.f32.mxu0 0.0
      %979 = vmatmul.mubr.f32.gmra.mrb[0].mxu0 %v765
      %v980 = vpop.f32.mrb[0].mxu0
      %v981 = vadd.f32 0.0, %v980
      %v982 = vpop.f32.mrb[0].mxu0
      %983 = vmatprep.mubr.f32.mxu0 0.0
      %984 = vmatmul.mubr.f32.gmra.mrb[0].mxu0 %v768
      %v985 = vpop.f32.mrb[0].mxu0
      %v986 = vadd.f32 0.0, %v985
      %v987 = vpop.f32.mrb[0].mxu0
      %988 = vmatprep.mubr.f32.mxu0 0.0
      %989 = vmatmul.mubr.f32.gmra.mrb[0].mxu0 %v771
      %v990 = vpop.f32.mrb[0].mxu0
      %v991 = vadd.f32 0.0, %v990
      %v992 = vpop.f32.mrb[0].mxu0
      %993 = vmatprep.mubr.f32.mxu0 0.0
      %994 = vmatmul.mubr.f32.gmra.mrb[0].mxu0 %v774
      %v995 = vpop.f32.mrb[0].mxu0
      %v996 = vadd.f32 0.0, %v995
      %v997 = vpop.f32.mrb[0].mxu0
      %998 = vmatprep.mubr.f32.mxu0 0.0
      %999 = vmatmul.mubr.f32.gmra.mrb[0].mxu0 %v777
      %v1000 = vpop.f32.mrb[0].mxu0
      %v1001 = vadd.f32 0.0, %v1000
      %v1002 = vpop.f32.mrb[0].mxu0
      %1003 = vmatprep.mubr.f32.mxu0 0.0
      %1004 = vmatmul.mubr.f32.gmra.mrb[0].mxu0 %v780
      %v1005 = vpop.f32.mrb[0].mxu0
      %v1006 = vadd.f32 0.0, %v1005
      %v1007 = vpop.f32.mrb[0].mxu0
      %1008 = vmatprep.mubr.f32.mxu0 0.0
      %1009 = vmatmul.mubr.f32.gmra.mrb[0].mxu0 %v783
      %v1010 = vpop.f32.mrb[0].mxu0
      %v1011 = vadd.f32 0.0, %v1010
      %v1012 = vpop.f32.mrb[0].mxu0
      %1013 = vmatprep.mubr.f32.mxu0 0.0
      %1014 = vmatmul.mubr.f32.gmra.mrb[0].mxu0 %v786
      %v1015 = vpop.f32.mrb[0].mxu0
      %v1016 = vadd.f32 0.0, %v1015
      %v1017 = vpop.f32.mrb[0].mxu0
      %1018 = vdwg.mxu0
      %vm1019 = vcmask 130048
      %v1020 = vsel %vm1019, %v861, -inf
      %1021 = vmax.xlane.f32.xlu0 %v1020
      %v1022 = vpop.xlane.xlu0 %1021
      %v1023 = vsel %vm1019, %v866, -inf
      %1024 = vmax.xlane.f32.xlu0 %v1023
      %v1025 = vpop.xlane.xlu0 %1024
      %v1026 = vsel %vm1019, %v871, -inf
      %1027 = vmax.xlane.f32.xlu0 %v1026
      %v1028 = vpop.xlane.xlu0 %1027
      %v1029 = vsel %vm1019, %v876, -inf
      %1030 = vmax.xlane.f32.xlu0 %v1029
      %v1031 = vpop.xlane.xlu0 %1030
      %v1032 = vsel %vm1019, %v881, -inf
      %1033 = vmax.xlane.f32.xlu0 %v1032
      %v1034 = vpop.xlane.xlu0 %1033
      %v1035 = vsel %vm1019, %v886, -inf
      %1036 = vmax.xlane.f32.xlu0 %v1035
      %v1037 = vpop.xlane.xlu0 %1036
      %v1038 = vsel %vm1019, %v891, -inf
      %1039 = vmax.xlane.f32.xlu0 %v1038
      %v1040 = vpop.xlane.xlu0 %1039
      %v1041 = vsel %vm1019, %v896, -inf
      %1042 = vmax.xlane.f32.xlu0 %v1041
      %v1043 = vpop.xlane.xlu0 %1042
      %v1044 = vsel %vm1019, %v901, -inf
      %1045 = vmax.xlane.f32.xlu0 %v1044
      %v1046 = vpop.xlane.xlu0 %1045
      %v1047 = vsel %vm1019, %v906, -inf
      %1048 = vmax.xlane.f32.xlu0 %v1047
      %v1049 = vpop.xlane.xlu0 %1048
      %v1050 = vsel %vm1019, %v911, -inf
      %1051 = vmax.xlane.f32.xlu0 %v1050
      %v1052 = vpop.xlane.xlu0 %1051
      %v1053 = vsel %vm1019, %v916, -inf
      %1054 = vmax.xlane.f32.xlu0 %v1053
      %v1055 = vpop.xlane.xlu0 %1054
      %v1056 = vsel %vm1019, %v921, -inf
      %1057 = vmax.xlane.f32.xlu0 %v1056
      %v1058 = vpop.xlane.xlu0 %1057
      %v1059 = vsel %vm1019, %v926, -inf
      %1060 = vmax.xlane.f32.xlu0 %v1059
      %v1061 = vpop.xlane.xlu0 %1060
      %v1062 = vsel %vm1019, %v931, -inf
      %1063 = vmax.xlane.f32.xlu0 %v1062
      %v1064 = vpop.xlane.xlu0 %1063
      %v1065 = vsel %vm1019, %v936, -inf
      %1066 = vmax.xlane.f32.xlu0 %v1065
      %v1067 = vpop.xlane.xlu0 %1066
      %v1068 = vsel %vm1019, %v941, -inf
      %1069 = vmax.xlane.f32.xlu0 %v1068
      %v1070 = vpop.xlane.xlu0 %1069
      %v1071 = vsel %vm1019, %v946, -inf
      %1072 = vmax.xlane.f32.xlu0 %v1071
      %v1073 = vpop.xlane.xlu0 %1072
      %v1074 = vsel %vm1019, %v951, -inf
      %1075 = vmax.xlane.f32.xlu0 %v1074
      %v1076 = vpop.xlane.xlu0 %1075
      %v1077 = vsel %vm1019, %v956, -inf
      %1078 = vmax.xlane.f32.xlu0 %v1077
      %v1079 = vpop.xlane.xlu0 %1078
      %v1080 = vsel %vm1019, %v961, -inf
      %1081 = vmax.xlane.f32.xlu0 %v1080
      %v1082 = vpop.xlane.xlu0 %1081
      %v1083 = vsel %vm1019, %v966, -inf
      %1084 = vmax.xlane.f32.xlu0 %v1083
      %v1085 = vpop.xlane.xlu0 %1084
      %v1086 = vsel %vm1019, %v971, -inf
      %1087 = vmax.xlane.f32.xlu0 %v1086
      %v1088 = vpop.xlane.xlu0 %1087
      %v1089 = vsel %vm1019, %v976, -inf
      %1090 = vmax.xlane.f32.xlu0 %v1089
      %v1091 = vpop.xlane.xlu0 %1090
      %v1092 = vsel %vm1019, %v981, -inf
      %1093 = vmax.xlane.f32.xlu0 %v1092
      %v1094 = vpop.xlane.xlu0 %1093
      %v1095 = vsel %vm1019, %v986, -inf
      %1096 = vmax.xlane.f32.xlu0 %v1095
      %v1097 = vpop.xlane.xlu0 %1096
      %v1098 = vsel %vm1019, %v991, -inf
      %1099 = vmax.xlane.f32.xlu0 %v1098
      %v1100 = vpop.xlane.xlu0 %1099
      %v1101 = vsel %vm1019, %v996, -inf
      %1102 = vmax.xlane.f32.xlu0 %v1101
      %v1103 = vpop.xlane.xlu0 %1102
      %v1104 = vsel %vm1019, %v1001, -inf
      %1105 = vmax.xlane.f32.xlu0 %v1104
      %v1106 = vpop.xlane.xlu0 %1105
      %v1107 = vsel %vm1019, %v1006, -inf
      %1108 = vmax.xlane.f32.xlu0 %v1107
      %v1109 = vpop.xlane.xlu0 %1108
      %v1110 = vsel %vm1019, %v1011, -inf
      %1111 = vmax.xlane.f32.xlu0 %v1110
      %v1112 = vpop.xlane.xlu0 %1111
      %v1113 = vsel %vm1019, %v1016, -inf
      %1114 = vmax.xlane.f32.xlu0 %v1113
      %v1115 = vpop.xlane.xlu0 %1114
      %v1116 = vsub.f32 %v861, %v1022
      %v1117 = vsub.f32 %v866, %v1025
      %v1118 = vsub.f32 %v871, %v1028
      %v1119 = vsub.f32 %v876, %v1031
      %v1120 = vsub.f32 %v881, %v1034
      %v1121 = vsub.f32 %v886, %v1037
      %v1122 = vsub.f32 %v891, %v1040
      %v1123 = vsub.f32 %v896, %v1043
      %v1124 = vsub.f32 %v901, %v1046
      %v1125 = vsub.f32 %v906, %v1049
      %v1126 = vsub.f32 %v911, %v1052
      %v1127 = vsub.f32 %v916, %v1055
      %v1128 = vsub.f32 %v921, %v1058
      %v1129 = vsub.f32 %v926, %v1061
      %v1130 = vsub.f32 %v931, %v1064
      %v1131 = vsub.f32 %v936, %v1067
      %v1132 = vsub.f32 %v941, %v1070
      %v1133 = vsub.f32 %v946, %v1073
      %v1134 = vsub.f32 %v951, %v1076
      %v1135 = vsub.f32 %v956, %v1079
      %v1136 = vsub.f32 %v961, %v1082
      %v1137 = vsub.f32 %v966, %v1085
      %v1138 = vsub.f32 %v971, %v1088
      %v1139 = vsub.f32 %v976, %v1091
      %v1140 = vsub.f32 %v981, %v1094
      %v1141 = vsub.f32 %v986, %v1097
      %v1142 = vsub.f32 %v991, %v1100
      %v1143 = vsub.f32 %v996, %v1103
      %v1144 = vsub.f32 %v1001, %v1106
      %v1145 = vsub.f32 %v1006, %v1109
      %v1146 = vsub.f32 %v1011, %v1112
      %v1147 = vsub.f32 %v1016, %v1115
      %v1148 = vmul.f32 %v1116, 1.442695
      %v1149 = vpow.pop %v1148
      %v1150 = vmul.f32 %v1117, 1.442695
      %v1151 = vpow.pop %v1150
      %v1152 = vmul.f32 %v1118, 1.442695
      %v1153 = vpow.pop %v1152
      %v1154 = vmul.f32 %v1119, 1.442695
      %v1155 = vpow.pop %v1154
      %v1156 = vmul.f32 %v1120, 1.442695
      %v1157 = vpow.pop %v1156
      %v1158 = vmul.f32 %v1121, 1.442695
      %v1159 = vpow.pop %v1158
      %v1160 = vmul.f32 %v1122, 1.442695
      %v1161 = vpow.pop %v1160
      %v1162 = vmul.f32 %v1123, 1.442695
      %v1163 = vpow.pop %v1162
      %v1164 = vmul.f32 %v1124, 1.442695
      %v1165 = vpow.pop %v1164
      %v1166 = vmul.f32 %v1125, 1.442695
      %v1167 = vpow.pop %v1166
      %v1168 = vmul.f32 %v1126, 1.442695
      %v1169 = vpow.pop %v1168
      %v1170 = vmul.f32 %v1127, 1.442695
      %v1171 = vpow.pop %v1170
      %v1172 = vmul.f32 %v1128, 1.442695
      %v1173 = vpow.pop %v1172
      %v1174 = vmul.f32 %v1129, 1.442695
      %v1175 = vpow.pop %v1174
      %v1176 = vmul.f32 %v1130, 1.442695
      %v1177 = vpow.pop %v1176
      %v1178 = vmul.f32 %v1131, 1.442695
      %v1179 = vpow.pop %v1178
      %v1180 = vmul.f32 %v1132, 1.442695
      %v1181 = vpow.pop %v1180
      %v1182 = vmul.f32 %v1133, 1.442695
      %v1183 = vpow.pop %v1182
      %v1184 = vmul.f32 %v1134, 1.442695
      %v1185 = vpow.pop %v1184
      %v1186 = vmul.f32 %v1135, 1.442695
      %v1187 = vpow.pop %v1186
      %v1188 = vmul.f32 %v1136, 1.442695
      %v1189 = vpow.pop %v1188
      %v1190 = vmul.f32 %v1137, 1.442695
      %v1191 = vpow.pop %v1190
      %v1192 = vmul.f32 %v1138, 1.442695
      %v1193 = vpow.pop %v1192
      %v1194 = vmul.f32 %v1139, 1.442695
      %v1195 = vpow.pop %v1194
      %v1196 = vmul.f32 %v1140, 1.442695
      %v1197 = vpow.pop %v1196
      %v1198 = vmul.f32 %v1141, 1.442695
      %v1199 = vpow.pop %v1198
      %v1200 = vmul.f32 %v1142, 1.442695
      %v1201 = vpow.pop %v1200
      %v1202 = vmul.f32 %v1143, 1.442695
      %v1203 = vpow.pop %v1202
      %v1204 = vmul.f32 %v1144, 1.442695
      %v1205 = vpow.pop %v1204
      %v1206 = vmul.f32 %v1145, 1.442695
      %v1207 = vpow.pop %v1206
      %v1208 = vmul.f32 %v1146, 1.442695
      %v1209 = vpow.pop %v1208
      %v1210 = vmul.f32 %v1147, 1.442695
      %v1211 = vpow.pop %v1210
      %v1212 = vsel %vm1019, %v1149, 0.0
      %1213 = vadd.xlane.f32.xlu0 %v1212
      %v1214 = vpop.xlane.xlu0 %1213
      %v1215 = vsel %vm1019, %v1151, 0.0
      %1216 = vadd.xlane.f32.xlu0 %v1215
      %v1217 = vpop.xlane.xlu0 %1216
      %v1218 = vsel %vm1019, %v1153, 0.0
      %1219 = vadd.xlane.f32.xlu0 %v1218
      %v1220 = vpop.xlane.xlu0 %1219
      %v1221 = vsel %vm1019, %v1155, 0.0
      %1222 = vadd.xlane.f32.xlu0 %v1221
      %v1223 = vpop.xlane.xlu0 %1222
      %v1224 = vsel %vm1019, %v1157, 0.0
      %1225 = vadd.xlane.f32.xlu0 %v1224
      %v1226 = vpop.xlane.xlu0 %1225
      %v1227 = vsel %vm1019, %v1159, 0.0
      %1228 = vadd.xlane.f32.xlu0 %v1227
      %v1229 = vpop.xlane.xlu0 %1228
      %v1230 = vsel %vm1019, %v1161, 0.0
      %1231 = vadd.xlane.f32.xlu0 %v1230
      %v1232 = vpop.xlane.xlu0 %1231
      %v1233 = vsel %vm1019, %v1163, 0.0
      %1234 = vadd.xlane.f32.xlu0 %v1233
      %v1235 = vpop.xlane.xlu0 %1234
      %v1236 = vsel %vm1019, %v1165, 0.0
      %1237 = vadd.xlane.f32.xlu0 %v1236
      %v1238 = vpop.xlane.xlu0 %1237
      %v1239 = vsel %vm1019, %v1167, 0.0
      %1240 = vadd.xlane.f32.xlu0 %v1239
      %v1241 = vpop.xlane.xlu0 %1240
      %v1242 = vsel %vm1019, %v1169, 0.0
      %1243 = vadd.xlane.f32.xlu0 %v1242
      %v1244 = vpop.xlane.xlu0 %1243
      %v1245 = vsel %vm1019, %v1171, 0.0
      %1246 = vadd.xlane.f32.xlu0 %v1245
      %v1247 = vpop.xlane.xlu0 %1246
      %v1248 = vsel %vm1019, %v1173, 0.0
      %1249 = vadd.xlane.f32.xlu0 %v1248
      %v1250 = vpop.xlane.xlu0 %1249
      %v1251 = vsel %vm1019, %v1175, 0.0
      %1252 = vadd.xlane.f32.xlu0 %v1251
      %v1253 = vpop.xlane.xlu0 %1252
      %v1254 = vsel %vm1019, %v1177, 0.0
      %1255 = vadd.xlane.f32.xlu0 %v1254
      %v1256 = vpop.xlane.xlu0 %1255
      %v1257 = vsel %vm1019, %v1179, 0.0
      %1258 = vadd.xlane.f32.xlu0 %v1257
      %v1259 = vpop.xlane.xlu0 %1258
      %v1260 = vsel %vm1019, %v1181, 0.0
      %1261 = vadd.xlane.f32.xlu0 %v1260
      %v1262 = vpop.xlane.xlu0 %1261
      %v1263 = vsel %vm1019, %v1183, 0.0
      %1264 = vadd.xlane.f32.xlu0 %v1263
      %v1265 = vpop.xlane.xlu0 %1264
      %v1266 = vsel %vm1019, %v1185, 0.0
      %1267 = vadd.xlane.f32.xlu0 %v1266
      %v1268 = vpop.xlane.xlu0 %1267
      %v1269 = vsel %vm1019, %v1187, 0.0
      %1270 = vadd.xlane.f32.xlu0 %v1269
      %v1271 = vpop.xlane.xlu0 %1270
      %v1272 = vsel %vm1019, %v1189, 0.0
      %1273 = vadd.xlane.f32.xlu0 %v1272
      %v1274 = vpop.xlane.xlu0 %1273
      %v1275 = vsel %vm1019, %v1191, 0.0
      %1276 = vadd.xlane.f32.xlu0 %v1275
      %v1277 = vpop.xlane.xlu0 %1276
      %v1278 = vsel %vm1019, %v1193, 0.0
      %1279 = vadd.xlane.f32.xlu0 %v1278
      %v1280 = vpop.xlane.xlu0 %1279
      %v1281 = vsel %vm1019, %v1195, 0.0
      %1282 = vadd.xlane.f32.xlu0 %v1281
      %v1283 = vpop.xlane.xlu0 %1282
      %v1284 = vsel %vm1019, %v1197, 0.0
      %1285 = vadd.xlane.f32.xlu0 %v1284
      %v1286 = vpop.xlane.xlu0 %1285
      %v1287 = vsel %vm1019, %v1199, 0.0
      %1288 = vadd.xlane.f32.xlu0 %v1287
      %v1289 = vpop.xlane.xlu0 %1288
      %v1290 = vsel %vm1019, %v1201, 0.0
      %1291 = vadd.xlane.f32.xlu0 %v1290
      %v1292 = vpop.xlane.xlu0 %1291
      %v1293 = vsel %vm1019, %v1203, 0.0
      %1294 = vadd.xlane.f32.xlu0 %v1293
      %v1295 = vpop.xlane.xlu0 %1294
      %v1296 = vsel %vm1019, %v1205, 0.0
      %1297 = vadd.xlane.f32.xlu0 %v1296
      %v1298 = vpop.xlane.xlu0 %1297
      %v1299 = vsel %vm1019, %v1207, 0.0
      %1300 = vadd.xlane.f32.xlu0 %v1299
      %v1301 = vpop.xlane.xlu0 %1300
      %v1302 = vsel %vm1019, %v1209, 0.0
      %1303 = vadd.xlane.f32.xlu0 %v1302
      %v1304 = vpop.xlane.xlu0 %1303
      %v1305 = vsel %vm1019, %v1211, 0.0
      %1306 = vadd.xlane.f32.xlu0 %v1305
      %v1307 = vpop.xlane.xlu0 %1306
      %v1308 = vrcp.pop %v1214
      %v1309 = vrcp.pop %v1217
      %v1310 = vrcp.pop %v1220
      %v1311 = vrcp.pop %v1223
      %v1312 = vrcp.pop %v1226
      %v1313 = vrcp.pop %v1229
      %v1314 = vrcp.pop %v1232
      %v1315 = vrcp.pop %v1235
      %v1316 = vrcp.pop %v1238
      %v1317 = vrcp.pop %v1241
      %v1318 = vrcp.pop %v1244
      %v1319 = vrcp.pop %v1247
      %v1320 = vrcp.pop %v1250
      %v1321 = vrcp.pop %v1253
      %v1322 = vrcp.pop %v1256
      %v1323 = vrcp.pop %v1259
      %v1324 = vrcp.pop %v1262
      %v1325 = vrcp.pop %v1265
      %v1326 = vrcp.pop %v1268
      %v1327 = vrcp.pop %v1271
      %v1328 = vrcp.pop %v1274
      %v1329 = vrcp.pop %v1277
      %v1330 = vrcp.pop %v1280
      %v1331 = vrcp.pop %v1283
      %v1332 = vrcp.pop %v1286
      %v1333 = vrcp.pop %v1289
      %v1334 = vrcp.pop %v1292
      %v1335 = vrcp.pop %v1295
      %v1336 = vrcp.pop %v1298
      %v1337 = vrcp.pop %v1301
      %v1338 = vrcp.pop %v1304
      %v1339 = vrcp.pop %v1307
      %v1340 = vmul.f32 %v1149, %v1308
      %v1341 = vmul.f32 %v1151, %v1309
      %v1342 = vmul.f32 %v1153, %v1310
      %v1343 = vmul.f32 %v1155, %v1311
      %v1344 = vmul.f32 %v1157, %v1312
      %v1345 = vmul.f32 %v1159, %v1313
      %v1346 = vmul.f32 %v1161, %v1314
      %v1347 = vmul.f32 %v1163, %v1315
      %v1348 = vmul.f32 %v1165, %v1316
      %v1349 = vmul.f32 %v1167, %v1317
      %v1350 = vmul.f32 %v1169, %v1318
      %v1351 = vmul.f32 %v1171, %v1319
      %v1352 = vmul.f32 %v1173, %v1320
      %v1353 = vmul.f32 %v1175, %v1321
      %v1354 = vmul.f32 %v1177, %v1322
      %v1355 = vmul.f32 %v1179, %v1323
      %v1356 = vmul.f32 %v1181, %v1324
      %v1357 = vmul.f32 %v1183, %v1325
      %v1358 = vmul.f32 %v1185, %v1326
      %v1359 = vmul.f32 %v1187, %v1327
      %v1360 = vmul.f32 %v1189, %v1328
      %v1361 = vmul.f32 %v1191, %v1329
      %v1362 = vmul.f32 %v1193, %v1330
      %v1363 = vmul.f32 %v1195, %v1331
      %v1364 = vmul.f32 %v1197, %v1332
      %v1365 = vmul.f32 %v1199, %v1333
      %v1366 = vmul.f32 %v1201, %v1334
      %v1367 = vmul.f32 %v1203, %v1335
      %v1368 = vmul.f32 %v1205, %v1336
      %v1369 = vmul.f32 %v1207, %v1337
      %v1370 = vmul.f32 %v1209, %v1338
      %v1371 = vmul.f32 %v1211, %v1339
      %1372 = vrot.lane.b32.xlu0 %v324, 96
      %v1373 = vpop.permute.xlu0 %1372
      %1374 = vrot.lane.b32.xlu0 %v325, 96
      %v1375 = vpop.permute.xlu0 %1374
      %v1379 = vsel %vm1019, %v1340, 0
      %v1382 = vsel %vm1019, %v1341, 0
      %v1385 = vsel %vm1019, %v1342, 0
      %v1388 = vsel %vm1019, %v1343, 0
      %v1391 = vsel %vm1019, %v1344, 0
      %v1394 = vsel %vm1019, %v1345, 0
      %v1397 = vsel %vm1019, %v1346, 0
      %v1400 = vsel %vm1019, %v1347, 0
      %v1403 = vsel %vm1019, %v1348, 0
      %v1406 = vsel %vm1019, %v1349, 0
      %v1409 = vsel %vm1019, %v1350, 0
      %v1412 = vsel %vm1019, %v1351, 0
      %v1415 = vsel %vm1019, %v1352, 0
      %v1418 = vsel %vm1019, %v1353, 0
      %v1421 = vsel %vm1019, %v1354, 0
      %v1424 = vsel %vm1019, %v1355, 0
      %v1427 = vsel %vm1019, %v1356, 0
      %v1430 = vsel %vm1019, %v1357, 0
      %v1433 = vsel %vm1019, %v1358, 0
      %v1436 = vsel %vm1019, %v1359, 0
      %v1439 = vsel %vm1019, %v1360, 0
      %v1442 = vsel %vm1019, %v1361, 0
      %v1445 = vsel %vm1019, %v1362, 0
      %v1448 = vsel %vm1019, %v1363, 0
      %v1451 = vsel %vm1019, %v1364, 0
      %v1454 = vsel %vm1019, %v1365, 0
      %v1457 = vsel %vm1019, %v1366, 0
      %v1460 = vsel %vm1019, %v1367, 0
      %v1463 = vsel %vm1019, %v1368, 0
      %v1466 = vsel %vm1019, %v1369, 0
      %v1469 = vsel %vm1019, %v1370, 0
      %v1472 = vsel %vm1019, %v1371, 0
      %1474 = vmatprep.subr.mxu0 0.0
      %1475 = vmatpush1.msra.mxu0 %v1373
      %1476 = vmatprep.subr.mxu0 0.0
      %1477 = vmatpush1.msra.mxu0 %v1375
      %1478 = vmatprep.subr.mxu0 0.0
      %1479 = vmatpush1.msra.mxu0 0.0
      %1480 = vmatprep.subr.mxu0 0.0
      %1481 = vmatpush1.msra.mxu0 0.0
      %1482 = vmatprep.subr.mxu0 0.0
      %1483 = vmatpush1.msra.mxu0 0.0
      %1484 = vmatprep.subr.mxu0 0.0
      %1485 = vmatpush1.msra.mxu0 0.0
      %1486 = vmatprep.subr.mxu0 0.0
      %1487 = vmatpush1.msra.mxu0 0.0
      %1488 = vmatprep.subr.mxu0 0.0
      %1489 = vmatpush1.msra.mxu0 0.0
      %1490 = vmatprep.subr.mxu0 0.0
      %1491 = vmatpush1.msra.mxu0 0.0
      %1492 = vmatprep.subr.mxu0 0.0
      %1493 = vmatpush1.msra.mxu0 0.0
      %1494 = vmatprep.subr.mxu0 0.0
      %1495 = vmatpush1.msra.mxu0 0.0
      %1496 = vmatprep.subr.mxu0 0.0
      %1497 = vmatpush1.msra.mxu0 0.0
      %1498 = vmatprep.subr.mxu0 0.0
      %1499 = vmatpush1.msra.mxu0 0.0
      %1500 = vmatprep.subr.mxu0 0.0
      %1501 = vmatpush1.msra.mxu0 0.0
      %1502 = vmatprep.subr.mxu0 0.0
      %1503 = vmatpush1.msra.mxu0 0.0
      %1504 = vmatprep.subr.mxu0 0.0
      %1505 = vmatpush1.msra.mxu0 0.0
      %1506 = vmatprep.subr.mxu0 0.0
      %1507 = vmatpush1.msra.mxu0 0.0
      %1508 = vmatprep.subr.mxu0 0.0
      %1509 = vmatpush1.msra.mxu0 0.0
      %1510 = vmatprep.subr.mxu0 0.0
      %1511 = vmatpush1.msra.mxu0 0.0
      %1512 = vmatprep.subr.mxu0 0.0
      %1513 = vmatpush1.msra.mxu0 0.0
      %1514 = vmatprep.subr.mxu0 0.0
      %1515 = vmatpush1.msra.mxu0 0.0
      %1516 = vmatprep.subr.mxu0 0.0
      %1517 = vmatpush1.msra.mxu0 0.0
      %1518 = vmatprep.subr.mxu0 0.0
      %1519 = vmatpush1.msra.mxu0 0.0
      %1520 = vmatprep.subr.mxu0 0.0
      %1521 = vmatpush1.msra.mxu0 0.0
      %1522 = vmatprep.subr.mxu0 0.0
      %1523 = vmatpush1.msra.mxu0 0.0
      %1524 = vmatprep.subr.mxu0 0.0
      %1525 = vmatpush1.msra.mxu0 0.0
      %1526 = vmatprep.subr.mxu0 0.0
      %1527 = vmatpush1.msra.mxu0 0.0
      %1528 = vmatprep.subr.mxu0 0.0
      %1529 = vmatpush1.msra.mxu0 0.0
      %1530 = vmatprep.subr.mxu0 0.0
      %1531 = vmatpush1.msra.mxu0 0.0
      %1532 = vmatprep.subr.mxu0 0.0
      %1533 = vmatpush1.msra.mxu0 0.0
      %1534 = vmatprep.subr.mxu0 0.0
      %1535 = vmatpush1.msra.mxu0 0.0
      %1536 = vmatprep.subr.mxu0 0.0
      %1537 = vmatpush1.msra.mxu0 0.0
      %1538 = vmatprep.mubr.f32.mxu0 0.0
      %1539 = vmatmul.mubr.f32.gmra.mrb[0].mxu0 %v1379
      %v1540 = vpop.f32.mrb[0].mxu0
      %v1541 = vadd.f32 0.0, %v1540
      %v1542 = vpop.f32.mrb[0].mxu0
      %1543 = vmatprep.mubr.f32.mxu0 0.0
      %1544 = vmatmul.mubr.f32.gmra.mrb[0].mxu0 %v1382
      %v1545 = vpop.f32.mrb[0].mxu0
      %v1546 = vadd.f32 0.0, %v1545
      %v1547 = vpop.f32.mrb[0].mxu0
      %1548 = vmatprep.mubr.f32.mxu0 0.0
      %1549 = vmatmul.mubr.f32.gmra.mrb[0].mxu0 %v1385
      %v1550 = vpop.f32.mrb[0].mxu0
      %v1551 = vadd.f32 0.0, %v1550
      %v1552 = vpop.f32.mrb[0].mxu0
      %1553 = vmatprep.mubr.f32.mxu0 0.0
      %1554 = vmatmul.mubr.f32.gmra.mrb[0].mxu0 %v1388
      %v1555 = vpop.f32.mrb[0].mxu0
      %v1556 = vadd.f32 0.0, %v1555
      %v1557 = vpop.f32.mrb[0].mxu0
      %1558 = vmatprep.mubr.f32.mxu0 0.0
      %1559 = vmatmul.mubr.f32.gmra.mrb[0].mxu0 %v1391
      %v1560 = vpop.f32.mrb[0].mxu0
      %v1561 = vadd.f32 0.0, %v1560
      %v1562 = vpop.f32.mrb[0].mxu0
      %1563 = vmatprep.mubr.f32.mxu0 0.0
      %1564 = vmatmul.mubr.f32.gmra.mrb[0].mxu0 %v1394
      %v1565 = vpop.f32.mrb[0].mxu0
      %v1566 = vadd.f32 0.0, %v1565
      %v1567 = vpop.f32.mrb[0].mxu0
      %1568 = vmatprep.mubr.f32.mxu0 0.0
      %1569 = vmatmul.mubr.f32.gmra.mrb[0].mxu0 %v1397
      %v1570 = vpop.f32.mrb[0].mxu0
      %v1571 = vadd.f32 0.0, %v1570
      %v1572 = vpop.f32.mrb[0].mxu0
      %1573 = vmatprep.mubr.f32.mxu0 0.0
      %1574 = vmatmul.mubr.f32.gmra.mrb[0].mxu0 %v1400
      %v1575 = vpop.f32.mrb[0].mxu0
      %v1576 = vadd.f32 0.0, %v1575
      %v1577 = vpop.f32.mrb[0].mxu0
      %1578 = vmatprep.mubr.f32.mxu0 0.0
      %1579 = vmatmul.mubr.f32.gmra.mrb[0].mxu0 %v1403
      %v1580 = vpop.f32.mrb[0].mxu0
      %v1581 = vadd.f32 0.0, %v1580
      %v1582 = vpop.f32.mrb[0].mxu0
      %1583 = vmatprep.mubr.f32.mxu0 0.0
      %1584 = vmatmul.mubr.f32.gmra.mrb[0].mxu0 %v1406
      %v1585 = vpop.f32.mrb[0].mxu0
      %v1586 = vadd.f32 0.0, %v1585
      %v1587 = vpop.f32.mrb[0].mxu0
      %1588 = vmatprep.mubr.f32.mxu0 0.0
      %1589 = vmatmul.mubr.f32.gmra.mrb[0].mxu0 %v1409
      %v1590 = vpop.f32.mrb[0].mxu0
      %v1591 = vadd.f32 0.0, %v1590
      %v1592 = vpop.f32.mrb[0].mxu0
      %1593 = vmatprep.mubr.f32.mxu0 0.0
      %1594 = vmatmul.mubr.f32.gmra.mrb[0].mxu0 %v1412
      %v1595 = vpop.f32.mrb[0].mxu0
      %v1596 = vadd.f32 0.0, %v1595
      %v1597 = vpop.f32.mrb[0].mxu0
      %1598 = vmatprep.mubr.f32.mxu0 0.0
      %1599 = vmatmul.mubr.f32.gmra.mrb[0].mxu0 %v1415
      %v1600 = vpop.f32.mrb[0].mxu0
      %v1601 = vadd.f32 0.0, %v1600
      %v1602 = vpop.f32.mrb[0].mxu0
      %1603 = vmatprep.mubr.f32.mxu0 0.0
      %1604 = vmatmul.mubr.f32.gmra.mrb[0].mxu0 %v1418
      %v1605 = vpop.f32.mrb[0].mxu0
      %v1606 = vadd.f32 0.0, %v1605
      %v1607 = vpop.f32.mrb[0].mxu0
      %1608 = vmatprep.mubr.f32.mxu0 0.0
      %1609 = vmatmul.mubr.f32.gmra.mrb[0].mxu0 %v1421
      %v1610 = vpop.f32.mrb[0].mxu0
      %v1611 = vadd.f32 0.0, %v1610
      %v1612 = vpop.f32.mrb[0].mxu0
      %1613 = vmatprep.mubr.f32.mxu0 0.0
      %1614 = vmatmul.mubr.f32.gmra.mrb[0].mxu0 %v1424
      %v1615 = vpop.f32.mrb[0].mxu0
      %v1616 = vadd.f32 0.0, %v1615
      %v1617 = vpop.f32.mrb[0].mxu0
      %1618 = vmatprep.mubr.f32.mxu0 0.0
      %1619 = vmatmul.mubr.f32.gmra.mrb[0].mxu0 %v1427
      %v1620 = vpop.f32.mrb[0].mxu0
      %v1621 = vadd.f32 0.0, %v1620
      %v1622 = vpop.f32.mrb[0].mxu0
      %1623 = vmatprep.mubr.f32.mxu0 0.0
      %1624 = vmatmul.mubr.f32.gmra.mrb[0].mxu0 %v1430
      %v1625 = vpop.f32.mrb[0].mxu0
      %v1626 = vadd.f32 0.0, %v1625
      %v1627 = vpop.f32.mrb[0].mxu0
      %1628 = vmatprep.mubr.f32.mxu0 0.0
      %1629 = vmatmul.mubr.f32.gmra.mrb[0].mxu0 %v1433
      %v1630 = vpop.f32.mrb[0].mxu0
      %v1631 = vadd.f32 0.0, %v1630
      %v1632 = vpop.f32.mrb[0].mxu0
      %1633 = vmatprep.mubr.f32.mxu0 0.0
      %1634 = vmatmul.mubr.f32.gmra.mrb[0].mxu0 %v1436
      %v1635 = vpop.f32.mrb[0].mxu0
      %v1636 = vadd.f32 0.0, %v1635
      %v1637 = vpop.f32.mrb[0].mxu0
      %1638 = vmatprep.mubr.f32.mxu0 0.0
      %1639 = vmatmul.mubr.f32.gmra.mrb[0].mxu0 %v1439
      %v1640 = vpop.f32.mrb[0].mxu0
      %v1641 = vadd.f32 0.0, %v1640
      %v1642 = vpop.f32.mrb[0].mxu0
      %1643 = vmatprep.mubr.f32.mxu0 0.0
      %1644 = vmatmul.mubr.f32.gmra.mrb[0].mxu0 %v1442
      %v1645 = vpop.f32.mrb[0].mxu0
      %v1646 = vadd.f32 0.0, %v1645
      %v1647 = vpop.f32.mrb[0].mxu0
      %1648 = vmatprep.mubr.f32.mxu0 0.0
      %1649 = vmatmul.mubr.f32.gmra.mrb[0].mxu0 %v1445
      %v1650 = vpop.f32.mrb[0].mxu0
      %v1651 = vadd.f32 0.0, %v1650
      %v1652 = vpop.f32.mrb[0].mxu0
      %1653 = vmatprep.mubr.f32.mxu0 0.0
      %1654 = vmatmul.mubr.f32.gmra.mrb[0].mxu0 %v1448
      %v1655 = vpop.f32.mrb[0].mxu0
      %v1656 = vadd.f32 0.0, %v1655
      %v1657 = vpop.f32.mrb[0].mxu0
      %1658 = vmatprep.mubr.f32.mxu0 0.0
      %1659 = vmatmul.mubr.f32.gmra.mrb[0].mxu0 %v1451
      %v1660 = vpop.f32.mrb[0].mxu0
      %v1661 = vadd.f32 0.0, %v1660
      %v1662 = vpop.f32.mrb[0].mxu0
      %1663 = vmatprep.mubr.f32.mxu0 0.0
      %1664 = vmatmul.mubr.f32.gmra.mrb[0].mxu0 %v1454
      %v1665 = vpop.f32.mrb[0].mxu0
      %v1666 = vadd.f32 0.0, %v1665
      %v1667 = vpop.f32.mrb[0].mxu0
      %1668 = vmatprep.mubr.f32.mxu0 0.0
      %1669 = vmatmul.mubr.f32.gmra.mrb[0].mxu0 %v1457
      %v1670 = vpop.f32.mrb[0].mxu0
      %v1671 = vadd.f32 0.0, %v1670
      %v1672 = vpop.f32.mrb[0].mxu0
      %1673 = vmatprep.mubr.f32.mxu0 0.0
      %1674 = vmatmul.mubr.f32.gmra.mrb[0].mxu0 %v1460
      %v1675 = vpop.f32.mrb[0].mxu0
      %v1676 = vadd.f32 0.0, %v1675
      %v1677 = vpop.f32.mrb[0].mxu0
      %1678 = vmatprep.mubr.f32.mxu0 0.0
      %1679 = vmatmul.mubr.f32.gmra.mrb[0].mxu0 %v1463
      %v1680 = vpop.f32.mrb[0].mxu0
      %v1681 = vadd.f32 0.0, %v1680
      %v1682 = vpop.f32.mrb[0].mxu0
      %1683 = vmatprep.mubr.f32.mxu0 0.0
      %1684 = vmatmul.mubr.f32.gmra.mrb[0].mxu0 %v1466
      %v1685 = vpop.f32.mrb[0].mxu0
      %v1686 = vadd.f32 0.0, %v1685
      %v1687 = vpop.f32.mrb[0].mxu0
      %1688 = vmatprep.mubr.f32.mxu0 0.0
      %1689 = vmatmul.mubr.f32.gmra.mrb[0].mxu0 %v1469
      %v1690 = vpop.f32.mrb[0].mxu0
      %v1691 = vadd.f32 0.0, %v1690
      %v1692 = vpop.f32.mrb[0].mxu0
      %1693 = vmatprep.mubr.f32.mxu0 0.0
      %1694 = vmatmul.mubr.f32.gmra.mrb[0].mxu0 %v1472
      %v1695 = vpop.f32.mrb[0].mxu0
      %v1696 = vadd.f32 0.0, %v1695
      %v1697 = vpop.f32.mrb[0].mxu0
      %1698 = vdwg.mxu0
      %v1700 = vsel %vm370, %v1541, 0
      %v1703 = vsel %vm370, %v1546, 0
      %v1706 = vsel %vm370, %v1551, 0
      %v1709 = vsel %vm370, %v1556, 0
      %v1712 = vsel %vm370, %v1561, 0
      %v1715 = vsel %vm370, %v1566, 0
      %v1718 = vsel %vm370, %v1571, 0
      %v1721 = vsel %vm370, %v1576, 0
      %v1724 = vsel %vm370, %v1581, 0
      %v1727 = vsel %vm370, %v1586, 0
      %v1730 = vsel %vm370, %v1591, 0
      %v1733 = vsel %vm370, %v1596, 0
      %v1736 = vsel %vm370, %v1601, 0
      %v1739 = vsel %vm370, %v1606, 0
      %v1742 = vsel %vm370, %v1611, 0
      %v1745 = vsel %vm370, %v1616, 0
      %v1748 = vsel %vm370, %v1621, 0
      %v1751 = vsel %vm370, %v1626, 0
      %v1754 = vsel %vm370, %v1631, 0
      %v1757 = vsel %vm370, %v1636, 0
      %v1760 = vsel %vm370, %v1641, 0
      %v1763 = vsel %vm370, %v1646, 0
      %v1766 = vsel %vm370, %v1651, 0
      %v1769 = vsel %vm370, %v1656, 0
      %v1772 = vsel %vm370, %v1661, 0
      %v1775 = vsel %vm370, %v1666, 0
      %v1778 = vsel %vm370, %v1671, 0
      %v1781 = vsel %vm370, %v1676, 0
      %v1784 = vsel %vm370, %v1681, 0
      %v1787 = vsel %vm370, %v1686, 0
      %v1790 = vsel %vm370, %v1691, 0
      %v1793 = vsel %vm370, %v1696, 0
      %1795 = vmatprep.subr.mxu0 0.0
      %1796 = vmatpush1.msra.mxu0 %v326
      %1797 = vmatprep.subr.mxu0 0.0
      %1798 = vmatpush1.msra.mxu0 0.0
      %1799 = vmatprep.subr.mxu0 0.0
      %1800 = vmatpush1.msra.mxu0 0.0
      %1801 = vmatprep.subr.mxu0 0.0
      %1802 = vmatpush1.msra.mxu0 0.0
      %1803 = vmatprep.subr.mxu0 0.0
      %1804 = vmatpush1.msra.mxu0 0.0
      %1805 = vmatprep.subr.mxu0 0.0
      %1806 = vmatpush1.msra.mxu0 0.0
      %1807 = vmatprep.subr.mxu0 0.0
      %1808 = vmatpush1.msra.mxu0 0.0
      %1809 = vmatprep.subr.mxu0 0.0
      %1810 = vmatpush1.msra.mxu0 0.0
      %1811 = vmatprep.subr.mxu0 0.0
      %1812 = vmatpush1.msra.mxu0 0.0
      %1813 = vmatprep.subr.mxu0 0.0
      %1814 = vmatpush1.msra.mxu0 0.0
      %1815 = vmatprep.subr.mxu0 0.0
      %1816 = vmatpush1.msra.mxu0 0.0
      %1817 = vmatprep.subr.mxu0 0.0
      %1818 = vmatpush1.msra.mxu0 0.0
      %1819 = vmatprep.subr.mxu0 0.0
      %1820 = vmatpush1.msra.mxu0 0.0
      %1821 = vmatprep.subr.mxu0 0.0
      %1822 = vmatpush1.msra.mxu0 0.0
      %1823 = vmatprep.subr.mxu0 0.0
      %1824 = vmatpush1.msra.mxu0 0.0
      %1825 = vmatprep.subr.mxu0 0.0
      %1826 = vmatpush1.msra.mxu0 0.0
      %1827 = vmatprep.subr.mxu0 0.0
      %1828 = vmatpush1.msra.mxu0 0.0
      %1829 = vmatprep.subr.mxu0 0.0
      %1830 = vmatpush1.msra.mxu0 0.0
      %1831 = vmatprep.subr.mxu0 0.0
      %1832 = vmatpush1.msra.mxu0 0.0
      %1833 = vmatprep.subr.mxu0 0.0
      %1834 = vmatpush1.msra.mxu0 0.0
      %1835 = vmatprep.subr.mxu0 0.0
      %1836 = vmatpush1.msra.mxu0 0.0
      %1837 = vmatprep.subr.mxu0 0.0
      %1838 = vmatpush1.msra.mxu0 0.0
      %1839 = vmatprep.subr.mxu0 0.0
      %1840 = vmatpush1.msra.mxu0 0.0
      %1841 = vmatprep.subr.mxu0 0.0
      %1842 = vmatpush1.msra.mxu0 0.0
      %1843 = vmatprep.subr.mxu0 0.0
      %1844 = vmatpush1.msra.mxu0 0.0
      %1845 = vmatprep.subr.mxu0 0.0
      %1846 = vmatpush1.msra.mxu0 0.0
      %1847 = vmatprep.subr.mxu0 0.0
      %1848 = vmatpush1.msra.mxu0 0.0
      %1849 = vmatprep.subr.mxu0 0.0
      %1850 = vmatpush1.msra.mxu0 0.0
      %1851 = vmatprep.subr.mxu0 0.0
      %1852 = vmatpush1.msra.mxu0 0.0
      %1853 = vmatprep.subr.mxu0 0.0
      %1854 = vmatpush1.msra.mxu0 0.0
      %1855 = vmatprep.subr.mxu0 0.0
      %1856 = vmatpush1.msra.mxu0 0.0
      %1857 = vmatprep.subr.mxu0 0.0
      %1858 = vmatpush1.msra.mxu0 0.0
      %1859 = vmatprep.mubr.f32.mxu0 0.0
      %1860 = vmatmul.mubr.f32.gmra.mrb[0].mxu0 %v1700
      %v1861 = vpop.f32.mrb[0].mxu0
      %v1862 = vadd.f32 0.0, %v1861
      %v1863 = vpop.f32.mrb[0].mxu0
      %1864 = vmatprep.mubr.f32.mxu0 0.0
      %1865 = vmatmul.mubr.f32.gmra.mrb[0].mxu0 %v1703
      %v1866 = vpop.f32.mrb[0].mxu0
      %v1867 = vadd.f32 0.0, %v1866
      %v1868 = vpop.f32.mrb[0].mxu0
      %1869 = vmatprep.mubr.f32.mxu0 0.0
      %1870 = vmatmul.mubr.f32.gmra.mrb[0].mxu0 %v1706
      %v1871 = vpop.f32.mrb[0].mxu0
      %v1872 = vadd.f32 0.0, %v1871
      %v1873 = vpop.f32.mrb[0].mxu0
      %1874 = vmatprep.mubr.f32.mxu0 0.0
      %1875 = vmatmul.mubr.f32.gmra.mrb[0].mxu0 %v1709
      %v1876 = vpop.f32.mrb[0].mxu0
      %v1877 = vadd.f32 0.0, %v1876
      %v1878 = vpop.f32.mrb[0].mxu0
      %1879 = vmatprep.mubr.f32.mxu0 0.0
      %1880 = vmatmul.mubr.f32.gmra.mrb[0].mxu0 %v1712
      %v1881 = vpop.f32.mrb[0].mxu0
      %v1882 = vadd.f32 0.0, %v1881
      %v1883 = vpop.f32.mrb[0].mxu0
      %1884 = vmatprep.mubr.f32.mxu0 0.0
      %1885 = vmatmul.mubr.f32.gmra.mrb[0].mxu0 %v1715
      %v1886 = vpop.f32.mrb[0].mxu0
      %v1887 = vadd.f32 0.0, %v1886
      %v1888 = vpop.f32.mrb[0].mxu0
      %1889 = vmatprep.mubr.f32.mxu0 0.0
      %1890 = vmatmul.mubr.f32.gmra.mrb[0].mxu0 %v1718
      %v1891 = vpop.f32.mrb[0].mxu0
      %v1892 = vadd.f32 0.0, %v1891
      %v1893 = vpop.f32.mrb[0].mxu0
      %1894 = vmatprep.mubr.f32.mxu0 0.0
      %1895 = vmatmul.mubr.f32.gmra.mrb[0].mxu0 %v1721
      %v1896 = vpop.f32.mrb[0].mxu0
      %v1897 = vadd.f32 0.0, %v1896
      %v1898 = vpop.f32.mrb[0].mxu0
      %1899 = vmatprep.mubr.f32.mxu0 0.0
      %1900 = vmatmul.mubr.f32.gmra.mrb[0].mxu0 %v1724
      %v1901 = vpop.f32.mrb[0].mxu0
      %v1902 = vadd.f32 0.0, %v1901
      %v1903 = vpop.f32.mrb[0].mxu0
      %1904 = vmatprep.mubr.f32.mxu0 0.0
      %1905 = vmatmul.mubr.f32.gmra.mrb[0].mxu0 %v1727
      %v1906 = vpop.f32.mrb[0].mxu0
      %v1907 = vadd.f32 0.0, %v1906
      %v1908 = vpop.f32.mrb[0].mxu0
      %1909 = vmatprep.mubr.f32.mxu0 0.0
      %1910 = vmatmul.mubr.f32.gmra.mrb[0].mxu0 %v1730
      %v1911 = vpop.f32.mrb[0].mxu0
      %v1912 = vadd.f32 0.0, %v1911
      %v1913 = vpop.f32.mrb[0].mxu0
      %1914 = vmatprep.mubr.f32.mxu0 0.0
      %1915 = vmatmul.mubr.f32.gmra.mrb[0].mxu0 %v1733
      %v1916 = vpop.f32.mrb[0].mxu0
      %v1917 = vadd.f32 0.0, %v1916
      %v1918 = vpop.f32.mrb[0].mxu0
      %1919 = vmatprep.mubr.f32.mxu0 0.0
      %1920 = vmatmul.mubr.f32.gmra.mrb[0].mxu0 %v1736
      %v1921 = vpop.f32.mrb[0].mxu0
      %v1922 = vadd.f32 0.0, %v1921
      %v1923 = vpop.f32.mrb[0].mxu0
      %1924 = vmatprep.mubr.f32.mxu0 0.0
      %1925 = vmatmul.mubr.f32.gmra.mrb[0].mxu0 %v1739
      %v1926 = vpop.f32.mrb[0].mxu0
      %v1927 = vadd.f32 0.0, %v1926
      %v1928 = vpop.f32.mrb[0].mxu0
      %1929 = vmatprep.mubr.f32.mxu0 0.0
      %1930 = vmatmul.mubr.f32.gmra.mrb[0].mxu0 %v1742
      %v1931 = vpop.f32.mrb[0].mxu0
      %v1932 = vadd.f32 0.0, %v1931
      %v1933 = vpop.f32.mrb[0].mxu0
      %1934 = vmatprep.mubr.f32.mxu0 0.0
      %1935 = vmatmul.mubr.f32.gmra.mrb[0].mxu0 %v1745
      %v1936 = vpop.f32.mrb[0].mxu0
      %v1937 = vadd.f32 0.0, %v1936
      %v1938 = vpop.f32.mrb[0].mxu0
      %1939 = vmatprep.mubr.f32.mxu0 0.0
      %1940 = vmatmul.mubr.f32.gmra.mrb[0].mxu0 %v1748
      %v1941 = vpop.f32.mrb[0].mxu0
      %v1942 = vadd.f32 0.0, %v1941
      %v1943 = vpop.f32.mrb[0].mxu0
      %1944 = vmatprep.mubr.f32.mxu0 0.0
      %1945 = vmatmul.mubr.f32.gmra.mrb[0].mxu0 %v1751
      %v1946 = vpop.f32.mrb[0].mxu0
      %v1947 = vadd.f32 0.0, %v1946
      %v1948 = vpop.f32.mrb[0].mxu0
      %1949 = vmatprep.mubr.f32.mxu0 0.0
      %1950 = vmatmul.mubr.f32.gmra.mrb[0].mxu0 %v1754
      %v1951 = vpop.f32.mrb[0].mxu0
      %v1952 = vadd.f32 0.0, %v1951
      %v1953 = vpop.f32.mrb[0].mxu0
      %1954 = vmatprep.mubr.f32.mxu0 0.0
      %1955 = vmatmul.mubr.f32.gmra.mrb[0].mxu0 %v1757
      %v1956 = vpop.f32.mrb[0].mxu0
      %v1957 = vadd.f32 0.0, %v1956
      %v1958 = vpop.f32.mrb[0].mxu0
      %1959 = vmatprep.mubr.f32.mxu0 0.0
      %1960 = vmatmul.mubr.f32.gmra.mrb[0].mxu0 %v1760
      %v1961 = vpop.f32.mrb[0].mxu0
      %v1962 = vadd.f32 0.0, %v1961
      %v1963 = vpop.f32.mrb[0].mxu0
      %1964 = vmatprep.mubr.f32.mxu0 0.0
      %1965 = vmatmul.mubr.f32.gmra.mrb[0].mxu0 %v1763
      %v1966 = vpop.f32.mrb[0].mxu0
      %v1967 = vadd.f32 0.0, %v1966
      %v1968 = vpop.f32.mrb[0].mxu0
      %1969 = vmatprep.mubr.f32.mxu0 0.0
      %1970 = vmatmul.mubr.f32.gmra.mrb[0].mxu0 %v1766
      %v1971 = vpop.f32.mrb[0].mxu0
      %v1972 = vadd.f32 0.0, %v1971
      %v1973 = vpop.f32.mrb[0].mxu0
      %1974 = vmatprep.mubr.f32.mxu0 0.0
      %1975 = vmatmul.mubr.f32.gmra.mrb[0].mxu0 %v1769
      %v1976 = vpop.f32.mrb[0].mxu0
      %v1977 = vadd.f32 0.0, %v1976
      %v1978 = vpop.f32.mrb[0].mxu0
      %1979 = vmatprep.mubr.f32.mxu0 0.0
      %1980 = vmatmul.mubr.f32.gmra.mrb[0].mxu0 %v1772
      %v1981 = vpop.f32.mrb[0].mxu0
      %v1982 = vadd.f32 0.0, %v1981
      %v1983 = vpop.f32.mrb[0].mxu0
      %1984 = vmatprep.mubr.f32.mxu0 0.0
      %1985 = vmatmul.mubr.f32.gmra.mrb[0].mxu0 %v1775
      %v1986 = vpop.f32.mrb[0].mxu0
      %v1987 = vadd.f32 0.0, %v1986
      %v1988 = vpop.f32.mrb[0].mxu0
      %1989 = vmatprep.mubr.f32.mxu0 0.0
      %1990 = vmatmul.mubr.f32.gmra.mrb[0].mxu0 %v1778
      %v1991 = vpop.f32.mrb[0].mxu0
      %v1992 = vadd.f32 0.0, %v1991
      %v1993 = vpop.f32.mrb[0].mxu0
      %1994 = vmatprep.mubr.f32.mxu0 0.0
      %1995 = vmatmul.mubr.f32.gmra.mrb[0].mxu0 %v1781
      %v1996 = vpop.f32.mrb[0].mxu0
      %v1997 = vadd.f32 0.0, %v1996
      %v1998 = vpop.f32.mrb[0].mxu0
      %1999 = vmatprep.mubr.f32.mxu0 0.0
      %2000 = vmatmul.mubr.f32.gmra.mrb[0].mxu0 %v1784
      %v2001 = vpop.f32.mrb[0].mxu0
      %v2002 = vadd.f32 0.0, %v2001
      %v2003 = vpop.f32.mrb[0].mxu0
      %2004 = vmatprep.mubr.f32.mxu0 0.0
      %2005 = vmatmul.mubr.f32.gmra.mrb[0].mxu0 %v1787
      %v2006 = vpop.f32.mrb[0].mxu0
      %v2007 = vadd.f32 0.0, %v2006
      %v2008 = vpop.f32.mrb[0].mxu0
      %2009 = vmatprep.mubr.f32.mxu0 0.0
      %2010 = vmatmul.mubr.f32.gmra.mrb[0].mxu0 %v1790
      %v2011 = vpop.f32.mrb[0].mxu0
      %v2012 = vadd.f32 0.0, %v2011
      %v2013 = vpop.f32.mrb[0].mxu0
      %2014 = vmatprep.mubr.f32.mxu0 0.0
      %2015 = vmatmul.mubr.f32.gmra.mrb[0].mxu0 %v1793
      %v2016 = vpop.f32.mrb[0].mxu0
      %v2017 = vadd.f32 0.0, %v2016
      %v2018 = vpop.f32.mrb[0].mxu0
      %2019 = vdwg.mxu0
      %v2020 = vadd.f32 %v534, %v1862
      %v2021 = vadd.f32 %v539, %v1867
      %v2022 = vadd.f32 %v544, %v1872
      %v2023 = vadd.f32 %v549, %v1877
      %v2024 = vadd.f32 %v554, %v1882
      %v2025 = vadd.f32 %v559, %v1887
      %v2026 = vadd.f32 %v564, %v1892
      %v2027 = vadd.f32 %v569, %v1897
      %v2028 = vadd.f32 %v574, %v1902
      %v2029 = vadd.f32 %v579, %v1907
      %v2030 = vadd.f32 %v584, %v1912
      %v2031 = vadd.f32 %v589, %v1917
      %v2032 = vadd.f32 %v594, %v1922
      %v2033 = vadd.f32 %v599, %v1927
      %v2034 = vadd.f32 %v604, %v1932
      %v2035 = vadd.f32 %v609, %v1937
      %v2036 = vadd.f32 %v614, %v1942
      %v2037 = vadd.f32 %v619, %v1947
      %v2038 = vadd.f32 %v624, %v1952
      %v2039 = vadd.f32 %v629, %v1957
      %v2040 = vadd.f32 %v634, %v1962
      %v2041 = vadd.f32 %v639, %v1967
      %v2042 = vadd.f32 %v644, %v1972
      %v2043 = vadd.f32 %v649, %v1977
      %v2044 = vadd.f32 %v654, %v1982
      %v2045 = vadd.f32 %v659, %v1987
      %v2046 = vadd.f32 %v664, %v1992
      %v2047 = vadd.f32 %v669, %v1997
      %v2048 = vadd.f32 %v674, %v2002
      %v2049 = vadd.f32 %v679, %v2007
      %v2050 = vadd.f32 %v684, %v2012
      %v2051 = vadd.f32 %v689, %v2017
      %2052 = vrot.lane.b32.xlu0 %v292, 120
      %v2053 = vpop.permute.xlu0 %2052
      %2054 = vrot.lane.b32.xlu0 %v293, 120
      %v2055 = vpop.permute.xlu0 %2054
      %2056 = vrot.lane.b32.xlu0 %v294, 120
      %v2057 = vpop.permute.xlu0 %2056
      %2058 = vrot.lane.b32.xlu0 %v295, 120
      %v2059 = vpop.permute.xlu0 %2058
      %2060 = vrot.lane.b32.xlu0 %v296, 120
      %v2061 = vpop.permute.xlu0 %2060
      %2062 = vrot.lane.b32.xlu0 %v297, 120
      %v2063 = vpop.permute.xlu0 %2062
      %2064 = vrot.lane.b32.xlu0 %v298, 120
      %v2065 = vpop.permute.xlu0 %2064
      %2066 = vrot.lane.b32.xlu0 %v299, 120
      %v2067 = vpop.permute.xlu0 %2066
      %2068 = vrot.lane.b32.xlu0 %v300, 120
      %v2069 = vpop.permute.xlu0 %2068
      %2070 = vrot.lane.b32.xlu0 %v301, 120
      %v2071 = vpop.permute.xlu0 %2070
      %2072 = vrot.lane.b32.xlu0 %v302, 120
      %v2073 = vpop.permute.xlu0 %2072
      %2074 = vrot.lane.b32.xlu0 %v303, 120
      %v2075 = vpop.permute.xlu0 %2074
      %2076 = vrot.lane.b32.xlu0 %v304, 120
      %v2077 = vpop.permute.xlu0 %2076
      %2078 = vrot.lane.b32.xlu0 %v305, 120
      %v2079 = vpop.permute.xlu0 %2078
      %2080 = vrot.lane.b32.xlu0 %v306, 120
      %v2081 = vpop.permute.xlu0 %2080
      %2082 = vrot.lane.b32.xlu0 %v307, 120
      %v2083 = vpop.permute.xlu0 %2082
      %2084 = vrot.lane.b32.xlu0 %v308, 120
      %v2085 = vpop.permute.xlu0 %2084
      %2086 = vrot.lane.b32.xlu0 %v309, 120
      %v2087 = vpop.permute.xlu0 %2086
      %2088 = vrot.lane.b32.xlu0 %v310, 120
      %v2089 = vpop.permute.xlu0 %2088
      %2090 = vrot.lane.b32.xlu0 %v311, 120
      %v2091 = vpop.permute.xlu0 %2090
      %2092 = vrot.lane.b32.xlu0 %v312, 120
      %v2093 = vpop.permute.xlu0 %2092
      %2094 = vrot.lane.b32.xlu0 %v313, 120
      %v2095 = vpop.permute.xlu0 %2094
      %2096 = vrot.lane.b32.xlu0 %v314, 120
      %v2097 = vpop.permute.xlu0 %2096
      %2098 = vrot.lane.b32.xlu0 %v315, 120
      %v2099 = vpop.permute.xlu0 %2098
      %2100 = vrot.lane.b32.xlu0 %v316, 120
      %v2101 = vpop.permute.xlu0 %2100
      %2102 = vrot.lane.b32.xlu0 %v317, 120
      %v2103 = vpop.permute.xlu0 %2102
      %2104 = vrot.lane.b32.xlu0 %v318, 120
      %v2105 = vpop.permute.xlu0 %2104
      %2106 = vrot.lane.b32.xlu0 %v319, 120
      %v2107 = vpop.permute.xlu0 %2106
      %2108 = vrot.lane.b32.xlu0 %v320, 120
      %v2109 = vpop.permute.xlu0 %2108
      %2110 = vrot.lane.b32.xlu0 %v321, 120
      %v2111 = vpop.permute.xlu0 %2110
      %2112 = vrot.lane.b32.xlu0 %v322, 120
      %v2113 = vpop.permute.xlu0 %2112
      %2114 = vrot.lane.b32.xlu0 %v323, 120
      %v2115 = vpop.permute.xlu0 %2114
      %2116 = vrot.lane.b32.xlu0 %v324, 120
      %v2117 = vpop.permute.xlu0 %2116
      %2118 = vrot.lane.b32.xlu0 %v325, 120
      %v2119 = vpop.permute.xlu0 %2118
      %v2120 = vsel %vm370, %v2053, 0
      %v2122 = vsel %vm370, %v2055, 0
      %v2124 = vsel %vm370, %v2057, 0
      %v2126 = vsel %vm370, %v2059, 0
      %v2128 = vsel %vm370, %v2061, 0
      %v2130 = vsel %vm370, %v2063, 0
      %v2132 = vsel %vm370, %v2065, 0
      %v2134 = vsel %vm370, %v2067, 0
      %v2136 = vsel %vm370, %v2069, 0
      %v2138 = vsel %vm370, %v2071, 0
      %v2140 = vsel %vm370, %v2073, 0
      %v2142 = vsel %vm370, %v2075, 0
      %v2144 = vsel %vm370, %v2077, 0
      %v2146 = vsel %vm370, %v2079, 0
      %v2148 = vsel %vm370, %v2081, 0
      %v2150 = vsel %vm370, %v2083, 0
      %v2152 = vsel %vm370, %v2085, 0
      %v2154 = vsel %vm370, %v2087, 0
      %v2156 = vsel %vm370, %v2089, 0
      %v2158 = vsel %vm370, %v2091, 0
      %v2160 = vsel %vm370, %v2093, 0
      %v2162 = vsel %vm370, %v2095, 0
      %v2164 = vsel %vm370, %v2097, 0
      %v2166 = vsel %vm370, %v2099, 0
      %v2168 = vsel %vm370, %v2101, 0
      %v2170 = vsel %vm370, %v2103, 0
      %v2172 = vsel %vm370, %v2105, 0
      %v2174 = vsel %vm370, %v2107, 0
      %v2176 = vsel %vm370, %v2109, 0
      %v2178 = vsel %vm370, %v2111, 0
      %v2180 = vsel %vm370, %v2113, 0
      %v2182 = vsel %vm370, %v2115, 0
      %v2184 = vsel %vm370, %v2117, 0
      %v2186 = vsel %vm370, %v2119, 0
      %2188 = vmatprep.subr.mxu0 0.0
      %2189 = vmatpush1.xpose.msra.mxu0 %v2184
      %2190 = vmatprep.subr.mxu0 0.0
      %2191 = vmatpush1.xpose.msra.mxu0 %v2186
      %2192 = vmatprep.subr.mxu0 0.0
      %2193 = vmatpush1.xpose.msra.mxu0 0.0
      %2194 = vmatprep.subr.mxu0 0.0
      %2195 = vmatpush1.xpose.msra.mxu0 0.0
      %2196 = vmatprep.subr.mxu0 0.0
      %2197 = vmatpush1.xpose.msra.mxu0 0.0
      %2198 = vmatprep.subr.mxu0 0.0
      %2199 = vmatpush1.xpose.msra.mxu0 0.0
      %2200 = vmatprep.subr.mxu0 0.0
      %2201 = vmatpush1.xpose.msra.mxu0 0.0
      %2202 = vmatprep.subr.mxu0 0.0
      %2203 = vmatpush1.xpose.msra.mxu0 0.0
      %2204 = vmatprep.subr.mxu0 0.0
      %2205 = vmatpush1.xpose.msra.mxu0 0.0
      %2206 = vmatprep.subr.mxu0 0.0
      %2207 = vmatpush1.xpose.msra.mxu0 0.0
      %2208 = vmatprep.subr.mxu0 0.0
      %2209 = vmatpush1.xpose.msra.mxu0 0.0
      %2210 = vmatprep.subr.mxu0 0.0
      %2211 = vmatpush1.xpose.msra.mxu0 0.0
      %2212 = vmatprep.subr.mxu0 0.0
      %2213 = vmatpush1.xpose.msra.mxu0 0.0
      %2214 = vmatprep.subr.mxu0 0.0
      %2215 = vmatpush1.xpose.msra.mxu0 0.0
      %2216 = vmatprep.subr.mxu0 0.0
      %2217 = vmatpush1.xpose.msra.mxu0 0.0
      %2218 = vmatprep.subr.mxu0 0.0
      %2219 = vmatpush1.xpose.msra.mxu0 0.0
      %2220 = vmatprep.subr.mxu0 0.0
      %2221 = vmatpush1.xpose.msra.mxu0 0.0
      %2222 = vmatprep.subr.mxu0 0.0
      %2223 = vmatpush1.xpose.msra.mxu0 0.0
      %2224 = vmatprep.subr.mxu0 0.0
      %2225 = vmatpush1.xpose.msra.mxu0 0.0
      %2226 = vmatprep.subr.mxu0 0.0
      %2227 = vmatpush1.xpose.msra.mxu0 0.0
      %2228 = vmatprep.subr.mxu0 0.0
      %2229 = vmatpush1.xpose.msra.mxu0 0.0
      %2230 = vmatprep.subr.mxu0 0.0
      %2231 = vmatpush1.xpose.msra.mxu0 0.0
      %2232 = vmatprep.subr.mxu0 0.0
      %2233 = vmatpush1.xpose.msra.mxu0 0.0
      %2234 = vmatprep.subr.mxu0 0.0
      %2235 = vmatpush1.xpose.msra.mxu0 0.0
      %2236 = vmatprep.subr.mxu0 0.0
      %2237 = vmatpush1.xpose.msra.mxu0 0.0
      %2238 = vmatprep.subr.mxu0 0.0
      %2239 = vmatpush1.xpose.msra.mxu0 0.0
      %2240 = vmatprep.subr.mxu0 0.0
      %2241 = vmatpush1.xpose.msra.mxu0 0.0
      %2242 = vmatprep.subr.mxu0 0.0
      %2243 = vmatpush1.xpose.msra.mxu0 0.0
      %2244 = vmatprep.subr.mxu0 0.0
      %2245 = vmatpush1.xpose.msra.mxu0 0.0
      %2246 = vmatprep.subr.mxu0 0.0
      %2247 = vmatpush1.xpose.msra.mxu0 0.0
      %2248 = vmatprep.subr.mxu0 0.0
      %2249 = vmatpush1.xpose.msra.mxu0 0.0
      %2250 = vmatprep.subr.mxu0 0.0
      %2251 = vmatpush1.xpose.msra.mxu0 0.0
      %2252 = vmatprep.mubr.f32.mxu0 0.0
      %2253 = vmatmul.mubr.f32.gmra.mrb[0].mxu0 %v2120
      %v2254 = vpop.f32.mrb[0].mxu0
      %v2255 = vadd.f32 0.0, %v2254
      %v2256 = vpop.f32.mrb[0].mxu0
      %2257 = vmatprep.mubr.f32.mxu0 0.0
      %2258 = vmatmul.mubr.f32.gmra.mrb[0].mxu0 %v2122
      %v2259 = vpop.f32.mrb[0].mxu0
      %v2260 = vadd.f32 0.0, %v2259
      %v2261 = vpop.f32.mrb[0].mxu0
      %2262 = vmatprep.mubr.f32.mxu0 0.0
      %2263 = vmatmul.mubr.f32.gmra.mrb[0].mxu0 %v2124
      %v2264 = vpop.f32.mrb[0].mxu0
      %v2265 = vadd.f32 0.0, %v2264
      %v2266 = vpop.f32.mrb[0].mxu0
      %2267 = vmatprep.mubr.f32.mxu0 0.0
      %2268 = vmatmul.mubr.f32.gmra.mrb[0].mxu0 %v2126
      %v2269 = vpop.f32.mrb[0].mxu0
      %v2270 = vadd.f32 0.0, %v2269
      %v2271 = vpop.f32.mrb[0].mxu0
      %2272 = vmatprep.mubr.f32.mxu0 0.0
      %2273 = vmatmul.mubr.f32.gmra.mrb[0].mxu0 %v2128
      %v2274 = vpop.f32.mrb[0].mxu0
      %v2275 = vadd.f32 0.0, %v2274
      %v2276 = vpop.f32.mrb[0].mxu0
      %2277 = vmatprep.mubr.f32.mxu0 0.0
      %2278 = vmatmul.mubr.f32.gmra.mrb[0].mxu0 %v2130
      %v2279 = vpop.f32.mrb[0].mxu0
      %v2280 = vadd.f32 0.0, %v2279
      %v2281 = vpop.f32.mrb[0].mxu0
      %2282 = vmatprep.mubr.f32.mxu0 0.0
      %2283 = vmatmul.mubr.f32.gmra.mrb[0].mxu0 %v2132
      %v2284 = vpop.f32.mrb[0].mxu0
      %v2285 = vadd.f32 0.0, %v2284
      %v2286 = vpop.f32.mrb[0].mxu0
      %2287 = vmatprep.mubr.f32.mxu0 0.0
      %2288 = vmatmul.mubr.f32.gmra.mrb[0].mxu0 %v2134
      %v2289 = vpop.f32.mrb[0].mxu0
      %v2290 = vadd.f32 0.0, %v2289
      %v2291 = vpop.f32.mrb[0].mxu0
      %2292 = vmatprep.mubr.f32.mxu0 0.0
      %2293 = vmatmul.mubr.f32.gmra.mrb[0].mxu0 %v2136
      %v2294 = vpop.f32.mrb[0].mxu0
      %v2295 = vadd.f32 0.0, %v2294
      %v2296 = vpop.f32.mrb[0].mxu0
      %2297 = vmatprep.mubr.f32.mxu0 0.0
      %2298 = vmatmul.mubr.f32.gmra.mrb[0].mxu0 %v2138
      %v2299 = vpop.f32.mrb[0].mxu0
      %v2300 = vadd.f32 0.0, %v2299
      %v2301 = vpop.f32.mrb[0].mxu0
      %2302 = vmatprep.mubr.f32.mxu0 0.0
      %2303 = vmatmul.mubr.f32.gmra.mrb[0].mxu0 %v2140
      %v2304 = vpop.f32.mrb[0].mxu0
      %v2305 = vadd.f32 0.0, %v2304
      %v2306 = vpop.f32.mrb[0].mxu0
      %2307 = vmatprep.mubr.f32.mxu0 0.0
      %2308 = vmatmul.mubr.f32.gmra.mrb[0].mxu0 %v2142
      %v2309 = vpop.f32.mrb[0].mxu0
      %v2310 = vadd.f32 0.0, %v2309
      %v2311 = vpop.f32.mrb[0].mxu0
      %2312 = vmatprep.mubr.f32.mxu0 0.0
      %2313 = vmatmul.mubr.f32.gmra.mrb[0].mxu0 %v2144
      %v2314 = vpop.f32.mrb[0].mxu0
      %v2315 = vadd.f32 0.0, %v2314
      %v2316 = vpop.f32.mrb[0].mxu0
      %2317 = vmatprep.mubr.f32.mxu0 0.0
      %2318 = vmatmul.mubr.f32.gmra.mrb[0].mxu0 %v2146
      %v2319 = vpop.f32.mrb[0].mxu0
      %v2320 = vadd.f32 0.0, %v2319
      %v2321 = vpop.f32.mrb[0].mxu0
      %2322 = vmatprep.mubr.f32.mxu0 0.0
      %2323 = vmatmul.mubr.f32.gmra.mrb[0].mxu0 %v2148
      %v2324 = vpop.f32.mrb[0].mxu0
      %v2325 = vadd.f32 0.0, %v2324
      %v2326 = vpop.f32.mrb[0].mxu0
      %2327 = vmatprep.mubr.f32.mxu0 0.0
      %2328 = vmatmul.mubr.f32.gmra.mrb[0].mxu0 %v2150
      %v2329 = vpop.f32.mrb[0].mxu0
      %v2330 = vadd.f32 0.0, %v2329
      %v2331 = vpop.f32.mrb[0].mxu0
      %2332 = vmatprep.mubr.f32.mxu0 0.0
      %2333 = vmatmul.mubr.f32.gmra.mrb[0].mxu0 %v2152
      %v2334 = vpop.f32.mrb[0].mxu0
      %v2335 = vadd.f32 0.0, %v2334
      %v2336 = vpop.f32.mrb[0].mxu0
      %2337 = vmatprep.mubr.f32.mxu0 0.0
      %2338 = vmatmul.mubr.f32.gmra.mrb[0].mxu0 %v2154
      %v2339 = vpop.f32.mrb[0].mxu0
      %v2340 = vadd.f32 0.0, %v2339
      %v2341 = vpop.f32.mrb[0].mxu0
      %2342 = vmatprep.mubr.f32.mxu0 0.0
      %2343 = vmatmul.mubr.f32.gmra.mrb[0].mxu0 %v2156
      %v2344 = vpop.f32.mrb[0].mxu0
      %v2345 = vadd.f32 0.0, %v2344
      %v2346 = vpop.f32.mrb[0].mxu0
      %2347 = vmatprep.mubr.f32.mxu0 0.0
      %2348 = vmatmul.mubr.f32.gmra.mrb[0].mxu0 %v2158
      %v2349 = vpop.f32.mrb[0].mxu0
      %v2350 = vadd.f32 0.0, %v2349
      %v2351 = vpop.f32.mrb[0].mxu0
      %2352 = vmatprep.mubr.f32.mxu0 0.0
      %2353 = vmatmul.mubr.f32.gmra.mrb[0].mxu0 %v2160
      %v2354 = vpop.f32.mrb[0].mxu0
      %v2355 = vadd.f32 0.0, %v2354
      %v2356 = vpop.f32.mrb[0].mxu0
      %2357 = vmatprep.mubr.f32.mxu0 0.0
      %2358 = vmatmul.mubr.f32.gmra.mrb[0].mxu0 %v2162
      %v2359 = vpop.f32.mrb[0].mxu0
      %v2360 = vadd.f32 0.0, %v2359
      %v2361 = vpop.f32.mrb[0].mxu0
      %2362 = vmatprep.mubr.f32.mxu0 0.0
      %2363 = vmatmul.mubr.f32.gmra.mrb[0].mxu0 %v2164
      %v2364 = vpop.f32.mrb[0].mxu0
      %v2365 = vadd.f32 0.0, %v2364
      %v2366 = vpop.f32.mrb[0].mxu0
      %2367 = vmatprep.mubr.f32.mxu0 0.0
      %2368 = vmatmul.mubr.f32.gmra.mrb[0].mxu0 %v2166
      %v2369 = vpop.f32.mrb[0].mxu0
      %v2370 = vadd.f32 0.0, %v2369
      %v2371 = vpop.f32.mrb[0].mxu0
      %2372 = vmatprep.mubr.f32.mxu0 0.0
      %2373 = vmatmul.mubr.f32.gmra.mrb[0].mxu0 %v2168
      %v2374 = vpop.f32.mrb[0].mxu0
      %v2375 = vadd.f32 0.0, %v2374
      %v2376 = vpop.f32.mrb[0].mxu0
      %2377 = vmatprep.mubr.f32.mxu0 0.0
      %2378 = vmatmul.mubr.f32.gmra.mrb[0].mxu0 %v2170
      %v2379 = vpop.f32.mrb[0].mxu0
      %v2380 = vadd.f32 0.0, %v2379
      %v2381 = vpop.f32.mrb[0].mxu0
      %2382 = vmatprep.mubr.f32.mxu0 0.0
      %2383 = vmatmul.mubr.f32.gmra.mrb[0].mxu0 %v2172
      %v2384 = vpop.f32.mrb[0].mxu0
      %v2385 = vadd.f32 0.0, %v2384
      %v2386 = vpop.f32.mrb[0].mxu0
      %2387 = vmatprep.mubr.f32.mxu0 0.0
      %2388 = vmatmul.mubr.f32.gmra.mrb[0].mxu0 %v2174
      %v2389 = vpop.f32.mrb[0].mxu0
      %v2390 = vadd.f32 0.0, %v2389
      %v2391 = vpop.f32.mrb[0].mxu0
      %2392 = vmatprep.mubr.f32.mxu0 0.0
      %2393 = vmatmul.mubr.f32.gmra.mrb[0].mxu0 %v2176
      %v2394 = vpop.f32.mrb[0].mxu0
      %v2395 = vadd.f32 0.0, %v2394
      %v2396 = vpop.f32.mrb[0].mxu0
      %2397 = vmatprep.mubr.f32.mxu0 0.0
      %2398 = vmatmul.mubr.f32.gmra.mrb[0].mxu0 %v2178
      %v2399 = vpop.f32.mrb[0].mxu0
      %v2400 = vadd.f32 0.0, %v2399
      %v2401 = vpop.f32.mrb[0].mxu0
      %2402 = vmatprep.mubr.f32.mxu0 0.0
      %2403 = vmatmul.mubr.f32.gmra.mrb[0].mxu0 %v2180
      %v2404 = vpop.f32.mrb[0].mxu0
      %v2405 = vadd.f32 0.0, %v2404
      %v2406 = vpop.f32.mrb[0].mxu0
      %2407 = vmatprep.mubr.f32.mxu0 0.0
      %2408 = vmatmul.mubr.f32.gmra.mrb[0].mxu0 %v2182
      %v2409 = vpop.f32.mrb[0].mxu0
      %v2410 = vadd.f32 0.0, %v2409
      %v2411 = vpop.f32.mrb[0].mxu0
      %2412 = vdwg.mxu0
      %v2413 = vsel %vm1019, %v2255, -inf
      %2414 = vmax.xlane.f32.xlu0 %v2413
      %v2415 = vpop.xlane.xlu0 %2414
      %v2416 = vsel %vm1019, %v2260, -inf
      %2417 = vmax.xlane.f32.xlu0 %v2416
      %v2418 = vpop.xlane.xlu0 %2417
      %v2419 = vsel %vm1019, %v2265, -inf
      %2420 = vmax.xlane.f32.xlu0 %v2419
      %v2421 = vpop.xlane.xlu0 %2420
      %v2422 = vsel %vm1019, %v2270, -inf
      %2423 = vmax.xlane.f32.xlu0 %v2422
      %v2424 = vpop.xlane.xlu0 %2423
      %v2425 = vsel %vm1019, %v2275, -inf
      %2426 = vmax.xlane.f32.xlu0 %v2425
      %v2427 = vpop.xlane.xlu0 %2426
      %v2428 = vsel %vm1019, %v2280, -inf
      %2429 = vmax.xlane.f32.xlu0 %v2428
      %v2430 = vpop.xlane.xlu0 %2429
      %v2431 = vsel %vm1019, %v2285, -inf
      %2432 = vmax.xlane.f32.xlu0 %v2431
      %v2433 = vpop.xlane.xlu0 %2432
      %v2434 = vsel %vm1019, %v2290, -inf
      %2435 = vmax.xlane.f32.xlu0 %v2434
      %v2436 = vpop.xlane.xlu0 %2435
      %v2437 = vsel %vm1019, %v2295, -inf
      %2438 = vmax.xlane.f32.xlu0 %v2437
      %v2439 = vpop.xlane.xlu0 %2438
      %v2440 = vsel %vm1019, %v2300, -inf
      %2441 = vmax.xlane.f32.xlu0 %v2440
      %v2442 = vpop.xlane.xlu0 %2441
      %v2443 = vsel %vm1019, %v2305, -inf
      %2444 = vmax.xlane.f32.xlu0 %v2443
      %v2445 = vpop.xlane.xlu0 %2444
      %v2446 = vsel %vm1019, %v2310, -inf
      %2447 = vmax.xlane.f32.xlu0 %v2446
      %v2448 = vpop.xlane.xlu0 %2447
      %v2449 = vsel %vm1019, %v2315, -inf
      %2450 = vmax.xlane.f32.xlu0 %v2449
      %v2451 = vpop.xlane.xlu0 %2450
      %v2452 = vsel %vm1019, %v2320, -inf
      %2453 = vmax.xlane.f32.xlu0 %v2452
      %v2454 = vpop.xlane.xlu0 %2453
      %v2455 = vsel %vm1019, %v2325, -inf
      %2456 = vmax.xlane.f32.xlu0 %v2455
      %v2457 = vpop.xlane.xlu0 %2456
      %v2458 = vsel %vm1019, %v2330, -inf
      %2459 = vmax.xlane.f32.xlu0 %v2458
      %v2460 = vpop.xlane.xlu0 %2459
      %v2461 = vsel %vm1019, %v2335, -inf
      %2462 = vmax.xlane.f32.xlu0 %v2461
      %v2463 = vpop.xlane.xlu0 %2462
      %v2464 = vsel %vm1019, %v2340, -inf
      %2465 = vmax.xlane.f32.xlu0 %v2464
      %v2466 = vpop.xlane.xlu0 %2465
      %v2467 = vsel %vm1019, %v2345, -inf
      %2468 = vmax.xlane.f32.xlu0 %v2467
      %v2469 = vpop.xlane.xlu0 %2468
      %v2470 = vsel %vm1019, %v2350, -inf
      %2471 = vmax.xlane.f32.xlu0 %v2470
      %v2472 = vpop.xlane.xlu0 %2471
      %v2473 = vsel %vm1019, %v2355, -inf
      %2474 = vmax.xlane.f32.xlu0 %v2473
      %v2475 = vpop.xlane.xlu0 %2474
      %v2476 = vsel %vm1019, %v2360, -inf
      %2477 = vmax.xlane.f32.xlu0 %v2476
      %v2478 = vpop.xlane.xlu0 %2477
      %v2479 = vsel %vm1019, %v2365, -inf
      %2480 = vmax.xlane.f32.xlu0 %v2479
      %v2481 = vpop.xlane.xlu0 %2480
      %v2482 = vsel %vm1019, %v2370, -inf
      %2483 = vmax.xlane.f32.xlu0 %v2482
      %v2484 = vpop.xlane.xlu0 %2483
      %v2485 = vsel %vm1019, %v2375, -inf
      %2486 = vmax.xlane.f32.xlu0 %v2485
      %v2487 = vpop.xlane.xlu0 %2486
      %v2488 = vsel %vm1019, %v2380, -inf
      %2489 = vmax.xlane.f32.xlu0 %v2488
      %v2490 = vpop.xlane.xlu0 %2489
      %v2491 = vsel %vm1019, %v2385, -inf
      %2492 = vmax.xlane.f32.xlu0 %v2491
      %v2493 = vpop.xlane.xlu0 %2492
      %v2494 = vsel %vm1019, %v2390, -inf
      %2495 = vmax.xlane.f32.xlu0 %v2494
      %v2496 = vpop.xlane.xlu0 %2495
      %v2497 = vsel %vm1019, %v2395, -inf
      %2498 = vmax.xlane.f32.xlu0 %v2497
      %v2499 = vpop.xlane.xlu0 %2498
      %v2500 = vsel %vm1019, %v2400, -inf
      %2501 = vmax.xlane.f32.xlu0 %v2500
      %v2502 = vpop.xlane.xlu0 %2501
      %v2503 = vsel %vm1019, %v2405, -inf
      %2504 = vmax.xlane.f32.xlu0 %v2503
      %v2505 = vpop.xlane.xlu0 %2504
      %v2506 = vsel %vm1019, %v2410, -inf
      %2507 = vmax.xlane.f32.xlu0 %v2506
      %v2508 = vpop.xlane.xlu0 %2507
      %v2509 = vsub.f32 %v2255, %v2415
      %v2510 = vsub.f32 %v2260, %v2418
      %v2511 = vsub.f32 %v2265, %v2421
      %v2512 = vsub.f32 %v2270, %v2424
      %v2513 = vsub.f32 %v2275, %v2427
      %v2514 = vsub.f32 %v2280, %v2430
      %v2515 = vsub.f32 %v2285, %v2433
      %v2516 = vsub.f32 %v2290, %v2436
      %v2517 = vsub.f32 %v2295, %v2439
      %v2518 = vsub.f32 %v2300, %v2442
      %v2519 = vsub.f32 %v2305, %v2445
      %v2520 = vsub.f32 %v2310, %v2448
      %v2521 = vsub.f32 %v2315, %v2451
      %v2522 = vsub.f32 %v2320, %v2454
      %v2523 = vsub.f32 %v2325, %v2457
      %v2524 = vsub.f32 %v2330, %v2460
      %v2525 = vsub.f32 %v2335, %v2463
      %v2526 = vsub.f32 %v2340, %v2466
      %v2527 = vsub.f32 %v2345, %v2469
      %v2528 = vsub.f32 %v2350, %v2472
      %v2529 = vsub.f32 %v2355, %v2475
      %v2530 = vsub.f32 %v2360, %v2478
      %v2531 = vsub.f32 %v2365, %v2481
      %v2532 = vsub.f32 %v2370, %v2484
      %v2533 = vsub.f32 %v2375, %v2487
      %v2534 = vsub.f32 %v2380, %v2490
      %v2535 = vsub.f32 %v2385, %v2493
      %v2536 = vsub.f32 %v2390, %v2496
      %v2537 = vsub.f32 %v2395, %v2499
      %v2538 = vsub.f32 %v2400, %v2502
      %v2539 = vsub.f32 %v2405, %v2505
      %v2540 = vsub.f32 %v2410, %v2508
      %v2541 = vmul.f32 %v2509, 1.442695
      %v2542 = vpow.pop %v2541
      %v2543 = vmul.f32 %v2510, 1.442695
      %v2544 = vpow.pop %v2543
      %v2545 = vmul.f32 %v2511, 1.442695
      %v2546 = vpow.pop %v2545
      %v2547 = vmul.f32 %v2512, 1.442695
      %v2548 = vpow.pop %v2547
      %v2549 = vmul.f32 %v2513, 1.442695
      %v2550 = vpow.pop %v2549
      %v2551 = vmul.f32 %v2514, 1.442695
      %v2552 = vpow.pop %v2551
      %v2553 = vmul.f32 %v2515, 1.442695
      %v2554 = vpow.pop %v2553
      %v2555 = vmul.f32 %v2516, 1.442695
      %v2556 = vpow.pop %v2555
      %v2557 = vmul.f32 %v2517, 1.442695
      %v2558 = vpow.pop %v2557
      %v2559 = vmul.f32 %v2518, 1.442695
      %v2560 = vpow.pop %v2559
      %v2561 = vmul.f32 %v2519, 1.442695
      %v2562 = vpow.pop %v2561
      %v2563 = vmul.f32 %v2520, 1.442695
      %v2564 = vpow.pop %v2563
      %v2565 = vmul.f32 %v2521, 1.442695
      %v2566 = vpow.pop %v2565
      %v2567 = vmul.f32 %v2522, 1.442695
      %v2568 = vpow.pop %v2567
      %v2569 = vmul.f32 %v2523, 1.442695
      %v2570 = vpow.pop %v2569
      %v2571 = vmul.f32 %v2524, 1.442695
      %v2572 = vpow.pop %v2571
      %v2573 = vmul.f32 %v2525, 1.442695
      %v2574 = vpow.pop %v2573
      %v2575 = vmul.f32 %v2526, 1.442695
      %v2576 = vpow.pop %v2575
      %v2577 = vmul.f32 %v2527, 1.442695
      %v2578 = vpow.pop %v2577
      %v2579 = vmul.f32 %v2528, 1.442695
      %v2580 = vpow.pop %v2579
      %v2581 = vmul.f32 %v2529, 1.442695
      %v2582 = vpow.pop %v2581
      %v2583 = vmul.f32 %v2530, 1.442695
      %v2584 = vpow.pop %v2583
      %v2585 = vmul.f32 %v2531, 1.442695
      %v2586 = vpow.pop %v2585
      %v2587 = vmul.f32 %v2532, 1.442695
      %v2588 = vpow.pop %v2587
      %v2589 = vmul.f32 %v2533, 1.442695
      %v2590 = vpow.pop %v2589
      %v2591 = vmul.f32 %v2534, 1.442695
      %v2592 = vpow.pop %v2591
      %v2593 = vmul.f32 %v2535, 1.442695
      %v2594 = vpow.pop %v2593
      %v2595 = vmul.f32 %v2536, 1.442695
      %v2596 = vpow.pop %v2595
      %v2597 = vmul.f32 %v2537, 1.442695
      %v2598 = vpow.pop %v2597
      %v2599 = vmul.f32 %v2538, 1.442695
      %v2600 = vpow.pop %v2599
      %v2601 = vmul.f32 %v2539, 1.442695
      %v2602 = vpow.pop %v2601
      %v2603 = vmul.f32 %v2540, 1.442695
      %v2604 = vpow.pop %v2603
      %v2605 = vsel %vm1019, %v2542, 0.0
      %2606 = vadd.xlane.f32.xlu0 %v2605
      %v2607 = vpop.xlane.xlu0 %2606
      %v2608 = vsel %vm1019, %v2544, 0.0
      %2609 = vadd.xlane.f32.xlu0 %v2608
      %v2610 = vpop.xlane.xlu0 %2609
      %v2611 = vsel %vm1019, %v2546, 0.0
      %2612 = vadd.xlane.f32.xlu0 %v2611
      %v2613 = vpop.xlane.xlu0 %2612
      %v2614 = vsel %vm1019, %v2548, 0.0
      %2615 = vadd.xlane.f32.xlu0 %v2614
      %v2616 = vpop.xlane.xlu0 %2615
      %v2617 = vsel %vm1019, %v2550, 0.0
      %2618 = vadd.xlane.f32.xlu0 %v2617
      %v2619 = vpop.xlane.xlu0 %2618
      %v2620 = vsel %vm1019, %v2552, 0.0
      %2621 = vadd.xlane.f32.xlu0 %v2620
      %v2622 = vpop.xlane.xlu0 %2621
      %v2623 = vsel %vm1019, %v2554, 0.0
      %2624 = vadd.xlane.f32.xlu0 %v2623
      %v2625 = vpop.xlane.xlu0 %2624
      %v2626 = vsel %vm1019, %v2556, 0.0
      %2627 = vadd.xlane.f32.xlu0 %v2626
      %v2628 = vpop.xlane.xlu0 %2627
      %v2629 = vsel %vm1019, %v2558, 0.0
      %2630 = vadd.xlane.f32.xlu0 %v2629
      %v2631 = vpop.xlane.xlu0 %2630
      %v2632 = vsel %vm1019, %v2560, 0.0
      %2633 = vadd.xlane.f32.xlu0 %v2632
      %v2634 = vpop.xlane.xlu0 %2633
      %v2635 = vsel %vm1019, %v2562, 0.0
      %2636 = vadd.xlane.f32.xlu0 %v2635
      %v2637 = vpop.xlane.xlu0 %2636
      %v2638 = vsel %vm1019, %v2564, 0.0
      %2639 = vadd.xlane.f32.xlu0 %v2638
      %v2640 = vpop.xlane.xlu0 %2639
      %v2641 = vsel %vm1019, %v2566, 0.0
      %2642 = vadd.xlane.f32.xlu0 %v2641
      %v2643 = vpop.xlane.xlu0 %2642
      %v2644 = vsel %vm1019, %v2568, 0.0
      %2645 = vadd.xlane.f32.xlu0 %v2644
      %v2646 = vpop.xlane.xlu0 %2645
      %v2647 = vsel %vm1019, %v2570, 0.0
      %2648 = vadd.xlane.f32.xlu0 %v2647
      %v2649 = vpop.xlane.xlu0 %2648
      %v2650 = vsel %vm1019, %v2572, 0.0
      %2651 = vadd.xlane.f32.xlu0 %v2650
      %v2652 = vpop.xlane.xlu0 %2651
      %v2653 = vsel %vm1019, %v2574, 0.0
      %2654 = vadd.xlane.f32.xlu0 %v2653
      %v2655 = vpop.xlane.xlu0 %2654
      %v2656 = vsel %vm1019, %v2576, 0.0
      %2657 = vadd.xlane.f32.xlu0 %v2656
      %v2658 = vpop.xlane.xlu0 %2657
      %v2659 = vsel %vm1019, %v2578, 0.0
      %2660 = vadd.xlane.f32.xlu0 %v2659
      %v2661 = vpop.xlane.xlu0 %2660
      %v2662 = vsel %vm1019, %v2580, 0.0
      %2663 = vadd.xlane.f32.xlu0 %v2662
      %v2664 = vpop.xlane.xlu0 %2663
      %v2665 = vsel %vm1019, %v2582, 0.0
      %2666 = vadd.xlane.f32.xlu0 %v2665
      %v2667 = vpop.xlane.xlu0 %2666
      %v2668 = vsel %vm1019, %v2584, 0.0
      %2669 = vadd.xlane.f32.xlu0 %v2668
      %v2670 = vpop.xlane.xlu0 %2669
      %v2671 = vsel %vm1019, %v2586, 0.0
      %2672 = vadd.xlane.f32.xlu0 %v2671
      %v2673 = vpop.xlane.xlu0 %2672
      %v2674 = vsel %vm1019, %v2588, 0.0
      %2675 = vadd.xlane.f32.xlu0 %v2674
      %v2676 = vpop.xlane.xlu0 %2675
      %v2677 = vsel %vm1019, %v2590, 0.0
      %2678 = vadd.xlane.f32.xlu0 %v2677
      %v2679 = vpop.xlane.xlu0 %2678
      %v2680 = vsel %vm1019, %v2592, 0.0
      %2681 = vadd.xlane.f32.xlu0 %v2680
      %v2682 = vpop.xlane.xlu0 %2681
      %v2683 = vsel %vm1019, %v2594, 0.0
      %2684 = vadd.xlane.f32.xlu0 %v2683
      %v2685 = vpop.xlane.xlu0 %2684
      %v2686 = vsel %vm1019, %v2596, 0.0
      %2687 = vadd.xlane.f32.xlu0 %v2686
      %v2688 = vpop.xlane.xlu0 %2687
      %v2689 = vsel %vm1019, %v2598, 0.0
      %2690 = vadd.xlane.f32.xlu0 %v2689
      %v2691 = vpop.xlane.xlu0 %2690
      %v2692 = vsel %vm1019, %v2600, 0.0
      %2693 = vadd.xlane.f32.xlu0 %v2692
      %v2694 = vpop.xlane.xlu0 %2693
      %v2695 = vsel %vm1019, %v2602, 0.0
      %2696 = vadd.xlane.f32.xlu0 %v2695
      %v2697 = vpop.xlane.xlu0 %2696
      %v2698 = vsel %vm1019, %v2604, 0.0
      %2699 = vadd.xlane.f32.xlu0 %v2698
      %v2700 = vpop.xlane.xlu0 %2699
      %v2701 = vrcp.pop %v2607
      %v2702 = vrcp.pop %v2610
      %v2703 = vrcp.pop %v2613
      %v2704 = vrcp.pop %v2616
      %v2705 = vrcp.pop %v2619
      %v2706 = vrcp.pop %v2622
      %v2707 = vrcp.pop %v2625
      %v2708 = vrcp.pop %v2628
      %v2709 = vrcp.pop %v2631
      %v2710 = vrcp.pop %v2634
      %v2711 = vrcp.pop %v2637
      %v2712 = vrcp.pop %v2640
      %v2713 = vrcp.pop %v2643
      %v2714 = vrcp.pop %v2646
      %v2715 = vrcp.pop %v2649
      %v2716 = vrcp.pop %v2652
      %v2717 = vrcp.pop %v2655
      %v2718 = vrcp.pop %v2658
      %v2719 = vrcp.pop %v2661
      %v2720 = vrcp.pop %v2664
      %v2721 = vrcp.pop %v2667
      %v2722 = vrcp.pop %v2670
      %v2723 = vrcp.pop %v2673
      %v2724 = vrcp.pop %v2676
      %v2725 = vrcp.pop %v2679
      %v2726 = vrcp.pop %v2682
      %v2727 = vrcp.pop %v2685
      %v2728 = vrcp.pop %v2688
      %v2729 = vrcp.pop %v2691
      %v2730 = vrcp.pop %v2694
      %v2731 = vrcp.pop %v2697
      %v2732 = vrcp.pop %v2700
      %v2733 = vmul.f32 %v2542, %v2701
      %v2734 = vmul.f32 %v2544, %v2702
      %v2735 = vmul.f32 %v2546, %v2703
      %v2736 = vmul.f32 %v2548, %v2704
      %v2737 = vmul.f32 %v2550, %v2705
      %v2738 = vmul.f32 %v2552, %v2706
      %v2739 = vmul.f32 %v2554, %v2707
      %v2740 = vmul.f32 %v2556, %v2708
      %v2741 = vmul.f32 %v2558, %v2709
      %v2742 = vmul.f32 %v2560, %v2710
      %v2743 = vmul.f32 %v2562, %v2711
      %v2744 = vmul.f32 %v2564, %v2712
      %v2745 = vmul.f32 %v2566, %v2713
      %v2746 = vmul.f32 %v2568, %v2714
      %v2747 = vmul.f32 %v2570, %v2715
      %v2748 = vmul.f32 %v2572, %v2716
      %v2749 = vmul.f32 %v2574, %v2717
      %v2750 = vmul.f32 %v2576, %v2718
      %v2751 = vmul.f32 %v2578, %v2719
      %v2752 = vmul.f32 %v2580, %v2720
      %v2753 = vmul.f32 %v2582, %v2721
      %v2754 = vmul.f32 %v2584, %v2722
      %v2755 = vmul.f32 %v2586, %v2723
      %v2756 = vmul.f32 %v2588, %v2724
      %v2757 = vmul.f32 %v2590, %v2725
      %v2758 = vmul.f32 %v2592, %v2726
      %v2759 = vmul.f32 %v2594, %v2727
      %v2760 = vmul.f32 %v2596, %v2728
      %v2761 = vmul.f32 %v2598, %v2729
      %v2762 = vmul.f32 %v2600, %v2730
      %v2763 = vmul.f32 %v2602, %v2731
      %v2764 = vmul.f32 %v2604, %v2732
      %2765 = vrot.lane.b32.xlu0 %v324, 88
      %v2766 = vpop.permute.xlu0 %2765
      %2767 = vrot.lane.b32.xlu0 %v325, 88
      %v2768 = vpop.permute.xlu0 %2767
      %v2772 = vsel %vm1019, %v2733, 0
      %v2775 = vsel %vm1019, %v2734, 0
      %v2778 = vsel %vm1019, %v2735, 0
      %v2781 = vsel %vm1019, %v2736, 0
      %v2784 = vsel %vm1019, %v2737, 0
      %v2787 = vsel %vm1019, %v2738, 0
      %v2790 = vsel %vm1019, %v2739, 0
      %v2793 = vsel %vm1019, %v2740, 0
      %v2796 = vsel %vm1019, %v2741, 0
      %v2799 = vsel %vm1019, %v2742, 0
      %v2802 = vsel %vm1019, %v2743, 0
      %v2805 = vsel %vm1019, %v2744, 0
      %v2808 = vsel %vm1019, %v2745, 0
      %v2811 = vsel %vm1019, %v2746, 0
      %v2814 = vsel %vm1019, %v2747, 0
      %v2817 = vsel %vm1019, %v2748, 0
      %v2820 = vsel %vm1019, %v2749, 0
      %v2823 = vsel %vm1019, %v2750, 0
      %v2826 = vsel %vm1019, %v2751, 0
      %v2829 = vsel %vm1019, %v2752, 0
      %v2832 = vsel %vm1019, %v2753, 0
      %v2835 = vsel %vm1019, %v2754, 0
      %v2838 = vsel %vm1019, %v2755, 0
      %v2841 = vsel %vm1019, %v2756, 0
      %v2844 = vsel %vm1019, %v2757, 0
      %v2847 = vsel %vm1019, %v2758, 0
      %v2850 = vsel %vm1019, %v2759, 0
      %v2853 = vsel %vm1019, %v2760, 0
      %v2856 = vsel %vm1019, %v2761, 0
      %v2859 = vsel %vm1019, %v2762, 0
      %v2862 = vsel %vm1019, %v2763, 0
      %v2865 = vsel %vm1019, %v2764, 0
      %2867 = vmatprep.subr.mxu0 0.0
      %2868 = vmatpush1.msra.mxu0 %v2766
      %2869 = vmatprep.subr.mxu0 0.0
      %2870 = vmatpush1.msra.mxu0 %v2768
      %2871 = vmatprep.subr.mxu0 0.0
      %2872 = vmatpush1.msra.mxu0 0.0
      %2873 = vmatprep.subr.mxu0 0.0
      %2874 = vmatpush1.msra.mxu0 0.0
      %2875 = vmatprep.subr.mxu0 0.0
      %2876 = vmatpush1.msra.mxu0 0.0
      %2877 = vmatprep.subr.mxu0 0.0
      %2878 = vmatpush1.msra.mxu0 0.0
      %2879 = vmatprep.subr.mxu0 0.0
      %2880 = vmatpush1.msra.mxu0 0.0
      %2881 = vmatprep.subr.mxu0 0.0
      %2882 = vmatpush1.msra.mxu0 0.0
      %2883 = vmatprep.subr.mxu0 0.0
      %2884 = vmatpush1.msra.mxu0 0.0
      %2885 = vmatprep.subr.mxu0 0.0
      %2886 = vmatpush1.msra.mxu0 0.0
      %2887 = vmatprep.subr.mxu0 0.0
      %2888 = vmatpush1.msra.mxu0 0.0
      %2889 = vmatprep.subr.mxu0 0.0
      %2890 = vmatpush1.msra.mxu0 0.0
      %2891 = vmatprep.subr.mxu0 0.0
      %2892 = vmatpush1.msra.mxu0 0.0
      %2893 = vmatprep.subr.mxu0 0.0
      %2894 = vmatpush1.msra.mxu0 0.0
      %2895 = vmatprep.subr.mxu0 0.0
      %2896 = vmatpush1.msra.mxu0 0.0
      %2897 = vmatprep.subr.mxu0 0.0
      %2898 = vmatpush1.msra.mxu0 0.0
      %2899 = vmatprep.subr.mxu0 0.0
      %2900 = vmatpush1.msra.mxu0 0.0
      %2901 = vmatprep.subr.mxu0 0.0
      %2902 = vmatpush1.msra.mxu0 0.0
      %2903 = vmatprep.subr.mxu0 0.0
      %2904 = vmatpush1.msra.mxu0 0.0
      %2905 = vmatprep.subr.mxu0 0.0
      %2906 = vmatpush1.msra.mxu0 0.0
      %2907 = vmatprep.subr.mxu0 0.0
      %2908 = vmatpush1.msra.mxu0 0.0
      %2909 = vmatprep.subr.mxu0 0.0
      %2910 = vmatpush1.msra.mxu0 0.0
      %2911 = vmatprep.subr.mxu0 0.0
      %2912 = vmatpush1.msra.mxu0 0.0
      %2913 = vmatprep.subr.mxu0 0.0
      %2914 = vmatpush1.msra.mxu0 0.0
      %2915 = vmatprep.subr.mxu0 0.0
      %2916 = vmatpush1.msra.mxu0 0.0
      %2917 = vmatprep.subr.mxu0 0.0
      %2918 = vmatpush1.msra.mxu0 0.0
      %2919 = vmatprep.subr.mxu0 0.0
      %2920 = vmatpush1.msra.mxu0 0.0
      %2921 = vmatprep.subr.mxu0 0.0
      %2922 = vmatpush1.msra.mxu0 0.0
      %2923 = vmatprep.subr.mxu0 0.0
      %2924 = vmatpush1.msra.mxu0 0.0
      %2925 = vmatprep.subr.mxu0 0.0
      %2926 = vmatpush1.msra.mxu0 0.0
      %2927 = vmatprep.subr.mxu0 0.0
      %2928 = vmatpush1.msra.mxu0 0.0
      %2929 = vmatprep.subr.mxu0 0.0
      %2930 = vmatpush1.msra.mxu0 0.0
      %2931 = vmatprep.mubr.f32.mxu0 0.0
      %2932 = vmatmul.mubr.f32.gmra.mrb[0].mxu0 %v2772
      %v2933 = vpop.f32.mrb[0].mxu0
      %v2934 = vadd.f32 0.0, %v2933
      %v2935 = vpop.f32.mrb[0].mxu0
      %2936 = vmatprep.mubr.f32.mxu0 0.0
      %2937 = vmatmul.mubr.f32.gmra.mrb[0].mxu0 %v2775
      %v2938 = vpop.f32.mrb[0].mxu0
      %v2939 = vadd.f32 0.0, %v2938
      %v2940 = vpop.f32.mrb[0].mxu0
      %2941 = vmatprep.mubr.f32.mxu0 0.0
      %2942 = vmatmul.mubr.f32.gmra.mrb[0].mxu0 %v2778
      %v2943 = vpop.f32.mrb[0].mxu0
      %v2944 = vadd.f32 0.0, %v2943
      %v2945 = vpop.f32.mrb[0].mxu0
      %2946 = vmatprep.mubr.f32.mxu0 0.0
      %2947 = vmatmul.mubr.f32.gmra.mrb[0].mxu0 %v2781
      %v2948 = vpop.f32.mrb[0].mxu0
      %v2949 = vadd.f32 0.0, %v2948
      %v2950 = vpop.f32.mrb[0].mxu0
      %2951 = vmatprep.mubr.f32.mxu0 0.0
      %2952 = vmatmul.mubr.f32.gmra.mrb[0].mxu0 %v2784
      %v2953 = vpop.f32.mrb[0].mxu0
      %v2954 = vadd.f32 0.0, %v2953
      %v2955 = vpop.f32.mrb[0].mxu0
      %2956 = vmatprep.mubr.f32.mxu0 0.0
      %2957 = vmatmul.mubr.f32.gmra.mrb[0].mxu0 %v2787
      %v2958 = vpop.f32.mrb[0].mxu0
      %v2959 = vadd.f32 0.0, %v2958
      %v2960 = vpop.f32.mrb[0].mxu0
      %2961 = vmatprep.mubr.f32.mxu0 0.0
      %2962 = vmatmul.mubr.f32.gmra.mrb[0].mxu0 %v2790
      %v2963 = vpop.f32.mrb[0].mxu0
      %v2964 = vadd.f32 0.0, %v2963
      %v2965 = vpop.f32.mrb[0].mxu0
      %2966 = vmatprep.mubr.f32.mxu0 0.0
      %2967 = vmatmul.mubr.f32.gmra.mrb[0].mxu0 %v2793
      %v2968 = vpop.f32.mrb[0].mxu0
      %v2969 = vadd.f32 0.0, %v2968
      %v2970 = vpop.f32.mrb[0].mxu0
      %2971 = vmatprep.mubr.f32.mxu0 0.0
      %2972 = vmatmul.mubr.f32.gmra.mrb[0].mxu0 %v2796
      %v2973 = vpop.f32.mrb[0].mxu0
      %v2974 = vadd.f32 0.0, %v2973
      %v2975 = vpop.f32.mrb[0].mxu0
      %2976 = vmatprep.mubr.f32.mxu0 0.0
      %2977 = vmatmul.mubr.f32.gmra.mrb[0].mxu0 %v2799
      %v2978 = vpop.f32.mrb[0].mxu0
      %v2979 = vadd.f32 0.0, %v2978
      %v2980 = vpop.f32.mrb[0].mxu0
      %2981 = vmatprep.mubr.f32.mxu0 0.0
      %2982 = vmatmul.mubr.f32.gmra.mrb[0].mxu0 %v2802
      %v2983 = vpop.f32.mrb[0].mxu0
      %v2984 = vadd.f32 0.0, %v2983
      %v2985 = vpop.f32.mrb[0].mxu0
      %2986 = vmatprep.mubr.f32.mxu0 0.0
      %2987 = vmatmul.mubr.f32.gmra.mrb[0].mxu0 %v2805
      %v2988 = vpop.f32.mrb[0].mxu0
      %v2989 = vadd.f32 0.0, %v2988
      %v2990 = vpop.f32.mrb[0].mxu0
      %2991 = vmatprep.mubr.f32.mxu0 0.0
      %2992 = vmatmul.mubr.f32.gmra.mrb[0].mxu0 %v2808
      %v2993 = vpop.f32.mrb[0].mxu0
      %v2994 = vadd.f32 0.0, %v2993
      %v2995 = vpop.f32.mrb[0].mxu0
      %2996 = vmatprep.mubr.f32.mxu0 0.0
      %2997 = vmatmul.mubr.f32.gmra.mrb[0].mxu0 %v2811
      %v2998 = vpop.f32.mrb[0].mxu0
      %v2999 = vadd.f32 0.0, %v2998
      %v3000 = vpop.f32.mrb[0].mxu0
      %3001 = vmatprep.mubr.f32.mxu0 0.0
      %3002 = vmatmul.mubr.f32.gmra.mrb[0].mxu0 %v2814
      %v3003 = vpop.f32.mrb[0].mxu0
      %v3004 = vadd.f32 0.0, %v3003
      %v3005 = vpop.f32.mrb[0].mxu0
      %3006 = vmatprep.mubr.f32.mxu0 0.0
      %3007 = vmatmul.mubr.f32.gmra.mrb[0].mxu0 %v2817
      %v3008 = vpop.f32.mrb[0].mxu0
      %v3009 = vadd.f32 0.0, %v3008
      %v3010 = vpop.f32.mrb[0].mxu0
      %3011 = vmatprep.mubr.f32.mxu0 0.0
      %3012 = vmatmul.mubr.f32.gmra.mrb[0].mxu0 %v2820
      %v3013 = vpop.f32.mrb[0].mxu0
      %v3014 = vadd.f32 0.0, %v3013
      %v3015 = vpop.f32.mrb[0].mxu0
      %3016 = vmatprep.mubr.f32.mxu0 0.0
      %3017 = vmatmul.mubr.f32.gmra.mrb[0].mxu0 %v2823
      %v3018 = vpop.f32.mrb[0].mxu0
      %v3019 = vadd.f32 0.0, %v3018
      %v3020 = vpop.f32.mrb[0].mxu0
      %3021 = vmatprep.mubr.f32.mxu0 0.0
      %3022 = vmatmul.mubr.f32.gmra.mrb[0].mxu0 %v2826
      %v3023 = vpop.f32.mrb[0].mxu0
      %v3024 = vadd.f32 0.0, %v3023
      %v3025 = vpop.f32.mrb[0].mxu0
      %3026 = vmatprep.mubr.f32.mxu0 0.0
      %3027 = vmatmul.mubr.f32.gmra.mrb[0].mxu0 %v2829
      %v3028 = vpop.f32.mrb[0].mxu0
      %v3029 = vadd.f32 0.0, %v3028
      %v3030 = vpop.f32.mrb[0].mxu0
      %3031 = vmatprep.mubr.f32.mxu0 0.0
      %3032 = vmatmul.mubr.f32.gmra.mrb[0].mxu0 %v2832
      %v3033 = vpop.f32.mrb[0].mxu0
      %v3034 = vadd.f32 0.0, %v3033
      %v3035 = vpop.f32.mrb[0].mxu0
      %3036 = vmatprep.mubr.f32.mxu0 0.0
      %3037 = vmatmul.mubr.f32.gmra.mrb[0].mxu0 %v2835
      %v3038 = vpop.f32.mrb[0].mxu0
      %v3039 = vadd.f32 0.0, %v3038
      %v3040 = vpop.f32.mrb[0].mxu0
      %3041 = vmatprep.mubr.f32.mxu0 0.0
      %3042 = vmatmul.mubr.f32.gmra.mrb[0].mxu0 %v2838
      %v3043 = vpop.f32.mrb[0].mxu0
      %v3044 = vadd.f32 0.0, %v3043
      %v3045 = vpop.f32.mrb[0].mxu0
      %3046 = vmatprep.mubr.f32.mxu0 0.0
      %3047 = vmatmul.mubr.f32.gmra.mrb[0].mxu0 %v2841
      %v3048 = vpop.f32.mrb[0].mxu0
      %v3049 = vadd.f32 0.0, %v3048
      %v3050 = vpop.f32.mrb[0].mxu0
      %3051 = vmatprep.mubr.f32.mxu0 0.0
      %3052 = vmatmul.mubr.f32.gmra.mrb[0].mxu0 %v2844
      %v3053 = vpop.f32.mrb[0].mxu0
      %v3054 = vadd.f32 0.0, %v3053
      %v3055 = vpop.f32.mrb[0].mxu0
      %3056 = vmatprep.mubr.f32.mxu0 0.0
      %3057 = vmatmul.mubr.f32.gmra.mrb[0].mxu0 %v2847
      %v3058 = vpop.f32.mrb[0].mxu0
      %v3059 = vadd.f32 0.0, %v3058
      %v3060 = vpop.f32.mrb[0].mxu0
      %3061 = vmatprep.mubr.f32.mxu0 0.0
      %3062 = vmatmul.mubr.f32.gmra.mrb[0].mxu0 %v2850
      %v3063 = vpop.f32.mrb[0].mxu0
      %v3064 = vadd.f32 0.0, %v3063
      %v3065 = vpop.f32.mrb[0].mxu0
      %3066 = vmatprep.mubr.f32.mxu0 0.0
      %3067 = vmatmul.mubr.f32.gmra.mrb[0].mxu0 %v2853
      %v3068 = vpop.f32.mrb[0].mxu0
      %v3069 = vadd.f32 0.0, %v3068
      %v3070 = vpop.f32.mrb[0].mxu0
      %3071 = vmatprep.mubr.f32.mxu0 0.0
      %3072 = vmatmul.mubr.f32.gmra.mrb[0].mxu0 %v2856
      %v3073 = vpop.f32.mrb[0].mxu0
      %v3074 = vadd.f32 0.0, %v3073
      %v3075 = vpop.f32.mrb[0].mxu0
      %3076 = vmatprep.mubr.f32.mxu0 0.0
      %3077 = vmatmul.mubr.f32.gmra.mrb[0].mxu0 %v2859
      %v3078 = vpop.f32.mrb[0].mxu0
      %v3079 = vadd.f32 0.0, %v3078
      %v3080 = vpop.f32.mrb[0].mxu0
      %3081 = vmatprep.mubr.f32.mxu0 0.0
      %3082 = vmatmul.mubr.f32.gmra.mrb[0].mxu0 %v2862
      %v3083 = vpop.f32.mrb[0].mxu0
      %v3084 = vadd.f32 0.0, %v3083
      %v3085 = vpop.f32.mrb[0].mxu0
      %3086 = vmatprep.mubr.f32.mxu0 0.0
      %3087 = vmatmul.mubr.f32.gmra.mrb[0].mxu0 %v2865
      %v3088 = vpop.f32.mrb[0].mxu0
      %v3089 = vadd.f32 0.0, %v3088
      %v3090 = vpop.f32.mrb[0].mxu0
      %3091 = vdwg.mxu0
      %v3093 = vsel %vm370, %v2934, 0
      %v3096 = vsel %vm370, %v2939, 0
      %v3099 = vsel %vm370, %v2944, 0
      %v3102 = vsel %vm370, %v2949, 0
      %v3105 = vsel %vm370, %v2954, 0
      %v3108 = vsel %vm370, %v2959, 0
      %v3111 = vsel %vm370, %v2964, 0
      %v3114 = vsel %vm370, %v2969, 0
      %v3117 = vsel %vm370, %v2974, 0
      %v3120 = vsel %vm370, %v2979, 0
      %v3123 = vsel %vm370, %v2984, 0
      %v3126 = vsel %vm370, %v2989, 0
      %v3129 = vsel %vm370, %v2994, 0
      %v3132 = vsel %vm370, %v2999, 0
      %v3135 = vsel %vm370, %v3004, 0
      %v3138 = vsel %vm370, %v3009, 0
      %v3141 = vsel %vm370, %v3014, 0
      %v3144 = vsel %vm370, %v3019, 0
      %v3147 = vsel %vm370, %v3024, 0
      %v3150 = vsel %vm370, %v3029, 0
      %v3153 = vsel %vm370, %v3034, 0
      %v3156 = vsel %vm370, %v3039, 0
      %v3159 = vsel %vm370, %v3044, 0
      %v3162 = vsel %vm370, %v3049, 0
      %v3165 = vsel %vm370, %v3054, 0
      %v3168 = vsel %vm370, %v3059, 0
      %v3171 = vsel %vm370, %v3064, 0
      %v3174 = vsel %vm370, %v3069, 0
      %v3177 = vsel %vm370, %v3074, 0
      %v3180 = vsel %vm370, %v3079, 0
      %v3183 = vsel %vm370, %v3084, 0
      %v3186 = vsel %vm370, %v3089, 0
      %3188 = vmatprep.subr.mxu0 0.0
      %3189 = vmatpush1.msra.mxu0 %v327
      %3190 = vmatprep.subr.mxu0 0.0
      %3191 = vmatpush1.msra.mxu0 0.0
      %3192 = vmatprep.subr.mxu0 0.0
      %3193 = vmatpush1.msra.mxu0 0.0
      %3194 = vmatprep.subr.mxu0 0.0
      %3195 = vmatpush1.msra.mxu0 0.0
      %3196 = vmatprep.subr.mxu0 0.0
      %3197 = vmatpush1.msra.mxu0 0.0
      %3198 = vmatprep.subr.mxu0 0.0
      %3199 = vmatpush1.msra.mxu0 0.0
      %3200 = vmatprep.subr.mxu0 0.0
      %3201 = vmatpush1.msra.mxu0 0.0
      %3202 = vmatprep.subr.mxu0 0.0
      %3203 = vmatpush1.msra.mxu0 0.0
      %3204 = vmatprep.subr.mxu0 0.0
      %3205 = vmatpush1.msra.mxu0 0.0
      %3206 = vmatprep.subr.mxu0 0.0
      %3207 = vmatpush1.msra.mxu0 0.0
      %3208 = vmatprep.subr.mxu0 0.0
      %3209 = vmatpush1.msra.mxu0 0.0
      %3210 = vmatprep.subr.mxu0 0.0
      %3211 = vmatpush1.msra.mxu0 0.0
      %3212 = vmatprep.subr.mxu0 0.0
      %3213 = vmatpush1.msra.mxu0 0.0
      %3214 = vmatprep.subr.mxu0 0.0
      %3215 = vmatpush1.msra.mxu0 0.0
      %3216 = vmatprep.subr.mxu0 0.0
      %3217 = vmatpush1.msra.mxu0 0.0
      %3218 = vmatprep.subr.mxu0 0.0
      %3219 = vmatpush1.msra.mxu0 0.0
      %3220 = vmatprep.subr.mxu0 0.0
      %3221 = vmatpush1.msra.mxu0 0.0
      %3222 = vmatprep.subr.mxu0 0.0
      %3223 = vmatpush1.msra.mxu0 0.0
      %3224 = vmatprep.subr.mxu0 0.0
      %3225 = vmatpush1.msra.mxu0 0.0
      %3226 = vmatprep.subr.mxu0 0.0
      %3227 = vmatpush1.msra.mxu0 0.0
      %3228 = vmatprep.subr.mxu0 0.0
      %3229 = vmatpush1.msra.mxu0 0.0
      %3230 = vmatprep.subr.mxu0 0.0
      %3231 = vmatpush1.msra.mxu0 0.0
      %3232 = vmatprep.subr.mxu0 0.0
      %3233 = vmatpush1.msra.mxu0 0.0
      %3234 = vmatprep.subr.mxu0 0.0
      %3235 = vmatpush1.msra.mxu0 0.0
      %3236 = vmatprep.subr.mxu0 0.0
      %3237 = vmatpush1.msra.mxu0 0.0
      %3238 = vmatprep.subr.mxu0 0.0
      %3239 = vmatpush1.msra.mxu0 0.0
      %3240 = vmatprep.subr.mxu0 0.0
      %3241 = vmatpush1.msra.mxu0 0.0
      %3242 = vmatprep.subr.mxu0 0.0
      %3243 = vmatpush1.msra.mxu0 0.0
      %3244 = vmatprep.subr.mxu0 0.0
      %3245 = vmatpush1.msra.mxu0 0.0
      %3246 = vmatprep.subr.mxu0 0.0
      %3247 = vmatpush1.msra.mxu0 0.0
      %3248 = vmatprep.subr.mxu0 0.0
      %3249 = vmatpush1.msra.mxu0 0.0
      %3250 = vmatprep.subr.mxu0 0.0
      %3251 = vmatpush1.msra.mxu0 0.0
      %3252 = vmatprep.mubr.f32.mxu0 0.0
      %3253 = vmatmul.mubr.f32.gmra.mrb[0].mxu0 %v3093
      %v3254 = vpop.f32.mrb[0].mxu0
      %v3255 = vadd.f32 0.0, %v3254
      %v3256 = vpop.f32.mrb[0].mxu0
      %3257 = vmatprep.mubr.f32.mxu0 0.0
      %3258 = vmatmul.mubr.f32.gmra.mrb[0].mxu0 %v3096
      %v3259 = vpop.f32.mrb[0].mxu0
      %v3260 = vadd.f32 0.0, %v3259
      %v3261 = vpop.f32.mrb[0].mxu0
      %3262 = vmatprep.mubr.f32.mxu0 0.0
      %3263 = vmatmul.mubr.f32.gmra.mrb[0].mxu0 %v3099
      %v3264 = vpop.f32.mrb[0].mxu0
      %v3265 = vadd.f32 0.0, %v3264
      %v3266 = vpop.f32.mrb[0].mxu0
      %3267 = vmatprep.mubr.f32.mxu0 0.0
      %3268 = vmatmul.mubr.f32.gmra.mrb[0].mxu0 %v3102
      %v3269 = vpop.f32.mrb[0].mxu0
      %v3270 = vadd.f32 0.0, %v3269
      %v3271 = vpop.f32.mrb[0].mxu0
      %3272 = vmatprep.mubr.f32.mxu0 0.0
      %3273 = vmatmul.mubr.f32.gmra.mrb[0].mxu0 %v3105
      %v3274 = vpop.f32.mrb[0].mxu0
      %v3275 = vadd.f32 0.0, %v3274
      %v3276 = vpop.f32.mrb[0].mxu0
      %3277 = vmatprep.mubr.f32.mxu0 0.0
      %3278 = vmatmul.mubr.f32.gmra.mrb[0].mxu0 %v3108
      %v3279 = vpop.f32.mrb[0].mxu0
      %v3280 = vadd.f32 0.0, %v3279
      %v3281 = vpop.f32.mrb[0].mxu0
      %3282 = vmatprep.mubr.f32.mxu0 0.0
      %3283 = vmatmul.mubr.f32.gmra.mrb[0].mxu0 %v3111
      %v3284 = vpop.f32.mrb[0].mxu0
      %v3285 = vadd.f32 0.0, %v3284
      %v3286 = vpop.f32.mrb[0].mxu0
      %3287 = vmatprep.mubr.f32.mxu0 0.0
      %3288 = vmatmul.mubr.f32.gmra.mrb[0].mxu0 %v3114
      %v3289 = vpop.f32.mrb[0].mxu0
      %v3290 = vadd.f32 0.0, %v3289
      %v3291 = vpop.f32.mrb[0].mxu0
      %3292 = vmatprep.mubr.f32.mxu0 0.0
      %3293 = vmatmul.mubr.f32.gmra.mrb[0].mxu0 %v3117
      %v3294 = vpop.f32.mrb[0].mxu0
      %v3295 = vadd.f32 0.0, %v3294
      %v3296 = vpop.f32.mrb[0].mxu0
      %3297 = vmatprep.mubr.f32.mxu0 0.0
      %3298 = vmatmul.mubr.f32.gmra.mrb[0].mxu0 %v3120
      %v3299 = vpop.f32.mrb[0].mxu0
      %v3300 = vadd.f32 0.0, %v3299
      %v3301 = vpop.f32.mrb[0].mxu0
      %3302 = vmatprep.mubr.f32.mxu0 0.0
      %3303 = vmatmul.mubr.f32.gmra.mrb[0].mxu0 %v3123
      %v3304 = vpop.f32.mrb[0].mxu0
      %v3305 = vadd.f32 0.0, %v3304
      %v3306 = vpop.f32.mrb[0].mxu0
      %3307 = vmatprep.mubr.f32.mxu0 0.0
      %3308 = vmatmul.mubr.f32.gmra.mrb[0].mxu0 %v3126
      %v3309 = vpop.f32.mrb[0].mxu0
      %v3310 = vadd.f32 0.0, %v3309
      %v3311 = vpop.f32.mrb[0].mxu0
      %3312 = vmatprep.mubr.f32.mxu0 0.0
      %3313 = vmatmul.mubr.f32.gmra.mrb[0].mxu0 %v3129
      %v3314 = vpop.f32.mrb[0].mxu0
      %v3315 = vadd.f32 0.0, %v3314
      %v3316 = vpop.f32.mrb[0].mxu0
      %3317 = vmatprep.mubr.f32.mxu0 0.0
      %3318 = vmatmul.mubr.f32.gmra.mrb[0].mxu0 %v3132
      %v3319 = vpop.f32.mrb[0].mxu0
      %v3320 = vadd.f32 0.0, %v3319
      %v3321 = vpop.f32.mrb[0].mxu0
      %3322 = vmatprep.mubr.f32.mxu0 0.0
      %3323 = vmatmul.mubr.f32.gmra.mrb[0].mxu0 %v3135
      %v3324 = vpop.f32.mrb[0].mxu0
      %v3325 = vadd.f32 0.0, %v3324
      %v3326 = vpop.f32.mrb[0].mxu0
      %3327 = vmatprep.mubr.f32.mxu0 0.0
      %3328 = vmatmul.mubr.f32.gmra.mrb[0].mxu0 %v3138
      %v3329 = vpop.f32.mrb[0].mxu0
      %v3330 = vadd.f32 0.0, %v3329
      %v3331 = vpop.f32.mrb[0].mxu0
      %3332 = vmatprep.mubr.f32.mxu0 0.0
      %3333 = vmatmul.mubr.f32.gmra.mrb[0].mxu0 %v3141
      %v3334 = vpop.f32.mrb[0].mxu0
      %v3335 = vadd.f32 0.0, %v3334
      %v3336 = vpop.f32.mrb[0].mxu0
      %3337 = vmatprep.mubr.f32.mxu0 0.0
      %3338 = vmatmul.mubr.f32.gmra.mrb[0].mxu0 %v3144
      %v3339 = vpop.f32.mrb[0].mxu0
      %v3340 = vadd.f32 0.0, %v3339
      %v3341 = vpop.f32.mrb[0].mxu0
      %3342 = vmatprep.mubr.f32.mxu0 0.0
      %3343 = vmatmul.mubr.f32.gmra.mrb[0].mxu0 %v3147
      %v3344 = vpop.f32.mrb[0].mxu0
      %v3345 = vadd.f32 0.0, %v3344
      %v3346 = vpop.f32.mrb[0].mxu0
      %3347 = vmatprep.mubr.f32.mxu0 0.0
      %3348 = vmatmul.mubr.f32.gmra.mrb[0].mxu0 %v3150
      %v3349 = vpop.f32.mrb[0].mxu0
      %v3350 = vadd.f32 0.0, %v3349
      %v3351 = vpop.f32.mrb[0].mxu0
      %3352 = vmatprep.mubr.f32.mxu0 0.0
      %3353 = vmatmul.mubr.f32.gmra.mrb[0].mxu0 %v3153
      %v3354 = vpop.f32.mrb[0].mxu0
      %v3355 = vadd.f32 0.0, %v3354
      %v3356 = vpop.f32.mrb[0].mxu0
      %3357 = vmatprep.mubr.f32.mxu0 0.0
      %3358 = vmatmul.mubr.f32.gmra.mrb[0].mxu0 %v3156
      %v3359 = vpop.f32.mrb[0].mxu0
      %v3360 = vadd.f32 0.0, %v3359
      %v3361 = vpop.f32.mrb[0].mxu0
      %3362 = vmatprep.mubr.f32.mxu0 0.0
      %3363 = vmatmul.mubr.f32.gmra.mrb[0].mxu0 %v3159
      %v3364 = vpop.f32.mrb[0].mxu0
      %v3365 = vadd.f32 0.0, %v3364
      %v3366 = vpop.f32.mrb[0].mxu0
      %3367 = vmatprep.mubr.f32.mxu0 0.0
      %3368 = vmatmul.mubr.f32.gmra.mrb[0].mxu0 %v3162
      %v3369 = vpop.f32.mrb[0].mxu0
      %v3370 = vadd.f32 0.0, %v3369
      %v3371 = vpop.f32.mrb[0].mxu0
      %3372 = vmatprep.mubr.f32.mxu0 0.0
      %3373 = vmatmul.mubr.f32.gmra.mrb[0].mxu0 %v3165
      %v3374 = vpop.f32.mrb[0].mxu0
      %v3375 = vadd.f32 0.0, %v3374
      %v3376 = vpop.f32.mrb[0].mxu0
      %3377 = vmatprep.mubr.f32.mxu0 0.0
      %3378 = vmatmul.mubr.f32.gmra.mrb[0].mxu0 %v3168
      %v3379 = vpop.f32.mrb[0].mxu0
      %v3380 = vadd.f32 0.0, %v3379
      %v3381 = vpop.f32.mrb[0].mxu0
      %3382 = vmatprep.mubr.f32.mxu0 0.0
      %3383 = vmatmul.mubr.f32.gmra.mrb[0].mxu0 %v3171
      %v3384 = vpop.f32.mrb[0].mxu0
      %v3385 = vadd.f32 0.0, %v3384
      %v3386 = vpop.f32.mrb[0].mxu0
      %3387 = vmatprep.mubr.f32.mxu0 0.0
      %3388 = vmatmul.mubr.f32.gmra.mrb[0].mxu0 %v3174
      %v3389 = vpop.f32.mrb[0].mxu0
      %v3390 = vadd.f32 0.0, %v3389
      %v3391 = vpop.f32.mrb[0].mxu0
      %3392 = vmatprep.mubr.f32.mxu0 0.0
      %3393 = vmatmul.mubr.f32.gmra.mrb[0].mxu0 %v3177
      %v3394 = vpop.f32.mrb[0].mxu0
      %v3395 = vadd.f32 0.0, %v3394
      %v3396 = vpop.f32.mrb[0].mxu0
      %3397 = vmatprep.mubr.f32.mxu0 0.0
      %3398 = vmatmul.mubr.f32.gmra.mrb[0].mxu0 %v3180
      %v3399 = vpop.f32.mrb[0].mxu0
      %v3400 = vadd.f32 0.0, %v3399
      %v3401 = vpop.f32.mrb[0].mxu0
      %3402 = vmatprep.mubr.f32.mxu0 0.0
      %3403 = vmatmul.mubr.f32.gmra.mrb[0].mxu0 %v3183
      %v3404 = vpop.f32.mrb[0].mxu0
      %v3405 = vadd.f32 0.0, %v3404
      %v3406 = vpop.f32.mrb[0].mxu0
      %3407 = vmatprep.mubr.f32.mxu0 0.0
      %3408 = vmatmul.mubr.f32.gmra.mrb[0].mxu0 %v3186
      %v3409 = vpop.f32.mrb[0].mxu0
      %v3410 = vadd.f32 0.0, %v3409
      %v3411 = vpop.f32.mrb[0].mxu0
      %3412 = vdwg.mxu0
      %v3413 = vadd.f32 %v2020, %v3255
      %v3414 = vadd.f32 %v2021, %v3260
      %v3415 = vadd.f32 %v2022, %v3265
      %v3416 = vadd.f32 %v2023, %v3270
      %v3417 = vadd.f32 %v2024, %v3275
      %v3418 = vadd.f32 %v2025, %v3280
      %v3419 = vadd.f32 %v2026, %v3285
      %v3420 = vadd.f32 %v2027, %v3290
      %v3421 = vadd.f32 %v2028, %v3295
      %v3422 = vadd.f32 %v2029, %v3300
      %v3423 = vadd.f32 %v2030, %v3305
      %v3424 = vadd.f32 %v2031, %v3310
      %v3425 = vadd.f32 %v2032, %v3315
      %v3426 = vadd.f32 %v2033, %v3320
      %v3427 = vadd.f32 %v2034, %v3325
      %v3428 = vadd.f32 %v2035, %v3330
      %v3429 = vadd.f32 %v2036, %v3335
      %v3430 = vadd.f32 %v2037, %v3340
      %v3431 = vadd.f32 %v2038, %v3345
      %v3432 = vadd.f32 %v2039, %v3350
      %v3433 = vadd.f32 %v2040, %v3355
      %v3434 = vadd.f32 %v2041, %v3360
      %v3435 = vadd.f32 %v2042, %v3365
      %v3436 = vadd.f32 %v2043, %v3370
      %v3437 = vadd.f32 %v2044, %v3375
      %v3438 = vadd.f32 %v2045, %v3380
      %v3439 = vadd.f32 %v2046, %v3385
      %v3440 = vadd.f32 %v2047, %v3390
      %v3441 = vadd.f32 %v2048, %v3395
      %v3442 = vadd.f32 %v2049, %v3400
      %v3443 = vadd.f32 %v2050, %v3405
      %v3444 = vadd.f32 %v2051, %v3410
      %3445 = vrot.lane.b32.xlu0 %v292, 112
      %v3446 = vpop.permute.xlu0 %3445
      %3447 = vrot.lane.b32.xlu0 %v293, 112
      %v3448 = vpop.permute.xlu0 %3447
      %3449 = vrot.lane.b32.xlu0 %v294, 112
      %v3450 = vpop.permute.xlu0 %3449
      %3451 = vrot.lane.b32.xlu0 %v295, 112
      %v3452 = vpop.permute.xlu0 %3451
      %3453 = vrot.lane.b32.xlu0 %v296, 112
      %v3454 = vpop.permute.xlu0 %3453
      %3455 = vrot.lane.b32.xlu0 %v297, 112
      %v3456 = vpop.permute.xlu0 %3455
      %3457 = vrot.lane.b32.xlu0 %v298, 112
      %v3458 = vpop.permute.xlu0 %3457
      %3459 = vrot.lane.b32.xlu0 %v299, 112
      %v3460 = vpop.permute.xlu0 %3459
      %3461 = vrot.lane.b32.xlu0 %v300, 112
      %v3462 = vpop.permute.xlu0 %3461
      %3463 = vrot.lane.b32.xlu0 %v301, 112
      %v3464 = vpop.permute.xlu0 %3463
      %3465 = vrot.lane.b32.xlu0 %v302, 112
      %v3466 = vpop.permute.xlu0 %3465
      %3467 = vrot.lane.b32.xlu0 %v303, 112
      %v3468 = vpop.permute.xlu0 %3467
      %3469 = vrot.lane.b32.xlu0 %v304, 112
      %v3470 = vpop.permute.xlu0 %3469
      %3471 = vrot.lane.b32.xlu0 %v305, 112
      %v3472 = vpop.permute.xlu0 %3471
      %3473 = vrot.lane.b32.xlu0 %v306, 112
      %v3474 = vpop.permute.xlu0 %3473
      %3475 = vrot.lane.b32.xlu0 %v307, 112
      %v3476 = vpop.permute.xlu0 %3475
      %3477 = vrot.lane.b32.xlu0 %v308, 112
      %v3478 = vpop.permute.xlu0 %3477
      %3479 = vrot.lane.b32.xlu0 %v309, 112
      %v3480 = vpop.permute.xlu0 %3479
      %3481 = vrot.lane.b32.xlu0 %v310, 112
      %v3482 = vpop.permute.xlu0 %3481
      %3483 = vrot.lane.b32.xlu0 %v311, 112
      %v3484 = vpop.permute.xlu0 %3483
      %3485 = vrot.lane.b32.xlu0 %v312, 112
      %v3486 = vpop.permute.xlu0 %3485
      %3487 = vrot.lane.b32.xlu0 %v313, 112
      %v3488 = vpop.permute.xlu0 %3487
      %3489 = vrot.lane.b32.xlu0 %v314, 112
      %v3490 = vpop.permute.xlu0 %3489
      %3491 = vrot.lane.b32.xlu0 %v315, 112
      %v3492 = vpop.permute.xlu0 %3491
      %3493 = vrot.lane.b32.xlu0 %v316, 112
      %v3494 = vpop.permute.xlu0 %3493
      %3495 = vrot.lane.b32.xlu0 %v317, 112
      %v3496 = vpop.permute.xlu0 %3495
      %3497 = vrot.lane.b32.xlu0 %v318, 112
      %v3498 = vpop.permute.xlu0 %3497
      %3499 = vrot.lane.b32.xlu0 %v319, 112
      %v3500 = vpop.permute.xlu0 %3499
      %3501 = vrot.lane.b32.xlu0 %v320, 112
      %v3502 = vpop.permute.xlu0 %3501
      %3503 = vrot.lane.b32.xlu0 %v321, 112
      %v3504 = vpop.permute.xlu0 %3503
      %3505 = vrot.lane.b32.xlu0 %v322, 112
      %v3506 = vpop.permute.xlu0 %3505
      %3507 = vrot.lane.b32.xlu0 %v323, 112
      %v3508 = vpop.permute.xlu0 %3507
      %3509 = vrot.lane.b32.xlu0 %v324, 112
      %v3510 = vpop.permute.xlu0 %3509
      %3511 = vrot.lane.b32.xlu0 %v325, 112
      %v3512 = vpop.permute.xlu0 %3511
      %v3513 = vsel %vm370, %v3446, 0
      %v3515 = vsel %vm370, %v3448, 0
      %v3517 = vsel %vm370, %v3450, 0
      %v3519 = vsel %vm370, %v3452, 0
      %v3521 = vsel %vm370, %v3454, 0
      %v3523 = vsel %vm370, %v3456, 0
      %v3525 = vsel %vm370, %v3458, 0
      %v3527 = vsel %vm370, %v3460, 0
      %v3529 = vsel %vm370, %v3462, 0
      %v3531 = vsel %vm370, %v3464, 0
      %v3533 = vsel %vm370, %v3466, 0
      %v3535 = vsel %vm370, %v3468, 0
      %v3537 = vsel %vm370, %v3470, 0
      %v3539 = vsel %vm370, %v3472, 0
      %v3541 = vsel %vm370, %v3474, 0
      %v3543 = vsel %vm370, %v3476, 0
      %v3545 = vsel %vm370, %v3478, 0
      %v3547 = vsel %vm370, %v3480, 0
      %v3549 = vsel %vm370, %v3482, 0
      %v3551 = vsel %vm370, %v3484, 0
      %v3553 = vsel %vm370, %v3486, 0
      %v3555 = vsel %vm370, %v3488, 0
      %v3557 = vsel %vm370, %v3490, 0
      %v3559 = vsel %vm370, %v3492, 0
      %v3561 = vsel %vm370, %v3494, 0
      %v3563 = vsel %vm370, %v3496, 0
      %v3565 = vsel %vm370, %v3498, 0
      %v3567 = vsel %vm370, %v3500, 0
      %v3569 = vsel %vm370, %v3502, 0
      %v3571 = vsel %vm370, %v3504, 0
      %v3573 = vsel %vm370, %v3506, 0
      %v3575 = vsel %vm370, %v3508, 0
      %v3577 = vsel %vm370, %v3510, 0
      %v3579 = vsel %vm370, %v3512, 0
      %3581 = vmatprep.subr.mxu0 0.0
      %3582 = vmatpush1.xpose.msra.mxu0 %v3577
      %3583 = vmatprep.subr.mxu0 0.0
      %3584 = vmatpush1.xpose.msra.mxu0 %v3579
      %3585 = vmatprep.subr.mxu0 0.0
      %3586 = vmatpush1.xpose.msra.mxu0 0.0
      %3587 = vmatprep.subr.mxu0 0.0
      %3588 = vmatpush1.xpose.msra.mxu0 0.0
      %3589 = vmatprep.subr.mxu0 0.0
      %3590 = vmatpush1.xpose.msra.mxu0 0.0
      %3591 = vmatprep.subr.mxu0 0.0
      %3592 = vmatpush1.xpose.msra.mxu0 0.0
      %3593 = vmatprep.subr.mxu0 0.0
      %3594 = vmatpush1.xpose.msra.mxu0 0.0
      %3595 = vmatprep.subr.mxu0 0.0
      %3596 = vmatpush1.xpose.msra.mxu0 0.0
      %3597 = vmatprep.subr.mxu0 0.0
      %3598 = vmatpush1.xpose.msra.mxu0 0.0
      %3599 = vmatprep.subr.mxu0 0.0
      %3600 = vmatpush1.xpose.msra.mxu0 0.0
      %3601 = vmatprep.subr.mxu0 0.0
      %3602 = vmatpush1.xpose.msra.mxu0 0.0
      %3603 = vmatprep.subr.mxu0 0.0
      %3604 = vmatpush1.xpose.msra.mxu0 0.0
      %3605 = vmatprep.subr.mxu0 0.0
      %3606 = vmatpush1.xpose.msra.mxu0 0.0
      %3607 = vmatprep.subr.mxu0 0.0
      %3608 = vmatpush1.xpose.msra.mxu0 0.0
      %3609 = vmatprep.subr.mxu0 0.0
      %3610 = vmatpush1.xpose.msra.mxu0 0.0
      %3611 = vmatprep.subr.mxu0 0.0
      %3612 = vmatpush1.xpose.msra.mxu0 0.0
      %3613 = vmatprep.subr.mxu0 0.0
      %3614 = vmatpush1.xpose.msra.mxu0 0.0
      %3615 = vmatprep.subr.mxu0 0.0
      %3616 = vmatpush1.xpose.msra.mxu0 0.0
      %3617 = vmatprep.subr.mxu0 0.0
      %3618 = vmatpush1.xpose.msra.mxu0 0.0
      %3619 = vmatprep.subr.mxu0 0.0
      %3620 = vmatpush1.xpose.msra.mxu0 0.0
      %3621 = vmatprep.subr.mxu0 0.0
      %3622 = vmatpush1.xpose.msra.mxu0 0.0
      %3623 = vmatprep.subr.mxu0 0.0
      %3624 = vmatpush1.xpose.msra.mxu0 0.0
      %3625 = vmatprep.subr.mxu0 0.0
      %3626 = vmatpush1.xpose.msra.mxu0 0.0
      %3627 = vmatprep.subr.mxu0 0.0
      %3628 = vmatpush1.xpose.msra.mxu0 0.0
      %3629 = vmatprep.subr.mxu0 0.0
      %3630 = vmatpush1.xpose.msra.mxu0 0.0
      %3631 = vmatprep.subr.mxu0 0.0
      %3632 = vmatpush1.xpose.msra.mxu0 0.0
      %3633 = vmatprep.subr.mxu0 0.0
      %3634 = vmatpush1.xpose.msra.mxu0 0.0
      %3635 = vmatprep.subr.mxu0 0.0
      %3636 = vmatpush1.xpose.msra.mxu0 0.0
      %3637 = vmatprep.subr.mxu0 0.0
      %3638 = vmatpush1.xpose.msra.mxu0 0.0
      %3639 = vmatprep.subr.mxu0 0.0
      %3640 = vmatpush1.xpose.msra.mxu0 0.0
      %3641 = vmatprep.subr.mxu0 0.0
      %3642 = vmatpush1.xpose.msra.mxu0 0.0
      %3643 = vmatprep.subr.mxu0 0.0
      %3644 = vmatpush1.xpose.msra.mxu0 0.0
      %3645 = vmatprep.mubr.f32.mxu0 0.0
      %3646 = vmatmul.mubr.f32.gmra.mrb[0].mxu0 %v3513
      %v3647 = vpop.f32.mrb[0].mxu0
      %v3648 = vadd.f32 0.0, %v3647
      %v3649 = vpop.f32.mrb[0].mxu0
      %3650 = vmatprep.mubr.f32.mxu0 0.0
      %3651 = vmatmul.mubr.f32.gmra.mrb[0].mxu0 %v3515
      %v3652 = vpop.f32.mrb[0].mxu0
      %v3653 = vadd.f32 0.0, %v3652
      %v3654 = vpop.f32.mrb[0].mxu0
      %3655 = vmatprep.mubr.f32.mxu0 0.0
      %3656 = vmatmul.mubr.f32.gmra.mrb[0].mxu0 %v3517
      %v3657 = vpop.f32.mrb[0].mxu0
      %v3658 = vadd.f32 0.0, %v3657
      %v3659 = vpop.f32.mrb[0].mxu0
      %3660 = vmatprep.mubr.f32.mxu0 0.0
      %3661 = vmatmul.mubr.f32.gmra.mrb[0].mxu0 %v3519
      %v3662 = vpop.f32.mrb[0].mxu0
      %v3663 = vadd.f32 0.0, %v3662
      %v3664 = vpop.f32.mrb[0].mxu0
      %3665 = vmatprep.mubr.f32.mxu0 0.0
      %3666 = vmatmul.mubr.f32.gmra.mrb[0].mxu0 %v3521
      %v3667 = vpop.f32.mrb[0].mxu0
      %v3668 = vadd.f32 0.0, %v3667
      %v3669 = vpop.f32.mrb[0].mxu0
      %3670 = vmatprep.mubr.f32.mxu0 0.0
      %3671 = vmatmul.mubr.f32.gmra.mrb[0].mxu0 %v3523
      %v3672 = vpop.f32.mrb[0].mxu0
      %v3673 = vadd.f32 0.0, %v3672
      %v3674 = vpop.f32.mrb[0].mxu0
      %3675 = vmatprep.mubr.f32.mxu0 0.0
      %3676 = vmatmul.mubr.f32.gmra.mrb[0].mxu0 %v3525
      %v3677 = vpop.f32.mrb[0].mxu0
      %v3678 = vadd.f32 0.0, %v3677
      %v3679 = vpop.f32.mrb[0].mxu0
      %3680 = vmatprep.mubr.f32.mxu0 0.0
      %3681 = vmatmul.mubr.f32.gmra.mrb[0].mxu0 %v3527
      %v3682 = vpop.f32.mrb[0].mxu0
      %v3683 = vadd.f32 0.0, %v3682
      %v3684 = vpop.f32.mrb[0].mxu0
      %3685 = vmatprep.mubr.f32.mxu0 0.0
      %3686 = vmatmul.mubr.f32.gmra.mrb[0].mxu0 %v3529
      %v3687 = vpop.f32.mrb[0].mxu0
      %v3688 = vadd.f32 0.0, %v3687
      %v3689 = vpop.f32.mrb[0].mxu0
      %3690 = vmatprep.mubr.f32.mxu0 0.0
      %3691 = vmatmul.mubr.f32.gmra.mrb[0].mxu0 %v3531
      %v3692 = vpop.f32.mrb[0].mxu0
      %v3693 = vadd.f32 0.0, %v3692
      %v3694 = vpop.f32.mrb[0].mxu0
      %3695 = vmatprep.mubr.f32.mxu0 0.0
      %3696 = vmatmul.mubr.f32.gmra.mrb[0].mxu0 %v3533
      %v3697 = vpop.f32.mrb[0].mxu0
      %v3698 = vadd.f32 0.0, %v3697
      %v3699 = vpop.f32.mrb[0].mxu0
      %3700 = vmatprep.mubr.f32.mxu0 0.0
      %3701 = vmatmul.mubr.f32.gmra.mrb[0].mxu0 %v3535
      %v3702 = vpop.f32.mrb[0].mxu0
      %v3703 = vadd.f32 0.0, %v3702
      %v3704 = vpop.f32.mrb[0].mxu0
      %3705 = vmatprep.mubr.f32.mxu0 0.0
      %3706 = vmatmul.mubr.f32.gmra.mrb[0].mxu0 %v3537
      %v3707 = vpop.f32.mrb[0].mxu0
      %v3708 = vadd.f32 0.0, %v3707
      %v3709 = vpop.f32.mrb[0].mxu0
      %3710 = vmatprep.mubr.f32.mxu0 0.0
      %3711 = vmatmul.mubr.f32.gmra.mrb[0].mxu0 %v3539
      %v3712 = vpop.f32.mrb[0].mxu0
      %v3713 = vadd.f32 0.0, %v3712
      %v3714 = vpop.f32.mrb[0].mxu0
      %3715 = vmatprep.mubr.f32.mxu0 0.0
      %3716 = vmatmul.mubr.f32.gmra.mrb[0].mxu0 %v3541
      %v3717 = vpop.f32.mrb[0].mxu0
      %v3718 = vadd.f32 0.0, %v3717
      %v3719 = vpop.f32.mrb[0].mxu0
      %3720 = vmatprep.mubr.f32.mxu0 0.0
      %3721 = vmatmul.mubr.f32.gmra.mrb[0].mxu0 %v3543
      %v3722 = vpop.f32.mrb[0].mxu0
      %v3723 = vadd.f32 0.0, %v3722
      %v3724 = vpop.f32.mrb[0].mxu0
      %3725 = vmatprep.mubr.f32.mxu0 0.0
      %3726 = vmatmul.mubr.f32.gmra.mrb[0].mxu0 %v3545
      %v3727 = vpop.f32.mrb[0].mxu0
      %v3728 = vadd.f32 0.0, %v3727
      %v3729 = vpop.f32.mrb[0].mxu0
      %3730 = vmatprep.mubr.f32.mxu0 0.0
      %3731 = vmatmul.mubr.f32.gmra.mrb[0].mxu0 %v3547
      %v3732 = vpop.f32.mrb[0].mxu0
      %v3733 = vadd.f32 0.0, %v3732
      %v3734 = vpop.f32.mrb[0].mxu0
      %3735 = vmatprep.mubr.f32.mxu0 0.0
      %3736 = vmatmul.mubr.f32.gmra.mrb[0].mxu0 %v3549
      %v3737 = vpop.f32.mrb[0].mxu0
      %v3738 = vadd.f32 0.0, %v3737
      %v3739 = vpop.f32.mrb[0].mxu0
      %3740 = vmatprep.mubr.f32.mxu0 0.0
      %3741 = vmatmul.mubr.f32.gmra.mrb[0].mxu0 %v3551
      %v3742 = vpop.f32.mrb[0].mxu0
      %v3743 = vadd.f32 0.0, %v3742
      %v3744 = vpop.f32.mrb[0].mxu0
      %3745 = vmatprep.mubr.f32.mxu0 0.0
      %3746 = vmatmul.mubr.f32.gmra.mrb[0].mxu0 %v3553
      %v3747 = vpop.f32.mrb[0].mxu0
      %v3748 = vadd.f32 0.0, %v3747
      %v3749 = vpop.f32.mrb[0].mxu0
      %3750 = vmatprep.mubr.f32.mxu0 0.0
      %3751 = vmatmul.mubr.f32.gmra.mrb[0].mxu0 %v3555
      %v3752 = vpop.f32.mrb[0].mxu0
      %v3753 = vadd.f32 0.0, %v3752
      %v3754 = vpop.f32.mrb[0].mxu0
      %3755 = vmatprep.mubr.f32.mxu0 0.0
      %3756 = vmatmul.mubr.f32.gmra.mrb[0].mxu0 %v3557
      %v3757 = vpop.f32.mrb[0].mxu0
      %v3758 = vadd.f32 0.0, %v3757
      %v3759 = vpop.f32.mrb[0].mxu0
      %3760 = vmatprep.mubr.f32.mxu0 0.0
      %3761 = vmatmul.mubr.f32.gmra.mrb[0].mxu0 %v3559
      %v3762 = vpop.f32.mrb[0].mxu0
      %v3763 = vadd.f32 0.0, %v3762
      %v3764 = vpop.f32.mrb[0].mxu0
      %3765 = vmatprep.mubr.f32.mxu0 0.0
      %3766 = vmatmul.mubr.f32.gmra.mrb[0].mxu0 %v3561
      %v3767 = vpop.f32.mrb[0].mxu0
      %v3768 = vadd.f32 0.0, %v3767
      %v3769 = vpop.f32.mrb[0].mxu0
      %3770 = vmatprep.mubr.f32.mxu0 0.0
      %3771 = vmatmul.mubr.f32.gmra.mrb[0].mxu0 %v3563
      %v3772 = vpop.f32.mrb[0].mxu0
      %v3773 = vadd.f32 0.0, %v3772
      %v3774 = vpop.f32.mrb[0].mxu0
      %3775 = vmatprep.mubr.f32.mxu0 0.0
      %3776 = vmatmul.mubr.f32.gmra.mrb[0].mxu0 %v3565
      %v3777 = vpop.f32.mrb[0].mxu0
      %v3778 = vadd.f32 0.0, %v3777
      %v3779 = vpop.f32.mrb[0].mxu0
      %3780 = vmatprep.mubr.f32.mxu0 0.0
      %3781 = vmatmul.mubr.f32.gmra.mrb[0].mxu0 %v3567
      %v3782 = vpop.f32.mrb[0].mxu0
      %v3783 = vadd.f32 0.0, %v3782
      %v3784 = vpop.f32.mrb[0].mxu0
      %3785 = vmatprep.mubr.f32.mxu0 0.0
      %3786 = vmatmul.mubr.f32.gmra.mrb[0].mxu0 %v3569
      %v3787 = vpop.f32.mrb[0].mxu0
      %v3788 = vadd.f32 0.0, %v3787
      %v3789 = vpop.f32.mrb[0].mxu0
      %3790 = vmatprep.mubr.f32.mxu0 0.0
      %3791 = vmatmul.mubr.f32.gmra.mrb[0].mxu0 %v3571
      %v3792 = vpop.f32.mrb[0].mxu0
      %v3793 = vadd.f32 0.0, %v3792
      %v3794 = vpop.f32.mrb[0].mxu0
      %3795 = vmatprep.mubr.f32.mxu0 0.0
      %3796 = vmatmul.mubr.f32.gmra.mrb[0].mxu0 %v3573
      %v3797 = vpop.f32.mrb[0].mxu0
      %v3798 = vadd.f32 0.0, %v3797
      %v3799 = vpop.f32.mrb[0].mxu0
      %3800 = vmatprep.mubr.f32.mxu0 0.0
      %3801 = vmatmul.mubr.f32.gmra.mrb[0].mxu0 %v3575
      %v3802 = vpop.f32.mrb[0].mxu0
      %v3803 = vadd.f32 0.0, %v3802
      %v3804 = vpop.f32.mrb[0].mxu0
      %3805 = vdwg.mxu0
      %v3806 = vsel %vm1019, %v3648, -inf
      %3807 = vmax.xlane.f32.xlu0 %v3806
      %v3808 = vpop.xlane.xlu0 %3807
      %v3809 = vsel %vm1019, %v3653, -inf
      %3810 = vmax.xlane.f32.xlu0 %v3809
      %v3811 = vpop.xlane.xlu0 %3810
      %v3812 = vsel %vm1019, %v3658, -inf
      %3813 = vmax.xlane.f32.xlu0 %v3812
      %v3814 = vpop.xlane.xlu0 %3813
      %v3815 = vsel %vm1019, %v3663, -inf
      %3816 = vmax.xlane.f32.xlu0 %v3815
      %v3817 = vpop.xlane.xlu0 %3816
      %v3818 = vsel %vm1019, %v3668, -inf
      %3819 = vmax.xlane.f32.xlu0 %v3818
      %v3820 = vpop.xlane.xlu0 %3819
      %v3821 = vsel %vm1019, %v3673, -inf
      %3822 = vmax.xlane.f32.xlu0 %v3821
      %v3823 = vpop.xlane.xlu0 %3822
      %v3824 = vsel %vm1019, %v3678, -inf
      %3825 = vmax.xlane.f32.xlu0 %v3824
      %v3826 = vpop.xlane.xlu0 %3825
      %v3827 = vsel %vm1019, %v3683, -inf
      %3828 = vmax.xlane.f32.xlu0 %v3827
      %v3829 = vpop.xlane.xlu0 %3828
      %v3830 = vsel %vm1019, %v3688, -inf
      %3831 = vmax.xlane.f32.xlu0 %v3830
      %v3832 = vpop.xlane.xlu0 %3831
      %v3833 = vsel %vm1019, %v3693, -inf
      %3834 = vmax.xlane.f32.xlu0 %v3833
      %v3835 = vpop.xlane.xlu0 %3834
      %v3836 = vsel %vm1019, %v3698, -inf
      %3837 = vmax.xlane.f32.xlu0 %v3836
      %v3838 = vpop.xlane.xlu0 %3837
      %v3839 = vsel %vm1019, %v3703, -inf
      %3840 = vmax.xlane.f32.xlu0 %v3839
      %v3841 = vpop.xlane.xlu0 %3840
      %v3842 = vsel %vm1019, %v3708, -inf
      %3843 = vmax.xlane.f32.xlu0 %v3842
      %v3844 = vpop.xlane.xlu0 %3843
      %v3845 = vsel %vm1019, %v3713, -inf
      %3846 = vmax.xlane.f32.xlu0 %v3845
      %v3847 = vpop.xlane.xlu0 %3846
      %v3848 = vsel %vm1019, %v3718, -inf
      %3849 = vmax.xlane.f32.xlu0 %v3848
      %v3850 = vpop.xlane.xlu0 %3849
      %v3851 = vsel %vm1019, %v3723, -inf
      %3852 = vmax.xlane.f32.xlu0 %v3851
      %v3853 = vpop.xlane.xlu0 %3852
      %v3854 = vsel %vm1019, %v3728, -inf
      %3855 = vmax.xlane.f32.xlu0 %v3854
      %v3856 = vpop.xlane.xlu0 %3855
      %v3857 = vsel %vm1019, %v3733, -inf
      %3858 = vmax.xlane.f32.xlu0 %v3857
      %v3859 = vpop.xlane.xlu0 %3858
      %v3860 = vsel %vm1019, %v3738, -inf
      %3861 = vmax.xlane.f32.xlu0 %v3860
      %v3862 = vpop.xlane.xlu0 %3861
      %v3863 = vsel %vm1019, %v3743, -inf
      %3864 = vmax.xlane.f32.xlu0 %v3863
      %v3865 = vpop.xlane.xlu0 %3864
      %v3866 = vsel %vm1019, %v3748, -inf
      %3867 = vmax.xlane.f32.xlu0 %v3866
      %v3868 = vpop.xlane.xlu0 %3867
      %v3869 = vsel %vm1019, %v3753, -inf
      %3870 = vmax.xlane.f32.xlu0 %v3869
      %v3871 = vpop.xlane.xlu0 %3870
      %v3872 = vsel %vm1019, %v3758, -inf
      %3873 = vmax.xlane.f32.xlu0 %v3872
      %v3874 = vpop.xlane.xlu0 %3873
      %v3875 = vsel %vm1019, %v3763, -inf
      %3876 = vmax.xlane.f32.xlu0 %v3875
      %v3877 = vpop.xlane.xlu0 %3876
      %v3878 = vsel %vm1019, %v3768, -inf
      %3879 = vmax.xlane.f32.xlu0 %v3878
      %v3880 = vpop.xlane.xlu0 %3879
      %v3881 = vsel %vm1019, %v3773, -inf
      %3882 = vmax.xlane.f32.xlu0 %v3881
      %v3883 = vpop.xlane.xlu0 %3882
      %v3884 = vsel %vm1019, %v3778, -inf
      %3885 = vmax.xlane.f32.xlu0 %v3884
      %v3886 = vpop.xlane.xlu0 %3885
      %v3887 = vsel %vm1019, %v3783, -inf
      %3888 = vmax.xlane.f32.xlu0 %v3887
      %v3889 = vpop.xlane.xlu0 %3888
      %v3890 = vsel %vm1019, %v3788, -inf
      %3891 = vmax.xlane.f32.xlu0 %v3890
      %v3892 = vpop.xlane.xlu0 %3891
      %v3893 = vsel %vm1019, %v3793, -inf
      %3894 = vmax.xlane.f32.xlu0 %v3893
      %v3895 = vpop.xlane.xlu0 %3894
      %v3896 = vsel %vm1019, %v3798, -inf
      %3897 = vmax.xlane.f32.xlu0 %v3896
      %v3898 = vpop.xlane.xlu0 %3897
      %v3899 = vsel %vm1019, %v3803, -inf
      %3900 = vmax.xlane.f32.xlu0 %v3899
      %v3901 = vpop.xlane.xlu0 %3900
      %v3902 = vsub.f32 %v3648, %v3808
      %v3903 = vsub.f32 %v3653, %v3811
      %v3904 = vsub.f32 %v3658, %v3814
      %v3905 = vsub.f32 %v3663, %v3817
      %v3906 = vsub.f32 %v3668, %v3820
      %v3907 = vsub.f32 %v3673, %v3823
      %v3908 = vsub.f32 %v3678, %v3826
      %v3909 = vsub.f32 %v3683, %v3829
      %v3910 = vsub.f32 %v3688, %v3832
      %v3911 = vsub.f32 %v3693, %v3835
      %v3912 = vsub.f32 %v3698, %v3838
      %v3913 = vsub.f32 %v3703, %v3841
      %v3914 = vsub.f32 %v3708, %v3844
      %v3915 = vsub.f32 %v3713, %v3847
      %v3916 = vsub.f32 %v3718, %v3850
      %v3917 = vsub.f32 %v3723, %v3853
      %v3918 = vsub.f32 %v3728, %v3856
      %v3919 = vsub.f32 %v3733, %v3859
      %v3920 = vsub.f32 %v3738, %v3862
      %v3921 = vsub.f32 %v3743, %v3865
      %v3922 = vsub.f32 %v3748, %v3868
      %v3923 = vsub.f32 %v3753, %v3871
      %v3924 = vsub.f32 %v3758, %v3874
      %v3925 = vsub.f32 %v3763, %v3877
      %v3926 = vsub.f32 %v3768, %v3880
      %v3927 = vsub.f32 %v3773, %v3883
      %v3928 = vsub.f32 %v3778, %v3886
      %v3929 = vsub.f32 %v3783, %v3889
      %v3930 = vsub.f32 %v3788, %v3892
      %v3931 = vsub.f32 %v3793, %v3895
      %v3932 = vsub.f32 %v3798, %v3898
      %v3933 = vsub.f32 %v3803, %v3901
      %v3934 = vmul.f32 %v3902, 1.442695
      %v3935 = vpow.pop %v3934
      %v3936 = vmul.f32 %v3903, 1.442695
      %v3937 = vpow.pop %v3936
      %v3938 = vmul.f32 %v3904, 1.442695
      %v3939 = vpow.pop %v3938
      %v3940 = vmul.f32 %v3905, 1.442695
      %v3941 = vpow.pop %v3940
      %v3942 = vmul.f32 %v3906, 1.442695
      %v3943 = vpow.pop %v3942
      %v3944 = vmul.f32 %v3907, 1.442695
      %v3945 = vpow.pop %v3944
      %v3946 = vmul.f32 %v3908, 1.442695
      %v3947 = vpow.pop %v3946
      %v3948 = vmul.f32 %v3909, 1.442695
      %v3949 = vpow.pop %v3948
      %v3950 = vmul.f32 %v3910, 1.442695
      %v3951 = vpow.pop %v3950
      %v3952 = vmul.f32 %v3911, 1.442695
      %v3953 = vpow.pop %v3952
      %v3954 = vmul.f32 %v3912, 1.442695
      %v3955 = vpow.pop %v3954
      %v3956 = vmul.f32 %v3913, 1.442695
      %v3957 = vpow.pop %v3956
      %v3958 = vmul.f32 %v3914, 1.442695
      %v3959 = vpow.pop %v3958
      %v3960 = vmul.f32 %v3915, 1.442695
      %v3961 = vpow.pop %v3960
      %v3962 = vmul.f32 %v3916, 1.442695
      %v3963 = vpow.pop %v3962
      %v3964 = vmul.f32 %v3917, 1.442695
      %v3965 = vpow.pop %v3964
      %v3966 = vmul.f32 %v3918, 1.442695
      %v3967 = vpow.pop %v3966
      %v3968 = vmul.f32 %v3919, 1.442695
      %v3969 = vpow.pop %v3968
      %v3970 = vmul.f32 %v3920, 1.442695
      %v3971 = vpow.pop %v3970
      %v3972 = vmul.f32 %v3921, 1.442695
      %v3973 = vpow.pop %v3972
      %v3974 = vmul.f32 %v3922, 1.442695
      %v3975 = vpow.pop %v3974
      %v3976 = vmul.f32 %v3923, 1.442695
      %v3977 = vpow.pop %v3976
      %v3978 = vmul.f32 %v3924, 1.442695
      %v3979 = vpow.pop %v3978
      %v3980 = vmul.f32 %v3925, 1.442695
      %v3981 = vpow.pop %v3980
      %v3982 = vmul.f32 %v3926, 1.442695
      %v3983 = vpow.pop %v3982
      %v3984 = vmul.f32 %v3927, 1.442695
      %v3985 = vpow.pop %v3984
      %v3986 = vmul.f32 %v3928, 1.442695
      %v3987 = vpow.pop %v3986
      %v3988 = vmul.f32 %v3929, 1.442695
      %v3989 = vpow.pop %v3988
      %v3990 = vmul.f32 %v3930, 1.442695
      %v3991 = vpow.pop %v3990
      %v3992 = vmul.f32 %v3931, 1.442695
      %v3993 = vpow.pop %v3992
      %v3994 = vmul.f32 %v3932, 1.442695
      %v3995 = vpow.pop %v3994
      %v3996 = vmul.f32 %v3933, 1.442695
      %v3997 = vpow.pop %v3996
      %v3998 = vsel %vm1019, %v3935, 0.0
      %3999 = vadd.xlane.f32.xlu0 %v3998
      %v4000 = vpop.xlane.xlu0 %3999
      %v4001 = vsel %vm1019, %v3937, 0.0
      %4002 = vadd.xlane.f32.xlu0 %v4001
      %v4003 = vpop.xlane.xlu0 %4002
      %v4004 = vsel %vm1019, %v3939, 0.0
      %4005 = vadd.xlane.f32.xlu0 %v4004
      %v4006 = vpop.xlane.xlu0 %4005
      %v4007 = vsel %vm1019, %v3941, 0.0
      %4008 = vadd.xlane.f32.xlu0 %v4007
      %v4009 = vpop.xlane.xlu0 %4008
      %v4010 = vsel %vm1019, %v3943, 0.0
      %4011 = vadd.xlane.f32.xlu0 %v4010
      %v4012 = vpop.xlane.xlu0 %4011
      %v4013 = vsel %vm1019, %v3945, 0.0
      %4014 = vadd.xlane.f32.xlu0 %v4013
      %v4015 = vpop.xlane.xlu0 %4014
      %v4016 = vsel %vm1019, %v3947, 0.0
      %4017 = vadd.xlane.f32.xlu0 %v4016
      %v4018 = vpop.xlane.xlu0 %4017
      %v4019 = vsel %vm1019, %v3949, 0.0
      %4020 = vadd.xlane.f32.xlu0 %v4019
      %v4021 = vpop.xlane.xlu0 %4020
      %v4022 = vsel %vm1019, %v3951, 0.0
      %4023 = vadd.xlane.f32.xlu0 %v4022
      %v4024 = vpop.xlane.xlu0 %4023
      %v4025 = vsel %vm1019, %v3953, 0.0
      %4026 = vadd.xlane.f32.xlu0 %v4025
      %v4027 = vpop.xlane.xlu0 %4026
      %v4028 = vsel %vm1019, %v3955, 0.0
      %4029 = vadd.xlane.f32.xlu0 %v4028
      %v4030 = vpop.xlane.xlu0 %4029
      %v4031 = vsel %vm1019, %v3957, 0.0
      %4032 = vadd.xlane.f32.xlu0 %v4031
      %v4033 = vpop.xlane.xlu0 %4032
      %v4034 = vsel %vm1019, %v3959, 0.0
      %4035 = vadd.xlane.f32.xlu0 %v4034
      %v4036 = vpop.xlane.xlu0 %4035
      %v4037 = vsel %vm1019, %v3961, 0.0
      %4038 = vadd.xlane.f32.xlu0 %v4037
      %v4039 = vpop.xlane.xlu0 %4038
      %v4040 = vsel %vm1019, %v3963, 0.0
      %4041 = vadd.xlane.f32.xlu0 %v4040
      %v4042 = vpop.xlane.xlu0 %4041
      %v4043 = vsel %vm1019, %v3965, 0.0
      %4044 = vadd.xlane.f32.xlu0 %v4043
      %v4045 = vpop.xlane.xlu0 %4044
      %v4046 = vsel %vm1019, %v3967, 0.0
      %4047 = vadd.xlane.f32.xlu0 %v4046
      %v4048 = vpop.xlane.xlu0 %4047
      %v4049 = vsel %vm1019, %v3969, 0.0
      %4050 = vadd.xlane.f32.xlu0 %v4049
      %v4051 = vpop.xlane.xlu0 %4050
      %v4052 = vsel %vm1019, %v3971, 0.0
      %4053 = vadd.xlane.f32.xlu0 %v4052
      %v4054 = vpop.xlane.xlu0 %4053
      %v4055 = vsel %vm1019, %v3973, 0.0
      %4056 = vadd.xlane.f32.xlu0 %v4055
      %v4057 = vpop.xlane.xlu0 %4056
      %v4058 = vsel %vm1019, %v3975, 0.0
      %4059 = vadd.xlane.f32.xlu0 %v4058
      %v4060 = vpop.xlane.xlu0 %4059
      %v4061 = vsel %vm1019, %v3977, 0.0
      %4062 = vadd.xlane.f32.xlu0 %v4061
      %v4063 = vpop.xlane.xlu0 %4062
      %v4064 = vsel %vm1019, %v3979, 0.0
      %4065 = vadd.xlane.f32.xlu0 %v4064
      %v4066 = vpop.xlane.xlu0 %4065
      %v4067 = vsel %vm1019, %v3981, 0.0
      %4068 = vadd.xlane.f32.xlu0 %v4067
      %v4069 = vpop.xlane.xlu0 %4068
      %v4070 = vsel %vm1019, %v3983, 0.0
      %4071 = vadd.xlane.f32.xlu0 %v4070
      %v4072 = vpop.xlane.xlu0 %4071
      %v4073 = vsel %vm1019, %v3985, 0.0
      %4074 = vadd.xlane.f32.xlu0 %v4073
      %v4075 = vpop.xlane.xlu0 %4074
      %v4076 = vsel %vm1019, %v3987, 0.0
      %4077 = vadd.xlane.f32.xlu0 %v4076
      %v4078 = vpop.xlane.xlu0 %4077
      %v4079 = vsel %vm1019, %v3989, 0.0
      %4080 = vadd.xlane.f32.xlu0 %v4079
      %v4081 = vpop.xlane.xlu0 %4080
      %v4082 = vsel %vm1019, %v3991, 0.0
      %4083 = vadd.xlane.f32.xlu0 %v4082
      %v4084 = vpop.xlane.xlu0 %4083
      %v4085 = vsel %vm1019, %v3993, 0.0
      %4086 = vadd.xlane.f32.xlu0 %v4085
      %v4087 = vpop.xlane.xlu0 %4086
      %v4088 = vsel %vm1019, %v3995, 0.0
      %4089 = vadd.xlane.f32.xlu0 %v4088
      %v4090 = vpop.xlane.xlu0 %4089
      %v4091 = vsel %vm1019, %v3997, 0.0
      %4092 = vadd.xlane.f32.xlu0 %v4091
      %v4093 = vpop.xlane.xlu0 %4092
      %v4094 = vrcp.pop %v4000
      %v4095 = vrcp.pop %v4003
      %v4096 = vrcp.pop %v4006
      %v4097 = vrcp.pop %v4009
      %v4098 = vrcp.pop %v4012
      %v4099 = vrcp.pop %v4015
      %v4100 = vrcp.pop %v4018
      %v4101 = vrcp.pop %v4021
      %v4102 = vrcp.pop %v4024
      %v4103 = vrcp.pop %v4027
      %v4104 = vrcp.pop %v4030
      %v4105 = vrcp.pop %v4033
      %v4106 = vrcp.pop %v4036
      %v4107 = vrcp.pop %v4039
      %v4108 = vrcp.pop %v4042
      %v4109 = vrcp.pop %v4045
      %v4110 = vrcp.pop %v4048
      %v4111 = vrcp.pop %v4051
      %v4112 = vrcp.pop %v4054
      %v4113 = vrcp.pop %v4057
      %v4114 = vrcp.pop %v4060
      %v4115 = vrcp.pop %v4063
      %v4116 = vrcp.pop %v4066
      %v4117 = vrcp.pop %v4069
      %v4118 = vrcp.pop %v4072
      %v4119 = vrcp.pop %v4075
      %v4120 = vrcp.pop %v4078
      %v4121 = vrcp.pop %v4081
      %v4122 = vrcp.pop %v4084
      %v4123 = vrcp.pop %v4087
      %v4124 = vrcp.pop %v4090
      %v4125 = vrcp.pop %v4093
      %v4126 = vmul.f32 %v3935, %v4094
      %v4127 = vmul.f32 %v3937, %v4095
      %v4128 = vmul.f32 %v3939, %v4096
      %v4129 = vmul.f32 %v3941, %v4097
      %v4130 = vmul.f32 %v3943, %v4098
      %v4131 = vmul.f32 %v3945, %v4099
      %v4132 = vmul.f32 %v3947, %v4100
      %v4133 = vmul.f32 %v3949, %v4101
      %v4134 = vmul.f32 %v3951, %v4102
      %v4135 = vmul.f32 %v3953, %v4103
      %v4136 = vmul.f32 %v3955, %v4104
      %v4137 = vmul.f32 %v3957, %v4105
      %v4138 = vmul.f32 %v3959, %v4106
      %v4139 = vmul.f32 %v3961, %v4107
      %v4140 = vmul.f32 %v3963, %v4108
      %v4141 = vmul.f32 %v3965, %v4109
      %v4142 = vmul.f32 %v3967, %v4110
      %v4143 = vmul.f32 %v3969, %v4111
      %v4144 = vmul.f32 %v3971, %v4112
      %v4145 = vmul.f32 %v3973, %v4113
      %v4146 = vmul.f32 %v3975, %v4114
      %v4147 = vmul.f32 %v3977, %v4115
      %v4148 = vmul.f32 %v3979, %v4116
      %v4149 = vmul.f32 %v3981, %v4117
      %v4150 = vmul.f32 %v3983, %v4118
      %v4151 = vmul.f32 %v3985, %v4119
      %v4152 = vmul.f32 %v3987, %v4120
      %v4153 = vmul.f32 %v3989, %v4121
      %v4154 = vmul.f32 %v3991, %v4122
      %v4155 = vmul.f32 %v3993, %v4123
      %v4156 = vmul.f32 %v3995, %v4124
      %v4157 = vmul.f32 %v3997, %v4125
      %4158 = vrot.lane.b32.xlu0 %v324, 80
      %v4159 = vpop.permute.xlu0 %4158
      %4160 = vrot.lane.b32.xlu0 %v325, 80
      %v4161 = vpop.permute.xlu0 %4160
      %v4165 = vsel %vm1019, %v4126, 0
      %v4168 = vsel %vm1019, %v4127, 0
      %v4171 = vsel %vm1019, %v4128, 0
      %v4174 = vsel %vm1019, %v4129, 0
      %v4177 = vsel %vm1019, %v4130, 0
      %v4180 = vsel %vm1019, %v4131, 0
      %v4183 = vsel %vm1019, %v4132, 0
      %v4186 = vsel %vm1019, %v4133, 0
      %v4189 = vsel %vm1019, %v4134, 0
      %v4192 = vsel %vm1019, %v4135, 0
      %v4195 = vsel %vm1019, %v4136, 0
      %v4198 = vsel %vm1019, %v4137, 0
      %v4201 = vsel %vm1019, %v4138, 0
      %v4204 = vsel %vm1019, %v4139, 0
      %v4207 = vsel %vm1019, %v4140, 0
      %v4210 = vsel %vm1019, %v4141, 0
      %v4213 = vsel %vm1019, %v4142, 0
      %v4216 = vsel %vm1019, %v4143, 0
      %v4219 = vsel %vm1019, %v4144, 0
      %v4222 = vsel %vm1019, %v4145, 0
      %v4225 = vsel %vm1019, %v4146, 0
      %v4228 = vsel %vm1019, %v4147, 0
      %v4231 = vsel %vm1019, %v4148, 0
      %v4234 = vsel %vm1019, %v4149, 0
      %v4237 = vsel %vm1019, %v4150, 0
      %v4240 = vsel %vm1019, %v4151, 0
      %v4243 = vsel %vm1019, %v4152, 0
      %v4246 = vsel %vm1019, %v4153, 0
      %v4249 = vsel %vm1019, %v4154, 0
      %v4252 = vsel %vm1019, %v4155, 0
      %v4255 = vsel %vm1019, %v4156, 0
      %v4258 = vsel %vm1019, %v4157, 0
      %4260 = vmatprep.subr.mxu0 0.0
      %4261 = vmatpush1.msra.mxu0 %v4159
      %4262 = vmatprep.subr.mxu0 0.0
      %4263 = vmatpush1.msra.mxu0 %v4161
      %4264 = vmatprep.subr.mxu0 0.0
      %4265 = vmatpush1.msra.mxu0 0.0
      %4266 = vmatprep.subr.mxu0 0.0
      %4267 = vmatpush1.msra.mxu0 0.0
      %4268 = vmatprep.subr.mxu0 0.0
      %4269 = vmatpush1.msra.mxu0 0.0
      %4270 = vmatprep.subr.mxu0 0.0
      %4271 = vmatpush1.msra.mxu0 0.0
      %4272 = vmatprep.subr.mxu0 0.0
      %4273 = vmatpush1.msra.mxu0 0.0
      %4274 = vmatprep.subr.mxu0 0.0
      %4275 = vmatpush1.msra.mxu0 0.0
      %4276 = vmatprep.subr.mxu0 0.0
      %4277 = vmatpush1.msra.mxu0 0.0
      %4278 = vmatprep.subr.mxu0 0.0
      %4279 = vmatpush1.msra.mxu0 0.0
      %4280 = vmatprep.subr.mxu0 0.0
      %4281 = vmatpush1.msra.mxu0 0.0
      %4282 = vmatprep.subr.mxu0 0.0
      %4283 = vmatpush1.msra.mxu0 0.0
      %4284 = vmatprep.subr.mxu0 0.0
      %4285 = vmatpush1.msra.mxu0 0.0
      %4286 = vmatprep.subr.mxu0 0.0
      %4287 = vmatpush1.msra.mxu0 0.0
      %4288 = vmatprep.subr.mxu0 0.0
      %4289 = vmatpush1.msra.mxu0 0.0
      %4290 = vmatprep.subr.mxu0 0.0
      %4291 = vmatpush1.msra.mxu0 0.0
      %4292 = vmatprep.subr.mxu0 0.0
      %4293 = vmatpush1.msra.mxu0 0.0
      %4294 = vmatprep.subr.mxu0 0.0
      %4295 = vmatpush1.msra.mxu0 0.0
      %4296 = vmatprep.subr.mxu0 0.0
      %4297 = vmatpush1.msra.mxu0 0.0
      %4298 = vmatprep.subr.mxu0 0.0
      %4299 = vmatpush1.msra.mxu0 0.0
      %4300 = vmatprep.subr.mxu0 0.0
      %4301 = vmatpush1.msra.mxu0 0.0
      %4302 = vmatprep.subr.mxu0 0.0
      %4303 = vmatpush1.msra.mxu0 0.0
      %4304 = vmatprep.subr.mxu0 0.0
      %4305 = vmatpush1.msra.mxu0 0.0
      %4306 = vmatprep.subr.mxu0 0.0
      %4307 = vmatpush1.msra.mxu0 0.0
      %4308 = vmatprep.subr.mxu0 0.0
      %4309 = vmatpush1.msra.mxu0 0.0
      %4310 = vmatprep.subr.mxu0 0.0
      %4311 = vmatpush1.msra.mxu0 0.0
      %4312 = vmatprep.subr.mxu0 0.0
      %4313 = vmatpush1.msra.mxu0 0.0
      %4314 = vmatprep.subr.mxu0 0.0
      %4315 = vmatpush1.msra.mxu0 0.0
      %4316 = vmatprep.subr.mxu0 0.0
      %4317 = vmatpush1.msra.mxu0 0.0
      %4318 = vmatprep.subr.mxu0 0.0
      %4319 = vmatpush1.msra.mxu0 0.0
      %4320 = vmatprep.subr.mxu0 0.0
      %4321 = vmatpush1.msra.mxu0 0.0
      %4322 = vmatprep.subr.mxu0 0.0
      %4323 = vmatpush1.msra.mxu0 0.0
      %4324 = vmatprep.mubr.f32.mxu0 0.0
      %4325 = vmatmul.mubr.f32.gmra.mrb[0].mxu0 %v4165
      %v4326 = vpop.f32.mrb[0].mxu0
      %v4327 = vadd.f32 0.0, %v4326
      %v4328 = vpop.f32.mrb[0].mxu0
      %4329 = vmatprep.mubr.f32.mxu0 0.0
      %4330 = vmatmul.mubr.f32.gmra.mrb[0].mxu0 %v4168
      %v4331 = vpop.f32.mrb[0].mxu0
      %v4332 = vadd.f32 0.0, %v4331
      %v4333 = vpop.f32.mrb[0].mxu0
      %4334 = vmatprep.mubr.f32.mxu0 0.0
      %4335 = vmatmul.mubr.f32.gmra.mrb[0].mxu0 %v4171
      %v4336 = vpop.f32.mrb[0].mxu0
      %v4337 = vadd.f32 0.0, %v4336
      %v4338 = vpop.f32.mrb[0].mxu0
      %4339 = vmatprep.mubr.f32.mxu0 0.0
      %4340 = vmatmul.mubr.f32.gmra.mrb[0].mxu0 %v4174
      %v4341 = vpop.f32.mrb[0].mxu0
      %v4342 = vadd.f32 0.0, %v4341
      %v4343 = vpop.f32.mrb[0].mxu0
      %4344 = vmatprep.mubr.f32.mxu0 0.0
      %4345 = vmatmul.mubr.f32.gmra.mrb[0].mxu0 %v4177
      %v4346 = vpop.f32.mrb[0].mxu0
      %v4347 = vadd.f32 0.0, %v4346
      %v4348 = vpop.f32.mrb[0].mxu0
      %4349 = vmatprep.mubr.f32.mxu0 0.0
      %4350 = vmatmul.mubr.f32.gmra.mrb[0].mxu0 %v4180
      %v4351 = vpop.f32.mrb[0].mxu0
      %v4352 = vadd.f32 0.0, %v4351
      %v4353 = vpop.f32.mrb[0].mxu0
      %4354 = vmatprep.mubr.f32.mxu0 0.0
      %4355 = vmatmul.mubr.f32.gmra.mrb[0].mxu0 %v4183
      %v4356 = vpop.f32.mrb[0].mxu0
      %v4357 = vadd.f32 0.0, %v4356
      %v4358 = vpop.f32.mrb[0].mxu0
      %4359 = vmatprep.mubr.f32.mxu0 0.0
      %4360 = vmatmul.mubr.f32.gmra.mrb[0].mxu0 %v4186
      %v4361 = vpop.f32.mrb[0].mxu0
      %v4362 = vadd.f32 0.0, %v4361
      %v4363 = vpop.f32.mrb[0].mxu0
      %4364 = vmatprep.mubr.f32.mxu0 0.0
      %4365 = vmatmul.mubr.f32.gmra.mrb[0].mxu0 %v4189
      %v4366 = vpop.f32.mrb[0].mxu0
      %v4367 = vadd.f32 0.0, %v4366
      %v4368 = vpop.f32.mrb[0].mxu0
      %4369 = vmatprep.mubr.f32.mxu0 0.0
      %4370 = vmatmul.mubr.f32.gmra.mrb[0].mxu0 %v4192
      %v4371 = vpop.f32.mrb[0].mxu0
      %v4372 = vadd.f32 0.0, %v4371
      %v4373 = vpop.f32.mrb[0].mxu0
      %4374 = vmatprep.mubr.f32.mxu0 0.0
      %4375 = vmatmul.mubr.f32.gmra.mrb[0].mxu0 %v4195
      %v4376 = vpop.f32.mrb[0].mxu0
      %v4377 = vadd.f32 0.0, %v4376
      %v4378 = vpop.f32.mrb[0].mxu0
      %4379 = vmatprep.mubr.f32.mxu0 0.0
      %4380 = vmatmul.mubr.f32.gmra.mrb[0].mxu0 %v4198
      %v4381 = vpop.f32.mrb[0].mxu0
      %v4382 = vadd.f32 0.0, %v4381
      %v4383 = vpop.f32.mrb[0].mxu0
      %4384 = vmatprep.mubr.f32.mxu0 0.0
      %4385 = vmatmul.mubr.f32.gmra.mrb[0].mxu0 %v4201
      %v4386 = vpop.f32.mrb[0].mxu0
      %v4387 = vadd.f32 0.0, %v4386
      %v4388 = vpop.f32.mrb[0].mxu0
      %4389 = vmatprep.mubr.f32.mxu0 0.0
      %4390 = vmatmul.mubr.f32.gmra.mrb[0].mxu0 %v4204
      %v4391 = vpop.f32.mrb[0].mxu0
      %v4392 = vadd.f32 0.0, %v4391
      %v4393 = vpop.f32.mrb[0].mxu0
      %4394 = vmatprep.mubr.f32.mxu0 0.0
      %4395 = vmatmul.mubr.f32.gmra.mrb[0].mxu0 %v4207
      %v4396 = vpop.f32.mrb[0].mxu0
      %v4397 = vadd.f32 0.0, %v4396
      %v4398 = vpop.f32.mrb[0].mxu0
      %4399 = vmatprep.mubr.f32.mxu0 0.0
      %4400 = vmatmul.mubr.f32.gmra.mrb[0].mxu0 %v4210
      %v4401 = vpop.f32.mrb[0].mxu0
      %v4402 = vadd.f32 0.0, %v4401
      %v4403 = vpop.f32.mrb[0].mxu0
      %4404 = vmatprep.mubr.f32.mxu0 0.0
      %4405 = vmatmul.mubr.f32.gmra.mrb[0].mxu0 %v4213
      %v4406 = vpop.f32.mrb[0].mxu0
      %v4407 = vadd.f32 0.0, %v4406
      %v4408 = vpop.f32.mrb[0].mxu0
      %4409 = vmatprep.mubr.f32.mxu0 0.0
      %4410 = vmatmul.mubr.f32.gmra.mrb[0].mxu0 %v4216
      %v4411 = vpop.f32.mrb[0].mxu0
      %v4412 = vadd.f32 0.0, %v4411
      %v4413 = vpop.f32.mrb[0].mxu0
      %4414 = vmatprep.mubr.f32.mxu0 0.0
      %4415 = vmatmul.mubr.f32.gmra.mrb[0].mxu0 %v4219
      %v4416 = vpop.f32.mrb[0].mxu0
      %v4417 = vadd.f32 0.0, %v4416
      %v4418 = vpop.f32.mrb[0].mxu0
      %4419 = vmatprep.mubr.f32.mxu0 0.0
      %4420 = vmatmul.mubr.f32.gmra.mrb[0].mxu0 %v4222
      %v4421 = vpop.f32.mrb[0].mxu0
      %v4422 = vadd.f32 0.0, %v4421
      %v4423 = vpop.f32.mrb[0].mxu0
      %4424 = vmatprep.mubr.f32.mxu0 0.0
      %4425 = vmatmul.mubr.f32.gmra.mrb[0].mxu0 %v4225
      %v4426 = vpop.f32.mrb[0].mxu0
      %v4427 = vadd.f32 0.0, %v4426
      %v4428 = vpop.f32.mrb[0].mxu0
      %4429 = vmatprep.mubr.f32.mxu0 0.0
      %4430 = vmatmul.mubr.f32.gmra.mrb[0].mxu0 %v4228
      %v4431 = vpop.f32.mrb[0].mxu0
      %v4432 = vadd.f32 0.0, %v4431
      %v4433 = vpop.f32.mrb[0].mxu0
      %4434 = vmatprep.mubr.f32.mxu0 0.0
      %4435 = vmatmul.mubr.f32.gmra.mrb[0].mxu0 %v4231
      %v4436 = vpop.f32.mrb[0].mxu0
      %v4437 = vadd.f32 0.0, %v4436
      %v4438 = vpop.f32.mrb[0].mxu0
      %4439 = vmatprep.mubr.f32.mxu0 0.0
      %4440 = vmatmul.mubr.f32.gmra.mrb[0].mxu0 %v4234
      %v4441 = vpop.f32.mrb[0].mxu0
      %v4442 = vadd.f32 0.0, %v4441
      %v4443 = vpop.f32.mrb[0].mxu0
      %4444 = vmatprep.mubr.f32.mxu0 0.0
      %4445 = vmatmul.mubr.f32.gmra.mrb[0].mxu0 %v4237
      %v4446 = vpop.f32.mrb[0].mxu0
      %v4447 = vadd.f32 0.0, %v4446
      %v4448 = vpop.f32.mrb[0].mxu0
      %4449 = vmatprep.mubr.f32.mxu0 0.0
      %4450 = vmatmul.mubr.f32.gmra.mrb[0].mxu0 %v4240
      %v4451 = vpop.f32.mrb[0].mxu0
      %v4452 = vadd.f32 0.0, %v4451
      %v4453 = vpop.f32.mrb[0].mxu0
      %4454 = vmatprep.mubr.f32.mxu0 0.0
      %4455 = vmatmul.mubr.f32.gmra.mrb[0].mxu0 %v4243
      %v4456 = vpop.f32.mrb[0].mxu0
      %v4457 = vadd.f32 0.0, %v4456
      %v4458 = vpop.f32.mrb[0].mxu0
      %4459 = vmatprep.mubr.f32.mxu0 0.0
      %4460 = vmatmul.mubr.f32.gmra.mrb[0].mxu0 %v4246
      %v4461 = vpop.f32.mrb[0].mxu0
      %v4462 = vadd.f32 0.0, %v4461
      %v4463 = vpop.f32.mrb[0].mxu0
      %4464 = vmatprep.mubr.f32.mxu0 0.0
      %4465 = vmatmul.mubr.f32.gmra.mrb[0].mxu0 %v4249
      %v4466 = vpop.f32.mrb[0].mxu0
      %v4467 = vadd.f32 0.0, %v4466
      %v4468 = vpop.f32.mrb[0].mxu0
      %4469 = vmatprep.mubr.f32.mxu0 0.0
      %4470 = vmatmul.mubr.f32.gmra.mrb[0].mxu0 %v4252
      %v4471 = vpop.f32.mrb[0].mxu0
      %v4472 = vadd.f32 0.0, %v4471
      %v4473 = vpop.f32.mrb[0].mxu0
      %4474 = vmatprep.mubr.f32.mxu0 0.0
      %4475 = vmatmul.mubr.f32.gmra.mrb[0].mxu0 %v4255
      %v4476 = vpop.f32.mrb[0].mxu0
      %v4477 = vadd.f32 0.0, %v4476
      %v4478 = vpop.f32.mrb[0].mxu0
      %4479 = vmatprep.mubr.f32.mxu0 0.0
      %4480 = vmatmul.mubr.f32.gmra.mrb[0].mxu0 %v4258
      %v4481 = vpop.f32.mrb[0].mxu0
      %v4482 = vadd.f32 0.0, %v4481
      %v4483 = vpop.f32.mrb[0].mxu0
      %4484 = vdwg.mxu0
      %v4486 = vsel %vm370, %v4327, 0
      %v4489 = vsel %vm370, %v4332, 0
      %v4492 = vsel %vm370, %v4337, 0
      %v4495 = vsel %vm370, %v4342, 0
      %v4498 = vsel %vm370, %v4347, 0
      %v4501 = vsel %vm370, %v4352, 0
      %v4504 = vsel %vm370, %v4357, 0
      %v4507 = vsel %vm370, %v4362, 0
      %v4510 = vsel %vm370, %v4367, 0
      %v4513 = vsel %vm370, %v4372, 0
      %v4516 = vsel %vm370, %v4377, 0
      %v4519 = vsel %vm370, %v4382, 0
      %v4522 = vsel %vm370, %v4387, 0
      %v4525 = vsel %vm370, %v4392, 0
      %v4528 = vsel %vm370, %v4397, 0
      %v4531 = vsel %vm370, %v4402, 0
      %v4534 = vsel %vm370, %v4407, 0
      %v4537 = vsel %vm370, %v4412, 0
      %v4540 = vsel %vm370, %v4417, 0
      %v4543 = vsel %vm370, %v4422, 0
      %v4546 = vsel %vm370, %v4427, 0
      %v4549 = vsel %vm370, %v4432, 0
      %v4552 = vsel %vm370, %v4437, 0
      %v4555 = vsel %vm370, %v4442, 0
      %v4558 = vsel %vm370, %v4447, 0
      %v4561 = vsel %vm370, %v4452, 0
      %v4564 = vsel %vm370, %v4457, 0
      %v4567 = vsel %vm370, %v4462, 0
      %v4570 = vsel %vm370, %v4467, 0
      %v4573 = vsel %vm370, %v4472, 0
      %v4576 = vsel %vm370, %v4477, 0
      %v4579 = vsel %vm370, %v4482, 0
      %4581 = vmatprep.subr.mxu0 0.0
      %4582 = vmatpush1.msra.mxu0 %v328
      %4583 = vmatprep.subr.mxu0 0.0
      %4584 = vmatpush1.msra.mxu0 0.0
      %4585 = vmatprep.subr.mxu0 0.0
      %4586 = vmatpush1.msra.mxu0 0.0
      %4587 = vmatprep.subr.mxu0 0.0
      %4588 = vmatpush1.msra.mxu0 0.0
      %4589 = vmatprep.subr.mxu0 0.0
      %4590 = vmatpush1.msra.mxu0 0.0
      %4591 = vmatprep.subr.mxu0 0.0
      %4592 = vmatpush1.msra.mxu0 0.0
      %4593 = vmatprep.subr.mxu0 0.0
      %4594 = vmatpush1.msra.mxu0 0.0
      %4595 = vmatprep.subr.mxu0 0.0
      %4596 = vmatpush1.msra.mxu0 0.0
      %4597 = vmatprep.subr.mxu0 0.0
      %4598 = vmatpush1.msra.mxu0 0.0
      %4599 = vmatprep.subr.mxu0 0.0
      %4600 = vmatpush1.msra.mxu0 0.0
      %4601 = vmatprep.subr.mxu0 0.0
      %4602 = vmatpush1.msra.mxu0 0.0
      %4603 = vmatprep.subr.mxu0 0.0
      %4604 = vmatpush1.msra.mxu0 0.0
      %4605 = vmatprep.subr.mxu0 0.0
      %4606 = vmatpush1.msra.mxu0 0.0
      %4607 = vmatprep.subr.mxu0 0.0
      %4608 = vmatpush1.msra.mxu0 0.0
      %4609 = vmatprep.subr.mxu0 0.0
      %4610 = vmatpush1.msra.mxu0 0.0
      %4611 = vmatprep.subr.mxu0 0.0
      %4612 = vmatpush1.msra.mxu0 0.0
      %4613 = vmatprep.subr.mxu0 0.0
      %4614 = vmatpush1.msra.mxu0 0.0
      %4615 = vmatprep.subr.mxu0 0.0
      %4616 = vmatpush1.msra.mxu0 0.0
      %4617 = vmatprep.subr.mxu0 0.0
      %4618 = vmatpush1.msra.mxu0 0.0
      %4619 = vmatprep.subr.mxu0 0.0
      %4620 = vmatpush1.msra.mxu0 0.0
      %4621 = vmatprep.subr.mxu0 0.0
      %4622 = vmatpush1.msra.mxu0 0.0
      %4623 = vmatprep.subr.mxu0 0.0
      %4624 = vmatpush1.msra.mxu0 0.0
      %4625 = vmatprep.subr.mxu0 0.0
      %4626 = vmatpush1.msra.mxu0 0.0
      %4627 = vmatprep.subr.mxu0 0.0
      %4628 = vmatpush1.msra.mxu0 0.0
      %4629 = vmatprep.subr.mxu0 0.0
      %4630 = vmatpush1.msra.mxu0 0.0
      %4631 = vmatprep.subr.mxu0 0.0
      %4632 = vmatpush1.msra.mxu0 0.0
      %4633 = vmatprep.subr.mxu0 0.0
      %4634 = vmatpush1.msra.mxu0 0.0
      %4635 = vmatprep.subr.mxu0 0.0
      %4636 = vmatpush1.msra.mxu0 0.0
      %4637 = vmatprep.subr.mxu0 0.0
      %4638 = vmatpush1.msra.mxu0 0.0
      %4639 = vmatprep.subr.mxu0 0.0
      %4640 = vmatpush1.msra.mxu0 0.0
      %4641 = vmatprep.subr.mxu0 0.0
      %4642 = vmatpush1.msra.mxu0 0.0
      %4643 = vmatprep.subr.mxu0 0.0
      %4644 = vmatpush1.msra.mxu0 0.0
      %4645 = vmatprep.mubr.f32.mxu0 0.0
      %4646 = vmatmul.mubr.f32.gmra.mrb[0].mxu0 %v4486
      %v4647 = vpop.f32.mrb[0].mxu0
      %v4648 = vadd.f32 0.0, %v4647
      %v4649 = vpop.f32.mrb[0].mxu0
      %4650 = vmatprep.mubr.f32.mxu0 0.0
      %4651 = vmatmul.mubr.f32.gmra.mrb[0].mxu0 %v4489
      %v4652 = vpop.f32.mrb[0].mxu0
      %v4653 = vadd.f32 0.0, %v4652
      %v4654 = vpop.f32.mrb[0].mxu0
      %4655 = vmatprep.mubr.f32.mxu0 0.0
      %4656 = vmatmul.mubr.f32.gmra.mrb[0].mxu0 %v4492
      %v4657 = vpop.f32.mrb[0].mxu0
      %v4658 = vadd.f32 0.0, %v4657
      %v4659 = vpop.f32.mrb[0].mxu0
      %4660 = vmatprep.mubr.f32.mxu0 0.0
      %4661 = vmatmul.mubr.f32.gmra.mrb[0].mxu0 %v4495
      %v4662 = vpop.f32.mrb[0].mxu0
      %v4663 = vadd.f32 0.0, %v4662
      %v4664 = vpop.f32.mrb[0].mxu0
      %4665 = vmatprep.mubr.f32.mxu0 0.0
      %4666 = vmatmul.mubr.f32.gmra.mrb[0].mxu0 %v4498
      %v4667 = vpop.f32.mrb[0].mxu0
      %v4668 = vadd.f32 0.0, %v4667
      %v4669 = vpop.f32.mrb[0].mxu0
      %4670 = vmatprep.mubr.f32.mxu0 0.0
      %4671 = vmatmul.mubr.f32.gmra.mrb[0].mxu0 %v4501
      %v4672 = vpop.f32.mrb[0].mxu0
      %v4673 = vadd.f32 0.0, %v4672
      %v4674 = vpop.f32.mrb[0].mxu0
      %4675 = vmatprep.mubr.f32.mxu0 0.0
      %4676 = vmatmul.mubr.f32.gmra.mrb[0].mxu0 %v4504
      %v4677 = vpop.f32.mrb[0].mxu0
      %v4678 = vadd.f32 0.0, %v4677
      %v4679 = vpop.f32.mrb[0].mxu0
      %4680 = vmatprep.mubr.f32.mxu0 0.0
      %4681 = vmatmul.mubr.f32.gmra.mrb[0].mxu0 %v4507
      %v4682 = vpop.f32.mrb[0].mxu0
      %v4683 = vadd.f32 0.0, %v4682
      %v4684 = vpop.f32.mrb[0].mxu0
      %4685 = vmatprep.mubr.f32.mxu0 0.0
      %4686 = vmatmul.mubr.f32.gmra.mrb[0].mxu0 %v4510
      %v4687 = vpop.f32.mrb[0].mxu0
      %v4688 = vadd.f32 0.0, %v4687
      %v4689 = vpop.f32.mrb[0].mxu0
      %4690 = vmatprep.mubr.f32.mxu0 0.0
      %4691 = vmatmul.mubr.f32.gmra.mrb[0].mxu0 %v4513
      %v4692 = vpop.f32.mrb[0].mxu0
      %v4693 = vadd.f32 0.0, %v4692
      %v4694 = vpop.f32.mrb[0].mxu0
      %4695 = vmatprep.mubr.f32.mxu0 0.0
      %4696 = vmatmul.mubr.f32.gmra.mrb[0].mxu0 %v4516
      %v4697 = vpop.f32.mrb[0].mxu0
      %v4698 = vadd.f32 0.0, %v4697
      %v4699 = vpop.f32.mrb[0].mxu0
      %4700 = vmatprep.mubr.f32.mxu0 0.0
      %4701 = vmatmul.mubr.f32.gmra.mrb[0].mxu0 %v4519
      %v4702 = vpop.f32.mrb[0].mxu0
      %v4703 = vadd.f32 0.0, %v4702
      %v4704 = vpop.f32.mrb[0].mxu0
      %4705 = vmatprep.mubr.f32.mxu0 0.0
      %4706 = vmatmul.mubr.f32.gmra.mrb[0].mxu0 %v4522
      %v4707 = vpop.f32.mrb[0].mxu0
      %v4708 = vadd.f32 0.0, %v4707
      %v4709 = vpop.f32.mrb[0].mxu0
      %4710 = vmatprep.mubr.f32.mxu0 0.0
      %4711 = vmatmul.mubr.f32.gmra.mrb[0].mxu0 %v4525
      %v4712 = vpop.f32.mrb[0].mxu0
      %v4713 = vadd.f32 0.0, %v4712
      %v4714 = vpop.f32.mrb[0].mxu0
      %4715 = vmatprep.mubr.f32.mxu0 0.0
      %4716 = vmatmul.mubr.f32.gmra.mrb[0].mxu0 %v4528
      %v4717 = vpop.f32.mrb[0].mxu0
      %v4718 = vadd.f32 0.0, %v4717
      %v4719 = vpop.f32.mrb[0].mxu0
      %4720 = vmatprep.mubr.f32.mxu0 0.0
      %4721 = vmatmul.mubr.f32.gmra.mrb[0].mxu0 %v4531
      %v4722 = vpop.f32.mrb[0].mxu0
      %v4723 = vadd.f32 0.0, %v4722
      %v4724 = vpop.f32.mrb[0].mxu0
      %4725 = vmatprep.mubr.f32.mxu0 0.0
      %4726 = vmatmul.mubr.f32.gmra.mrb[0].mxu0 %v4534
      %v4727 = vpop.f32.mrb[0].mxu0
      %v4728 = vadd.f32 0.0, %v4727
      %v4729 = vpop.f32.mrb[0].mxu0
      %4730 = vmatprep.mubr.f32.mxu0 0.0
      %4731 = vmatmul.mubr.f32.gmra.mrb[0].mxu0 %v4537
      %v4732 = vpop.f32.mrb[0].mxu0
      %v4733 = vadd.f32 0.0, %v4732
      %v4734 = vpop.f32.mrb[0].mxu0
      %4735 = vmatprep.mubr.f32.mxu0 0.0
      %4736 = vmatmul.mubr.f32.gmra.mrb[0].mxu0 %v4540
      %v4737 = vpop.f32.mrb[0].mxu0
      %v4738 = vadd.f32 0.0, %v4737
      %v4739 = vpop.f32.mrb[0].mxu0
      %4740 = vmatprep.mubr.f32.mxu0 0.0
      %4741 = vmatmul.mubr.f32.gmra.mrb[0].mxu0 %v4543
      %v4742 = vpop.f32.mrb[0].mxu0
      %v4743 = vadd.f32 0.0, %v4742
      %v4744 = vpop.f32.mrb[0].mxu0
      %4745 = vmatprep.mubr.f32.mxu0 0.0
      %4746 = vmatmul.mubr.f32.gmra.mrb[0].mxu0 %v4546
      %v4747 = vpop.f32.mrb[0].mxu0
      %v4748 = vadd.f32 0.0, %v4747
      %v4749 = vpop.f32.mrb[0].mxu0
      %4750 = vmatprep.mubr.f32.mxu0 0.0
      %4751 = vmatmul.mubr.f32.gmra.mrb[0].mxu0 %v4549
      %v4752 = vpop.f32.mrb[0].mxu0
      %v4753 = vadd.f32 0.0, %v4752
      %v4754 = vpop.f32.mrb[0].mxu0
      %4755 = vmatprep.mubr.f32.mxu0 0.0
      %4756 = vmatmul.mubr.f32.gmra.mrb[0].mxu0 %v4552
      %v4757 = vpop.f32.mrb[0].mxu0
      %v4758 = vadd.f32 0.0, %v4757
      %v4759 = vpop.f32.mrb[0].mxu0
      %4760 = vmatprep.mubr.f32.mxu0 0.0
      %4761 = vmatmul.mubr.f32.gmra.mrb[0].mxu0 %v4555
      %v4762 = vpop.f32.mrb[0].mxu0
      %v4763 = vadd.f32 0.0, %v4762
      %v4764 = vpop.f32.mrb[0].mxu0
      %4765 = vmatprep.mubr.f32.mxu0 0.0
      %4766 = vmatmul.mubr.f32.gmra.mrb[0].mxu0 %v4558
      %v4767 = vpop.f32.mrb[0].mxu0
      %v4768 = vadd.f32 0.0, %v4767
      %v4769 = vpop.f32.mrb[0].mxu0
      %4770 = vmatprep.mubr.f32.mxu0 0.0
      %4771 = vmatmul.mubr.f32.gmra.mrb[0].mxu0 %v4561
      %v4772 = vpop.f32.mrb[0].mxu0
      %v4773 = vadd.f32 0.0, %v4772
      %v4774 = vpop.f32.mrb[0].mxu0
      %4775 = vmatprep.mubr.f32.mxu0 0.0
      %4776 = vmatmul.mubr.f32.gmra.mrb[0].mxu0 %v4564
      %v4777 = vpop.f32.mrb[0].mxu0
      %v4778 = vadd.f32 0.0, %v4777
      %v4779 = vpop.f32.mrb[0].mxu0
      %4780 = vmatprep.mubr.f32.mxu0 0.0
      %4781 = vmatmul.mubr.f32.gmra.mrb[0].mxu0 %v4567
      %v4782 = vpop.f32.mrb[0].mxu0
      %v4783 = vadd.f32 0.0, %v4782
      %v4784 = vpop.f32.mrb[0].mxu0
      %4785 = vmatprep.mubr.f32.mxu0 0.0
      %4786 = vmatmul.mubr.f32.gmra.mrb[0].mxu0 %v4570
      %v4787 = vpop.f32.mrb[0].mxu0
      %v4788 = vadd.f32 0.0, %v4787
      %v4789 = vpop.f32.mrb[0].mxu0
      %4790 = vmatprep.mubr.f32.mxu0 0.0
      %4791 = vmatmul.mubr.f32.gmra.mrb[0].mxu0 %v4573
      %v4792 = vpop.f32.mrb[0].mxu0
      %v4793 = vadd.f32 0.0, %v4792
      %v4794 = vpop.f32.mrb[0].mxu0
      %4795 = vmatprep.mubr.f32.mxu0 0.0
      %4796 = vmatmul.mubr.f32.gmra.mrb[0].mxu0 %v4576
      %v4797 = vpop.f32.mrb[0].mxu0
      %v4798 = vadd.f32 0.0, %v4797
      %v4799 = vpop.f32.mrb[0].mxu0
      %4800 = vmatprep.mubr.f32.mxu0 0.0
      %4801 = vmatmul.mubr.f32.gmra.mrb[0].mxu0 %v4579
      %v4802 = vpop.f32.mrb[0].mxu0
      %v4803 = vadd.f32 0.0, %v4802
      %v4804 = vpop.f32.mrb[0].mxu0
      %4805 = vdwg.mxu0
      %v4806 = vadd.f32 %v3413, %v4648
      %v4807 = vadd.f32 %v3414, %v4653
      %v4808 = vadd.f32 %v3415, %v4658
      %v4809 = vadd.f32 %v3416, %v4663
      %v4810 = vadd.f32 %v3417, %v4668
      %v4811 = vadd.f32 %v3418, %v4673
      %v4812 = vadd.f32 %v3419, %v4678
      %v4813 = vadd.f32 %v3420, %v4683
      %v4814 = vadd.f32 %v3421, %v4688
      %v4815 = vadd.f32 %v3422, %v4693
      %v4816 = vadd.f32 %v3423, %v4698
      %v4817 = vadd.f32 %v3424, %v4703
      %v4818 = vadd.f32 %v3425, %v4708
      %v4819 = vadd.f32 %v3426, %v4713
      %v4820 = vadd.f32 %v3427, %v4718
      %v4821 = vadd.f32 %v3428, %v4723
      %v4822 = vadd.f32 %v3429, %v4728
      %v4823 = vadd.f32 %v3430, %v4733
      %v4824 = vadd.f32 %v3431, %v4738
      %v4825 = vadd.f32 %v3432, %v4743
      %v4826 = vadd.f32 %v3433, %v4748
      %v4827 = vadd.f32 %v3434, %v4753
      %v4828 = vadd.f32 %v3435, %v4758
      %v4829 = vadd.f32 %v3436, %v4763
      %v4830 = vadd.f32 %v3437, %v4768
      %v4831 = vadd.f32 %v3438, %v4773
      %v4832 = vadd.f32 %v3439, %v4778
      %v4833 = vadd.f32 %v3440, %v4783
      %v4834 = vadd.f32 %v3441, %v4788
      %v4835 = vadd.f32 %v3442, %v4793
      %v4836 = vadd.f32 %v3443, %v4798
      %v4837 = vadd.f32 %v3444, %v4803
      %4838 = vrot.lane.b32.xlu0 %v292, 104
      %v4839 = vpop.permute.xlu0 %4838
      %4840 = vrot.lane.b32.xlu0 %v293, 104
      %v4841 = vpop.permute.xlu0 %4840
      %4842 = vrot.lane.b32.xlu0 %v294, 104
      %v4843 = vpop.permute.xlu0 %4842
      %4844 = vrot.lane.b32.xlu0 %v295, 104
      %v4845 = vpop.permute.xlu0 %4844
      %4846 = vrot.lane.b32.xlu0 %v296, 104
      %v4847 = vpop.permute.xlu0 %4846
      %4848 = vrot.lane.b32.xlu0 %v297, 104
      %v4849 = vpop.permute.xlu0 %4848
      %4850 = vrot.lane.b32.xlu0 %v298, 104
      %v4851 = vpop.permute.xlu0 %4850
      %4852 = vrot.lane.b32.xlu0 %v299, 104
      %v4853 = vpop.permute.xlu0 %4852
      %4854 = vrot.lane.b32.xlu0 %v300, 104
      %v4855 = vpop.permute.xlu0 %4854
      %4856 = vrot.lane.b32.xlu0 %v301, 104
      %v4857 = vpop.permute.xlu0 %4856
      %4858 = vrot.lane.b32.xlu0 %v302, 104
      %v4859 = vpop.permute.xlu0 %4858
      %4860 = vrot.lane.b32.xlu0 %v303, 104
      %v4861 = vpop.permute.xlu0 %4860
      %4862 = vrot.lane.b32.xlu0 %v304, 104
      %v4863 = vpop.permute.xlu0 %4862
      %4864 = vrot.lane.b32.xlu0 %v305, 104
      %v4865 = vpop.permute.xlu0 %4864
      %4866 = vrot.lane.b32.xlu0 %v306, 104
      %v4867 = vpop.permute.xlu0 %4866
      %4868 = vrot.lane.b32.xlu0 %v307, 104
      %v4869 = vpop.permute.xlu0 %4868
      %4870 = vrot.lane.b32.xlu0 %v308, 104
      %v4871 = vpop.permute.xlu0 %4870
      %4872 = vrot.lane.b32.xlu0 %v309, 104
      %v4873 = vpop.permute.xlu0 %4872
      %4874 = vrot.lane.b32.xlu0 %v310, 104
      %v4875 = vpop.permute.xlu0 %4874
      %4876 = vrot.lane.b32.xlu0 %v311, 104
      %v4877 = vpop.permute.xlu0 %4876
      %4878 = vrot.lane.b32.xlu0 %v312, 104
      %v4879 = vpop.permute.xlu0 %4878
      %4880 = vrot.lane.b32.xlu0 %v313, 104
      %v4881 = vpop.permute.xlu0 %4880
      %4882 = vrot.lane.b32.xlu0 %v314, 104
      %v4883 = vpop.permute.xlu0 %4882
      %4884 = vrot.lane.b32.xlu0 %v315, 104
      %v4885 = vpop.permute.xlu0 %4884
      %4886 = vrot.lane.b32.xlu0 %v316, 104
      %v4887 = vpop.permute.xlu0 %4886
      %4888 = vrot.lane.b32.xlu0 %v317, 104
      %v4889 = vpop.permute.xlu0 %4888
      %4890 = vrot.lane.b32.xlu0 %v318, 104
      %v4891 = vpop.permute.xlu0 %4890
      %4892 = vrot.lane.b32.xlu0 %v319, 104
      %v4893 = vpop.permute.xlu0 %4892
      %4894 = vrot.lane.b32.xlu0 %v320, 104
      %v4895 = vpop.permute.xlu0 %4894
      %4896 = vrot.lane.b32.xlu0 %v321, 104
      %v4897 = vpop.permute.xlu0 %4896
      %4898 = vrot.lane.b32.xlu0 %v322, 104
      %v4899 = vpop.permute.xlu0 %4898
      %4900 = vrot.lane.b32.xlu0 %v323, 104
      %v4901 = vpop.permute.xlu0 %4900
      %4902 = vrot.lane.b32.xlu0 %v324, 104
      %v4903 = vpop.permute.xlu0 %4902
      %4904 = vrot.lane.b32.xlu0 %v325, 104
      %v4905 = vpop.permute.xlu0 %4904
      %v4906 = vsel %vm370, %v4839, 0
      %v4908 = vsel %vm370, %v4841, 0
      %v4910 = vsel %vm370, %v4843, 0
      %v4912 = vsel %vm370, %v4845, 0
      %v4914 = vsel %vm370, %v4847, 0
      %v4916 = vsel %vm370, %v4849, 0
      %v4918 = vsel %vm370, %v4851, 0
      %v4920 = vsel %vm370, %v4853, 0
      %v4922 = vsel %vm370, %v4855, 0
      %v4924 = vsel %vm370, %v4857, 0
      %v4926 = vsel %vm370, %v4859, 0
      %v4928 = vsel %vm370, %v4861, 0
      %v4930 = vsel %vm370, %v4863, 0
      %v4932 = vsel %vm370, %v4865, 0
      %v4934 = vsel %vm370, %v4867, 0
      %v4936 = vsel %vm370, %v4869, 0
      %v4938 = vsel %vm370, %v4871, 0
      %v4940 = vsel %vm370, %v4873, 0
      %v4942 = vsel %vm370, %v4875, 0
      %v4944 = vsel %vm370, %v4877, 0
      %v4946 = vsel %vm370, %v4879, 0
      %v4948 = vsel %vm370, %v4881, 0
      %v4950 = vsel %vm370, %v4883, 0
      %v4952 = vsel %vm370, %v4885, 0
      %v4954 = vsel %vm370, %v4887, 0
      %v4956 = vsel %vm370, %v4889, 0
      %v4958 = vsel %vm370, %v4891, 0
      %v4960 = vsel %vm370, %v4893, 0
      %v4962 = vsel %vm370, %v4895, 0
      %v4964 = vsel %vm370, %v4897, 0
      %v4966 = vsel %vm370, %v4899, 0
      %v4968 = vsel %vm370, %v4901, 0
      %v4970 = vsel %vm370, %v4903, 0
      %v4972 = vsel %vm370, %v4905, 0
      %4974 = vmatprep.subr.mxu0 0.0
      %4975 = vmatpush1.xpose.msra.mxu0 %v4970
      %4976 = vmatprep.subr.mxu0 0.0
      %4977 = vmatpush1.xpose.msra.mxu0 %v4972
      %4978 = vmatprep.subr.mxu0 0.0
      %4979 = vmatpush1.xpose.msra.mxu0 0.0
      %4980 = vmatprep.subr.mxu0 0.0
      %4981 = vmatpush1.xpose.msra.mxu0 0.0
      %4982 = vmatprep.subr.mxu0 0.0
      %4983 = vmatpush1.xpose.msra.mxu0 0.0
      %4984 = vmatprep.subr.mxu0 0.0
      %4985 = vmatpush1.xpose.msra.mxu0 0.0
      %4986 = vmatprep.subr.mxu0 0.0
      %4987 = vmatpush1.xpose.msra.mxu0 0.0
      %4988 = vmatprep.subr.mxu0 0.0
      %4989 = vmatpush1.xpose.msra.mxu0 0.0
      %4990 = vmatprep.subr.mxu0 0.0
      %4991 = vmatpush1.xpose.msra.mxu0 0.0
      %4992 = vmatprep.subr.mxu0 0.0
      %4993 = vmatpush1.xpose.msra.mxu0 0.0
      %4994 = vmatprep.subr.mxu0 0.0
      %4995 = vmatpush1.xpose.msra.mxu0 0.0
      %4996 = vmatprep.subr.mxu0 0.0
      %4997 = vmatpush1.xpose.msra.mxu0 0.0
      %4998 = vmatprep.subr.mxu0 0.0
      %4999 = vmatpush1.xpose.msra.mxu0 0.0
      %5000 = vmatprep.subr.mxu0 0.0
      %5001 = vmatpush1.xpose.msra.mxu0 0.0
      %5002 = vmatprep.subr.mxu0 0.0
      %5003 = vmatpush1.xpose.msra.mxu0 0.0
      %5004 = vmatprep.subr.mxu0 0.0
      %5005 = vmatpush1.xpose.msra.mxu0 0.0
      %5006 = vmatprep.subr.mxu0 0.0
      %5007 = vmatpush1.xpose.msra.mxu0 0.0
      %5008 = vmatprep.subr.mxu0 0.0
      %5009 = vmatpush1.xpose.msra.mxu0 0.0
      %5010 = vmatprep.subr.mxu0 0.0
      %5011 = vmatpush1.xpose.msra.mxu0 0.0
      %5012 = vmatprep.subr.mxu0 0.0
      %5013 = vmatpush1.xpose.msra.mxu0 0.0
      %5014 = vmatprep.subr.mxu0 0.0
      %5015 = vmatpush1.xpose.msra.mxu0 0.0
      %5016 = vmatprep.subr.mxu0 0.0
      %5017 = vmatpush1.xpose.msra.mxu0 0.0
      %5018 = vmatprep.subr.mxu0 0.0
      %5019 = vmatpush1.xpose.msra.mxu0 0.0
      %5020 = vmatprep.subr.mxu0 0.0
      %5021 = vmatpush1.xpose.msra.mxu0 0.0
      %5022 = vmatprep.subr.mxu0 0.0
      %5023 = vmatpush1.xpose.msra.mxu0 0.0
      %5024 = vmatprep.subr.mxu0 0.0
      %5025 = vmatpush1.xpose.msra.mxu0 0.0
      %5026 = vmatprep.subr.mxu0 0.0
      %5027 = vmatpush1.xpose.msra.mxu0 0.0
      %5028 = vmatprep.subr.mxu0 0.0
      %5029 = vmatpush1.xpose.msra.mxu0 0.0
      %5030 = vmatprep.subr.mxu0 0.0
      %5031 = vmatpush1.xpose.msra.mxu0 0.0
      %5032 = vmatprep.subr.mxu0 0.0
      %5033 = vmatpush1.xpose.msra.mxu0 0.0
      %5034 = vmatprep.subr.mxu0 0.0
      %5035 = vmatpush1.xpose.msra.mxu0 0.0
      %5036 = vmatprep.subr.mxu0 0.0
      %5037 = vmatpush1.xpose.msra.mxu0 0.0
      %5038 = vmatprep.mubr.f32.mxu0 0.0
      %5039 = vmatmul.mubr.f32.gmra.mrb[0].mxu0 %v4906
      %v5040 = vpop.f32.mrb[0].mxu0
      %v5041 = vadd.f32 0.0, %v5040
      %v5042 = vpop.f32.mrb[0].mxu0
      %5043 = vmatprep.mubr.f32.mxu0 0.0
      %5044 = vmatmul.mubr.f32.gmra.mrb[0].mxu0 %v4908
      %v5045 = vpop.f32.mrb[0].mxu0
      %v5046 = vadd.f32 0.0, %v5045
      %v5047 = vpop.f32.mrb[0].mxu0
      %5048 = vmatprep.mubr.f32.mxu0 0.0
      %5049 = vmatmul.mubr.f32.gmra.mrb[0].mxu0 %v4910
      %v5050 = vpop.f32.mrb[0].mxu0
      %v5051 = vadd.f32 0.0, %v5050
      %v5052 = vpop.f32.mrb[0].mxu0
      %5053 = vmatprep.mubr.f32.mxu0 0.0
      %5054 = vmatmul.mubr.f32.gmra.mrb[0].mxu0 %v4912
      %v5055 = vpop.f32.mrb[0].mxu0
      %v5056 = vadd.f32 0.0, %v5055
      %v5057 = vpop.f32.mrb[0].mxu0
      %5058 = vmatprep.mubr.f32.mxu0 0.0
      %5059 = vmatmul.mubr.f32.gmra.mrb[0].mxu0 %v4914
      %v5060 = vpop.f32.mrb[0].mxu0
      %v5061 = vadd.f32 0.0, %v5060
      %v5062 = vpop.f32.mrb[0].mxu0
      %5063 = vmatprep.mubr.f32.mxu0 0.0
      %5064 = vmatmul.mubr.f32.gmra.mrb[0].mxu0 %v4916
      %v5065 = vpop.f32.mrb[0].mxu0
      %v5066 = vadd.f32 0.0, %v5065
      %v5067 = vpop.f32.mrb[0].mxu0
      %5068 = vmatprep.mubr.f32.mxu0 0.0
      %5069 = vmatmul.mubr.f32.gmra.mrb[0].mxu0 %v4918
      %v5070 = vpop.f32.mrb[0].mxu0
      %v5071 = vadd.f32 0.0, %v5070
      %v5072 = vpop.f32.mrb[0].mxu0
      %5073 = vmatprep.mubr.f32.mxu0 0.0
      %5074 = vmatmul.mubr.f32.gmra.mrb[0].mxu0 %v4920
      %v5075 = vpop.f32.mrb[0].mxu0
      %v5076 = vadd.f32 0.0, %v5075
      %v5077 = vpop.f32.mrb[0].mxu0
      %5078 = vmatprep.mubr.f32.mxu0 0.0
      %5079 = vmatmul.mubr.f32.gmra.mrb[0].mxu0 %v4922
      %v5080 = vpop.f32.mrb[0].mxu0
      %v5081 = vadd.f32 0.0, %v5080
      %v5082 = vpop.f32.mrb[0].mxu0
      %5083 = vmatprep.mubr.f32.mxu0 0.0
      %5084 = vmatmul.mubr.f32.gmra.mrb[0].mxu0 %v4924
      %v5085 = vpop.f32.mrb[0].mxu0
      %v5086 = vadd.f32 0.0, %v5085
      %v5087 = vpop.f32.mrb[0].mxu0
      %5088 = vmatprep.mubr.f32.mxu0 0.0
      %5089 = vmatmul.mubr.f32.gmra.mrb[0].mxu0 %v4926
      %v5090 = vpop.f32.mrb[0].mxu0
      %v5091 = vadd.f32 0.0, %v5090
      %v5092 = vpop.f32.mrb[0].mxu0
      %5093 = vmatprep.mubr.f32.mxu0 0.0
      %5094 = vmatmul.mubr.f32.gmra.mrb[0].mxu0 %v4928
      %v5095 = vpop.f32.mrb[0].mxu0
      %v5096 = vadd.f32 0.0, %v5095
      %v5097 = vpop.f32.mrb[0].mxu0
      %5098 = vmatprep.mubr.f32.mxu0 0.0
      %5099 = vmatmul.mubr.f32.gmra.mrb[0].mxu0 %v4930
      %v5100 = vpop.f32.mrb[0].mxu0
      %v5101 = vadd.f32 0.0, %v5100
      %v5102 = vpop.f32.mrb[0].mxu0
      %5103 = vmatprep.mubr.f32.mxu0 0.0
      %5104 = vmatmul.mubr.f32.gmra.mrb[0].mxu0 %v4932
      %v5105 = vpop.f32.mrb[0].mxu0
      %v5106 = vadd.f32 0.0, %v5105
      %v5107 = vpop.f32.mrb[0].mxu0
      %5108 = vmatprep.mubr.f32.mxu0 0.0
      %5109 = vmatmul.mubr.f32.gmra.mrb[0].mxu0 %v4934
      %v5110 = vpop.f32.mrb[0].mxu0
      %v5111 = vadd.f32 0.0, %v5110
      %v5112 = vpop.f32.mrb[0].mxu0
      %5113 = vmatprep.mubr.f32.mxu0 0.0
      %5114 = vmatmul.mubr.f32.gmra.mrb[0].mxu0 %v4936
      %v5115 = vpop.f32.mrb[0].mxu0
      %v5116 = vadd.f32 0.0, %v5115
      %v5117 = vpop.f32.mrb[0].mxu0
      %5118 = vmatprep.mubr.f32.mxu0 0.0
      %5119 = vmatmul.mubr.f32.gmra.mrb[0].mxu0 %v4938
      %v5120 = vpop.f32.mrb[0].mxu0
      %v5121 = vadd.f32 0.0, %v5120
      %v5122 = vpop.f32.mrb[0].mxu0
      %5123 = vmatprep.mubr.f32.mxu0 0.0
      %5124 = vmatmul.mubr.f32.gmra.mrb[0].mxu0 %v4940
      %v5125 = vpop.f32.mrb[0].mxu0
      %v5126 = vadd.f32 0.0, %v5125
      %v5127 = vpop.f32.mrb[0].mxu0
      %5128 = vmatprep.mubr.f32.mxu0 0.0
      %5129 = vmatmul.mubr.f32.gmra.mrb[0].mxu0 %v4942
      %v5130 = vpop.f32.mrb[0].mxu0
      %v5131 = vadd.f32 0.0, %v5130
      %v5132 = vpop.f32.mrb[0].mxu0
      %5133 = vmatprep.mubr.f32.mxu0 0.0
      %5134 = vmatmul.mubr.f32.gmra.mrb[0].mxu0 %v4944
      %v5135 = vpop.f32.mrb[0].mxu0
      %v5136 = vadd.f32 0.0, %v5135
      %v5137 = vpop.f32.mrb[0].mxu0
      %5138 = vmatprep.mubr.f32.mxu0 0.0
      %5139 = vmatmul.mubr.f32.gmra.mrb[0].mxu0 %v4946
      %v5140 = vpop.f32.mrb[0].mxu0
      %v5141 = vadd.f32 0.0, %v5140
      %v5142 = vpop.f32.mrb[0].mxu0
      %5143 = vmatprep.mubr.f32.mxu0 0.0
      %5144 = vmatmul.mubr.f32.gmra.mrb[0].mxu0 %v4948
      %v5145 = vpop.f32.mrb[0].mxu0
      %v5146 = vadd.f32 0.0, %v5145
      %v5147 = vpop.f32.mrb[0].mxu0
      %5148 = vmatprep.mubr.f32.mxu0 0.0
      %5149 = vmatmul.mubr.f32.gmra.mrb[0].mxu0 %v4950
      %v5150 = vpop.f32.mrb[0].mxu0
      %v5151 = vadd.f32 0.0, %v5150
      %v5152 = vpop.f32.mrb[0].mxu0
      %5153 = vmatprep.mubr.f32.mxu0 0.0
      %5154 = vmatmul.mubr.f32.gmra.mrb[0].mxu0 %v4952
      %v5155 = vpop.f32.mrb[0].mxu0
      %v5156 = vadd.f32 0.0, %v5155
      %v5157 = vpop.f32.mrb[0].mxu0
      %5158 = vmatprep.mubr.f32.mxu0 0.0
      %5159 = vmatmul.mubr.f32.gmra.mrb[0].mxu0 %v4954
      %v5160 = vpop.f32.mrb[0].mxu0
      %v5161 = vadd.f32 0.0, %v5160
      %v5162 = vpop.f32.mrb[0].mxu0
      %5163 = vmatprep.mubr.f32.mxu0 0.0
      %5164 = vmatmul.mubr.f32.gmra.mrb[0].mxu0 %v4956
      %v5165 = vpop.f32.mrb[0].mxu0
      %v5166 = vadd.f32 0.0, %v5165
      %v5167 = vpop.f32.mrb[0].mxu0
      %5168 = vmatprep.mubr.f32.mxu0 0.0
      %5169 = vmatmul.mubr.f32.gmra.mrb[0].mxu0 %v4958
      %v5170 = vpop.f32.mrb[0].mxu0
      %v5171 = vadd.f32 0.0, %v5170
      %v5172 = vpop.f32.mrb[0].mxu0
      %5173 = vmatprep.mubr.f32.mxu0 0.0
      %5174 = vmatmul.mubr.f32.gmra.mrb[0].mxu0 %v4960
      %v5175 = vpop.f32.mrb[0].mxu0
      %v5176 = vadd.f32 0.0, %v5175
      %v5177 = vpop.f32.mrb[0].mxu0
      %5178 = vmatprep.mubr.f32.mxu0 0.0
      %5179 = vmatmul.mubr.f32.gmra.mrb[0].mxu0 %v4962
      %v5180 = vpop.f32.mrb[0].mxu0
      %v5181 = vadd.f32 0.0, %v5180
      %v5182 = vpop.f32.mrb[0].mxu0
      %5183 = vmatprep.mubr.f32.mxu0 0.0
      %5184 = vmatmul.mubr.f32.gmra.mrb[0].mxu0 %v4964
      %v5185 = vpop.f32.mrb[0].mxu0
      %v5186 = vadd.f32 0.0, %v5185
      %v5187 = vpop.f32.mrb[0].mxu0
      %5188 = vmatprep.mubr.f32.mxu0 0.0
      %5189 = vmatmul.mubr.f32.gmra.mrb[0].mxu0 %v4966
      %v5190 = vpop.f32.mrb[0].mxu0
      %v5191 = vadd.f32 0.0, %v5190
      %v5192 = vpop.f32.mrb[0].mxu0
      %5193 = vmatprep.mubr.f32.mxu0 0.0
      %5194 = vmatmul.mubr.f32.gmra.mrb[0].mxu0 %v4968
      %v5195 = vpop.f32.mrb[0].mxu0
      %v5196 = vadd.f32 0.0, %v5195
      %v5197 = vpop.f32.mrb[0].mxu0
      %5198 = vdwg.mxu0
      %v5199 = vsel %vm1019, %v5041, -inf
      %5200 = vmax.xlane.f32.xlu0 %v5199
      %v5201 = vpop.xlane.xlu0 %5200
      %v5202 = vsel %vm1019, %v5046, -inf
      %5203 = vmax.xlane.f32.xlu0 %v5202
      %v5204 = vpop.xlane.xlu0 %5203
      %v5205 = vsel %vm1019, %v5051, -inf
      %5206 = vmax.xlane.f32.xlu0 %v5205
      %v5207 = vpop.xlane.xlu0 %5206
      %v5208 = vsel %vm1019, %v5056, -inf
      %5209 = vmax.xlane.f32.xlu0 %v5208
      %v5210 = vpop.xlane.xlu0 %5209
      %v5211 = vsel %vm1019, %v5061, -inf
      %5212 = vmax.xlane.f32.xlu0 %v5211
      %v5213 = vpop.xlane.xlu0 %5212
      %v5214 = vsel %vm1019, %v5066, -inf
      %5215 = vmax.xlane.f32.xlu0 %v5214
      %v5216 = vpop.xlane.xlu0 %5215
      %v5217 = vsel %vm1019, %v5071, -inf
      %5218 = vmax.xlane.f32.xlu0 %v5217
      %v5219 = vpop.xlane.xlu0 %5218
      %v5220 = vsel %vm1019, %v5076, -inf
      %5221 = vmax.xlane.f32.xlu0 %v5220
      %v5222 = vpop.xlane.xlu0 %5221
      %v5223 = vsel %vm1019, %v5081, -inf
      %5224 = vmax.xlane.f32.xlu0 %v5223
      %v5225 = vpop.xlane.xlu0 %5224
      %v5226 = vsel %vm1019, %v5086, -inf
      %5227 = vmax.xlane.f32.xlu0 %v5226
      %v5228 = vpop.xlane.xlu0 %5227
      %v5229 = vsel %vm1019, %v5091, -inf
      %5230 = vmax.xlane.f32.xlu0 %v5229
      %v5231 = vpop.xlane.xlu0 %5230
      %v5232 = vsel %vm1019, %v5096, -inf
      %5233 = vmax.xlane.f32.xlu0 %v5232
      %v5234 = vpop.xlane.xlu0 %5233
      %v5235 = vsel %vm1019, %v5101, -inf
      %5236 = vmax.xlane.f32.xlu0 %v5235
      %v5237 = vpop.xlane.xlu0 %5236
      %v5238 = vsel %vm1019, %v5106, -inf
      %5239 = vmax.xlane.f32.xlu0 %v5238
      %v5240 = vpop.xlane.xlu0 %5239
      %v5241 = vsel %vm1019, %v5111, -inf
      %5242 = vmax.xlane.f32.xlu0 %v5241
      %v5243 = vpop.xlane.xlu0 %5242
      %v5244 = vsel %vm1019, %v5116, -inf
      %5245 = vmax.xlane.f32.xlu0 %v5244
      %v5246 = vpop.xlane.xlu0 %5245
      %v5247 = vsel %vm1019, %v5121, -inf
      %5248 = vmax.xlane.f32.xlu0 %v5247
      %v5249 = vpop.xlane.xlu0 %5248
      %v5250 = vsel %vm1019, %v5126, -inf
      %5251 = vmax.xlane.f32.xlu0 %v5250
      %v5252 = vpop.xlane.xlu0 %5251
      %v5253 = vsel %vm1019, %v5131, -inf
      %5254 = vmax.xlane.f32.xlu0 %v5253
      %v5255 = vpop.xlane.xlu0 %5254
      %v5256 = vsel %vm1019, %v5136, -inf
      %5257 = vmax.xlane.f32.xlu0 %v5256
      %v5258 = vpop.xlane.xlu0 %5257
      %v5259 = vsel %vm1019, %v5141, -inf
      %5260 = vmax.xlane.f32.xlu0 %v5259
      %v5261 = vpop.xlane.xlu0 %5260
      %v5262 = vsel %vm1019, %v5146, -inf
      %5263 = vmax.xlane.f32.xlu0 %v5262
      %v5264 = vpop.xlane.xlu0 %5263
      %v5265 = vsel %vm1019, %v5151, -inf
      %5266 = vmax.xlane.f32.xlu0 %v5265
      %v5267 = vpop.xlane.xlu0 %5266
      %v5268 = vsel %vm1019, %v5156, -inf
      %5269 = vmax.xlane.f32.xlu0 %v5268
      %v5270 = vpop.xlane.xlu0 %5269
      %v5271 = vsel %vm1019, %v5161, -inf
      %5272 = vmax.xlane.f32.xlu0 %v5271
      %v5273 = vpop.xlane.xlu0 %5272
      %v5274 = vsel %vm1019, %v5166, -inf
      %5275 = vmax.xlane.f32.xlu0 %v5274
      %v5276 = vpop.xlane.xlu0 %5275
      %v5277 = vsel %vm1019, %v5171, -inf
      %5278 = vmax.xlane.f32.xlu0 %v5277
      %v5279 = vpop.xlane.xlu0 %5278
      %v5280 = vsel %vm1019, %v5176, -inf
      %5281 = vmax.xlane.f32.xlu0 %v5280
      %v5282 = vpop.xlane.xlu0 %5281
      %v5283 = vsel %vm1019, %v5181, -inf
      %5284 = vmax.xlane.f32.xlu0 %v5283
      %v5285 = vpop.xlane.xlu0 %5284
      %v5286 = vsel %vm1019, %v5186, -inf
      %5287 = vmax.xlane.f32.xlu0 %v5286
      %v5288 = vpop.xlane.xlu0 %5287
      %v5289 = vsel %vm1019, %v5191, -inf
      %5290 = vmax.xlane.f32.xlu0 %v5289
      %v5291 = vpop.xlane.xlu0 %5290
      %v5292 = vsel %vm1019, %v5196, -inf
      %5293 = vmax.xlane.f32.xlu0 %v5292
      %v5294 = vpop.xlane.xlu0 %5293
      %v5295 = vsub.f32 %v5041, %v5201
      %v5296 = vsub.f32 %v5046, %v5204
      %v5297 = vsub.f32 %v5051, %v5207
      %v5298 = vsub.f32 %v5056, %v5210
      %v5299 = vsub.f32 %v5061, %v5213
      %v5300 = vsub.f32 %v5066, %v5216
      %v5301 = vsub.f32 %v5071, %v5219
      %v5302 = vsub.f32 %v5076, %v5222
      %v5303 = vsub.f32 %v5081, %v5225
      %v5304 = vsub.f32 %v5086, %v5228
      %v5305 = vsub.f32 %v5091, %v5231
      %v5306 = vsub.f32 %v5096, %v5234
      %v5307 = vsub.f32 %v5101, %v5237
      %v5308 = vsub.f32 %v5106, %v5240
      %v5309 = vsub.f32 %v5111, %v5243
      %v5310 = vsub.f32 %v5116, %v5246
      %v5311 = vsub.f32 %v5121, %v5249
      %v5312 = vsub.f32 %v5126, %v5252
      %v5313 = vsub.f32 %v5131, %v5255
      %v5314 = vsub.f32 %v5136, %v5258
      %v5315 = vsub.f32 %v5141, %v5261
      %v5316 = vsub.f32 %v5146, %v5264
      %v5317 = vsub.f32 %v5151, %v5267
      %v5318 = vsub.f32 %v5156, %v5270
      %v5319 = vsub.f32 %v5161, %v5273
      %v5320 = vsub.f32 %v5166, %v5276
      %v5321 = vsub.f32 %v5171, %v5279
      %v5322 = vsub.f32 %v5176, %v5282
      %v5323 = vsub.f32 %v5181, %v5285
      %v5324 = vsub.f32 %v5186, %v5288
      %v5325 = vsub.f32 %v5191, %v5291
      %v5326 = vsub.f32 %v5196, %v5294
      %v5327 = vmul.f32 %v5295, 1.442695
      %v5328 = vpow.pop %v5327
      %v5329 = vmul.f32 %v5296, 1.442695
      %v5330 = vpow.pop %v5329
      %v5331 = vmul.f32 %v5297, 1.442695
      %v5332 = vpow.pop %v5331
      %v5333 = vmul.f32 %v5298, 1.442695
      %v5334 = vpow.pop %v5333
      %v5335 = vmul.f32 %v5299, 1.442695
      %v5336 = vpow.pop %v5335
      %v5337 = vmul.f32 %v5300, 1.442695
      %v5338 = vpow.pop %v5337
      %v5339 = vmul.f32 %v5301, 1.442695
      %v5340 = vpow.pop %v5339
      %v5341 = vmul.f32 %v5302, 1.442695
      %v5342 = vpow.pop %v5341
      %v5343 = vmul.f32 %v5303, 1.442695
      %v5344 = vpow.pop %v5343
      %v5345 = vmul.f32 %v5304, 1.442695
      %v5346 = vpow.pop %v5345
      %v5347 = vmul.f32 %v5305, 1.442695
      %v5348 = vpow.pop %v5347
      %v5349 = vmul.f32 %v5306, 1.442695
      %v5350 = vpow.pop %v5349
      %v5351 = vmul.f32 %v5307, 1.442695
      %v5352 = vpow.pop %v5351
      %v5353 = vmul.f32 %v5308, 1.442695
      %v5354 = vpow.pop %v5353
      %v5355 = vmul.f32 %v5309, 1.442695
      %v5356 = vpow.pop %v5355
      %v5357 = vmul.f32 %v5310, 1.442695
      %v5358 = vpow.pop %v5357
      %v5359 = vmul.f32 %v5311, 1.442695
      %v5360 = vpow.pop %v5359
      %v5361 = vmul.f32 %v5312, 1.442695
      %v5362 = vpow.pop %v5361
      %v5363 = vmul.f32 %v5313, 1.442695
      %v5364 = vpow.pop %v5363
      %v5365 = vmul.f32 %v5314, 1.442695
      %v5366 = vpow.pop %v5365
      %v5367 = vmul.f32 %v5315, 1.442695
      %v5368 = vpow.pop %v5367
      %v5369 = vmul.f32 %v5316, 1.442695
      %v5370 = vpow.pop %v5369
      %v5371 = vmul.f32 %v5317, 1.442695
      %v5372 = vpow.pop %v5371
      %v5373 = vmul.f32 %v5318, 1.442695
      %v5374 = vpow.pop %v5373
      %v5375 = vmul.f32 %v5319, 1.442695
      %v5376 = vpow.pop %v5375
      %v5377 = vmul.f32 %v5320, 1.442695
      %v5378 = vpow.pop %v5377
      %v5379 = vmul.f32 %v5321, 1.442695
      %v5380 = vpow.pop %v5379
      %v5381 = vmul.f32 %v5322, 1.442695
      %v5382 = vpow.pop %v5381
      %v5383 = vmul.f32 %v5323, 1.442695
      %v5384 = vpow.pop %v5383
      %v5385 = vmul.f32 %v5324, 1.442695
      %v5386 = vpow.pop %v5385
      %v5387 = vmul.f32 %v5325, 1.442695
      %v5388 = vpow.pop %v5387
      %v5389 = vmul.f32 %v5326, 1.442695
      %v5390 = vpow.pop %v5389
      %v5391 = vsel %vm1019, %v5328, 0.0
      %5392 = vadd.xlane.f32.xlu0 %v5391
      %v5393 = vpop.xlane.xlu0 %5392
      %v5394 = vsel %vm1019, %v5330, 0.0
      %5395 = vadd.xlane.f32.xlu0 %v5394
      %v5396 = vpop.xlane.xlu0 %5395
      %v5397 = vsel %vm1019, %v5332, 0.0
      %5398 = vadd.xlane.f32.xlu0 %v5397
      %v5399 = vpop.xlane.xlu0 %5398
      %v5400 = vsel %vm1019, %v5334, 0.0
      %5401 = vadd.xlane.f32.xlu0 %v5400
      %v5402 = vpop.xlane.xlu0 %5401
      %v5403 = vsel %vm1019, %v5336, 0.0
      %5404 = vadd.xlane.f32.xlu0 %v5403
      %v5405 = vpop.xlane.xlu0 %5404
      %v5406 = vsel %vm1019, %v5338, 0.0
      %5407 = vadd.xlane.f32.xlu0 %v5406
      %v5408 = vpop.xlane.xlu0 %5407
      %v5409 = vsel %vm1019, %v5340, 0.0
      %5410 = vadd.xlane.f32.xlu0 %v5409
      %v5411 = vpop.xlane.xlu0 %5410
      %v5412 = vsel %vm1019, %v5342, 0.0
      %5413 = vadd.xlane.f32.xlu0 %v5412
      %v5414 = vpop.xlane.xlu0 %5413
      %v5415 = vsel %vm1019, %v5344, 0.0
      %5416 = vadd.xlane.f32.xlu0 %v5415
      %v5417 = vpop.xlane.xlu0 %5416
      %v5418 = vsel %vm1019, %v5346, 0.0
      %5419 = vadd.xlane.f32.xlu0 %v5418
      %v5420 = vpop.xlane.xlu0 %5419
      %v5421 = vsel %vm1019, %v5348, 0.0
      %5422 = vadd.xlane.f32.xlu0 %v5421
      %v5423 = vpop.xlane.xlu0 %5422
      %v5424 = vsel %vm1019, %v5350, 0.0
      %5425 = vadd.xlane.f32.xlu0 %v5424
      %v5426 = vpop.xlane.xlu0 %5425
      %v5427 = vsel %vm1019, %v5352, 0.0
      %5428 = vadd.xlane.f32.xlu0 %v5427
      %v5429 = vpop.xlane.xlu0 %5428
      %v5430 = vsel %vm1019, %v5354, 0.0
      %5431 = vadd.xlane.f32.xlu0 %v5430
      %v5432 = vpop.xlane.xlu0 %5431
      %v5433 = vsel %vm1019, %v5356, 0.0
      %5434 = vadd.xlane.f32.xlu0 %v5433
      %v5435 = vpop.xlane.xlu0 %5434
      %v5436 = vsel %vm1019, %v5358, 0.0
      %5437 = vadd.xlane.f32.xlu0 %v5436
      %v5438 = vpop.xlane.xlu0 %5437
      %v5439 = vsel %vm1019, %v5360, 0.0
      %5440 = vadd.xlane.f32.xlu0 %v5439
      %v5441 = vpop.xlane.xlu0 %5440
      %v5442 = vsel %vm1019, %v5362, 0.0
      %5443 = vadd.xlane.f32.xlu0 %v5442
      %v5444 = vpop.xlane.xlu0 %5443
      %v5445 = vsel %vm1019, %v5364, 0.0
      %5446 = vadd.xlane.f32.xlu0 %v5445
      %v5447 = vpop.xlane.xlu0 %5446
      %v5448 = vsel %vm1019, %v5366, 0.0
      %5449 = vadd.xlane.f32.xlu0 %v5448
      %v5450 = vpop.xlane.xlu0 %5449
      %v5451 = vsel %vm1019, %v5368, 0.0
      %5452 = vadd.xlane.f32.xlu0 %v5451
      %v5453 = vpop.xlane.xlu0 %5452
      %v5454 = vsel %vm1019, %v5370, 0.0
      %5455 = vadd.xlane.f32.xlu0 %v5454
      %v5456 = vpop.xlane.xlu0 %5455
      %v5457 = vsel %vm1019, %v5372, 0.0
      %5458 = vadd.xlane.f32.xlu0 %v5457
      %v5459 = vpop.xlane.xlu0 %5458
      %v5460 = vsel %vm1019, %v5374, 0.0
      %5461 = vadd.xlane.f32.xlu0 %v5460
      %v5462 = vpop.xlane.xlu0 %5461
      %v5463 = vsel %vm1019, %v5376, 0.0
      %5464 = vadd.xlane.f32.xlu0 %v5463
      %v5465 = vpop.xlane.xlu0 %5464
      %v5466 = vsel %vm1019, %v5378, 0.0
      %5467 = vadd.xlane.f32.xlu0 %v5466
      %v5468 = vpop.xlane.xlu0 %5467
      %v5469 = vsel %vm1019, %v5380, 0.0
      %5470 = vadd.xlane.f32.xlu0 %v5469
      %v5471 = vpop.xlane.xlu0 %5470
      %v5472 = vsel %vm1019, %v5382, 0.0
      %5473 = vadd.xlane.f32.xlu0 %v5472
      %v5474 = vpop.xlane.xlu0 %5473
      %v5475 = vsel %vm1019, %v5384, 0.0
      %5476 = vadd.xlane.f32.xlu0 %v5475
      %v5477 = vpop.xlane.xlu0 %5476
      %v5478 = vsel %vm1019, %v5386, 0.0
      %5479 = vadd.xlane.f32.xlu0 %v5478
      %v5480 = vpop.xlane.xlu0 %5479
      %v5481 = vsel %vm1019, %v5388, 0.0
      %5482 = vadd.xlane.f32.xlu0 %v5481
      %v5483 = vpop.xlane.xlu0 %5482
      %v5484 = vsel %vm1019, %v5390, 0.0
      %5485 = vadd.xlane.f32.xlu0 %v5484
      %v5486 = vpop.xlane.xlu0 %5485
      %v5487 = vrcp.pop %v5393
      %v5488 = vrcp.pop %v5396
      %v5489 = vrcp.pop %v5399
      %v5490 = vrcp.pop %v5402
      %v5491 = vrcp.pop %v5405
      %v5492 = vrcp.pop %v5408
      %v5493 = vrcp.pop %v5411
      %v5494 = vrcp.pop %v5414
      %v5495 = vrcp.pop %v5417
      %v5496 = vrcp.pop %v5420
      %v5497 = vrcp.pop %v5423
      %v5498 = vrcp.pop %v5426
      %v5499 = vrcp.pop %v5429
      %v5500 = vrcp.pop %v5432
      %v5501 = vrcp.pop %v5435
      %v5502 = vrcp.pop %v5438
      %v5503 = vrcp.pop %v5441
      %v5504 = vrcp.pop %v5444
      %v5505 = vrcp.pop %v5447
      %v5506 = vrcp.pop %v5450
      %v5507 = vrcp.pop %v5453
      %v5508 = vrcp.pop %v5456
      %v5509 = vrcp.pop %v5459
      %v5510 = vrcp.pop %v5462
      %v5511 = vrcp.pop %v5465
      %v5512 = vrcp.pop %v5468
      %v5513 = vrcp.pop %v5471
      %v5514 = vrcp.pop %v5474
      %v5515 = vrcp.pop %v5477
      %v5516 = vrcp.pop %v5480
      %v5517 = vrcp.pop %v5483
      %v5518 = vrcp.pop %v5486
      %v5519 = vmul.f32 %v5328, %v5487
      %v5520 = vmul.f32 %v5330, %v5488
      %v5521 = vmul.f32 %v5332, %v5489
      %v5522 = vmul.f32 %v5334, %v5490
      %v5523 = vmul.f32 %v5336, %v5491
      %v5524 = vmul.f32 %v5338, %v5492
      %v5525 = vmul.f32 %v5340, %v5493
      %v5526 = vmul.f32 %v5342, %v5494
      %v5527 = vmul.f32 %v5344, %v5495
      %v5528 = vmul.f32 %v5346, %v5496
      %v5529 = vmul.f32 %v5348, %v5497
      %v5530 = vmul.f32 %v5350, %v5498
      %v5531 = vmul.f32 %v5352, %v5499
      %v5532 = vmul.f32 %v5354, %v5500
      %v5533 = vmul.f32 %v5356, %v5501
      %v5534 = vmul.f32 %v5358, %v5502
      %v5535 = vmul.f32 %v5360, %v5503
      %v5536 = vmul.f32 %v5362, %v5504
      %v5537 = vmul.f32 %v5364, %v5505
      %v5538 = vmul.f32 %v5366, %v5506
      %v5539 = vmul.f32 %v5368, %v5507
      %v5540 = vmul.f32 %v5370, %v5508
      %v5541 = vmul.f32 %v5372, %v5509
      %v5542 = vmul.f32 %v5374, %v5510
      %v5543 = vmul.f32 %v5376, %v5511
      %v5544 = vmul.f32 %v5378, %v5512
      %v5545 = vmul.f32 %v5380, %v5513
      %v5546 = vmul.f32 %v5382, %v5514
      %v5547 = vmul.f32 %v5384, %v5515
      %v5548 = vmul.f32 %v5386, %v5516
      %v5549 = vmul.f32 %v5388, %v5517
      %v5550 = vmul.f32 %v5390, %v5518
      %5551 = vrot.lane.b32.xlu0 %v324, 72
      %v5552 = vpop.permute.xlu0 %5551
      %5553 = vrot.lane.b32.xlu0 %v325, 72
      %v5554 = vpop.permute.xlu0 %5553
      %v5558 = vsel %vm1019, %v5519, 0
      %v5561 = vsel %vm1019, %v5520, 0
      %v5564 = vsel %vm1019, %v5521, 0
      %v5567 = vsel %vm1019, %v5522, 0
      %v5570 = vsel %vm1019, %v5523, 0
      %v5573 = vsel %vm1019, %v5524, 0
      %v5576 = vsel %vm1019, %v5525, 0
      %v5579 = vsel %vm1019, %v5526, 0
      %v5582 = vsel %vm1019, %v5527, 0
      %v5585 = vsel %vm1019, %v5528, 0
      %v5588 = vsel %vm1019, %v5529, 0
      %v5591 = vsel %vm1019, %v5530, 0
      %v5594 = vsel %vm1019, %v5531, 0
      %v5597 = vsel %vm1019, %v5532, 0
      %v5600 = vsel %vm1019, %v5533, 0
      %v5603 = vsel %vm1019, %v5534, 0
      %v5606 = vsel %vm1019, %v5535, 0
      %v5609 = vsel %vm1019, %v5536, 0
      %v5612 = vsel %vm1019, %v5537, 0
      %v5615 = vsel %vm1019, %v5538, 0
      %v5618 = vsel %vm1019, %v5539, 0
      %v5621 = vsel %vm1019, %v5540, 0
      %v5624 = vsel %vm1019, %v5541, 0
      %v5627 = vsel %vm1019, %v5542, 0
      %v5630 = vsel %vm1019, %v5543, 0
      %v5633 = vsel %vm1019, %v5544, 0
      %v5636 = vsel %vm1019, %v5545, 0
      %v5639 = vsel %vm1019, %v5546, 0
      %v5642 = vsel %vm1019, %v5547, 0
      %v5645 = vsel %vm1019, %v5548, 0
      %v5648 = vsel %vm1019, %v5549, 0
      %v5651 = vsel %vm1019, %v5550, 0
      %5653 = vmatprep.subr.mxu0 0.0
      %5654 = vmatpush1.msra.mxu0 %v5552
      %5655 = vmatprep.subr.mxu0 0.0
      %5656 = vmatpush1.msra.mxu0 %v5554
      %5657 = vmatprep.subr.mxu0 0.0
      %5658 = vmatpush1.msra.mxu0 0.0
      %5659 = vmatprep.subr.mxu0 0.0
      %5660 = vmatpush1.msra.mxu0 0.0
      %5661 = vmatprep.subr.mxu0 0.0
      %5662 = vmatpush1.msra.mxu0 0.0
      %5663 = vmatprep.subr.mxu0 0.0
      %5664 = vmatpush1.msra.mxu0 0.0
      %5665 = vmatprep.subr.mxu0 0.0
      %5666 = vmatpush1.msra.mxu0 0.0
      %5667 = vmatprep.subr.mxu0 0.0
      %5668 = vmatpush1.msra.mxu0 0.0
      %5669 = vmatprep.subr.mxu0 0.0
      %5670 = vmatpush1.msra.mxu0 0.0
      %5671 = vmatprep.subr.mxu0 0.0
      %5672 = vmatpush1.msra.mxu0 0.0
      %5673 = vmatprep.subr.mxu0 0.0
      %5674 = vmatpush1.msra.mxu0 0.0
      %5675 = vmatprep.subr.mxu0 0.0
      %5676 = vmatpush1.msra.mxu0 0.0
      %5677 = vmatprep.subr.mxu0 0.0
      %5678 = vmatpush1.msra.mxu0 0.0
      %5679 = vmatprep.subr.mxu0 0.0
      %5680 = vmatpush1.msra.mxu0 0.0
      %5681 = vmatprep.subr.mxu0 0.0
      %5682 = vmatpush1.msra.mxu0 0.0
      %5683 = vmatprep.subr.mxu0 0.0
      %5684 = vmatpush1.msra.mxu0 0.0
      %5685 = vmatprep.subr.mxu0 0.0
      %5686 = vmatpush1.msra.mxu0 0.0
      %5687 = vmatprep.subr.mxu0 0.0
      %5688 = vmatpush1.msra.mxu0 0.0
      %5689 = vmatprep.subr.mxu0 0.0
      %5690 = vmatpush1.msra.mxu0 0.0
      %5691 = vmatprep.subr.mxu0 0.0
      %5692 = vmatpush1.msra.mxu0 0.0
      %5693 = vmatprep.subr.mxu0 0.0
      %5694 = vmatpush1.msra.mxu0 0.0
      %5695 = vmatprep.subr.mxu0 0.0
      %5696 = vmatpush1.msra.mxu0 0.0
      %5697 = vmatprep.subr.mxu0 0.0
      %5698 = vmatpush1.msra.mxu0 0.0
      %5699 = vmatprep.subr.mxu0 0.0
      %5700 = vmatpush1.msra.mxu0 0.0
      %5701 = vmatprep.subr.mxu0 0.0
      %5702 = vmatpush1.msra.mxu0 0.0
      %5703 = vmatprep.subr.mxu0 0.0
      %5704 = vmatpush1.msra.mxu0 0.0
      %5705 = vmatprep.subr.mxu0 0.0
      %5706 = vmatpush1.msra.mxu0 0.0
      %5707 = vmatprep.subr.mxu0 0.0
      %5708 = vmatpush1.msra.mxu0 0.0
      %5709 = vmatprep.subr.mxu0 0.0
      %5710 = vmatpush1.msra.mxu0 0.0
      %5711 = vmatprep.subr.mxu0 0.0
      %5712 = vmatpush1.msra.mxu0 0.0
      %5713 = vmatprep.subr.mxu0 0.0
      %5714 = vmatpush1.msra.mxu0 0.0
      %5715 = vmatprep.subr.mxu0 0.0
      %5716 = vmatpush1.msra.mxu0 0.0
      %5717 = vmatprep.mubr.f32.mxu0 0.0
      %5718 = vmatmul.mubr.f32.gmra.mrb[0].mxu0 %v5558
      %v5719 = vpop.f32.mrb[0].mxu0
      %v5720 = vadd.f32 0.0, %v5719
      %v5721 = vpop.f32.mrb[0].mxu0
      %5722 = vmatprep.mubr.f32.mxu0 0.0
      %5723 = vmatmul.mubr.f32.gmra.mrb[0].mxu0 %v5561
      %v5724 = vpop.f32.mrb[0].mxu0
      %v5725 = vadd.f32 0.0, %v5724
      %v5726 = vpop.f32.mrb[0].mxu0
      %5727 = vmatprep.mubr.f32.mxu0 0.0
      %5728 = vmatmul.mubr.f32.gmra.mrb[0].mxu0 %v5564
      %v5729 = vpop.f32.mrb[0].mxu0
      %v5730 = vadd.f32 0.0, %v5729
      %v5731 = vpop.f32.mrb[0].mxu0
      %5732 = vmatprep.mubr.f32.mxu0 0.0
      %5733 = vmatmul.mubr.f32.gmra.mrb[0].mxu0 %v5567
      %v5734 = vpop.f32.mrb[0].mxu0
      %v5735 = vadd.f32 0.0, %v5734
      %v5736 = vpop.f32.mrb[0].mxu0
      %5737 = vmatprep.mubr.f32.mxu0 0.0
      %5738 = vmatmul.mubr.f32.gmra.mrb[0].mxu0 %v5570
      %v5739 = vpop.f32.mrb[0].mxu0
      %v5740 = vadd.f32 0.0, %v5739
      %v5741 = vpop.f32.mrb[0].mxu0
      %5742 = vmatprep.mubr.f32.mxu0 0.0
      %5743 = vmatmul.mubr.f32.gmra.mrb[0].mxu0 %v5573
      %v5744 = vpop.f32.mrb[0].mxu0
      %v5745 = vadd.f32 0.0, %v5744
      %v5746 = vpop.f32.mrb[0].mxu0
      %5747 = vmatprep.mubr.f32.mxu0 0.0
      %5748 = vmatmul.mubr.f32.gmra.mrb[0].mxu0 %v5576
      %v5749 = vpop.f32.mrb[0].mxu0
      %v5750 = vadd.f32 0.0, %v5749
      %v5751 = vpop.f32.mrb[0].mxu0
      %5752 = vmatprep.mubr.f32.mxu0 0.0
      %5753 = vmatmul.mubr.f32.gmra.mrb[0].mxu0 %v5579
      %v5754 = vpop.f32.mrb[0].mxu0
      %v5755 = vadd.f32 0.0, %v5754
      %v5756 = vpop.f32.mrb[0].mxu0
      %5757 = vmatprep.mubr.f32.mxu0 0.0
      %5758 = vmatmul.mubr.f32.gmra.mrb[0].mxu0 %v5582
      %v5759 = vpop.f32.mrb[0].mxu0
      %v5760 = vadd.f32 0.0, %v5759
      %v5761 = vpop.f32.mrb[0].mxu0
      %5762 = vmatprep.mubr.f32.mxu0 0.0
      %5763 = vmatmul.mubr.f32.gmra.mrb[0].mxu0 %v5585
      %v5764 = vpop.f32.mrb[0].mxu0
      %v5765 = vadd.f32 0.0, %v5764
      %v5766 = vpop.f32.mrb[0].mxu0
      %5767 = vmatprep.mubr.f32.mxu0 0.0
      %5768 = vmatmul.mubr.f32.gmra.mrb[0].mxu0 %v5588
      %v5769 = vpop.f32.mrb[0].mxu0
      %v5770 = vadd.f32 0.0, %v5769
      %v5771 = vpop.f32.mrb[0].mxu0
      %5772 = vmatprep.mubr.f32.mxu0 0.0
      %5773 = vmatmul.mubr.f32.gmra.mrb[0].mxu0 %v5591
      %v5774 = vpop.f32.mrb[0].mxu0
      %v5775 = vadd.f32 0.0, %v5774
      %v5776 = vpop.f32.mrb[0].mxu0
      %5777 = vmatprep.mubr.f32.mxu0 0.0
      %5778 = vmatmul.mubr.f32.gmra.mrb[0].mxu0 %v5594
      %v5779 = vpop.f32.mrb[0].mxu0
      %v5780 = vadd.f32 0.0, %v5779
      %v5781 = vpop.f32.mrb[0].mxu0
      %5782 = vmatprep.mubr.f32.mxu0 0.0
      %5783 = vmatmul.mubr.f32.gmra.mrb[0].mxu0 %v5597
      %v5784 = vpop.f32.mrb[0].mxu0
      %v5785 = vadd.f32 0.0, %v5784
      %v5786 = vpop.f32.mrb[0].mxu0
      %5787 = vmatprep.mubr.f32.mxu0 0.0
      %5788 = vmatmul.mubr.f32.gmra.mrb[0].mxu0 %v5600
      %v5789 = vpop.f32.mrb[0].mxu0
      %v5790 = vadd.f32 0.0, %v5789
      %v5791 = vpop.f32.mrb[0].mxu0
      %5792 = vmatprep.mubr.f32.mxu0 0.0
      %5793 = vmatmul.mubr.f32.gmra.mrb[0].mxu0 %v5603
      %v5794 = vpop.f32.mrb[0].mxu0
      %v5795 = vadd.f32 0.0, %v5794
      %v5796 = vpop.f32.mrb[0].mxu0
      %5797 = vmatprep.mubr.f32.mxu0 0.0
      %5798 = vmatmul.mubr.f32.gmra.mrb[0].mxu0 %v5606
      %v5799 = vpop.f32.mrb[0].mxu0
      %v5800 = vadd.f32 0.0, %v5799
      %v5801 = vpop.f32.mrb[0].mxu0
      %5802 = vmatprep.mubr.f32.mxu0 0.0
      %5803 = vmatmul.mubr.f32.gmra.mrb[0].mxu0 %v5609
      %v5804 = vpop.f32.mrb[0].mxu0
      %v5805 = vadd.f32 0.0, %v5804
      %v5806 = vpop.f32.mrb[0].mxu0
      %5807 = vmatprep.mubr.f32.mxu0 0.0
      %5808 = vmatmul.mubr.f32.gmra.mrb[0].mxu0 %v5612
      %v5809 = vpop.f32.mrb[0].mxu0
      %v5810 = vadd.f32 0.0, %v5809
      %v5811 = vpop.f32.mrb[0].mxu0
      %5812 = vmatprep.mubr.f32.mxu0 0.0
      %5813 = vmatmul.mubr.f32.gmra.mrb[0].mxu0 %v5615
      %v5814 = vpop.f32.mrb[0].mxu0
      %v5815 = vadd.f32 0.0, %v5814
      %v5816 = vpop.f32.mrb[0].mxu0
      %5817 = vmatprep.mubr.f32.mxu0 0.0
      %5818 = vmatmul.mubr.f32.gmra.mrb[0].mxu0 %v5618
      %v5819 = vpop.f32.mrb[0].mxu0
      %v5820 = vadd.f32 0.0, %v5819
      %v5821 = vpop.f32.mrb[0].mxu0
      %5822 = vmatprep.mubr.f32.mxu0 0.0
      %5823 = vmatmul.mubr.f32.gmra.mrb[0].mxu0 %v5621
      %v5824 = vpop.f32.mrb[0].mxu0
      %v5825 = vadd.f32 0.0, %v5824
      %v5826 = vpop.f32.mrb[0].mxu0
      %5827 = vmatprep.mubr.f32.mxu0 0.0
      %5828 = vmatmul.mubr.f32.gmra.mrb[0].mxu0 %v5624
      %v5829 = vpop.f32.mrb[0].mxu0
      %v5830 = vadd.f32 0.0, %v5829
      %v5831 = vpop.f32.mrb[0].mxu0
      %5832 = vmatprep.mubr.f32.mxu0 0.0
      %5833 = vmatmul.mubr.f32.gmra.mrb[0].mxu0 %v5627
      %v5834 = vpop.f32.mrb[0].mxu0
      %v5835 = vadd.f32 0.0, %v5834
      %v5836 = vpop.f32.mrb[0].mxu0
      %5837 = vmatprep.mubr.f32.mxu0 0.0
      %5838 = vmatmul.mubr.f32.gmra.mrb[0].mxu0 %v5630
      %v5839 = vpop.f32.mrb[0].mxu0
      %v5840 = vadd.f32 0.0, %v5839
      %v5841 = vpop.f32.mrb[0].mxu0
      %5842 = vmatprep.mubr.f32.mxu0 0.0
      %5843 = vmatmul.mubr.f32.gmra.mrb[0].mxu0 %v5633
      %v5844 = vpop.f32.mrb[0].mxu0
      %v5845 = vadd.f32 0.0, %v5844
      %v5846 = vpop.f32.mrb[0].mxu0
      %5847 = vmatprep.mubr.f32.mxu0 0.0
      %5848 = vmatmul.mubr.f32.gmra.mrb[0].mxu0 %v5636
      %v5849 = vpop.f32.mrb[0].mxu0
      %v5850 = vadd.f32 0.0, %v5849
      %v5851 = vpop.f32.mrb[0].mxu0
      %5852 = vmatprep.mubr.f32.mxu0 0.0
      %5853 = vmatmul.mubr.f32.gmra.mrb[0].mxu0 %v5639
      %v5854 = vpop.f32.mrb[0].mxu0
      %v5855 = vadd.f32 0.0, %v5854
      %v5856 = vpop.f32.mrb[0].mxu0
      %5857 = vmatprep.mubr.f32.mxu0 0.0
      %5858 = vmatmul.mubr.f32.gmra.mrb[0].mxu0 %v5642
      %v5859 = vpop.f32.mrb[0].mxu0
      %v5860 = vadd.f32 0.0, %v5859
      %v5861 = vpop.f32.mrb[0].mxu0
      %5862 = vmatprep.mubr.f32.mxu0 0.0
      %5863 = vmatmul.mubr.f32.gmra.mrb[0].mxu0 %v5645
      %v5864 = vpop.f32.mrb[0].mxu0
      %v5865 = vadd.f32 0.0, %v5864
      %v5866 = vpop.f32.mrb[0].mxu0
      %5867 = vmatprep.mubr.f32.mxu0 0.0
      %5868 = vmatmul.mubr.f32.gmra.mrb[0].mxu0 %v5648
      %v5869 = vpop.f32.mrb[0].mxu0
      %v5870 = vadd.f32 0.0, %v5869
      %v5871 = vpop.f32.mrb[0].mxu0
      %5872 = vmatprep.mubr.f32.mxu0 0.0
      %5873 = vmatmul.mubr.f32.gmra.mrb[0].mxu0 %v5651
      %v5874 = vpop.f32.mrb[0].mxu0
      %v5875 = vadd.f32 0.0, %v5874
      %v5876 = vpop.f32.mrb[0].mxu0
      %5877 = vdwg.mxu0
      %v5879 = vsel %vm370, %v5720, 0
      %v5882 = vsel %vm370, %v5725, 0
      %v5885 = vsel %vm370, %v5730, 0
      %v5888 = vsel %vm370, %v5735, 0
      %v5891 = vsel %vm370, %v5740, 0
      %v5894 = vsel %vm370, %v5745, 0
      %v5897 = vsel %vm370, %v5750, 0
      %v5900 = vsel %vm370, %v5755, 0
      %v5903 = vsel %vm370, %v5760, 0
      %v5906 = vsel %vm370, %v5765, 0
      %v5909 = vsel %vm370, %v5770, 0
      %v5912 = vsel %vm370, %v5775, 0
      %v5915 = vsel %vm370, %v5780, 0
      %v5918 = vsel %vm370, %v5785, 0
      %v5921 = vsel %vm370, %v5790, 0
      %v5924 = vsel %vm370, %v5795, 0
      %v5927 = vsel %vm370, %v5800, 0
      %v5930 = vsel %vm370, %v5805, 0
      %v5933 = vsel %vm370, %v5810, 0
      %v5936 = vsel %vm370, %v5815, 0
      %v5939 = vsel %vm370, %v5820, 0
      %v5942 = vsel %vm370, %v5825, 0
      %v5945 = vsel %vm370, %v5830, 0
      %v5948 = vsel %vm370, %v5835, 0
      %v5951 = vsel %vm370, %v5840, 0
      %v5954 = vsel %vm370, %v5845, 0
      %v5957 = vsel %vm370, %v5850, 0
      %v5960 = vsel %vm370, %v5855, 0
      %v5963 = vsel %vm370, %v5860, 0
      %v5966 = vsel %vm370, %v5865, 0
      %v5969 = vsel %vm370, %v5870, 0
      %v5972 = vsel %vm370, %v5875, 0
      %5974 = vmatprep.subr.mxu0 0.0
      %5975 = vmatpush1.msra.mxu0 %v329
      %5976 = vmatprep.subr.mxu0 0.0
      %5977 = vmatpush1.msra.mxu0 0.0
      %5978 = vmatprep.subr.mxu0 0.0
      %5979 = vmatpush1.msra.mxu0 0.0
      %5980 = vmatprep.subr.mxu0 0.0
      %5981 = vmatpush1.msra.mxu0 0.0
      %5982 = vmatprep.subr.mxu0 0.0
      %5983 = vmatpush1.msra.mxu0 0.0
      %5984 = vmatprep.subr.mxu0 0.0
      %5985 = vmatpush1.msra.mxu0 0.0
      %5986 = vmatprep.subr.mxu0 0.0
      %5987 = vmatpush1.msra.mxu0 0.0
      %5988 = vmatprep.subr.mxu0 0.0
      %5989 = vmatpush1.msra.mxu0 0.0
      %5990 = vmatprep.subr.mxu0 0.0
      %5991 = vmatpush1.msra.mxu0 0.0
      %5992 = vmatprep.subr.mxu0 0.0
      %5993 = vmatpush1.msra.mxu0 0.0
      %5994 = vmatprep.subr.mxu0 0.0
      %5995 = vmatpush1.msra.mxu0 0.0
      %5996 = vmatprep.subr.mxu0 0.0
      %5997 = vmatpush1.msra.mxu0 0.0
      %5998 = vmatprep.subr.mxu0 0.0
      %5999 = vmatpush1.msra.mxu0 0.0
      %6000 = vmatprep.subr.mxu0 0.0
      %6001 = vmatpush1.msra.mxu0 0.0
      %6002 = vmatprep.subr.mxu0 0.0
      %6003 = vmatpush1.msra.mxu0 0.0
      %6004 = vmatprep.subr.mxu0 0.0
      %6005 = vmatpush1.msra.mxu0 0.0
      %6006 = vmatprep.subr.mxu0 0.0
      %6007 = vmatpush1.msra.mxu0 0.0
      %6008 = vmatprep.subr.mxu0 0.0
      %6009 = vmatpush1.msra.mxu0 0.0
      %6010 = vmatprep.subr.mxu0 0.0
      %6011 = vmatpush1.msra.mxu0 0.0
      %6012 = vmatprep.subr.mxu0 0.0
      %6013 = vmatpush1.msra.mxu0 0.0
      %6014 = vmatprep.subr.mxu0 0.0
      %6015 = vmatpush1.msra.mxu0 0.0
      %6016 = vmatprep.subr.mxu0 0.0
      %6017 = vmatpush1.msra.mxu0 0.0
      %6018 = vmatprep.subr.mxu0 0.0
      %6019 = vmatpush1.msra.mxu0 0.0
      %6020 = vmatprep.subr.mxu0 0.0
      %6021 = vmatpush1.msra.mxu0 0.0
      %6022 = vmatprep.subr.mxu0 0.0
      %6023 = vmatpush1.msra.mxu0 0.0
      %6024 = vmatprep.subr.mxu0 0.0
      %6025 = vmatpush1.msra.mxu0 0.0
      %6026 = vmatprep.subr.mxu0 0.0
      %6027 = vmatpush1.msra.mxu0 0.0
      %6028 = vmatprep.subr.mxu0 0.0
      %6029 = vmatpush1.msra.mxu0 0.0
      %6030 = vmatprep.subr.mxu0 0.0
      %6031 = vmatpush1.msra.mxu0 0.0
      %6032 = vmatprep.subr.mxu0 0.0
      %6033 = vmatpush1.msra.mxu0 0.0
      %6034 = vmatprep.subr.mxu0 0.0
      %6035 = vmatpush1.msra.mxu0 0.0
      %6036 = vmatprep.subr.mxu0 0.0
      %6037 = vmatpush1.msra.mxu0 0.0
      %6038 = vmatprep.mubr.f32.mxu0 0.0
      %6039 = vmatmul.mubr.f32.gmra.mrb[0].mxu0 %v5879
      %v6040 = vpop.f32.mrb[0].mxu0
      %v6041 = vadd.f32 0.0, %v6040
      %v6042 = vpop.f32.mrb[0].mxu0
      %6043 = vmatprep.mubr.f32.mxu0 0.0
      %6044 = vmatmul.mubr.f32.gmra.mrb[0].mxu0 %v5882
      %v6045 = vpop.f32.mrb[0].mxu0
      %v6046 = vadd.f32 0.0, %v6045
      %v6047 = vpop.f32.mrb[0].mxu0
      %6048 = vmatprep.mubr.f32.mxu0 0.0
      %6049 = vmatmul.mubr.f32.gmra.mrb[0].mxu0 %v5885
      %v6050 = vpop.f32.mrb[0].mxu0
      %v6051 = vadd.f32 0.0, %v6050
      %v6052 = vpop.f32.mrb[0].mxu0
      %6053 = vmatprep.mubr.f32.mxu0 0.0
      %6054 = vmatmul.mubr.f32.gmra.mrb[0].mxu0 %v5888
      %v6055 = vpop.f32.mrb[0].mxu0
      %v6056 = vadd.f32 0.0, %v6055
      %v6057 = vpop.f32.mrb[0].mxu0
      %6058 = vmatprep.mubr.f32.mxu0 0.0
      %6059 = vmatmul.mubr.f32.gmra.mrb[0].mxu0 %v5891
      %v6060 = vpop.f32.mrb[0].mxu0
      %v6061 = vadd.f32 0.0, %v6060
      %v6062 = vpop.f32.mrb[0].mxu0
      %6063 = vmatprep.mubr.f32.mxu0 0.0
      %6064 = vmatmul.mubr.f32.gmra.mrb[0].mxu0 %v5894
      %v6065 = vpop.f32.mrb[0].mxu0
      %v6066 = vadd.f32 0.0, %v6065
      %v6067 = vpop.f32.mrb[0].mxu0
      %6068 = vmatprep.mubr.f32.mxu0 0.0
      %6069 = vmatmul.mubr.f32.gmra.mrb[0].mxu0 %v5897
      %v6070 = vpop.f32.mrb[0].mxu0
      %v6071 = vadd.f32 0.0, %v6070
      %v6072 = vpop.f32.mrb[0].mxu0
      %6073 = vmatprep.mubr.f32.mxu0 0.0
      %6074 = vmatmul.mubr.f32.gmra.mrb[0].mxu0 %v5900
      %v6075 = vpop.f32.mrb[0].mxu0
      %v6076 = vadd.f32 0.0, %v6075
      %v6077 = vpop.f32.mrb[0].mxu0
      %6078 = vmatprep.mubr.f32.mxu0 0.0
      %6079 = vmatmul.mubr.f32.gmra.mrb[0].mxu0 %v5903
      %v6080 = vpop.f32.mrb[0].mxu0
      %v6081 = vadd.f32 0.0, %v6080
      %v6082 = vpop.f32.mrb[0].mxu0
      %6083 = vmatprep.mubr.f32.mxu0 0.0
      %6084 = vmatmul.mubr.f32.gmra.mrb[0].mxu0 %v5906
      %v6085 = vpop.f32.mrb[0].mxu0
      %v6086 = vadd.f32 0.0, %v6085
      %v6087 = vpop.f32.mrb[0].mxu0
      %6088 = vmatprep.mubr.f32.mxu0 0.0
      %6089 = vmatmul.mubr.f32.gmra.mrb[0].mxu0 %v5909
      %v6090 = vpop.f32.mrb[0].mxu0
      %v6091 = vadd.f32 0.0, %v6090
      %v6092 = vpop.f32.mrb[0].mxu0
      %6093 = vmatprep.mubr.f32.mxu0 0.0
      %6094 = vmatmul.mubr.f32.gmra.mrb[0].mxu0 %v5912
      %v6095 = vpop.f32.mrb[0].mxu0
      %v6096 = vadd.f32 0.0, %v6095
      %v6097 = vpop.f32.mrb[0].mxu0
      %6098 = vmatprep.mubr.f32.mxu0 0.0
      %6099 = vmatmul.mubr.f32.gmra.mrb[0].mxu0 %v5915
      %v6100 = vpop.f32.mrb[0].mxu0
      %v6101 = vadd.f32 0.0, %v6100
      %v6102 = vpop.f32.mrb[0].mxu0
      %6103 = vmatprep.mubr.f32.mxu0 0.0
      %6104 = vmatmul.mubr.f32.gmra.mrb[0].mxu0 %v5918
      %v6105 = vpop.f32.mrb[0].mxu0
      %v6106 = vadd.f32 0.0, %v6105
      %v6107 = vpop.f32.mrb[0].mxu0
      %6108 = vmatprep.mubr.f32.mxu0 0.0
      %6109 = vmatmul.mubr.f32.gmra.mrb[0].mxu0 %v5921
      %v6110 = vpop.f32.mrb[0].mxu0
      %v6111 = vadd.f32 0.0, %v6110
      %v6112 = vpop.f32.mrb[0].mxu0
      %6113 = vmatprep.mubr.f32.mxu0 0.0
      %6114 = vmatmul.mubr.f32.gmra.mrb[0].mxu0 %v5924
      %v6115 = vpop.f32.mrb[0].mxu0
      %v6116 = vadd.f32 0.0, %v6115
      %v6117 = vpop.f32.mrb[0].mxu0
      %6118 = vmatprep.mubr.f32.mxu0 0.0
      %6119 = vmatmul.mubr.f32.gmra.mrb[0].mxu0 %v5927
      %v6120 = vpop.f32.mrb[0].mxu0
      %v6121 = vadd.f32 0.0, %v6120
      %v6122 = vpop.f32.mrb[0].mxu0
      %6123 = vmatprep.mubr.f32.mxu0 0.0
      %6124 = vmatmul.mubr.f32.gmra.mrb[0].mxu0 %v5930
      %v6125 = vpop.f32.mrb[0].mxu0
      %v6126 = vadd.f32 0.0, %v6125
      %v6127 = vpop.f32.mrb[0].mxu0
      %6128 = vmatprep.mubr.f32.mxu0 0.0
      %6129 = vmatmul.mubr.f32.gmra.mrb[0].mxu0 %v5933
      %v6130 = vpop.f32.mrb[0].mxu0
      %v6131 = vadd.f32 0.0, %v6130
      %v6132 = vpop.f32.mrb[0].mxu0
      %6133 = vmatprep.mubr.f32.mxu0 0.0
      %6134 = vmatmul.mubr.f32.gmra.mrb[0].mxu0 %v5936
      %v6135 = vpop.f32.mrb[0].mxu0
      %v6136 = vadd.f32 0.0, %v6135
      %v6137 = vpop.f32.mrb[0].mxu0
      %6138 = vmatprep.mubr.f32.mxu0 0.0
      %6139 = vmatmul.mubr.f32.gmra.mrb[0].mxu0 %v5939
      %v6140 = vpop.f32.mrb[0].mxu0
      %v6141 = vadd.f32 0.0, %v6140
      %v6142 = vpop.f32.mrb[0].mxu0
      %6143 = vmatprep.mubr.f32.mxu0 0.0
      %6144 = vmatmul.mubr.f32.gmra.mrb[0].mxu0 %v5942
      %v6145 = vpop.f32.mrb[0].mxu0
      %v6146 = vadd.f32 0.0, %v6145
      %v6147 = vpop.f32.mrb[0].mxu0
      %6148 = vmatprep.mubr.f32.mxu0 0.0
      %6149 = vmatmul.mubr.f32.gmra.mrb[0].mxu0 %v5945
      %v6150 = vpop.f32.mrb[0].mxu0
      %v6151 = vadd.f32 0.0, %v6150
      %v6152 = vpop.f32.mrb[0].mxu0
      %6153 = vmatprep.mubr.f32.mxu0 0.0
      %6154 = vmatmul.mubr.f32.gmra.mrb[0].mxu0 %v5948
      %v6155 = vpop.f32.mrb[0].mxu0
      %v6156 = vadd.f32 0.0, %v6155
      %v6157 = vpop.f32.mrb[0].mxu0
      %6158 = vmatprep.mubr.f32.mxu0 0.0
      %6159 = vmatmul.mubr.f32.gmra.mrb[0].mxu0 %v5951
      %v6160 = vpop.f32.mrb[0].mxu0
      %v6161 = vadd.f32 0.0, %v6160
      %v6162 = vpop.f32.mrb[0].mxu0
      %6163 = vmatprep.mubr.f32.mxu0 0.0
      %6164 = vmatmul.mubr.f32.gmra.mrb[0].mxu0 %v5954
      %v6165 = vpop.f32.mrb[0].mxu0
      %v6166 = vadd.f32 0.0, %v6165
      %v6167 = vpop.f32.mrb[0].mxu0
      %6168 = vmatprep.mubr.f32.mxu0 0.0
      %6169 = vmatmul.mubr.f32.gmra.mrb[0].mxu0 %v5957
      %v6170 = vpop.f32.mrb[0].mxu0
      %v6171 = vadd.f32 0.0, %v6170
      %v6172 = vpop.f32.mrb[0].mxu0
      %6173 = vmatprep.mubr.f32.mxu0 0.0
      %6174 = vmatmul.mubr.f32.gmra.mrb[0].mxu0 %v5960
      %v6175 = vpop.f32.mrb[0].mxu0
      %v6176 = vadd.f32 0.0, %v6175
      %v6177 = vpop.f32.mrb[0].mxu0
      %6178 = vmatprep.mubr.f32.mxu0 0.0
      %6179 = vmatmul.mubr.f32.gmra.mrb[0].mxu0 %v5963
      %v6180 = vpop.f32.mrb[0].mxu0
      %v6181 = vadd.f32 0.0, %v6180
      %v6182 = vpop.f32.mrb[0].mxu0
      %6183 = vmatprep.mubr.f32.mxu0 0.0
      %6184 = vmatmul.mubr.f32.gmra.mrb[0].mxu0 %v5966
      %v6185 = vpop.f32.mrb[0].mxu0
      %v6186 = vadd.f32 0.0, %v6185
      %v6187 = vpop.f32.mrb[0].mxu0
      %6188 = vmatprep.mubr.f32.mxu0 0.0
      %6189 = vmatmul.mubr.f32.gmra.mrb[0].mxu0 %v5969
      %v6190 = vpop.f32.mrb[0].mxu0
      %v6191 = vadd.f32 0.0, %v6190
      %v6192 = vpop.f32.mrb[0].mxu0
      %6193 = vmatprep.mubr.f32.mxu0 0.0
      %6194 = vmatmul.mubr.f32.gmra.mrb[0].mxu0 %v5972
      %v6195 = vpop.f32.mrb[0].mxu0
      %v6196 = vadd.f32 0.0, %v6195
      %v6197 = vpop.f32.mrb[0].mxu0
      %6198 = vdwg.mxu0
      %v6199 = vadd.f32 %v4806, %v6041
      %v6200 = vadd.f32 %v4807, %v6046
      %v6201 = vadd.f32 %v4808, %v6051
      %v6202 = vadd.f32 %v4809, %v6056
      %v6203 = vadd.f32 %v4810, %v6061
      %v6204 = vadd.f32 %v4811, %v6066
      %v6205 = vadd.f32 %v4812, %v6071
      %v6206 = vadd.f32 %v4813, %v6076
      %v6207 = vadd.f32 %v4814, %v6081
      %v6208 = vadd.f32 %v4815, %v6086
      %v6209 = vadd.f32 %v4816, %v6091
      %v6210 = vadd.f32 %v4817, %v6096
      %v6211 = vadd.f32 %v4818, %v6101
      %v6212 = vadd.f32 %v4819, %v6106
      %v6213 = vadd.f32 %v4820, %v6111
      %v6214 = vadd.f32 %v4821, %v6116
      %v6215 = vadd.f32 %v4822, %v6121
      %v6216 = vadd.f32 %v4823, %v6126
      %v6217 = vadd.f32 %v4824, %v6131
      %v6218 = vadd.f32 %v4825, %v6136
      %v6219 = vadd.f32 %v4826, %v6141
      %v6220 = vadd.f32 %v4827, %v6146
      %v6221 = vadd.f32 %v4828, %v6151
      %v6222 = vadd.f32 %v4829, %v6156
      %v6223 = vadd.f32 %v4830, %v6161
      %v6224 = vadd.f32 %v4831, %v6166
      %v6225 = vadd.f32 %v4832, %v6171
      %v6226 = vadd.f32 %v4833, %v6176
      %v6227 = vadd.f32 %v4834, %v6181
      %v6228 = vadd.f32 %v4835, %v6186
      %v6229 = vadd.f32 %v4836, %v6191
      %v6230 = vadd.f32 %v4837, %v6196
      %vm6231 = vcmask 261120
      %6232 = vst.msk [vmem:[%s291] sm:$0xff] %vm6231, %v6199
      %6233 = vst.msk [vmem:[%s291 + $0x8] sm:$0xff] %vm6231, %v6200
      %6234 = vst.msk [vmem:[%s291 + $0x10] sm:$0xff] %vm6231, %v6201
      %6235 = vst.msk [vmem:[%s291 + $0x18] sm:$0xff] %vm6231, %v6202
      %6236 = vst.msk [vmem:[%s291 + $0x20] sm:$0xff] %vm6231, %v6203
      %6237 = vst.msk [vmem:[%s291 + $0x28] sm:$0xff] %vm6231, %v6204
      %6238 = vst.msk [vmem:[%s291 + $0x30] sm:$0xff] %vm6231, %v6205
      %6239 = vst.msk [vmem:[%s291 + $0x38] sm:$0xff] %vm6231, %v6206
      %6240 = vst.msk [vmem:[%s291 + $0x40] sm:$0xff] %vm6231, %v6207
      %6241 = vst.msk [vmem:[%s291 + $0x48] sm:$0xff] %vm6231, %v6208
      %6242 = vst.msk [vmem:[%s291 + $0x50] sm:$0xff] %vm6231, %v6209
      %6243 = vst.msk [vmem:[%s291 + $0x58] sm:$0xff] %vm6231, %v6210
      %6244 = vst.msk [vmem:[%s291 + $0x60] sm:$0xff] %vm6231, %v6211
      %6245 = vst.msk [vmem:[%s291 + $0x68] sm:$0xff] %vm6231, %v6212
      %6246 = vst.msk [vmem:[%s291 + $0x70] sm:$0xff] %vm6231, %v6213
      %6247 = vst.msk [vmem:[%s291 + $0x78] sm:$0xff] %vm6231, %v6214
      %6248 = vst.msk [vmem:[%s291 + $0x80] sm:$0xff] %vm6231, %v6215
      %6249 = vst.msk [vmem:[%s291 + $0x88] sm:$0xff] %vm6231, %v6216
      %6250 = vst.msk [vmem:[%s291 + $0x90] sm:$0xff] %vm6231, %v6217
      %6251 = vst.msk [vmem:[%s291 + $0x98] sm:$0xff] %vm6231, %v6218
      %6252 = vst.msk [vmem:[%s291 + $0xa0] sm:$0xff] %vm6231, %v6219
      %6253 = vst.msk [vmem:[%s291 + $0xa8] sm:$0xff] %vm6231, %v6220
      %6254 = vst.msk [vmem:[%s291 + $0xb0] sm:$0xff] %vm6231, %v6221
      %6255 = vst.msk [vmem:[%s291 + $0xb8] sm:$0xff] %vm6231, %v6222
      %6256 = vst.msk [vmem:[%s291 + $0xc0] sm:$0xff] %vm6231, %v6223
      %6257 = vst.msk [vmem:[%s291 + $0xc8] sm:$0xff] %vm6231, %v6224
      %6258 = vst.msk [vmem:[%s291 + $0xd0] sm:$0xff] %vm6231, %v6225
      %6259 = vst.msk [vmem:[%s291 + $0xd8] sm:$0xff] %vm6231, %v6226
      %6260 = vst.msk [vmem:[%s291 + $0xe0] sm:$0xff] %vm6231, %v6227
      %6261 = vst.msk [vmem:[%s291 + $0xe8] sm:$0xff] %vm6231, %v6228
      %6262 = vst.msk [vmem:[%s291 + $0xf0] sm:$0xff] %vm6231, %v6229
      %6263 = vst.msk [vmem:[%s291 + $0xf8] sm:$0xff] %vm6231, %v6230
      %p6264 = scmp.lt.s32.totalorder %s17, 1
      %s6265 = scalar_select %p6264, %s17, 1
      %s6266 = smul.addr %s6265, 32
      %s6267 = smul.addr %s6266, 8
      %s6268 = scalar_lea.vmem %s6, %s6267
      // Predicated region
      $region45: #{wave_attention_forward.11} parent=43 // pred_check
        %p6269 = pneg %p176
      $region46: #{wave_attention_forward.11} parent=43 // pred_check_branch
        %6271 = sbr.rel (%p6269) target = $region48
      $region47: #{wave_attention_forward.11} parent=43 // pred_region
        _
      $region48: #{wave_attention_forward.11} parent=43 // pred_fallthru
        _
    $region44: #{wave_attention_forward.11} parent=5 // pred_fallthru
      _
    %p6272 = scmp.le.s32.totalorder 2, %s12
    // Predicated region
    $region49: #{wave_attention_forward.11} parent=5 // pred_check
      %p6273 = pneg %p6272
    $region50: #{wave_attention_forward.11} parent=5 // pred_check_branch
      %6275 = sbr.rel (%p6273) target = $region52
    $region51: #{wave_attention_forward.11} parent=5 // pred_region
      %s6276 = ssub.s32 %s12, 2
      // Predicated region
      $region53: #{wave_attention_forward.11} parent=51 // pred_check
        %p6277 = pneg %p182
      $region54: #{wave_attention_forward.11} parent=51 // pred_check_branch
        %6279 = sbr.rel (%p6277) target = $region56
      $region55: #{wave_attention_forward.11} parent=51 // pred_region
        %p6280 = scmp.lt.s32.totalorder %s18, 1
        %s6281 = scalar_select %p6280, %s18, 1
        %s6282 = smul.addr %s6281, 32
        %s6283 = smul.addr %s6282, 8
        %s6284 = scalar_lea.vmem %s6, %s6283
      $region56: #{wave_attention_forward.11} parent=51 // pred_fallthru
        _
    $region52: #{wave_attention_forward.11} parent=5 // pred_fallthru
      _
  $region6: #{wave_attention_forward.11} parent=0 // loop_footer
    %s16 = sadd.s32 1, %s12
  $region7: #{wave_attention_forward.11} parent=0 // loop_footer_branch
    %11 = sbr.rel target = $region3
  $region8: #{wave_attention_forward.11} parent=0 // loop_exit
    _

</llo_original>
